<compile_context>
chip_gen: v5e
topology: v5e:2x2
jax: 0.10.0
libtpu: 0.0.40
codegen_flags: <defaults>
</compile_context>

<pallas_src>
import functools

import jax
import jax.numpy as jnp
from jax.experimental import pallas as pl
from jax.experimental.pallas import tpu as pltpu

FINAL_EMBED = 784 * 2 + 128 + 1   # 1697
K_PAD = 1792                      # 14 * 128  (zero-padded contraction dim)
HIDDEN = 1024
OUT = 800
OUT_PAD = 896                     # 7 * 128   (zero-padded output dim)


def _simple_predict_kernel(h_ref, w1_ref, b1_ref, w2_ref, b2_ref, out_ref):
    # ---- fc (+ folded BatchNorm) : (bb, 1792)bf16 @ (1792, 1024)bf16 -> f32 ----
    x = h_ref[...]
    z = jnp.dot(x, w1_ref[...], preferred_element_type=jnp.float32)
    z = jnp.maximum(z + b1_ref[...], 0.0)          # f32 epilogue (bias + ReLU)
    # Dropout(0.7) == identity in eval mode.

    # ---- predict : (bb, 1024)bf16 @ (1024, 896)bf16 -> f32, bias, ReLU ----
    y = jnp.dot(z.astype(w2_ref.dtype), w2_ref[...],
                preferred_element_type=jnp.float32)
    out_ref[...] = jnp.maximum(y + b2_ref[...], 0.0).astype(out_ref.dtype)


@functools.partial(jax.jit, static_argnames=("block_b",))
def simple_predict(h, w1p, b1p, w2p, b2p, *, block_b=128):
    """h: (B, 1697) f32/bf16.  w1p/b1p/w2p/b2p from prepare_params()."""
    B, F = h.shape
    assert F == FINAL_EMBED

    # Pick a batch tile: big (128) for large batches, shrink for tiny batches.
    bb = min(block_b, max(8, ((B + 7) // 8) * 8))
    n_blocks = pl.cdiv(B, bb)
    Bp = n_blocks * bb

    # Zero-pad batch -> Bp and features 1697 -> 1792; cast to bf16 for the MXU.
    hp = jnp.zeros((Bp, K_PAD), jnp.bfloat16)
    hp = hp.at[:B, :FINAL_EMBED].set(h.astype(jnp.bfloat16))

    resident = dict(pipeline_mode=pl.Buffered(1))   # weights never change: 1 buffer

    out2d = pl.pallas_call(
        _simple_predict_kernel,
        out_shape=jax.ShapeDtypeStruct((Bp, OUT_PAD), jnp.float32),
        grid_spec=pltpu.PrefetchScalarGridSpec(
            num_scalar_prefetch=0,
            grid=(n_blocks,),
            in_specs=[
                pl.BlockSpec((bb, K_PAD), lambda i: (i, 0)),                    # h tile
                pl.BlockSpec((K_PAD, HIDDEN), lambda i: (0, 0), **resident),    # W1 (BN folded)
                pl.BlockSpec((1, HIDDEN), lambda i: (0, 0), **resident),        # b1 (BN folded)
                pl.BlockSpec((HIDDEN, OUT_PAD), lambda i: (0, 0), **resident),  # W2
                pl.BlockSpec((1, OUT_PAD), lambda i: (0, 0), **resident),       # b2
            ],
            out_specs=pl.BlockSpec((bb, OUT_PAD), lambda i: (i, 0)),
        ),
        compiler_params=pltpu.CompilerParams(
            dimension_semantics=("parallel",),
        ),
    )(hp, w1p, b1p, w2p, b2p)

    # Drop batch / feature padding, then h.view(-1, 20, 40).
    return out2d[:B, :OUT].reshape(-1, 20, 40)


def prepare_params(w1, b1, bn_scale, bn_shift, w2, b2):
    """Fold BN into fc, pad to MXU-friendly shapes, cast weights to bf16."""
    # Fold BatchNorm affine into the first Linear (per output channel).
    w1f = w1 * bn_scale                   # (1697, 1024) * (1, 1024)
    b1f = b1 * bn_scale + bn_shift        # (1, 1024)

    # Pad contraction dim 1697 -> 1792 with zero rows (exact).
    w1p = jnp.zeros((K_PAD, HIDDEN), jnp.bfloat16)
    w1p = w1p.at[:FINAL_EMBED, :].set(w1f.astype(jnp.bfloat16))

    # Pad output dim 800 -> 896 with zero columns (exact; sliced off afterwards).
    w2p = jnp.zeros((HIDDEN, OUT_PAD), jnp.bfloat16)
    w2p = w2p.at[:, :OUT].set(w2.astype(jnp.bfloat16))
    b2p = jnp.zeros((1, OUT_PAD), jnp.float32).at[:, :OUT].set(b2)

    return w1p, b1f.astype(jnp.float32), w2p, b2p


def init_params(key):
    """Deterministic PyTorch-style init: U(-1/sqrt(fan_in), 1/sqrt(fan_in))."""
    k1, k2, k3, k4 = jax.random.split(key, 4)

    bound1 = 1.0 / jnp.sqrt(jnp.float32(FINAL_EMBED))
    w1 = jax.random.uniform(k1, (FINAL_EMBED, HIDDEN), jnp.float32, -bound1, bound1)
    b1 = jax.random.uniform(k2, (1, HIDDEN), jnp.float32, -bound1, bound1)

    bound2 = 1.0 / jnp.sqrt(jnp.float32(HIDDEN))
    w2 = jax.random.uniform(k3, (HIDDEN, OUT), jnp.float32, -bound2, bound2)
    b2 = jax.random.uniform(k4, (1, OUT), jnp.float32, -bound2, bound2)

    # BatchNorm1d(1024) default params (gamma=1, beta=0, mean=0, var=1), eps=1e-5.
    eps = 1e-5
    gamma = jnp.ones((1, HIDDEN), jnp.float32)
    beta = jnp.zeros((1, HIDDEN), jnp.float32)
    running_mean = jnp.zeros((1, HIDDEN), jnp.float32)
    running_var = jnp.ones((1, HIDDEN), jnp.float32)
    bn_scale = gamma / jnp.sqrt(running_var + eps)
    bn_shift = beta - running_mean * bn_scale

    return w1, b1, bn_scale, bn_shift, w2, b2


def reference(h, w1, b1, bn_scale, bn_shift, w2, b2):
    z = h @ w1 + b1
    z = jnp.maximum(z * bn_scale + bn_shift, 0.0)
    y = jnp.maximum(z @ w2 + b2, 0.0)
    return y.reshape(-1, 20, 40)


if __name__ == "__main__":
    key = jax.random.PRNGKey(0)
    k_h, k_p = jax.random.split(key)

    B = 8
    h = jax.random.normal(k_h, (B, FINAL_EMBED), jnp.float32)
    raw_params = init_params(k_p)
    params = prepare_params(*raw_params)

    out = simple_predict(h, *params)
    out = jax.block_until_ready(out)
    assert out.shape == (B, 20, 40), out.shape

    # bf16 weights/activations with f32 accumulation -> loosened tolerance.
    ref = reference(h, *raw_params)
    assert jnp.allclose(out, ref, atol=5e-2, rtol=5e-2), \
        float(jnp.max(jnp.abs(out - ref)))

    print("KERNEL_OK")
</pallas_src>

<mosaic_0001>
module attributes {stable_mosaic.version = 11 : i64} {
  func.func @_simple_predict_kernel(%arg0: i32, %arg1: memref<8x1792xbf16, #tpu.memory_space<vmem>>, %arg2: memref<1792x1024xbf16, #tpu.memory_space<vmem>>, %arg3: memref<1x1024xf32, #tpu.memory_space<vmem>>, %arg4: memref<1024x896xbf16, #tpu.memory_space<vmem>>, %arg5: memref<1x896xf32, #tpu.memory_space<vmem>>, %arg6: memref<8x896xf32, #tpu.memory_space<vmem>>) attributes {dimension_semantics = [#tpu.dimension_semantics<parallel>], iteration_bounds = array<i64: 1>, scalar_prefetch = 0 : i64, scratch_operands = 0 : i64, tpu.core_type = #tpu.core_type<tc>, window_params = [{transform_indices = @transform_0, window_bounds = array<i64: 8, 1792>}, {pipeline_mode = #tpu.pipeline_mode<synchronous>, transform_indices = @transform_1, window_bounds = array<i64: 1792, 1024>}, {pipeline_mode = #tpu.pipeline_mode<synchronous>, transform_indices = @transform_2, window_bounds = array<i64: 1, 1024>}, {pipeline_mode = #tpu.pipeline_mode<synchronous>, transform_indices = @transform_3, window_bounds = array<i64: 1024, 896>}, {pipeline_mode = #tpu.pipeline_mode<synchronous>, transform_indices = @transform_4, window_bounds = array<i64: 1, 896>}, {transform_indices = @transform_5, window_bounds = array<i64: 8, 896>}]} {
    %c0 = arith.constant 0 : index
    %c0_0 = arith.constant 0 : index
    %0 = vector.load %arg1[%c0, %c0_0] : memref<8x1792xbf16, #tpu.memory_space<vmem>>, vector<8x1792xbf16>
    %c0_1 = arith.constant 0 : index
    %c0_2 = arith.constant 0 : index
    %1 = vector.load %arg2[%c0_1, %c0_2] : memref<1792x1024xbf16, #tpu.memory_space<vmem>>, vector<1792x1024xbf16>
    %cst = arith.constant dense<0.000000e+00> : vector<8x1024xf32>
    %2 = tpu.matmul %0, %1, %cst {dimension_numbers = #tpu.dot_dimension_numbers<[1], [0], [0], [1], [0, 0, 1, 1], [], []>} : vector<8x1792xbf16>, vector<1792x1024xbf16>, vector<8x1024xf32> -> vector<8x1024xf32>
    %c0_3 = arith.constant 0 : index
    %c0_4 = arith.constant 0 : index
    %3 = vector.load %arg3[%c0_3, %c0_4] : memref<1x1024xf32, #tpu.memory_space<vmem>>, vector<1x1024xf32>
    %4 = vector.broadcast %3 : vector<1x1024xf32> to vector<8x1024xf32>
    %5 = arith.addf %2, %4 : vector<8x1024xf32>
    %cst_5 = arith.constant 0.000000e+00 : f32
    %6 = vector.broadcast %cst_5 : f32 to vector<8x1024xf32>
    %7 = arith.maximumf %5, %6 : vector<8x1024xf32>
    %8 = arith.truncf %7 : vector<8x1024xf32> to vector<8x1024xbf16>
    %c0_6 = arith.constant 0 : index
    %c0_7 = arith.constant 0 : index
    %9 = vector.load %arg4[%c0_6, %c0_7] : memref<1024x896xbf16, #tpu.memory_space<vmem>>, vector<1024x896xbf16>
    %cst_8 = arith.constant dense<0.000000e+00> : vector<8x896xf32>
    %10 = tpu.matmul %8, %9, %cst_8 {dimension_numbers = #tpu.dot_dimension_numbers<[1], [0], [0], [1], [0, 0, 1, 1], [], []>} : vector<8x1024xbf16>, vector<1024x896xbf16>, vector<8x896xf32> -> vector<8x896xf32>
    %c0_9 = arith.constant 0 : index
    %c0_10 = arith.constant 0 : index
    %11 = vector.load %arg5[%c0_9, %c0_10] : memref<1x896xf32, #tpu.memory_space<vmem>>, vector<1x896xf32>
    %12 = vector.broadcast %11 : vector<1x896xf32> to vector<8x896xf32>
    %13 = arith.addf %10, %12 : vector<8x896xf32>
    %cst_11 = arith.constant 0.000000e+00 : f32
    %14 = vector.broadcast %cst_11 : f32 to vector<8x896xf32>
    %15 = arith.maximumf %13, %14 : vector<8x896xf32>
    %c0_12 = arith.constant 0 : index
    %c0_13 = arith.constant 0 : index
    %16 = vector.load %arg6[%c0_12, %c0_13] : memref<8x896xf32, #tpu.memory_space<vmem>>, vector<8x896xf32>
    tpu.vector_store %arg6[%c0_12, %c0_13], %15 {strides = array<i32>} : memref<8x896xf32, #tpu.memory_space<vmem>>, vector<8x896xf32>,
    return
  }
  func.func @transform_0(%arg0: i32) -> (i32, i32) {
    %c0_i32 = arith.constant 0 : i32
    %c0_i32_0 = arith.constant 0 : i32
    return %arg0, %c0_i32 : i32, i32
  }
  func.func @transform_1(%arg0: i32) -> (i32, i32) {
    %c0_i32 = arith.constant 0 : i32
    %c0_i32_0 = arith.constant 0 : i32
    %c0_i32_1 = arith.constant 0 : i32
    return %c0_i32, %c0_i32_0 : i32, i32
  }
  func.func @transform_2(%arg0: i32) -> (i32, i32) {
    %c0_i32 = arith.constant 0 : i32
    %c0_i32_0 = arith.constant 0 : i32
    %c0_i32_1 = arith.constant 0 : i32
    return %c0_i32, %c0_i32_0 : i32, i32
  }
  func.func @transform_3(%arg0: i32) -> (i32, i32) {
    %c0_i32 = arith.constant 0 : i32
    %c0_i32_0 = arith.constant 0 : i32
    %c0_i32_1 = arith.constant 0 : i32
    return %c0_i32, %c0_i32_0 : i32, i32
  }
  func.func @transform_4(%arg0: i32) -> (i32, i32) {
    %c0_i32 = arith.constant 0 : i32
    %c0_i32_0 = arith.constant 0 : i32
    %c0_i32_1 = arith.constant 0 : i32
    return %c0_i32, %c0_i32_0 : i32, i32
  }
  func.func @transform_5(%arg0: i32) -> (i32, i32) {
    %c0_i32 = arith.constant 0 : i32
    %c0_i32_0 = arith.constant 0 : i32
    return %arg0, %c0_i32 : i32, i32
  }
}

</mosaic_0001>

<llo_original>
// kernel: simple_predict.1
$region0: #{simple_predict.1}
  #allocation0 [shape = 'u32[]', space=smem, size = 0x4, offset = 0x4, fixed_abs, tag = 'smem constant byte address 0x4 - core index']
  #allocation1 [shape = 'u32[72,128]{1,0:T(1,128)}', space=vmem, size = 0x9000, scoped, tag = 'internal scratch']
  %s0 = inlined_call_operand.vmem [shape: bf16[8,1792], index: 0, kind: input, shape index: {}]
  %s1 = inlined_call_operand.hbm [shape: bf16[1792,1024], index: 1, kind: input, shape index: {}]
  %s2 = inlined_call_operand.hbm [shape: f32[1,1024], index: 2, kind: input, shape index: {}]
  %s3 = inlined_call_operand.hbm [shape: bf16[1024,896], index: 3, kind: input, shape index: {}]
  %s4 = inlined_call_operand.hbm [shape: f32[1,896], index: 4, kind: input, shape index: {}]
  %s5 = inlined_call_operand.vmem [shape: f32[8,896], index: 5, kind: output, shape index: {}]
  %s6 = sld [smem:[#allocation0]]
  $region46: #{simple_predict.1} parent=0
    _
  %s8 = ssub.s32 1, %s6
  %s9 = scalar_select 0, %s8, %s6
  $region1: #{simple_predict.1} parent=0
    #allocation2 [shape = 'u8[3670016]{0}', space=vmem, size = 0x380000, scoped, tag = 'input window, operand 1, single buffered']
    #allocation3 [shape = 's32[1]{0}', space=sflag, size = 0x4, scoped, tag = 'scoped memory for simple_predict.1']
    #allocation4 [shape = 'u8[4096]{0}', space=vmem, size = 0x1000, scoped, tag = 'input window, operand 2, single buffered']
    #allocation5 [shape = 's32[1]{0}', space=sflag, size = 0x4, scoped, tag = 'scoped memory for simple_predict.1']
    #allocation6 [shape = 'u8[1835008]{0}', space=vmem, size = 0x1c0000, scoped, tag = 'input window, operand 3, single buffered']
    #allocation7 [shape = 'u8[3584]{0}', space=vmem, size = 0x1000, scoped, tag = 'input window, operand 4, single buffered']
    #allocation8 [shape = 's32[1]{0}', space=sflag, size = 0x4, scoped, tag = 'scoped memory for simple_predict.1']
    %10 = vsyncpa [#allocation3], 0
    %11 = vsyncpa [#allocation5], 0
    %12 = vsyncpa [#allocation8], 0
    // Predicated region
    $region2: #{simple_predict.1} parent=1 // pred_check
      _
    $region3: #{simple_predict.1} parent=1 // pred_check_branch
      %14 = sbr.rel (0) target = $region5
    $region4: #{simple_predict.1} parent=1 // pred_region
      _
    $region5: #{simple_predict.1} parent=1 // pred_fallthru
      _
    // Predicated region
    $region6: #{simple_predict.1} parent=1 // pred_check
      _
    $region7: #{simple_predict.1} parent=1 // pred_check_branch
      %16 = sbr.rel (0) target = $region9
    $region8: #{simple_predict.1} parent=1 // pred_region
      %18 = vsyncadd [#allocation3], 0
      %s19 = sshll.u32 %s1, 4
      %s20 = int_to_ptr.hbm [resolvable:$true] %s19
      %s21 = sshll.u32 [#allocation2], 4
      %s22 = int_to_ptr.vmem [resolvable:$true] %s21
      %27 = dma.hbm_to_vmem [thread:$0]  %s20, 114688, %s22, [#allocation3], 512, 512, 32
    $region9: #{simple_predict.1} parent=1 // pred_fallthru
      _
    // Predicated region
    $region10: #{simple_predict.1} parent=1 // pred_check
      _
    $region11: #{simple_predict.1} parent=1 // pred_check_branch
      %29 = sbr.rel (0) target = $region13
    $region12: #{simple_predict.1} parent=1 // pred_region
      %31 = vsyncadd [#allocation5], 0
      %s33 = sshll.u32 %s2, 4
      %s34 = int_to_ptr.hbm [resolvable:$true] %s33
      %s35 = sshll.u32 [#allocation4], 4
      %s36 = int_to_ptr.vmem [resolvable:$true] %s35
      %38 = dma.hbm_to_vmem [thread:$0]  %s34, 128, %s36, [#allocation5]
    $region13: #{simple_predict.1} parent=1 // pred_fallthru
      _
    // Predicated region
    $region14: #{simple_predict.1} parent=1 // pred_check
      _
    $region15: #{simple_predict.1} parent=1 // pred_check_branch
      %40 = sbr.rel (0) target = $region17
    $region16: #{simple_predict.1} parent=1 // pred_region
      %42 = vsyncadd [#allocation5], 0
      %s43 = sshll.u32 %s3, 4
      %s44 = int_to_ptr.hbm [resolvable:$true] %s43
      %s45 = sshll.u32 [#allocation6], 4
      %s46 = int_to_ptr.vmem [resolvable:$true] %s45
      %51 = dma.hbm_to_vmem [thread:$0]  %s44, 57344, %s46, [#allocation5], 448, 448, 28
    $region17: #{simple_predict.1} parent=1 // pred_fallthru
      _
    // Predicated region
    $region18: #{simple_predict.1} parent=1 // pred_check
      _
    $region19: #{simple_predict.1} parent=1 // pred_check_branch
      %53 = sbr.rel (0) target = $region21
    $region20: #{simple_predict.1} parent=1 // pred_region
      %55 = vsyncadd [#allocation8], 0
      %s57 = sshll.u32 %s4, 4
      %s58 = int_to_ptr.hbm [resolvable:$true] %s57
      %s59 = sshll.u32 [#allocation7], 4
      %s60 = int_to_ptr.vmem [resolvable:$true] %s59
      %62 = dma.hbm_to_vmem [thread:$0]  %s58, 112, %s60, [#allocation8]
    $region21: #{simple_predict.1} parent=1 // pred_fallthru
      _
    // Predicated region
    $region22: #{simple_predict.1} parent=1 // pred_check
      _
    $region23: #{simple_predict.1} parent=1 // pred_check_branch
      %64 = sbr.rel (0) target = $region25
    $region24: #{simple_predict.1} parent=1 // pred_region
      %66 = dma.done [#allocation3], 114688
    $region25: #{simple_predict.1} parent=1 // pred_fallthru
      _
    // Predicated region
    $region26: #{simple_predict.1} parent=1 // pred_check
      _
    $region27: #{simple_predict.1} parent=1 // pred_check_branch
      %68 = sbr.rel (0) target = $region29
    $region28: #{simple_predict.1} parent=1 // pred_region
      %70 = dma.done [#allocation5], 128
    $region29: #{simple_predict.1} parent=1 // pred_fallthru
      _
    // Predicated region
    $region30: #{simple_predict.1} parent=1 // pred_check
      _
    $region31: #{simple_predict.1} parent=1 // pred_check_branch
      %72 = sbr.rel (0) target = $region33
    $region32: #{simple_predict.1} parent=1 // pred_region
      %74 = dma.done [#allocation5], 57344
    $region33: #{simple_predict.1} parent=1 // pred_fallthru
      _
    // Predicated region
    $region34: #{simple_predict.1} parent=1 // pred_check
      _
    $region35: #{simple_predict.1} parent=1 // pred_check_branch
      %76 = sbr.rel (0) target = $region37
    $region36: #{simple_predict.1} parent=1 // pred_region
      %78 = dma.done [#allocation8], 112
    $region37: #{simple_predict.1} parent=1 // pred_fallthru
      _
    %v79 = vld [vmem:[%s0] sm:$0xff]
    %v80 = vld [vmem:[%s0 + $0x8] sm:$0xff]
    %v81 = vld [vmem:[%s0 + $0x10] sm:$0xff]
    %v82 = vld [vmem:[%s0 + $0x18] sm:$0xff]
    %v83 = vld [vmem:[%s0 + $0x20] sm:$0xff]
    %v84 = vld [vmem:[%s0 + $0x28] sm:$0xff]
    %v85 = vld [vmem:[%s0 + $0x30] sm:$0xff]
    %v86 = vld [vmem:[#allocation2] sm:$0xff]
    %v87 = vld [vmem:[#allocation2 + $0x8] sm:$0xff]
    %v88 = vld [vmem:[#allocation2 + $0x10] sm:$0xff]
    %v89 = vld [vmem:[#allocation2 + $0x18] sm:$0xff]
    %v90 = vld [vmem:[#allocation2 + $0x20] sm:$0xff]
    %v91 = vld [vmem:[#allocation2 + $0x28] sm:$0xff]
    %v92 = vld [vmem:[#allocation2 + $0x30] sm:$0xff]
    %v93 = vld [vmem:[#allocation2 + $0x38] sm:$0xff]
    %v94 = vld [vmem:[#allocation2 + $0x40] sm:$0xff]
    %v95 = vld [vmem:[#allocation2 + $0x48] sm:$0xff]
    %v96 = vld [vmem:[#allocation2 + $0x50] sm:$0xff]
    %v97 = vld [vmem:[#allocation2 + $0x58] sm:$0xff]
    %v98 = vld [vmem:[#allocation2 + $0x60] sm:$0xff]
    %v99 = vld [vmem:[#allocation2 + $0x68] sm:$0xff]
    %v100 = vld [vmem:[#allocation2 + $0x70] sm:$0xff]
    %v101 = vld [vmem:[#allocation2 + $0x78] sm:$0xff]
    %v102 = vld [vmem:[#allocation2 + $0x80] sm:$0xff]
    %v103 = vld [vmem:[#allocation2 + $0x88] sm:$0xff]
    %v104 = vld [vmem:[#allocation2 + $0x90] sm:$0xff]
    %v105 = vld [vmem:[#allocation2 + $0x98] sm:$0xff]
    %v106 = vld [vmem:[#allocation2 + $0xa0] sm:$0xff]
    %v107 = vld [vmem:[#allocation2 + $0xa8] sm:$0xff]
    %v108 = vld [vmem:[#allocation2 + $0xb0] sm:$0xff]
    %v109 = vld [vmem:[#allocation2 + $0xb8] sm:$0xff]
    %v110 = vld [vmem:[#allocation2 + $0xc0] sm:$0xff]
    %v111 = vld [vmem:[#allocation2 + $0xc8] sm:$0xff]
    %v112 = vld [vmem:[#allocation2 + $0xd0] sm:$0xff]
    %v113 = vld [vmem:[#allocation2 + $0xd8] sm:$0xff]
    %v114 = vld [vmem:[#allocation2 + $0xe0] sm:$0xff]
    %v115 = vld [vmem:[#allocation2 + $0xe8] sm:$0xff]
    %v116 = vld [vmem:[#allocation2 + $0xf0] sm:$0xff]
    %v117 = vld [vmem:[#allocation2 + $0xf8] sm:$0xff]
    %v118 = vld [vmem:[#allocation2 + $0x100] sm:$0xff]
    %v119 = vld [vmem:[#allocation2 + $0x108] sm:$0xff]
    %v120 = vld [vmem:[#allocation2 + $0x110] sm:$0xff]
    %v121 = vld [vmem:[#allocation2 + $0x118] sm:$0xff]
    %v122 = vld [vmem:[#allocation2 + $0x120] sm:$0xff]
    %v123 = vld [vmem:[#allocation2 + $0x128] sm:$0xff]
    %v124 = vld [vmem:[#allocation2 + $0x130] sm:$0xff]
    %v125 = vld [vmem:[#allocation2 + $0x138] sm:$0xff]
    %v126 = vld [vmem:[#allocation2 + $0x140] sm:$0xff]
    %v127 = vld [vmem:[#allocation2 + $0x148] sm:$0xff]
    %v128 = vld [vmem:[#allocation2 + $0x150] sm:$0xff]
    %v129 = vld [vmem:[#allocation2 + $0x158] sm:$0xff]
    %v130 = vld [vmem:[#allocation2 + $0x160] sm:$0xff]
    %v131 = vld [vmem:[#allocation2 + $0x168] sm:$0xff]
    %v132 = vld [vmem:[#allocation2 + $0x170] sm:$0xff]
    %v133 = vld [vmem:[#allocation2 + $0x178] sm:$0xff]
    %v134 = vld [vmem:[#allocation2 + $0x180] sm:$0xff]
    %v135 = vld [vmem:[#allocation2 + $0x188] sm:$0xff]
    %v136 = vld [vmem:[#allocation2 + $0x190] sm:$0xff]
    %v137 = vld [vmem:[#allocation2 + $0x198] sm:$0xff]
    %v138 = vld [vmem:[#allocation2 + $0x1a0] sm:$0xff]
    %v139 = vld [vmem:[#allocation2 + $0x1a8] sm:$0xff]
    %v140 = vld [vmem:[#allocation2 + $0x1b0] sm:$0xff]
    %v141 = vld [vmem:[#allocation2 + $0x1b8] sm:$0xff]
    %v142 = vld [vmem:[#allocation2 + $0x1c0] sm:$0xff]
    %v143 = vld [vmem:[#allocation2 + $0x1c8] sm:$0xff]
    %v144 = vld [vmem:[#allocation2 + $0x1d0] sm:$0xff]
    %v145 = vld [vmem:[#allocation2 + $0x1d8] sm:$0xff]
    %v146 = vld [vmem:[#allocation2 + $0x1e0] sm:$0xff]
    %v147 = vld [vmem:[#allocation2 + $0x1e8] sm:$0xff]
    %v148 = vld [vmem:[#allocation2 + $0x1f0] sm:$0xff]
    %v149 = vld [vmem:[#allocation2 + $0x1f8] sm:$0xff]
    %v150 = vld [vmem:[#allocation2 + $0x200] sm:$0xff]
    %v151 = vld [vmem:[#allocation2 + $0x208] sm:$0xff]
    %v152 = vld [vmem:[#allocation2 + $0x210] sm:$0xff]
    %v153 = vld [vmem:[#allocation2 + $0x218] sm:$0xff]
    %v154 = vld [vmem:[#allocation2 + $0x220] sm:$0xff]
    %v155 = vld [vmem:[#allocation2 + $0x228] sm:$0xff]
    %v156 = vld [vmem:[#allocation2 + $0x230] sm:$0xff]
    %v157 = vld [vmem:[#allocation2 + $0x238] sm:$0xff]
    %v158 = vld [vmem:[#allocation2 + $0x240] sm:$0xff]
    %v159 = vld [vmem:[#allocation2 + $0x248] sm:$0xff]
    %v160 = vld [vmem:[#allocation2 + $0x250] sm:$0xff]
    %v161 = vld [vmem:[#allocation2 + $0x258] sm:$0xff]
    %v162 = vld [vmem:[#allocation2 + $0x260] sm:$0xff]
    %v163 = vld [vmem:[#allocation2 + $0x268] sm:$0xff]
    %v164 = vld [vmem:[#allocation2 + $0x270] sm:$0xff]
    %v165 = vld [vmem:[#allocation2 + $0x278] sm:$0xff]
    %v166 = vld [vmem:[#allocation2 + $0x280] sm:$0xff]
    %v167 = vld [vmem:[#allocation2 + $0x288] sm:$0xff]
    %v168 = vld [vmem:[#allocation2 + $0x290] sm:$0xff]
    %v169 = vld [vmem:[#allocation2 + $0x298] sm:$0xff]
    %v170 = vld [vmem:[#allocation2 + $0x2a0] sm:$0xff]
    %v171 = vld [vmem:[#allocation2 + $0x2a8] sm:$0xff]
    %v172 = vld [vmem:[#allocation2 + $0x2b0] sm:$0xff]
    %v173 = vld [vmem:[#allocation2 + $0x2b8] sm:$0xff]
    %v174 = vld [vmem:[#allocation2 + $0x2c0] sm:$0xff]
    %v175 = vld [vmem:[#allocation2 + $0x2c8] sm:$0xff]
    %v176 = vld [vmem:[#allocation2 + $0x2d0] sm:$0xff]
    %v177 = vld [vmem:[#allocation2 + $0x2d8] sm:$0xff]
    %v178 = vld [vmem:[#allocation2 + $0x2e0] sm:$0xff]
    %v179 = vld [vmem:[#allocation2 + $0x2e8] sm:$0xff]
    %v180 = vld [vmem:[#allocation2 + $0x2f0] sm:$0xff]
    %v181 = vld [vmem:[#allocation2 + $0x2f8] sm:$0xff]
    %v182 = vld [vmem:[#allocation2 + $0x300] sm:$0xff]
    %v183 = vld [vmem:[#allocation2 + $0x308] sm:$0xff]
    %v184 = vld [vmem:[#allocation2 + $0x310] sm:$0xff]
    %v185 = vld [vmem:[#allocation2 + $0x318] sm:$0xff]
    %v186 = vld [vmem:[#allocation2 + $0x320] sm:$0xff]
    %v187 = vld [vmem:[#allocation2 + $0x328] sm:$0xff]
    %v188 = vld [vmem:[#allocation2 + $0x330] sm:$0xff]
    %v189 = vld [vmem:[#allocation2 + $0x338] sm:$0xff]
    %v190 = vld [vmem:[#allocation2 + $0x340] sm:$0xff]
    %v191 = vld [vmem:[#allocation2 + $0x348] sm:$0xff]
    %v192 = vld [vmem:[#allocation2 + $0x350] sm:$0xff]
    %v193 = vld [vmem:[#allocation2 + $0x358] sm:$0xff]
    %v194 = vld [vmem:[#allocation2 + $0x360] sm:$0xff]
    %v195 = vld [vmem:[#allocation2 + $0x368] sm:$0xff]
    %v196 = vld [vmem:[#allocation2 + $0x370] sm:$0xff]
    %v197 = vld [vmem:[#allocation2 + $0x378] sm:$0xff]
    %v198 = vld [vmem:[#allocation2 + $0x380] sm:$0xff]
    %v199 = vld [vmem:[#allocation2 + $0x388] sm:$0xff]
    %v200 = vld [vmem:[#allocation2 + $0x390] sm:$0xff]
    %v201 = vld [vmem:[#allocation2 + $0x398] sm:$0xff]
    %v202 = vld [vmem:[#allocation2 + $0x3a0] sm:$0xff]
    %v203 = vld [vmem:[#allocation2 + $0x3a8] sm:$0xff]
    %v204 = vld [vmem:[#allocation2 + $0x3b0] sm:$0xff]
    %v205 = vld [vmem:[#allocation2 + $0x3b8] sm:$0xff]
    %v206 = vld [vmem:[#allocation2 + $0x3c0] sm:$0xff]
    %v207 = vld [vmem:[#allocation2 + $0x3c8] sm:$0xff]
    %v208 = vld [vmem:[#allocation2 + $0x3d0] sm:$0xff]
    %v209 = vld [vmem:[#allocation2 + $0x3d8] sm:$0xff]
    %v210 = vld [vmem:[#allocation2 + $0x3e0] sm:$0xff]
    %v211 = vld [vmem:[#allocation2 + $0x3e8] sm:$0xff]
    %v212 = vld [vmem:[#allocation2 + $0x3f0] sm:$0xff]
    %v213 = vld [vmem:[#allocation2 + $0x3f8] sm:$0xff]
    %v214 = vld [vmem:[#allocation2 + $0x400] sm:$0xff]
    %v215 = vld [vmem:[#allocation2 + $0x408] sm:$0xff]
    %v216 = vld [vmem:[#allocation2 + $0x410] sm:$0xff]
    %v217 = vld [vmem:[#allocation2 + $0x418] sm:$0xff]
    %v218 = vld [vmem:[#allocation2 + $0x420] sm:$0xff]
    %v219 = vld [vmem:[#allocation2 + $0x428] sm:$0xff]
    %v220 = vld [vmem:[#allocation2 + $0x430] sm:$0xff]
    %v221 = vld [vmem:[#allocation2 + $0x438] sm:$0xff]
    %v222 = vld [vmem:[#allocation2 + $0x440] sm:$0xff]
    %v223 = vld [vmem:[#allocation2 + $0x448] sm:$0xff]
    %v224 = vld [vmem:[#allocation2 + $0x450] sm:$0xff]
    %v225 = vld [vmem:[#allocation2 + $0x458] sm:$0xff]
    %v226 = vld [vmem:[#allocation2 + $0x460] sm:$0xff]
    %v227 = vld [vmem:[#allocation2 + $0x468] sm:$0xff]
    %v228 = vld [vmem:[#allocation2 + $0x470] sm:$0xff]
    %v229 = vld [vmem:[#allocation2 + $0x478] sm:$0xff]
    %v230 = vld [vmem:[#allocation2 + $0x480] sm:$0xff]
    %v231 = vld [vmem:[#allocation2 + $0x488] sm:$0xff]
    %v232 = vld [vmem:[#allocation2 + $0x490] sm:$0xff]
    %v233 = vld [vmem:[#allocation2 + $0x498] sm:$0xff]
    %v234 = vld [vmem:[#allocation2 + $0x4a0] sm:$0xff]
    %v235 = vld [vmem:[#allocation2 + $0x4a8] sm:$0xff]
    %v236 = vld [vmem:[#allocation2 + $0x4b0] sm:$0xff]
    %v237 = vld [vmem:[#allocation2 + $0x4b8] sm:$0xff]
    %v238 = vld [vmem:[#allocation2 + $0x4c0] sm:$0xff]
    %v239 = vld [vmem:[#allocation2 + $0x4c8] sm:$0xff]
    %v240 = vld [vmem:[#allocation2 + $0x4d0] sm:$0xff]
    %v241 = vld [vmem:[#allocation2 + $0x4d8] sm:$0xff]
    %v242 = vld [vmem:[#allocation2 + $0x4e0] sm:$0xff]
    %v243 = vld [vmem:[#allocation2 + $0x4e8] sm:$0xff]
    %v244 = vld [vmem:[#allocation2 + $0x4f0] sm:$0xff]
    %v245 = vld [vmem:[#allocation2 + $0x4f8] sm:$0xff]
    %v246 = vld [vmem:[#allocation2 + $0x500] sm:$0xff]
    %v247 = vld [vmem:[#allocation2 + $0x508] sm:$0xff]
    %v248 = vld [vmem:[#allocation2 + $0x510] sm:$0xff]
    %v249 = vld [vmem:[#allocation2 + $0x518] sm:$0xff]
    %v250 = vld [vmem:[#allocation2 + $0x520] sm:$0xff]
    %v251 = vld [vmem:[#allocation2 + $0x528] sm:$0xff]
    %v252 = vld [vmem:[#allocation2 + $0x530] sm:$0xff]
    %v253 = vld [vmem:[#allocation2 + $0x538] sm:$0xff]
    %v254 = vld [vmem:[#allocation2 + $0x540] sm:$0xff]
    %v255 = vld [vmem:[#allocation2 + $0x548] sm:$0xff]
    %v256 = vld [vmem:[#allocation2 + $0x550] sm:$0xff]
    %v257 = vld [vmem:[#allocation2 + $0x558] sm:$0xff]
    %v258 = vld [vmem:[#allocation2 + $0x560] sm:$0xff]
    %v259 = vld [vmem:[#allocation2 + $0x568] sm:$0xff]
    %v260 = vld [vmem:[#allocation2 + $0x570] sm:$0xff]
    %v261 = vld [vmem:[#allocation2 + $0x578] sm:$0xff]
    %v262 = vld [vmem:[#allocation2 + $0x580] sm:$0xff]
    %v263 = vld [vmem:[#allocation2 + $0x588] sm:$0xff]
    %v264 = vld [vmem:[#allocation2 + $0x590] sm:$0xff]
    %v265 = vld [vmem:[#allocation2 + $0x598] sm:$0xff]
    %v266 = vld [vmem:[#allocation2 + $0x5a0] sm:$0xff]
    %v267 = vld [vmem:[#allocation2 + $0x5a8] sm:$0xff]
    %v268 = vld [vmem:[#allocation2 + $0x5b0] sm:$0xff]
    %v269 = vld [vmem:[#allocation2 + $0x5b8] sm:$0xff]
    %v270 = vld [vmem:[#allocation2 + $0x5c0] sm:$0xff]
    %v271 = vld [vmem:[#allocation2 + $0x5c8] sm:$0xff]
    %v272 = vld [vmem:[#allocation2 + $0x5d0] sm:$0xff]
    %v273 = vld [vmem:[#allocation2 + $0x5d8] sm:$0xff]
    %v274 = vld [vmem:[#allocation2 + $0x5e0] sm:$0xff]
    %v275 = vld [vmem:[#allocation2 + $0x5e8] sm:$0xff]
    %v276 = vld [vmem:[#allocation2 + $0x5f0] sm:$0xff]
    %v277 = vld [vmem:[#allocation2 + $0x5f8] sm:$0xff]
    %v278 = vld [vmem:[#allocation2 + $0x600] sm:$0xff]
    %v279 = vld [vmem:[#allocation2 + $0x608] sm:$0xff]
    %v280 = vld [vmem:[#allocation2 + $0x610] sm:$0xff]
    %v281 = vld [vmem:[#allocation2 + $0x618] sm:$0xff]
    %v282 = vld [vmem:[#allocation2 + $0x620] sm:$0xff]
    %v283 = vld [vmem:[#allocation2 + $0x628] sm:$0xff]
    %v284 = vld [vmem:[#allocation2 + $0x630] sm:$0xff]
    %v285 = vld [vmem:[#allocation2 + $0x638] sm:$0xff]
    %v286 = vld [vmem:[#allocation2 + $0x640] sm:$0xff]
    %v287 = vld [vmem:[#allocation2 + $0x648] sm:$0xff]
    %v288 = vld [vmem:[#allocation2 + $0x650] sm:$0xff]
    %v289 = vld [vmem:[#allocation2 + $0x658] sm:$0xff]
    %v290 = vld [vmem:[#allocation2 + $0x660] sm:$0xff]
    %v291 = vld [vmem:[#allocation2 + $0x668] sm:$0xff]
    %v292 = vld [vmem:[#allocation2 + $0x670] sm:$0xff]
    %v293 = vld [vmem:[#allocation2 + $0x678] sm:$0xff]
    %v294 = vld [vmem:[#allocation2 + $0x680] sm:$0xff]
    %v295 = vld [vmem:[#allocation2 + $0x688] sm:$0xff]
    %v296 = vld [vmem:[#allocation2 + $0x690] sm:$0xff]
    %v297 = vld [vmem:[#allocation2 + $0x698] sm:$0xff]
    %v298 = vld [vmem:[#allocation2 + $0x6a0] sm:$0xff]
    %v299 = vld [vmem:[#allocation2 + $0x6a8] sm:$0xff]
    %v300 = vld [vmem:[#allocation2 + $0x6b0] sm:$0xff]
    %v301 = vld [vmem:[#allocation2 + $0x6b8] sm:$0xff]
    %v302 = vld [vmem:[#allocation2 + $0x6c0] sm:$0xff]
    %v303 = vld [vmem:[#allocation2 + $0x6c8] sm:$0xff]
    %v304 = vld [vmem:[#allocation2 + $0x6d0] sm:$0xff]
    %v305 = vld [vmem:[#allocation2 + $0x6d8] sm:$0xff]
    %v306 = vld [vmem:[#allocation2 + $0x6e0] sm:$0xff]
    %v307 = vld [vmem:[#allocation2 + $0x6e8] sm:$0xff]
    %v308 = vld [vmem:[#allocation2 + $0x6f0] sm:$0xff]
    %v309 = vld [vmem:[#allocation2 + $0x6f8] sm:$0xff]
    %v310 = vld [vmem:[#allocation2 + $0x700] sm:$0xff]
    %v311 = vld [vmem:[#allocation2 + $0x708] sm:$0xff]
    %v312 = vld [vmem:[#allocation2 + $0x710] sm:$0xff]
    %v313 = vld [vmem:[#allocation2 + $0x718] sm:$0xff]
    %v314 = vld [vmem:[#allocation2 + $0x720] sm:$0xff]
    %v315 = vld [vmem:[#allocation2 + $0x728] sm:$0xff]
    %v316 = vld [vmem:[#allocation2 + $0x730] sm:$0xff]
    %v317 = vld [vmem:[#allocation2 + $0x738] sm:$0xff]
    %v318 = vld [vmem:[#allocation2 + $0x740] sm:$0xff]
    %v319 = vld [vmem:[#allocation2 + $0x748] sm:$0xff]
    %v320 = vld [vmem:[#allocation2 + $0x750] sm:$0xff]
    %v321 = vld [vmem:[#allocation2 + $0x758] sm:$0xff]
    %v322 = vld [vmem:[#allocation2 + $0x760] sm:$0xff]
    %v323 = vld [vmem:[#allocation2 + $0x768] sm:$0xff]
    %v324 = vld [vmem:[#allocation2 + $0x770] sm:$0xff]
    %v325 = vld [vmem:[#allocation2 + $0x778] sm:$0xff]
    %v326 = vld [vmem:[#allocation2 + $0x780] sm:$0xff]
    %v327 = vld [vmem:[#allocation2 + $0x788] sm:$0xff]
    %v328 = vld [vmem:[#allocation2 + $0x790] sm:$0xff]
    %v329 = vld [vmem:[#allocation2 + $0x798] sm:$0xff]
    %v330 = vld [vmem:[#allocation2 + $0x7a0] sm:$0xff]
    %v331 = vld [vmem:[#allocation2 + $0x7a8] sm:$0xff]
    %v332 = vld [vmem:[#allocation2 + $0x7b0] sm:$0xff]
    %v333 = vld [vmem:[#allocation2 + $0x7b8] sm:$0xff]
    %v334 = vld [vmem:[#allocation2 + $0x7c0] sm:$0xff]
    %v335 = vld [vmem:[#allocation2 + $0x7c8] sm:$0xff]
    %v336 = vld [vmem:[#allocation2 + $0x7d0] sm:$0xff]
    %v337 = vld [vmem:[#allocation2 + $0x7d8] sm:$0xff]
    %v338 = vld [vmem:[#allocation2 + $0x7e0] sm:$0xff]
    %v339 = vld [vmem:[#allocation2 + $0x7e8] sm:$0xff]
    %v340 = vld [vmem:[#allocation2 + $0x7f0] sm:$0xff]
    %v341 = vld [vmem:[#allocation2 + $0x7f8] sm:$0xff]
    %v342 = vld [vmem:[#allocation2 + $0x800] sm:$0xff]
    %v343 = vld [vmem:[#allocation2 + $0x808] sm:$0xff]
    %v344 = vld [vmem:[#allocation2 + $0x810] sm:$0xff]
    %v345 = vld [vmem:[#allocation2 + $0x818] sm:$0xff]
    %v346 = vld [vmem:[#allocation2 + $0x820] sm:$0xff]
    %v347 = vld [vmem:[#allocation2 + $0x828] sm:$0xff]
    %v348 = vld [vmem:[#allocation2 + $0x830] sm:$0xff]
    %v349 = vld [vmem:[#allocation2 + $0x838] sm:$0xff]
    %v350 = vld [vmem:[#allocation2 + $0x840] sm:$0xff]
    %v351 = vld [vmem:[#allocation2 + $0x848] sm:$0xff]
    %v352 = vld [vmem:[#allocation2 + $0x850] sm:$0xff]
    %v353 = vld [vmem:[#allocation2 + $0x858] sm:$0xff]
    %v354 = vld [vmem:[#allocation2 + $0x860] sm:$0xff]
    %v355 = vld [vmem:[#allocation2 + $0x868] sm:$0xff]
    %v356 = vld [vmem:[#allocation2 + $0x870] sm:$0xff]
    %v357 = vld [vmem:[#allocation2 + $0x878] sm:$0xff]
    %v358 = vld [vmem:[#allocation2 + $0x880] sm:$0xff]
    %v359 = vld [vmem:[#allocation2 + $0x888] sm:$0xff]
    %v360 = vld [vmem:[#allocation2 + $0x890] sm:$0xff]
    %v361 = vld [vmem:[#allocation2 + $0x898] sm:$0xff]
    %v362 = vld [vmem:[#allocation2 + $0x8a0] sm:$0xff]
    %v363 = vld [vmem:[#allocation2 + $0x8a8] sm:$0xff]
    %v364 = vld [vmem:[#allocation2 + $0x8b0] sm:$0xff]
    %v365 = vld [vmem:[#allocation2 + $0x8b8] sm:$0xff]
    %v366 = vld [vmem:[#allocation2 + $0x8c0] sm:$0xff]
    %v367 = vld [vmem:[#allocation2 + $0x8c8] sm:$0xff]
    %v368 = vld [vmem:[#allocation2 + $0x8d0] sm:$0xff]
    %v369 = vld [vmem:[#allocation2 + $0x8d8] sm:$0xff]
    %v370 = vld [vmem:[#allocation2 + $0x8e0] sm:$0xff]
    %v371 = vld [vmem:[#allocation2 + $0x8e8] sm:$0xff]
    %v372 = vld [vmem:[#allocation2 + $0x8f0] sm:$0xff]
    %v373 = vld [vmem:[#allocation2 + $0x8f8] sm:$0xff]
    %v374 = vld [vmem:[#allocation2 + $0x900] sm:$0xff]
    %v375 = vld [vmem:[#allocation2 + $0x908] sm:$0xff]
    %v376 = vld [vmem:[#allocation2 + $0x910] sm:$0xff]
    %v377 = vld [vmem:[#allocation2 + $0x918] sm:$0xff]
    %v378 = vld [vmem:[#allocation2 + $0x920] sm:$0xff]
    %v379 = vld [vmem:[#allocation2 + $0x928] sm:$0xff]
    %v380 = vld [vmem:[#allocation2 + $0x930] sm:$0xff]
    %v381 = vld [vmem:[#allocation2 + $0x938] sm:$0xff]
    %v382 = vld [vmem:[#allocation2 + $0x940] sm:$0xff]
    %v383 = vld [vmem:[#allocation2 + $0x948] sm:$0xff]
    %v384 = vld [vmem:[#allocation2 + $0x950] sm:$0xff]
    %v385 = vld [vmem:[#allocation2 + $0x958] sm:$0xff]
    %v386 = vld [vmem:[#allocation2 + $0x960] sm:$0xff]
    %v387 = vld [vmem:[#allocation2 + $0x968] sm:$0xff]
    %v388 = vld [vmem:[#allocation2 + $0x970] sm:$0xff]
    %v389 = vld [vmem:[#allocation2 + $0x978] sm:$0xff]
    %v390 = vld [vmem:[#allocation2 + $0x980] sm:$0xff]
    %v391 = vld [vmem:[#allocation2 + $0x988] sm:$0xff]
    %v392 = vld [vmem:[#allocation2 + $0x990] sm:$0xff]
    %v393 = vld [vmem:[#allocation2 + $0x998] sm:$0xff]
    %v394 = vld [vmem:[#allocation2 + $0x9a0] sm:$0xff]
    %v395 = vld [vmem:[#allocation2 + $0x9a8] sm:$0xff]
    %v396 = vld [vmem:[#allocation2 + $0x9b0] sm:$0xff]
    %v397 = vld [vmem:[#allocation2 + $0x9b8] sm:$0xff]
    %v398 = vld [vmem:[#allocation2 + $0x9c0] sm:$0xff]
    %v399 = vld [vmem:[#allocation2 + $0x9c8] sm:$0xff]
    %v400 = vld [vmem:[#allocation2 + $0x9d0] sm:$0xff]
    %v401 = vld [vmem:[#allocation2 + $0x9d8] sm:$0xff]
    %v402 = vld [vmem:[#allocation2 + $0x9e0] sm:$0xff]
    %v403 = vld [vmem:[#allocation2 + $0x9e8] sm:$0xff]
    %v404 = vld [vmem:[#allocation2 + $0x9f0] sm:$0xff]
    %v405 = vld [vmem:[#allocation2 + $0x9f8] sm:$0xff]
    %v406 = vld [vmem:[#allocation2 + $0xa00] sm:$0xff]
    %v407 = vld [vmem:[#allocation2 + $0xa08] sm:$0xff]
    %v408 = vld [vmem:[#allocation2 + $0xa10] sm:$0xff]
    %v409 = vld [vmem:[#allocation2 + $0xa18] sm:$0xff]
    %v410 = vld [vmem:[#allocation2 + $0xa20] sm:$0xff]
    %v411 = vld [vmem:[#allocation2 + $0xa28] sm:$0xff]
    %v412 = vld [vmem:[#allocation2 + $0xa30] sm:$0xff]
    %v413 = vld [vmem:[#allocation2 + $0xa38] sm:$0xff]
    %v414 = vld [vmem:[#allocation2 + $0xa40] sm:$0xff]
    %v415 = vld [vmem:[#allocation2 + $0xa48] sm:$0xff]
    %v416 = vld [vmem:[#allocation2 + $0xa50] sm:$0xff]
    %v417 = vld [vmem:[#allocation2 + $0xa58] sm:$0xff]
    %v418 = vld [vmem:[#allocation2 + $0xa60] sm:$0xff]
    %v419 = vld [vmem:[#allocation2 + $0xa68] sm:$0xff]
    %v420 = vld [vmem:[#allocation2 + $0xa70] sm:$0xff]
    %v421 = vld [vmem:[#allocation2 + $0xa78] sm:$0xff]
    %v422 = vld [vmem:[#allocation2 + $0xa80] sm:$0xff]
    %v423 = vld [vmem:[#allocation2 + $0xa88] sm:$0xff]
    %v424 = vld [vmem:[#allocation2 + $0xa90] sm:$0xff]
    %v425 = vld [vmem:[#allocation2 + $0xa98] sm:$0xff]
    %v426 = vld [vmem:[#allocation2 + $0xaa0] sm:$0xff]
    %v427 = vld [vmem:[#allocation2 + $0xaa8] sm:$0xff]
    %v428 = vld [vmem:[#allocation2 + $0xab0] sm:$0xff]
    %v429 = vld [vmem:[#allocation2 + $0xab8] sm:$0xff]
    %v430 = vld [vmem:[#allocation2 + $0xac0] sm:$0xff]
    %v431 = vld [vmem:[#allocation2 + $0xac8] sm:$0xff]
    %v432 = vld [vmem:[#allocation2 + $0xad0] sm:$0xff]
    %v433 = vld [vmem:[#allocation2 + $0xad8] sm:$0xff]
    %v434 = vld [vmem:[#allocation2 + $0xae0] sm:$0xff]
    %v435 = vld [vmem:[#allocation2 + $0xae8] sm:$0xff]
    %v436 = vld [vmem:[#allocation2 + $0xaf0] sm:$0xff]
    %v437 = vld [vmem:[#allocation2 + $0xaf8] sm:$0xff]
    %v438 = vld [vmem:[#allocation2 + $0xb00] sm:$0xff]
    %v439 = vld [vmem:[#allocation2 + $0xb08] sm:$0xff]
    %v440 = vld [vmem:[#allocation2 + $0xb10] sm:$0xff]
    %v441 = vld [vmem:[#allocation2 + $0xb18] sm:$0xff]
    %v442 = vld [vmem:[#allocation2 + $0xb20] sm:$0xff]
    %v443 = vld [vmem:[#allocation2 + $0xb28] sm:$0xff]
    %v444 = vld [vmem:[#allocation2 + $0xb30] sm:$0xff]
    %v445 = vld [vmem:[#allocation2 + $0xb38] sm:$0xff]
    %v446 = vld [vmem:[#allocation2 + $0xb40] sm:$0xff]
    %v447 = vld [vmem:[#allocation2 + $0xb48] sm:$0xff]
    %v448 = vld [vmem:[#allocation2 + $0xb50] sm:$0xff]
    %v449 = vld [vmem:[#allocation2 + $0xb58] sm:$0xff]
    %v450 = vld [vmem:[#allocation2 + $0xb60] sm:$0xff]
    %v451 = vld [vmem:[#allocation2 + $0xb68] sm:$0xff]
    %v452 = vld [vmem:[#allocation2 + $0xb70] sm:$0xff]
    %v453 = vld [vmem:[#allocation2 + $0xb78] sm:$0xff]
    %v454 = vld [vmem:[#allocation2 + $0xb80] sm:$0xff]
    %v455 = vld [vmem:[#allocation2 + $0xb88] sm:$0xff]
    %v456 = vld [vmem:[#allocation2 + $0xb90] sm:$0xff]
    %v457 = vld [vmem:[#allocation2 + $0xb98] sm:$0xff]
    %v458 = vld [vmem:[#allocation2 + $0xba0] sm:$0xff]
    %v459 = vld [vmem:[#allocation2 + $0xba8] sm:$0xff]
    %v460 = vld [vmem:[#allocation2 + $0xbb0] sm:$0xff]
    %v461 = vld [vmem:[#allocation2 + $0xbb8] sm:$0xff]
    %v462 = vld [vmem:[#allocation2 + $0xbc0] sm:$0xff]
    %v463 = vld [vmem:[#allocation2 + $0xbc8] sm:$0xff]
    %v464 = vld [vmem:[#allocation2 + $0xbd0] sm:$0xff]
    %v465 = vld [vmem:[#allocation2 + $0xbd8] sm:$0xff]
    %v466 = vld [vmem:[#allocation2 + $0xbe0] sm:$0xff]
    %v467 = vld [vmem:[#allocation2 + $0xbe8] sm:$0xff]
    %v468 = vld [vmem:[#allocation2 + $0xbf0] sm:$0xff]
    %v469 = vld [vmem:[#allocation2 + $0xbf8] sm:$0xff]
    %v470 = vld [vmem:[#allocation2 + $0xc00] sm:$0xff]
    %v471 = vld [vmem:[#allocation2 + $0xc08] sm:$0xff]
    %v472 = vld [vmem:[#allocation2 + $0xc10] sm:$0xff]
    %v473 = vld [vmem:[#allocation2 + $0xc18] sm:$0xff]
    %v474 = vld [vmem:[#allocation2 + $0xc20] sm:$0xff]
    %v475 = vld [vmem:[#allocation2 + $0xc28] sm:$0xff]
    %v476 = vld [vmem:[#allocation2 + $0xc30] sm:$0xff]
    %v477 = vld [vmem:[#allocation2 + $0xc38] sm:$0xff]
    %v478 = vld [vmem:[#allocation2 + $0xc40] sm:$0xff]
    %v479 = vld [vmem:[#allocation2 + $0xc48] sm:$0xff]
    %v480 = vld [vmem:[#allocation2 + $0xc50] sm:$0xff]
    %v481 = vld [vmem:[#allocation2 + $0xc58] sm:$0xff]
    %v482 = vld [vmem:[#allocation2 + $0xc60] sm:$0xff]
    %v483 = vld [vmem:[#allocation2 + $0xc68] sm:$0xff]
    %v484 = vld [vmem:[#allocation2 + $0xc70] sm:$0xff]
    %v485 = vld [vmem:[#allocation2 + $0xc78] sm:$0xff]
    %v486 = vld [vmem:[#allocation2 + $0xc80] sm:$0xff]
    %v487 = vld [vmem:[#allocation2 + $0xc88] sm:$0xff]
    %v488 = vld [vmem:[#allocation2 + $0xc90] sm:$0xff]
    %v489 = vld [vmem:[#allocation2 + $0xc98] sm:$0xff]
    %v490 = vld [vmem:[#allocation2 + $0xca0] sm:$0xff]
    %v491 = vld [vmem:[#allocation2 + $0xca8] sm:$0xff]
    %v492 = vld [vmem:[#allocation2 + $0xcb0] sm:$0xff]
    %v493 = vld [vmem:[#allocation2 + $0xcb8] sm:$0xff]
    %v494 = vld [vmem:[#allocation2 + $0xcc0] sm:$0xff]
    %v495 = vld [vmem:[#allocation2 + $0xcc8] sm:$0xff]
    %v496 = vld [vmem:[#allocation2 + $0xcd0] sm:$0xff]
    %v497 = vld [vmem:[#allocation2 + $0xcd8] sm:$0xff]
    %v498 = vld [vmem:[#allocation2 + $0xce0] sm:$0xff]
    %v499 = vld [vmem:[#allocation2 + $0xce8] sm:$0xff]
    %v500 = vld [vmem:[#allocation2 + $0xcf0] sm:$0xff]
    %v501 = vld [vmem:[#allocation2 + $0xcf8] sm:$0xff]
    %v502 = vld [vmem:[#allocation2 + $0xd00] sm:$0xff]
    %v503 = vld [vmem:[#allocation2 + $0xd08] sm:$0xff]
    %v504 = vld [vmem:[#allocation2 + $0xd10] sm:$0xff]
    %v505 = vld [vmem:[#allocation2 + $0xd18] sm:$0xff]
    %v506 = vld [vmem:[#allocation2 + $0xd20] sm:$0xff]
    %v507 = vld [vmem:[#allocation2 + $0xd28] sm:$0xff]
    %v508 = vld [vmem:[#allocation2 + $0xd30] sm:$0xff]
    %v509 = vld [vmem:[#allocation2 + $0xd38] sm:$0xff]
    %v510 = vld [vmem:[#allocation2 + $0xd40] sm:$0xff]
    %v511 = vld [vmem:[#allocation2 + $0xd48] sm:$0xff]
    %v512 = vld [vmem:[#allocation2 + $0xd50] sm:$0xff]
    %v513 = vld [vmem:[#allocation2 + $0xd58] sm:$0xff]
    %v514 = vld [vmem:[#allocation2 + $0xd60] sm:$0xff]
    %v515 = vld [vmem:[#allocation2 + $0xd68] sm:$0xff]
    %v516 = vld [vmem:[#allocation2 + $0xd70] sm:$0xff]
    %v517 = vld [vmem:[#allocation2 + $0xd78] sm:$0xff]
    %v518 = vld [vmem:[#allocation2 + $0xd80] sm:$0xff]
    %v519 = vld [vmem:[#allocation2 + $0xd88] sm:$0xff]
    %v520 = vld [vmem:[#allocation2 + $0xd90] sm:$0xff]
    %v521 = vld [vmem:[#allocation2 + $0xd98] sm:$0xff]
    %v522 = vld [vmem:[#allocation2 + $0xda0] sm:$0xff]
    %v523 = vld [vmem:[#allocation2 + $0xda8] sm:$0xff]
    %v524 = vld [vmem:[#allocation2 + $0xdb0] sm:$0xff]
    %v525 = vld [vmem:[#allocation2 + $0xdb8] sm:$0xff]
    %v526 = vld [vmem:[#allocation2 + $0xdc0] sm:$0xff]
    %v527 = vld [vmem:[#allocation2 + $0xdc8] sm:$0xff]
    %v528 = vld [vmem:[#allocation2 + $0xdd0] sm:$0xff]
    %v529 = vld [vmem:[#allocation2 + $0xdd8] sm:$0xff]
    %v530 = vld [vmem:[#allocation2 + $0xde0] sm:$0xff]
    %v531 = vld [vmem:[#allocation2 + $0xde8] sm:$0xff]
    %v532 = vld [vmem:[#allocation2 + $0xdf0] sm:$0xff]
    %v533 = vld [vmem:[#allocation2 + $0xdf8] sm:$0xff]
    %v534 = vld [vmem:[#allocation2 + $0xe00] sm:$0xff]
    %v535 = vld [vmem:[#allocation2 + $0xe08] sm:$0xff]
    %v536 = vld [vmem:[#allocation2 + $0xe10] sm:$0xff]
    %v537 = vld [vmem:[#allocation2 + $0xe18] sm:$0xff]
    %v538 = vld [vmem:[#allocation2 + $0xe20] sm:$0xff]
    %v539 = vld [vmem:[#allocation2 + $0xe28] sm:$0xff]
    %v540 = vld [vmem:[#allocation2 + $0xe30] sm:$0xff]
    %v541 = vld [vmem:[#allocation2 + $0xe38] sm:$0xff]
    %v542 = vld [vmem:[#allocation2 + $0xe40] sm:$0xff]
    %v543 = vld [vmem:[#allocation2 + $0xe48] sm:$0xff]
    %v544 = vld [vmem:[#allocation2 + $0xe50] sm:$0xff]
    %v545 = vld [vmem:[#allocation2 + $0xe58] sm:$0xff]
    %v546 = vld [vmem:[#allocation2 + $0xe60] sm:$0xff]
    %v547 = vld [vmem:[#allocation2 + $0xe68] sm:$0xff]
    %v548 = vld [vmem:[#allocation2 + $0xe70] sm:$0xff]
    %v549 = vld [vmem:[#allocation2 + $0xe78] sm:$0xff]
    %v550 = vld [vmem:[#allocation2 + $0xe80] sm:$0xff]
    %v551 = vld [vmem:[#allocation2 + $0xe88] sm:$0xff]
    %v552 = vld [vmem:[#allocation2 + $0xe90] sm:$0xff]
    %v553 = vld [vmem:[#allocation2 + $0xe98] sm:$0xff]
    %v554 = vld [vmem:[#allocation2 + $0xea0] sm:$0xff]
    %v555 = vld [vmem:[#allocation2 + $0xea8] sm:$0xff]
    %v556 = vld [vmem:[#allocation2 + $0xeb0] sm:$0xff]
    %v557 = vld [vmem:[#allocation2 + $0xeb8] sm:$0xff]
    %v558 = vld [vmem:[#allocation2 + $0xec0] sm:$0xff]
    %v559 = vld [vmem:[#allocation2 + $0xec8] sm:$0xff]
    %v560 = vld [vmem:[#allocation2 + $0xed0] sm:$0xff]
    %v561 = vld [vmem:[#allocation2 + $0xed8] sm:$0xff]
    %v562 = vld [vmem:[#allocation2 + $0xee0] sm:$0xff]
    %v563 = vld [vmem:[#allocation2 + $0xee8] sm:$0xff]
    %v564 = vld [vmem:[#allocation2 + $0xef0] sm:$0xff]
    %v565 = vld [vmem:[#allocation2 + $0xef8] sm:$0xff]
    %v566 = vld [vmem:[#allocation2 + $0xf00] sm:$0xff]
    %v567 = vld [vmem:[#allocation2 + $0xf08] sm:$0xff]
    %v568 = vld [vmem:[#allocation2 + $0xf10] sm:$0xff]
    %v569 = vld [vmem:[#allocation2 + $0xf18] sm:$0xff]
    %v570 = vld [vmem:[#allocation2 + $0xf20] sm:$0xff]
    %v571 = vld [vmem:[#allocation2 + $0xf28] sm:$0xff]
    %v572 = vld [vmem:[#allocation2 + $0xf30] sm:$0xff]
    %v573 = vld [vmem:[#allocation2 + $0xf38] sm:$0xff]
    %v574 = vld [vmem:[#allocation2 + $0xf40] sm:$0xff]
    %v575 = vld [vmem:[#allocation2 + $0xf48] sm:$0xff]
    %v576 = vld [vmem:[#allocation2 + $0xf50] sm:$0xff]
    %v577 = vld [vmem:[#allocation2 + $0xf58] sm:$0xff]
    %v578 = vld [vmem:[#allocation2 + $0xf60] sm:$0xff]
    %v579 = vld [vmem:[#allocation2 + $0xf68] sm:$0xff]
    %v580 = vld [vmem:[#allocation2 + $0xf70] sm:$0xff]
    %v581 = vld [vmem:[#allocation2 + $0xf78] sm:$0xff]
    %v582 = vld [vmem:[#allocation2 + $0xf80] sm:$0xff]
    %v583 = vld [vmem:[#allocation2 + $0xf88] sm:$0xff]
    %v584 = vld [vmem:[#allocation2 + $0xf90] sm:$0xff]
    %v585 = vld [vmem:[#allocation2 + $0xf98] sm:$0xff]
    %v586 = vld [vmem:[#allocation2 + $0xfa0] sm:$0xff]
    %v587 = vld [vmem:[#allocation2 + $0xfa8] sm:$0xff]
    %v588 = vld [vmem:[#allocation2 + $0xfb0] sm:$0xff]
    %v589 = vld [vmem:[#allocation2 + $0xfb8] sm:$0xff]
    %v590 = vld [vmem:[#allocation2 + $0xfc0] sm:$0xff]
    %v591 = vld [vmem:[#allocation2 + $0xfc8] sm:$0xff]
    %v592 = vld [vmem:[#allocation2 + $0xfd0] sm:$0xff]
    %v593 = vld [vmem:[#allocation2 + $0xfd8] sm:$0xff]
    %v594 = vld [vmem:[#allocation2 + $0xfe0] sm:$0xff]
    %v595 = vld [vmem:[#allocation2 + $0xfe8] sm:$0xff]
    %v596 = vld [vmem:[#allocation2 + $0xff0] sm:$0xff]
    %v597 = vld [vmem:[#allocation2 + $0xff8] sm:$0xff]
    %v598 = vld [vmem:[#allocation2 + $0x1000] sm:$0xff]
    %v599 = vld [vmem:[#allocation2 + $0x1008] sm:$0xff]
    %v600 = vld [vmem:[#allocation2 + $0x1010] sm:$0xff]
    %v601 = vld [vmem:[#allocation2 + $0x1018] sm:$0xff]
    %v602 = vld [vmem:[#allocation2 + $0x1020] sm:$0xff]
    %v603 = vld [vmem:[#allocation2 + $0x1028] sm:$0xff]
    %v604 = vld [vmem:[#allocation2 + $0x1030] sm:$0xff]
    %v605 = vld [vmem:[#allocation2 + $0x1038] sm:$0xff]
    %v606 = vld [vmem:[#allocation2 + $0x1040] sm:$0xff]
    %v607 = vld [vmem:[#allocation2 + $0x1048] sm:$0xff]
    %v608 = vld [vmem:[#allocation2 + $0x1050] sm:$0xff]
    %v609 = vld [vmem:[#allocation2 + $0x1058] sm:$0xff]
    %v610 = vld [vmem:[#allocation2 + $0x1060] sm:$0xff]
    %v611 = vld [vmem:[#allocation2 + $0x1068] sm:$0xff]
    %v612 = vld [vmem:[#allocation2 + $0x1070] sm:$0xff]
    %v613 = vld [vmem:[#allocation2 + $0x1078] sm:$0xff]
    %v614 = vld [vmem:[#allocation2 + $0x1080] sm:$0xff]
    %v615 = vld [vmem:[#allocation2 + $0x1088] sm:$0xff]
    %v616 = vld [vmem:[#allocation2 + $0x1090] sm:$0xff]
    %v617 = vld [vmem:[#allocation2 + $0x1098] sm:$0xff]
    %v618 = vld [vmem:[#allocation2 + $0x10a0] sm:$0xff]
    %v619 = vld [vmem:[#allocation2 + $0x10a8] sm:$0xff]
    %v620 = vld [vmem:[#allocation2 + $0x10b0] sm:$0xff]
    %v621 = vld [vmem:[#allocation2 + $0x10b8] sm:$0xff]
    %v622 = vld [vmem:[#allocation2 + $0x10c0] sm:$0xff]
    %v623 = vld [vmem:[#allocation2 + $0x10c8] sm:$0xff]
    %v624 = vld [vmem:[#allocation2 + $0x10d0] sm:$0xff]
    %v625 = vld [vmem:[#allocation2 + $0x10d8] sm:$0xff]
    %v626 = vld [vmem:[#allocation2 + $0x10e0] sm:$0xff]
    %v627 = vld [vmem:[#allocation2 + $0x10e8] sm:$0xff]
    %v628 = vld [vmem:[#allocation2 + $0x10f0] sm:$0xff]
    %v629 = vld [vmem:[#allocation2 + $0x10f8] sm:$0xff]
    %v630 = vld [vmem:[#allocation2 + $0x1100] sm:$0xff]
    %v631 = vld [vmem:[#allocation2 + $0x1108] sm:$0xff]
    %v632 = vld [vmem:[#allocation2 + $0x1110] sm:$0xff]
    %v633 = vld [vmem:[#allocation2 + $0x1118] sm:$0xff]
    %v634 = vld [vmem:[#allocation2 + $0x1120] sm:$0xff]
    %v635 = vld [vmem:[#allocation2 + $0x1128] sm:$0xff]
    %v636 = vld [vmem:[#allocation2 + $0x1130] sm:$0xff]
    %v637 = vld [vmem:[#allocation2 + $0x1138] sm:$0xff]
    %v638 = vld [vmem:[#allocation2 + $0x1140] sm:$0xff]
    %v639 = vld [vmem:[#allocation2 + $0x1148] sm:$0xff]
    %v640 = vld [vmem:[#allocation2 + $0x1150] sm:$0xff]
    %v641 = vld [vmem:[#allocation2 + $0x1158] sm:$0xff]
    %v642 = vld [vmem:[#allocation2 + $0x1160] sm:$0xff]
    %v643 = vld [vmem:[#allocation2 + $0x1168] sm:$0xff]
    %v644 = vld [vmem:[#allocation2 + $0x1170] sm:$0xff]
    %v645 = vld [vmem:[#allocation2 + $0x1178] sm:$0xff]
    %v646 = vld [vmem:[#allocation2 + $0x1180] sm:$0xff]
    %v647 = vld [vmem:[#allocation2 + $0x1188] sm:$0xff]
    %v648 = vld [vmem:[#allocation2 + $0x1190] sm:$0xff]
    %v649 = vld [vmem:[#allocation2 + $0x1198] sm:$0xff]
    %v650 = vld [vmem:[#allocation2 + $0x11a0] sm:$0xff]
    %v651 = vld [vmem:[#allocation2 + $0x11a8] sm:$0xff]
    %v652 = vld [vmem:[#allocation2 + $0x11b0] sm:$0xff]
    %v653 = vld [vmem:[#allocation2 + $0x11b8] sm:$0xff]
    %v654 = vld [vmem:[#allocation2 + $0x11c0] sm:$0xff]
    %v655 = vld [vmem:[#allocation2 + $0x11c8] sm:$0xff]
    %v656 = vld [vmem:[#allocation2 + $0x11d0] sm:$0xff]
    %v657 = vld [vmem:[#allocation2 + $0x11d8] sm:$0xff]
    %v658 = vld [vmem:[#allocation2 + $0x11e0] sm:$0xff]
    %v659 = vld [vmem:[#allocation2 + $0x11e8] sm:$0xff]
    %v660 = vld [vmem:[#allocation2 + $0x11f0] sm:$0xff]
    %v661 = vld [vmem:[#allocation2 + $0x11f8] sm:$0xff]
    %v662 = vld [vmem:[#allocation2 + $0x1200] sm:$0xff]
    %v663 = vld [vmem:[#allocation2 + $0x1208] sm:$0xff]
    %v664 = vld [vmem:[#allocation2 + $0x1210] sm:$0xff]
    %v665 = vld [vmem:[#allocation2 + $0x1218] sm:$0xff]
    %v666 = vld [vmem:[#allocation2 + $0x1220] sm:$0xff]
    %v667 = vld [vmem:[#allocation2 + $0x1228] sm:$0xff]
    %v668 = vld [vmem:[#allocation2 + $0x1230] sm:$0xff]
    %v669 = vld [vmem:[#allocation2 + $0x1238] sm:$0xff]
    %v670 = vld [vmem:[#allocation2 + $0x1240] sm:$0xff]
    %v671 = vld [vmem:[#allocation2 + $0x1248] sm:$0xff]
    %v672 = vld [vmem:[#allocation2 + $0x1250] sm:$0xff]
    %v673 = vld [vmem:[#allocation2 + $0x1258] sm:$0xff]
    %v674 = vld [vmem:[#allocation2 + $0x1260] sm:$0xff]
    %v675 = vld [vmem:[#allocation2 + $0x1268] sm:$0xff]
    %v676 = vld [vmem:[#allocation2 + $0x1270] sm:$0xff]
    %v677 = vld [vmem:[#allocation2 + $0x1278] sm:$0xff]
    %v678 = vld [vmem:[#allocation2 + $0x1280] sm:$0xff]
    %v679 = vld [vmem:[#allocation2 + $0x1288] sm:$0xff]
    %v680 = vld [vmem:[#allocation2 + $0x1290] sm:$0xff]
    %v681 = vld [vmem:[#allocation2 + $0x1298] sm:$0xff]
    %v682 = vld [vmem:[#allocation2 + $0x12a0] sm:$0xff]
    %v683 = vld [vmem:[#allocation2 + $0x12a8] sm:$0xff]
    %v684 = vld [vmem:[#allocation2 + $0x12b0] sm:$0xff]
    %v685 = vld [vmem:[#allocation2 + $0x12b8] sm:$0xff]
    %v686 = vld [vmem:[#allocation2 + $0x12c0] sm:$0xff]
    %v687 = vld [vmem:[#allocation2 + $0x12c8] sm:$0xff]
    %v688 = vld [vmem:[#allocation2 + $0x12d0] sm:$0xff]
    %v689 = vld [vmem:[#allocation2 + $0x12d8] sm:$0xff]
    %v690 = vld [vmem:[#allocation2 + $0x12e0] sm:$0xff]
    %v691 = vld [vmem:[#allocation2 + $0x12e8] sm:$0xff]
    %v692 = vld [vmem:[#allocation2 + $0x12f0] sm:$0xff]
    %v693 = vld [vmem:[#allocation2 + $0x12f8] sm:$0xff]
    %v694 = vld [vmem:[#allocation2 + $0x1300] sm:$0xff]
    %v695 = vld [vmem:[#allocation2 + $0x1308] sm:$0xff]
    %v696 = vld [vmem:[#allocation2 + $0x1310] sm:$0xff]
    %v697 = vld [vmem:[#allocation2 + $0x1318] sm:$0xff]
    %v698 = vld [vmem:[#allocation2 + $0x1320] sm:$0xff]
    %v699 = vld [vmem:[#allocation2 + $0x1328] sm:$0xff]
    %v700 = vld [vmem:[#allocation2 + $0x1330] sm:$0xff]
    %v701 = vld [vmem:[#allocation2 + $0x1338] sm:$0xff]
    %v702 = vld [vmem:[#allocation2 + $0x1340] sm:$0xff]
    %v703 = vld [vmem:[#allocation2 + $0x1348] sm:$0xff]
    %v704 = vld [vmem:[#allocation2 + $0x1350] sm:$0xff]
    %v705 = vld [vmem:[#allocation2 + $0x1358] sm:$0xff]
    %v706 = vld [vmem:[#allocation2 + $0x1360] sm:$0xff]
    %v707 = vld [vmem:[#allocation2 + $0x1368] sm:$0xff]
    %v708 = vld [vmem:[#allocation2 + $0x1370] sm:$0xff]
    %v709 = vld [vmem:[#allocation2 + $0x1378] sm:$0xff]
    %v710 = vld [vmem:[#allocation2 + $0x1380] sm:$0xff]
    %v711 = vld [vmem:[#allocation2 + $0x1388] sm:$0xff]
    %v712 = vld [vmem:[#allocation2 + $0x1390] sm:$0xff]
    %v713 = vld [vmem:[#allocation2 + $0x1398] sm:$0xff]
    %v714 = vld [vmem:[#allocation2 + $0x13a0] sm:$0xff]
    %v715 = vld [vmem:[#allocation2 + $0x13a8] sm:$0xff]
    %v716 = vld [vmem:[#allocation2 + $0x13b0] sm:$0xff]
    %v717 = vld [vmem:[#allocation2 + $0x13b8] sm:$0xff]
    %v718 = vld [vmem:[#allocation2 + $0x13c0] sm:$0xff]
    %v719 = vld [vmem:[#allocation2 + $0x13c8] sm:$0xff]
    %v720 = vld [vmem:[#allocation2 + $0x13d0] sm:$0xff]
    %v721 = vld [vmem:[#allocation2 + $0x13d8] sm:$0xff]
    %v722 = vld [vmem:[#allocation2 + $0x13e0] sm:$0xff]
    %v723 = vld [vmem:[#allocation2 + $0x13e8] sm:$0xff]
    %v724 = vld [vmem:[#allocation2 + $0x13f0] sm:$0xff]
    %v725 = vld [vmem:[#allocation2 + $0x13f8] sm:$0xff]
    %v726 = vld [vmem:[#allocation2 + $0x1400] sm:$0xff]
    %v727 = vld [vmem:[#allocation2 + $0x1408] sm:$0xff]
    %v728 = vld [vmem:[#allocation2 + $0x1410] sm:$0xff]
    %v729 = vld [vmem:[#allocation2 + $0x1418] sm:$0xff]
    %v730 = vld [vmem:[#allocation2 + $0x1420] sm:$0xff]
    %v731 = vld [vmem:[#allocation2 + $0x1428] sm:$0xff]
    %v732 = vld [vmem:[#allocation2 + $0x1430] sm:$0xff]
    %v733 = vld [vmem:[#allocation2 + $0x1438] sm:$0xff]
    %v734 = vld [vmem:[#allocation2 + $0x1440] sm:$0xff]
    %v735 = vld [vmem:[#allocation2 + $0x1448] sm:$0xff]
    %v736 = vld [vmem:[#allocation2 + $0x1450] sm:$0xff]
    %v737 = vld [vmem:[#allocation2 + $0x1458] sm:$0xff]
    %v738 = vld [vmem:[#allocation2 + $0x1460] sm:$0xff]
    %v739 = vld [vmem:[#allocation2 + $0x1468] sm:$0xff]
    %v740 = vld [vmem:[#allocation2 + $0x1470] sm:$0xff]
    %v741 = vld [vmem:[#allocation2 + $0x1478] sm:$0xff]
    %v742 = vld [vmem:[#allocation2 + $0x1480] sm:$0xff]
    %v743 = vld [vmem:[#allocation2 + $0x1488] sm:$0xff]
    %v744 = vld [vmem:[#allocation2 + $0x1490] sm:$0xff]
    %v745 = vld [vmem:[#allocation2 + $0x1498] sm:$0xff]
    %v746 = vld [vmem:[#allocation2 + $0x14a0] sm:$0xff]
    %v747 = vld [vmem:[#allocation2 + $0x14a8] sm:$0xff]
    %v748 = vld [vmem:[#allocation2 + $0x14b0] sm:$0xff]
    %v749 = vld [vmem:[#allocation2 + $0x14b8] sm:$0xff]
    %v750 = vld [vmem:[#allocation2 + $0x14c0] sm:$0xff]
    %v751 = vld [vmem:[#allocation2 + $0x14c8] sm:$0xff]
    %v752 = vld [vmem:[#allocation2 + $0x14d0] sm:$0xff]
    %v753 = vld [vmem:[#allocation2 + $0x14d8] sm:$0xff]
    %v754 = vld [vmem:[#allocation2 + $0x14e0] sm:$0xff]
    %v755 = vld [vmem:[#allocation2 + $0x14e8] sm:$0xff]
    %v756 = vld [vmem:[#allocation2 + $0x14f0] sm:$0xff]
    %v757 = vld [vmem:[#allocation2 + $0x14f8] sm:$0xff]
    %v758 = vld [vmem:[#allocation2 + $0x1500] sm:$0xff]
    %v759 = vld [vmem:[#allocation2 + $0x1508] sm:$0xff]
    %v760 = vld [vmem:[#allocation2 + $0x1510] sm:$0xff]
    %v761 = vld [vmem:[#allocation2 + $0x1518] sm:$0xff]
    %v762 = vld [vmem:[#allocation2 + $0x1520] sm:$0xff]
    %v763 = vld [vmem:[#allocation2 + $0x1528] sm:$0xff]
    %v764 = vld [vmem:[#allocation2 + $0x1530] sm:$0xff]
    %v765 = vld [vmem:[#allocation2 + $0x1538] sm:$0xff]
    %v766 = vld [vmem:[#allocation2 + $0x1540] sm:$0xff]
    %v767 = vld [vmem:[#allocation2 + $0x1548] sm:$0xff]
    %v768 = vld [vmem:[#allocation2 + $0x1550] sm:$0xff]
    %v769 = vld [vmem:[#allocation2 + $0x1558] sm:$0xff]
    %v770 = vld [vmem:[#allocation2 + $0x1560] sm:$0xff]
    %v771 = vld [vmem:[#allocation2 + $0x1568] sm:$0xff]
    %v772 = vld [vmem:[#allocation2 + $0x1570] sm:$0xff]
    %v773 = vld [vmem:[#allocation2 + $0x1578] sm:$0xff]
    %v774 = vld [vmem:[#allocation2 + $0x1580] sm:$0xff]
    %v775 = vld [vmem:[#allocation2 + $0x1588] sm:$0xff]
    %v776 = vld [vmem:[#allocation2 + $0x1590] sm:$0xff]
    %v777 = vld [vmem:[#allocation2 + $0x1598] sm:$0xff]
    %v778 = vld [vmem:[#allocation2 + $0x15a0] sm:$0xff]
    %v779 = vld [vmem:[#allocation2 + $0x15a8] sm:$0xff]
    %v780 = vld [vmem:[#allocation2 + $0x15b0] sm:$0xff]
    %v781 = vld [vmem:[#allocation2 + $0x15b8] sm:$0xff]
    %v782 = vld [vmem:[#allocation2 + $0x15c0] sm:$0xff]
    %v783 = vld [vmem:[#allocation2 + $0x15c8] sm:$0xff]
    %v784 = vld [vmem:[#allocation2 + $0x15d0] sm:$0xff]
    %v785 = vld [vmem:[#allocation2 + $0x15d8] sm:$0xff]
    %v786 = vld [vmem:[#allocation2 + $0x15e0] sm:$0xff]
    %v787 = vld [vmem:[#allocation2 + $0x15e8] sm:$0xff]
    %v788 = vld [vmem:[#allocation2 + $0x15f0] sm:$0xff]
    %v789 = vld [vmem:[#allocation2 + $0x15f8] sm:$0xff]
    %v790 = vld [vmem:[#allocation2 + $0x1600] sm:$0xff]
    %v791 = vld [vmem:[#allocation2 + $0x1608] sm:$0xff]
    %v792 = vld [vmem:[#allocation2 + $0x1610] sm:$0xff]
    %v793 = vld [vmem:[#allocation2 + $0x1618] sm:$0xff]
    %v794 = vld [vmem:[#allocation2 + $0x1620] sm:$0xff]
    %v795 = vld [vmem:[#allocation2 + $0x1628] sm:$0xff]
    %v796 = vld [vmem:[#allocation2 + $0x1630] sm:$0xff]
    %v797 = vld [vmem:[#allocation2 + $0x1638] sm:$0xff]
    %v798 = vld [vmem:[#allocation2 + $0x1640] sm:$0xff]
    %v799 = vld [vmem:[#allocation2 + $0x1648] sm:$0xff]
    %v800 = vld [vmem:[#allocation2 + $0x1650] sm:$0xff]
    %v801 = vld [vmem:[#allocation2 + $0x1658] sm:$0xff]
    %v802 = vld [vmem:[#allocation2 + $0x1660] sm:$0xff]
    %v803 = vld [vmem:[#allocation2 + $0x1668] sm:$0xff]
    %v804 = vld [vmem:[#allocation2 + $0x1670] sm:$0xff]
    %v805 = vld [vmem:[#allocation2 + $0x1678] sm:$0xff]
    %v806 = vld [vmem:[#allocation2 + $0x1680] sm:$0xff]
    %v807 = vld [vmem:[#allocation2 + $0x1688] sm:$0xff]
    %v808 = vld [vmem:[#allocation2 + $0x1690] sm:$0xff]
    %v809 = vld [vmem:[#allocation2 + $0x1698] sm:$0xff]
    %v810 = vld [vmem:[#allocation2 + $0x16a0] sm:$0xff]
    %v811 = vld [vmem:[#allocation2 + $0x16a8] sm:$0xff]
    %v812 = vld [vmem:[#allocation2 + $0x16b0] sm:$0xff]
    %v813 = vld [vmem:[#allocation2 + $0x16b8] sm:$0xff]
    %v814 = vld [vmem:[#allocation2 + $0x16c0] sm:$0xff]
    %v815 = vld [vmem:[#allocation2 + $0x16c8] sm:$0xff]
    %v816 = vld [vmem:[#allocation2 + $0x16d0] sm:$0xff]
    %v817 = vld [vmem:[#allocation2 + $0x16d8] sm:$0xff]
    %v818 = vld [vmem:[#allocation2 + $0x16e0] sm:$0xff]
    %v819 = vld [vmem:[#allocation2 + $0x16e8] sm:$0xff]
    %v820 = vld [vmem:[#allocation2 + $0x16f0] sm:$0xff]
    %v821 = vld [vmem:[#allocation2 + $0x16f8] sm:$0xff]
    %v822 = vld [vmem:[#allocation2 + $0x1700] sm:$0xff]
    %v823 = vld [vmem:[#allocation2 + $0x1708] sm:$0xff]
    %v824 = vld [vmem:[#allocation2 + $0x1710] sm:$0xff]
    %v825 = vld [vmem:[#allocation2 + $0x1718] sm:$0xff]
    %v826 = vld [vmem:[#allocation2 + $0x1720] sm:$0xff]
    %v827 = vld [vmem:[#allocation2 + $0x1728] sm:$0xff]
    %v828 = vld [vmem:[#allocation2 + $0x1730] sm:$0xff]
    %v829 = vld [vmem:[#allocation2 + $0x1738] sm:$0xff]
    %v830 = vld [vmem:[#allocation2 + $0x1740] sm:$0xff]
    %v831 = vld [vmem:[#allocation2 + $0x1748] sm:$0xff]
    %v832 = vld [vmem:[#allocation2 + $0x1750] sm:$0xff]
    %v833 = vld [vmem:[#allocation2 + $0x1758] sm:$0xff]
    %v834 = vld [vmem:[#allocation2 + $0x1760] sm:$0xff]
    %v835 = vld [vmem:[#allocation2 + $0x1768] sm:$0xff]
    %v836 = vld [vmem:[#allocation2 + $0x1770] sm:$0xff]
    %v837 = vld [vmem:[#allocation2 + $0x1778] sm:$0xff]
    %v838 = vld [vmem:[#allocation2 + $0x1780] sm:$0xff]
    %v839 = vld [vmem:[#allocation2 + $0x1788] sm:$0xff]
    %v840 = vld [vmem:[#allocation2 + $0x1790] sm:$0xff]
    %v841 = vld [vmem:[#allocation2 + $0x1798] sm:$0xff]
    %v842 = vld [vmem:[#allocation2 + $0x17a0] sm:$0xff]
    %v843 = vld [vmem:[#allocation2 + $0x17a8] sm:$0xff]
    %v844 = vld [vmem:[#allocation2 + $0x17b0] sm:$0xff]
    %v845 = vld [vmem:[#allocation2 + $0x17b8] sm:$0xff]
    %v846 = vld [vmem:[#allocation2 + $0x17c0] sm:$0xff]
    %v847 = vld [vmem:[#allocation2 + $0x17c8] sm:$0xff]
    %v848 = vld [vmem:[#allocation2 + $0x17d0] sm:$0xff]
    %v849 = vld [vmem:[#allocation2 + $0x17d8] sm:$0xff]
    %v850 = vld [vmem:[#allocation2 + $0x17e0] sm:$0xff]
    %v851 = vld [vmem:[#allocation2 + $0x17e8] sm:$0xff]
    %v852 = vld [vmem:[#allocation2 + $0x17f0] sm:$0xff]
    %v853 = vld [vmem:[#allocation2 + $0x17f8] sm:$0xff]
    %v854 = vld [vmem:[#allocation2 + $0x1800] sm:$0xff]
    %v855 = vld [vmem:[#allocation2 + $0x1808] sm:$0xff]
    %v856 = vld [vmem:[#allocation2 + $0x1810] sm:$0xff]
    %v857 = vld [vmem:[#allocation2 + $0x1818] sm:$0xff]
    %v858 = vld [vmem:[#allocation2 + $0x1820] sm:$0xff]
    %v859 = vld [vmem:[#allocation2 + $0x1828] sm:$0xff]
    %v860 = vld [vmem:[#allocation2 + $0x1830] sm:$0xff]
    %v861 = vld [vmem:[#allocation2 + $0x1838] sm:$0xff]
    %v862 = vld [vmem:[#allocation2 + $0x1840] sm:$0xff]
    %v863 = vld [vmem:[#allocation2 + $0x1848] sm:$0xff]
    %v864 = vld [vmem:[#allocation2 + $0x1850] sm:$0xff]
    %v865 = vld [vmem:[#allocation2 + $0x1858] sm:$0xff]
    %v866 = vld [vmem:[#allocation2 + $0x1860] sm:$0xff]
    %v867 = vld [vmem:[#allocation2 + $0x1868] sm:$0xff]
    %v868 = vld [vmem:[#allocation2 + $0x1870] sm:$0xff]
    %v869 = vld [vmem:[#allocation2 + $0x1878] sm:$0xff]
    %v870 = vld [vmem:[#allocation2 + $0x1880] sm:$0xff]
    %v871 = vld [vmem:[#allocation2 + $0x1888] sm:$0xff]
    %v872 = vld [vmem:[#allocation2 + $0x1890] sm:$0xff]
    %v873 = vld [vmem:[#allocation2 + $0x1898] sm:$0xff]
    %v874 = vld [vmem:[#allocation2 + $0x18a0] sm:$0xff]
    %v875 = vld [vmem:[#allocation2 + $0x18a8] sm:$0xff]
    %v876 = vld [vmem:[#allocation2 + $0x18b0] sm:$0xff]
    %v877 = vld [vmem:[#allocation2 + $0x18b8] sm:$0xff]
    %v878 = vld [vmem:[#allocation2 + $0x18c0] sm:$0xff]
    %v879 = vld [vmem:[#allocation2 + $0x18c8] sm:$0xff]
    %v880 = vld [vmem:[#allocation2 + $0x18d0] sm:$0xff]
    %v881 = vld [vmem:[#allocation2 + $0x18d8] sm:$0xff]
    %v882 = vld [vmem:[#allocation2 + $0x18e0] sm:$0xff]
    %v883 = vld [vmem:[#allocation2 + $0x18e8] sm:$0xff]
    %v884 = vld [vmem:[#allocation2 + $0x18f0] sm:$0xff]
    %v885 = vld [vmem:[#allocation2 + $0x18f8] sm:$0xff]
    %v886 = vld [vmem:[#allocation2 + $0x1900] sm:$0xff]
    %v887 = vld [vmem:[#allocation2 + $0x1908] sm:$0xff]
    %v888 = vld [vmem:[#allocation2 + $0x1910] sm:$0xff]
    %v889 = vld [vmem:[#allocation2 + $0x1918] sm:$0xff]
    %v890 = vld [vmem:[#allocation2 + $0x1920] sm:$0xff]
    %v891 = vld [vmem:[#allocation2 + $0x1928] sm:$0xff]
    %v892 = vld [vmem:[#allocation2 + $0x1930] sm:$0xff]
    %v893 = vld [vmem:[#allocation2 + $0x1938] sm:$0xff]
    %v894 = vld [vmem:[#allocation2 + $0x1940] sm:$0xff]
    %v895 = vld [vmem:[#allocation2 + $0x1948] sm:$0xff]
    %v896 = vld [vmem:[#allocation2 + $0x1950] sm:$0xff]
    %v897 = vld [vmem:[#allocation2 + $0x1958] sm:$0xff]
    %v898 = vld [vmem:[#allocation2 + $0x1960] sm:$0xff]
    %v899 = vld [vmem:[#allocation2 + $0x1968] sm:$0xff]
    %v900 = vld [vmem:[#allocation2 + $0x1970] sm:$0xff]
    %v901 = vld [vmem:[#allocation2 + $0x1978] sm:$0xff]
    %v902 = vld [vmem:[#allocation2 + $0x1980] sm:$0xff]
    %v903 = vld [vmem:[#allocation2 + $0x1988] sm:$0xff]
    %v904 = vld [vmem:[#allocation2 + $0x1990] sm:$0xff]
    %v905 = vld [vmem:[#allocation2 + $0x1998] sm:$0xff]
    %v906 = vld [vmem:[#allocation2 + $0x19a0] sm:$0xff]
    %v907 = vld [vmem:[#allocation2 + $0x19a8] sm:$0xff]
    %v908 = vld [vmem:[#allocation2 + $0x19b0] sm:$0xff]
    %v909 = vld [vmem:[#allocation2 + $0x19b8] sm:$0xff]
    %v910 = vld [vmem:[#allocation2 + $0x19c0] sm:$0xff]
    %v911 = vld [vmem:[#allocation2 + $0x19c8] sm:$0xff]
    %v912 = vld [vmem:[#allocation2 + $0x19d0] sm:$0xff]
    %v913 = vld [vmem:[#allocation2 + $0x19d8] sm:$0xff]
    %v914 = vld [vmem:[#allocation2 + $0x19e0] sm:$0xff]
    %v915 = vld [vmem:[#allocation2 + $0x19e8] sm:$0xff]
    %v916 = vld [vmem:[#allocation2 + $0x19f0] sm:$0xff]
    %v917 = vld [vmem:[#allocation2 + $0x19f8] sm:$0xff]
    %v918 = vld [vmem:[#allocation2 + $0x1a00] sm:$0xff]
    %v919 = vld [vmem:[#allocation2 + $0x1a08] sm:$0xff]
    %v920 = vld [vmem:[#allocation2 + $0x1a10] sm:$0xff]
    %v921 = vld [vmem:[#allocation2 + $0x1a18] sm:$0xff]
    %v922 = vld [vmem:[#allocation2 + $0x1a20] sm:$0xff]
    %v923 = vld [vmem:[#allocation2 + $0x1a28] sm:$0xff]
    %v924 = vld [vmem:[#allocation2 + $0x1a30] sm:$0xff]
    %v925 = vld [vmem:[#allocation2 + $0x1a38] sm:$0xff]
    %v926 = vld [vmem:[#allocation2 + $0x1a40] sm:$0xff]
    %v927 = vld [vmem:[#allocation2 + $0x1a48] sm:$0xff]
    %v928 = vld [vmem:[#allocation2 + $0x1a50] sm:$0xff]
    %v929 = vld [vmem:[#allocation2 + $0x1a58] sm:$0xff]
    %v930 = vld [vmem:[#allocation2 + $0x1a60] sm:$0xff]
    %v931 = vld [vmem:[#allocation2 + $0x1a68] sm:$0xff]
    %v932 = vld [vmem:[#allocation2 + $0x1a70] sm:$0xff]
    %v933 = vld [vmem:[#allocation2 + $0x1a78] sm:$0xff]
    %v934 = vld [vmem:[#allocation2 + $0x1a80] sm:$0xff]
    %v935 = vld [vmem:[#allocation2 + $0x1a88] sm:$0xff]
    %v936 = vld [vmem:[#allocation2 + $0x1a90] sm:$0xff]
    %v937 = vld [vmem:[#allocation2 + $0x1a98] sm:$0xff]
    %v938 = vld [vmem:[#allocation2 + $0x1aa0] sm:$0xff]
    %v939 = vld [vmem:[#allocation2 + $0x1aa8] sm:$0xff]
    %v940 = vld [vmem:[#allocation2 + $0x1ab0] sm:$0xff]
    %v941 = vld [vmem:[#allocation2 + $0x1ab8] sm:$0xff]
    %v942 = vld [vmem:[#allocation2 + $0x1ac0] sm:$0xff]
    %v943 = vld [vmem:[#allocation2 + $0x1ac8] sm:$0xff]
    %v944 = vld [vmem:[#allocation2 + $0x1ad0] sm:$0xff]
    %v945 = vld [vmem:[#allocation2 + $0x1ad8] sm:$0xff]
    %v946 = vld [vmem:[#allocation2 + $0x1ae0] sm:$0xff]
    %v947 = vld [vmem:[#allocation2 + $0x1ae8] sm:$0xff]
    %v948 = vld [vmem:[#allocation2 + $0x1af0] sm:$0xff]
    %v949 = vld [vmem:[#allocation2 + $0x1af8] sm:$0xff]
    %v950 = vld [vmem:[#allocation2 + $0x1b00] sm:$0xff]
    %v951 = vld [vmem:[#allocation2 + $0x1b08] sm:$0xff]
    %v952 = vld [vmem:[#allocation2 + $0x1b10] sm:$0xff]
    %v953 = vld [vmem:[#allocation2 + $0x1b18] sm:$0xff]
    %v954 = vld [vmem:[#allocation2 + $0x1b20] sm:$0xff]
    %v955 = vld [vmem:[#allocation2 + $0x1b28] sm:$0xff]
    %v956 = vld [vmem:[#allocation2 + $0x1b30] sm:$0xff]
    %v957 = vld [vmem:[#allocation2 + $0x1b38] sm:$0xff]
    %v958 = vld [vmem:[#allocation2 + $0x1b40] sm:$0xff]
    %v959 = vld [vmem:[#allocation2 + $0x1b48] sm:$0xff]
    %v960 = vld [vmem:[#allocation2 + $0x1b50] sm:$0xff]
    %v961 = vld [vmem:[#allocation2 + $0x1b58] sm:$0xff]
    %v962 = vld [vmem:[#allocation2 + $0x1b60] sm:$0xff]
    %v963 = vld [vmem:[#allocation2 + $0x1b68] sm:$0xff]
    %v964 = vld [vmem:[#allocation2 + $0x1b70] sm:$0xff]
    %v965 = vld [vmem:[#allocation2 + $0x1b78] sm:$0xff]
    %v966 = vld [vmem:[#allocation2 + $0x1b80] sm:$0xff]
    %v967 = vld [vmem:[#allocation2 + $0x1b88] sm:$0xff]
    %v968 = vld [vmem:[#allocation2 + $0x1b90] sm:$0xff]
    %v969 = vld [vmem:[#allocation2 + $0x1b98] sm:$0xff]
    %v970 = vld [vmem:[#allocation2 + $0x1ba0] sm:$0xff]
    %v971 = vld [vmem:[#allocation2 + $0x1ba8] sm:$0xff]
    %v972 = vld [vmem:[#allocation2 + $0x1bb0] sm:$0xff]
    %v973 = vld [vmem:[#allocation2 + $0x1bb8] sm:$0xff]
    %v974 = vld [vmem:[#allocation2 + $0x1bc0] sm:$0xff]
    %v975 = vld [vmem:[#allocation2 + $0x1bc8] sm:$0xff]
    %v976 = vld [vmem:[#allocation2 + $0x1bd0] sm:$0xff]
    %v977 = vld [vmem:[#allocation2 + $0x1bd8] sm:$0xff]
    %v978 = vld [vmem:[#allocation2 + $0x1be0] sm:$0xff]
    %v979 = vld [vmem:[#allocation2 + $0x1be8] sm:$0xff]
    %v980 = vld [vmem:[#allocation2 + $0x1bf0] sm:$0xff]
    %v981 = vld [vmem:[#allocation2 + $0x1bf8] sm:$0xff]
    %v982 = vld [vmem:[#allocation4] sm:$0xff]
    %v984 = vperm.slane %v982, 0
    %v985 = vperm.slane %v982, 1
    %v986 = vperm.slane %v982, 2
    %v987 = vperm.slane %v982, 3
    %v988 = vperm.slane %v982, 4
    %v989 = vperm.slane %v982, 5
    %v990 = vperm.slane %v982, 6
    %v991 = vperm.slane %v982, 7
    %v1007 = vunpack.c.l.b16 %v79
    %v1008 = vunpack.c.h.b16 %v79
    %v1009 = vunpack.c.l.b16 %v80
    %v1010 = vunpack.c.h.b16 %v80
    %v1011 = vunpack.c.l.b16 %v81
    %v1012 = vunpack.c.h.b16 %v81
    %v1013 = vunpack.c.l.b16 %v82
    %v1014 = vunpack.c.h.b16 %v82
    %v1015 = vunpack.c.l.b16 %v83
    %v1016 = vunpack.c.h.b16 %v83
    %v1017 = vunpack.c.l.b16 %v84
    %v1018 = vunpack.c.h.b16 %v84
    %v1019 = vunpack.c.l.b16 %v85
    %v1020 = vunpack.c.h.b16 %v85
    %v1021 = vpack.c.b16 %v1007, %v1007
    %v1022 = vpack.c.b16 %v1008, %v1008
    %v1023 = vpack.c.b16 %v1009, %v1009
    %v1024 = vpack.c.b16 %v1010, %v1010
    %v1025 = vpack.c.b16 %v1011, %v1011
    %v1026 = vpack.c.b16 %v1012, %v1012
    %v1027 = vpack.c.b16 %v1013, %v1013
    %v1028 = vpack.c.b16 %v1014, %v1014
    %v1029 = vpack.c.b16 %v1015, %v1015
    %v1030 = vpack.c.b16 %v1016, %v1016
    %v1031 = vpack.c.b16 %v1017, %v1017
    %v1032 = vpack.c.b16 %v1018, %v1018
    %v1033 = vpack.c.b16 %v1019, %v1019
    %v1034 = vpack.c.b16 %v1020, %v1020
    %v1945 = vunpack.c.l.b16 %v86
    %v1946 = vunpack.c.h.b16 %v86
    %v1947 = vunpack.c.l.b16 %v87
    %v1948 = vunpack.c.h.b16 %v87
    %v1949 = vunpack.c.l.b16 %v88
    %v1950 = vunpack.c.h.b16 %v88
    %v1951 = vunpack.c.l.b16 %v89
    %v1952 = vunpack.c.h.b16 %v89
    %v1953 = vunpack.c.l.b16 %v90
    %v1954 = vunpack.c.h.b16 %v90
    %v1955 = vunpack.c.l.b16 %v91
    %v1956 = vunpack.c.h.b16 %v91
    %v1957 = vunpack.c.l.b16 %v92
    %v1958 = vunpack.c.h.b16 %v92
    %v1959 = vunpack.c.l.b16 %v93
    %v1960 = vunpack.c.h.b16 %v93
    %v1961 = vunpack.c.l.b16 %v94
    %v1962 = vunpack.c.h.b16 %v94
    %v1963 = vunpack.c.l.b16 %v95
    %v1964 = vunpack.c.h.b16 %v95
    %v1965 = vunpack.c.l.b16 %v96
    %v1966 = vunpack.c.h.b16 %v96
    %v1967 = vunpack.c.l.b16 %v97
    %v1968 = vunpack.c.h.b16 %v97
    %v1969 = vunpack.c.l.b16 %v98
    %v1970 = vunpack.c.h.b16 %v98
    %v1971 = vunpack.c.l.b16 %v99
    %v1972 = vunpack.c.h.b16 %v99
    %v1973 = vunpack.c.l.b16 %v100
    %v1974 = vunpack.c.h.b16 %v100
    %v1975 = vunpack.c.l.b16 %v101
    %v1976 = vunpack.c.h.b16 %v101
    %v1977 = vunpack.c.l.b16 %v102
    %v1978 = vunpack.c.h.b16 %v102
    %v1979 = vunpack.c.l.b16 %v103
    %v1980 = vunpack.c.h.b16 %v103
    %v1981 = vunpack.c.l.b16 %v104
    %v1982 = vunpack.c.h.b16 %v104
    %v1983 = vunpack.c.l.b16 %v105
    %v1984 = vunpack.c.h.b16 %v105
    %v1985 = vunpack.c.l.b16 %v106
    %v1986 = vunpack.c.h.b16 %v106
    %v1987 = vunpack.c.l.b16 %v107
    %v1988 = vunpack.c.h.b16 %v107
    %v1989 = vunpack.c.l.b16 %v108
    %v1990 = vunpack.c.h.b16 %v108
    %v1991 = vunpack.c.l.b16 %v109
    %v1992 = vunpack.c.h.b16 %v109
    %v1993 = vunpack.c.l.b16 %v110
    %v1994 = vunpack.c.h.b16 %v110
    %v1995 = vunpack.c.l.b16 %v111
    %v1996 = vunpack.c.h.b16 %v111
    %v1997 = vunpack.c.l.b16 %v112
    %v1998 = vunpack.c.h.b16 %v112
    %v1999 = vunpack.c.l.b16 %v113
    %v2000 = vunpack.c.h.b16 %v113
    %v2001 = vunpack.c.l.b16 %v114
    %v2002 = vunpack.c.h.b16 %v114
    %v2003 = vunpack.c.l.b16 %v115
    %v2004 = vunpack.c.h.b16 %v115
    %v2005 = vunpack.c.l.b16 %v116
    %v2006 = vunpack.c.h.b16 %v116
    %v2007 = vunpack.c.l.b16 %v117
    %v2008 = vunpack.c.h.b16 %v117
    %v2009 = vunpack.c.l.b16 %v118
    %v2010 = vunpack.c.h.b16 %v118
    %v2011 = vunpack.c.l.b16 %v119
    %v2012 = vunpack.c.h.b16 %v119
    %v2013 = vunpack.c.l.b16 %v120
    %v2014 = vunpack.c.h.b16 %v120
    %v2015 = vunpack.c.l.b16 %v121
    %v2016 = vunpack.c.h.b16 %v121
    %v2017 = vunpack.c.l.b16 %v122
    %v2018 = vunpack.c.h.b16 %v122
    %v2019 = vunpack.c.l.b16 %v123
    %v2020 = vunpack.c.h.b16 %v123
    %v2021 = vunpack.c.l.b16 %v124
    %v2022 = vunpack.c.h.b16 %v124
    %v2023 = vunpack.c.l.b16 %v125
    %v2024 = vunpack.c.h.b16 %v125
    %v2025 = vunpack.c.l.b16 %v126
    %v2026 = vunpack.c.h.b16 %v126
    %v2027 = vunpack.c.l.b16 %v127
    %v2028 = vunpack.c.h.b16 %v127
    %v2029 = vunpack.c.l.b16 %v128
    %v2030 = vunpack.c.h.b16 %v128
    %v2031 = vunpack.c.l.b16 %v129
    %v2032 = vunpack.c.h.b16 %v129
    %v2033 = vunpack.c.l.b16 %v130
    %v2034 = vunpack.c.h.b16 %v130
    %v2035 = vunpack.c.l.b16 %v131
    %v2036 = vunpack.c.h.b16 %v131
    %v2037 = vunpack.c.l.b16 %v132
    %v2038 = vunpack.c.h.b16 %v132
    %v2039 = vunpack.c.l.b16 %v133
    %v2040 = vunpack.c.h.b16 %v133
    %v2041 = vunpack.c.l.b16 %v134
    %v2042 = vunpack.c.h.b16 %v134
    %v2043 = vunpack.c.l.b16 %v135
    %v2044 = vunpack.c.h.b16 %v135
    %v2045 = vunpack.c.l.b16 %v136
    %v2046 = vunpack.c.h.b16 %v136
    %v2047 = vunpack.c.l.b16 %v137
    %v2048 = vunpack.c.h.b16 %v137
    %v2049 = vunpack.c.l.b16 %v138
    %v2050 = vunpack.c.h.b16 %v138
    %v2051 = vunpack.c.l.b16 %v139
    %v2052 = vunpack.c.h.b16 %v139
    %v2053 = vunpack.c.l.b16 %v140
    %v2054 = vunpack.c.h.b16 %v140
    %v2055 = vunpack.c.l.b16 %v141
    %v2056 = vunpack.c.h.b16 %v141
    %v2057 = vunpack.c.l.b16 %v142
    %v2058 = vunpack.c.h.b16 %v142
    %v2059 = vunpack.c.l.b16 %v143
    %v2060 = vunpack.c.h.b16 %v143
    %v2061 = vunpack.c.l.b16 %v144
    %v2062 = vunpack.c.h.b16 %v144
    %v2063 = vunpack.c.l.b16 %v145
    %v2064 = vunpack.c.h.b16 %v145
    %v2065 = vunpack.c.l.b16 %v146
    %v2066 = vunpack.c.h.b16 %v146
    %v2067 = vunpack.c.l.b16 %v147
    %v2068 = vunpack.c.h.b16 %v147
    %v2069 = vunpack.c.l.b16 %v148
    %v2070 = vunpack.c.h.b16 %v148
    %v2071 = vunpack.c.l.b16 %v149
    %v2072 = vunpack.c.h.b16 %v149
    %v2073 = vunpack.c.l.b16 %v150
    %v2074 = vunpack.c.h.b16 %v150
    %v2075 = vunpack.c.l.b16 %v151
    %v2076 = vunpack.c.h.b16 %v151
    %v2077 = vunpack.c.l.b16 %v152
    %v2078 = vunpack.c.h.b16 %v152
    %v2079 = vunpack.c.l.b16 %v153
    %v2080 = vunpack.c.h.b16 %v153
    %v2081 = vunpack.c.l.b16 %v154
    %v2082 = vunpack.c.h.b16 %v154
    %v2083 = vunpack.c.l.b16 %v155
    %v2084 = vunpack.c.h.b16 %v155
    %v2085 = vunpack.c.l.b16 %v156
    %v2086 = vunpack.c.h.b16 %v156
    %v2087 = vunpack.c.l.b16 %v157
    %v2088 = vunpack.c.h.b16 %v157
    %v2089 = vunpack.c.l.b16 %v158
    %v2090 = vunpack.c.h.b16 %v158
    %v2091 = vunpack.c.l.b16 %v159
    %v2092 = vunpack.c.h.b16 %v159
    %v2093 = vunpack.c.l.b16 %v160
    %v2094 = vunpack.c.h.b16 %v160
    %v2095 = vunpack.c.l.b16 %v161
    %v2096 = vunpack.c.h.b16 %v161
    %v2097 = vunpack.c.l.b16 %v162
    %v2098 = vunpack.c.h.b16 %v162
    %v2099 = vunpack.c.l.b16 %v163
    %v2100 = vunpack.c.h.b16 %v163
    %v2101 = vunpack.c.l.b16 %v164
    %v2102 = vunpack.c.h.b16 %v164
    %v2103 = vunpack.c.l.b16 %v165
    %v2104 = vunpack.c.h.b16 %v165
    %v2105 = vunpack.c.l.b16 %v166
    %v2106 = vunpack.c.h.b16 %v166
    %v2107 = vunpack.c.l.b16 %v167
    %v2108 = vunpack.c.h.b16 %v167
    %v2109 = vunpack.c.l.b16 %v168
    %v2110 = vunpack.c.h.b16 %v168
    %v2111 = vunpack.c.l.b16 %v169
    %v2112 = vunpack.c.h.b16 %v169
    %v2113 = vunpack.c.l.b16 %v170
    %v2114 = vunpack.c.h.b16 %v170
    %v2115 = vunpack.c.l.b16 %v171
    %v2116 = vunpack.c.h.b16 %v171
    %v2117 = vunpack.c.l.b16 %v172
    %v2118 = vunpack.c.h.b16 %v172
    %v2119 = vunpack.c.l.b16 %v173
    %v2120 = vunpack.c.h.b16 %v173
    %v2121 = vunpack.c.l.b16 %v174
    %v2122 = vunpack.c.h.b16 %v174
    %v2123 = vunpack.c.l.b16 %v175
    %v2124 = vunpack.c.h.b16 %v175
    %v2125 = vunpack.c.l.b16 %v176
    %v2126 = vunpack.c.h.b16 %v176
    %v2127 = vunpack.c.l.b16 %v177
    %v2128 = vunpack.c.h.b16 %v177
    %v2129 = vunpack.c.l.b16 %v178
    %v2130 = vunpack.c.h.b16 %v178
    %v2131 = vunpack.c.l.b16 %v179
    %v2132 = vunpack.c.h.b16 %v179
    %v2133 = vunpack.c.l.b16 %v180
    %v2134 = vunpack.c.h.b16 %v180
    %v2135 = vunpack.c.l.b16 %v181
    %v2136 = vunpack.c.h.b16 %v181
    %v2137 = vunpack.c.l.b16 %v182
    %v2138 = vunpack.c.h.b16 %v182
    %v2139 = vunpack.c.l.b16 %v183
    %v2140 = vunpack.c.h.b16 %v183
    %v2141 = vunpack.c.l.b16 %v184
    %v2142 = vunpack.c.h.b16 %v184
    %v2143 = vunpack.c.l.b16 %v185
    %v2144 = vunpack.c.h.b16 %v185
    %v2145 = vunpack.c.l.b16 %v186
    %v2146 = vunpack.c.h.b16 %v186
    %v2147 = vunpack.c.l.b16 %v187
    %v2148 = vunpack.c.h.b16 %v187
    %v2149 = vunpack.c.l.b16 %v188
    %v2150 = vunpack.c.h.b16 %v188
    %v2151 = vunpack.c.l.b16 %v189
    %v2152 = vunpack.c.h.b16 %v189
    %v2153 = vunpack.c.l.b16 %v190
    %v2154 = vunpack.c.h.b16 %v190
    %v2155 = vunpack.c.l.b16 %v191
    %v2156 = vunpack.c.h.b16 %v191
    %v2157 = vunpack.c.l.b16 %v192
    %v2158 = vunpack.c.h.b16 %v192
    %v2159 = vunpack.c.l.b16 %v193
    %v2160 = vunpack.c.h.b16 %v193
    %v2161 = vunpack.c.l.b16 %v194
    %v2162 = vunpack.c.h.b16 %v194
    %v2163 = vunpack.c.l.b16 %v195
    %v2164 = vunpack.c.h.b16 %v195
    %v2165 = vunpack.c.l.b16 %v196
    %v2166 = vunpack.c.h.b16 %v196
    %v2167 = vunpack.c.l.b16 %v197
    %v2168 = vunpack.c.h.b16 %v197
    %v2169 = vunpack.c.l.b16 %v198
    %v2170 = vunpack.c.h.b16 %v198
    %v2171 = vunpack.c.l.b16 %v199
    %v2172 = vunpack.c.h.b16 %v199
    %v2173 = vunpack.c.l.b16 %v200
    %v2174 = vunpack.c.h.b16 %v200
    %v2175 = vunpack.c.l.b16 %v201
    %v2176 = vunpack.c.h.b16 %v201
    %v2177 = vunpack.c.l.b16 %v202
    %v2178 = vunpack.c.h.b16 %v202
    %v2179 = vunpack.c.l.b16 %v203
    %v2180 = vunpack.c.h.b16 %v203
    %v2181 = vunpack.c.l.b16 %v204
    %v2182 = vunpack.c.h.b16 %v204
    %v2183 = vunpack.c.l.b16 %v205
    %v2184 = vunpack.c.h.b16 %v205
    %v2185 = vunpack.c.l.b16 %v206
    %v2186 = vunpack.c.h.b16 %v206
    %v2187 = vunpack.c.l.b16 %v207
    %v2188 = vunpack.c.h.b16 %v207
    %v2189 = vunpack.c.l.b16 %v208
    %v2190 = vunpack.c.h.b16 %v208
    %v2191 = vunpack.c.l.b16 %v209
    %v2192 = vunpack.c.h.b16 %v209
    %v2193 = vunpack.c.l.b16 %v210
    %v2194 = vunpack.c.h.b16 %v210
    %v2195 = vunpack.c.l.b16 %v211
    %v2196 = vunpack.c.h.b16 %v211
    %v2197 = vunpack.c.l.b16 %v212
    %v2198 = vunpack.c.h.b16 %v212
    %v2199 = vunpack.c.l.b16 %v213
    %v2200 = vunpack.c.h.b16 %v213
    %v2201 = vunpack.c.l.b16 %v214
    %v2202 = vunpack.c.h.b16 %v214
    %v2203 = vunpack.c.l.b16 %v215
    %v2204 = vunpack.c.h.b16 %v215
    %v2205 = vunpack.c.l.b16 %v216
    %v2206 = vunpack.c.h.b16 %v216
    %v2207 = vunpack.c.l.b16 %v217
    %v2208 = vunpack.c.h.b16 %v217
    %v2209 = vunpack.c.l.b16 %v218
    %v2210 = vunpack.c.h.b16 %v218
    %v2211 = vunpack.c.l.b16 %v219
    %v2212 = vunpack.c.h.b16 %v219
    %v2213 = vunpack.c.l.b16 %v220
    %v2214 = vunpack.c.h.b16 %v220
    %v2215 = vunpack.c.l.b16 %v221
    %v2216 = vunpack.c.h.b16 %v221
    %v2217 = vunpack.c.l.b16 %v222
    %v2218 = vunpack.c.h.b16 %v222
    %v2219 = vunpack.c.l.b16 %v223
    %v2220 = vunpack.c.h.b16 %v223
    %v2221 = vunpack.c.l.b16 %v224
    %v2222 = vunpack.c.h.b16 %v224
    %v2223 = vunpack.c.l.b16 %v225
    %v2224 = vunpack.c.h.b16 %v225
    %v2225 = vunpack.c.l.b16 %v226
    %v2226 = vunpack.c.h.b16 %v226
    %v2227 = vunpack.c.l.b16 %v227
    %v2228 = vunpack.c.h.b16 %v227
    %v2229 = vunpack.c.l.b16 %v228
    %v2230 = vunpack.c.h.b16 %v228
    %v2231 = vunpack.c.l.b16 %v229
    %v2232 = vunpack.c.h.b16 %v229
    %v2233 = vunpack.c.l.b16 %v230
    %v2234 = vunpack.c.h.b16 %v230
    %v2235 = vunpack.c.l.b16 %v231
    %v2236 = vunpack.c.h.b16 %v231
    %v2237 = vunpack.c.l.b16 %v232
    %v2238 = vunpack.c.h.b16 %v232
    %v2239 = vunpack.c.l.b16 %v233
    %v2240 = vunpack.c.h.b16 %v233
    %v2241 = vunpack.c.l.b16 %v234
    %v2242 = vunpack.c.h.b16 %v234
    %v2243 = vunpack.c.l.b16 %v235
    %v2244 = vunpack.c.h.b16 %v235
    %v2245 = vunpack.c.l.b16 %v236
    %v2246 = vunpack.c.h.b16 %v236
    %v2247 = vunpack.c.l.b16 %v237
    %v2248 = vunpack.c.h.b16 %v237
    %v2249 = vunpack.c.l.b16 %v238
    %v2250 = vunpack.c.h.b16 %v238
    %v2251 = vunpack.c.l.b16 %v239
    %v2252 = vunpack.c.h.b16 %v239
    %v2253 = vunpack.c.l.b16 %v240
    %v2254 = vunpack.c.h.b16 %v240
    %v2255 = vunpack.c.l.b16 %v241
    %v2256 = vunpack.c.h.b16 %v241
    %v2257 = vunpack.c.l.b16 %v242
    %v2258 = vunpack.c.h.b16 %v242
    %v2259 = vunpack.c.l.b16 %v243
    %v2260 = vunpack.c.h.b16 %v243
    %v2261 = vunpack.c.l.b16 %v244
    %v2262 = vunpack.c.h.b16 %v244
    %v2263 = vunpack.c.l.b16 %v245
    %v2264 = vunpack.c.h.b16 %v245
    %v2265 = vunpack.c.l.b16 %v246
    %v2266 = vunpack.c.h.b16 %v246
    %v2267 = vunpack.c.l.b16 %v247
    %v2268 = vunpack.c.h.b16 %v247
    %v2269 = vunpack.c.l.b16 %v248
    %v2270 = vunpack.c.h.b16 %v248
    %v2271 = vunpack.c.l.b16 %v249
    %v2272 = vunpack.c.h.b16 %v249
    %v2273 = vunpack.c.l.b16 %v250
    %v2274 = vunpack.c.h.b16 %v250
    %v2275 = vunpack.c.l.b16 %v251
    %v2276 = vunpack.c.h.b16 %v251
    %v2277 = vunpack.c.l.b16 %v252
    %v2278 = vunpack.c.h.b16 %v252
    %v2279 = vunpack.c.l.b16 %v253
    %v2280 = vunpack.c.h.b16 %v253
    %v2281 = vunpack.c.l.b16 %v254
    %v2282 = vunpack.c.h.b16 %v254
    %v2283 = vunpack.c.l.b16 %v255
    %v2284 = vunpack.c.h.b16 %v255
    %v2285 = vunpack.c.l.b16 %v256
    %v2286 = vunpack.c.h.b16 %v256
    %v2287 = vunpack.c.l.b16 %v257
    %v2288 = vunpack.c.h.b16 %v257
    %v2289 = vunpack.c.l.b16 %v258
    %v2290 = vunpack.c.h.b16 %v258
    %v2291 = vunpack.c.l.b16 %v259
    %v2292 = vunpack.c.h.b16 %v259
    %v2293 = vunpack.c.l.b16 %v260
    %v2294 = vunpack.c.h.b16 %v260
    %v2295 = vunpack.c.l.b16 %v261
    %v2296 = vunpack.c.h.b16 %v261
    %v2297 = vunpack.c.l.b16 %v262
    %v2298 = vunpack.c.h.b16 %v262
    %v2299 = vunpack.c.l.b16 %v263
    %v2300 = vunpack.c.h.b16 %v263
    %v2301 = vunpack.c.l.b16 %v264
    %v2302 = vunpack.c.h.b16 %v264
    %v2303 = vunpack.c.l.b16 %v265
    %v2304 = vunpack.c.h.b16 %v265
    %v2305 = vunpack.c.l.b16 %v266
    %v2306 = vunpack.c.h.b16 %v266
    %v2307 = vunpack.c.l.b16 %v267
    %v2308 = vunpack.c.h.b16 %v267
    %v2309 = vunpack.c.l.b16 %v268
    %v2310 = vunpack.c.h.b16 %v268
    %v2311 = vunpack.c.l.b16 %v269
    %v2312 = vunpack.c.h.b16 %v269
    %v2313 = vunpack.c.l.b16 %v270
    %v2314 = vunpack.c.h.b16 %v270
    %v2315 = vunpack.c.l.b16 %v271
    %v2316 = vunpack.c.h.b16 %v271
    %v2317 = vunpack.c.l.b16 %v272
    %v2318 = vunpack.c.h.b16 %v272
    %v2319 = vunpack.c.l.b16 %v273
    %v2320 = vunpack.c.h.b16 %v273
    %v2321 = vunpack.c.l.b16 %v274
    %v2322 = vunpack.c.h.b16 %v274
    %v2323 = vunpack.c.l.b16 %v275
    %v2324 = vunpack.c.h.b16 %v275
    %v2325 = vunpack.c.l.b16 %v276
    %v2326 = vunpack.c.h.b16 %v276
    %v2327 = vunpack.c.l.b16 %v277
    %v2328 = vunpack.c.h.b16 %v277
    %v2329 = vunpack.c.l.b16 %v278
    %v2330 = vunpack.c.h.b16 %v278
    %v2331 = vunpack.c.l.b16 %v279
    %v2332 = vunpack.c.h.b16 %v279
    %v2333 = vunpack.c.l.b16 %v280
    %v2334 = vunpack.c.h.b16 %v280
    %v2335 = vunpack.c.l.b16 %v281
    %v2336 = vunpack.c.h.b16 %v281
    %v2337 = vunpack.c.l.b16 %v282
    %v2338 = vunpack.c.h.b16 %v282
    %v2339 = vunpack.c.l.b16 %v283
    %v2340 = vunpack.c.h.b16 %v283
    %v2341 = vunpack.c.l.b16 %v284
    %v2342 = vunpack.c.h.b16 %v284
    %v2343 = vunpack.c.l.b16 %v285
    %v2344 = vunpack.c.h.b16 %v285
    %v2345 = vunpack.c.l.b16 %v286
    %v2346 = vunpack.c.h.b16 %v286
    %v2347 = vunpack.c.l.b16 %v287
    %v2348 = vunpack.c.h.b16 %v287
    %v2349 = vunpack.c.l.b16 %v288
    %v2350 = vunpack.c.h.b16 %v288
    %v2351 = vunpack.c.l.b16 %v289
    %v2352 = vunpack.c.h.b16 %v289
    %v2353 = vunpack.c.l.b16 %v290
    %v2354 = vunpack.c.h.b16 %v290
    %v2355 = vunpack.c.l.b16 %v291
    %v2356 = vunpack.c.h.b16 %v291
    %v2357 = vunpack.c.l.b16 %v292
    %v2358 = vunpack.c.h.b16 %v292
    %v2359 = vunpack.c.l.b16 %v293
    %v2360 = vunpack.c.h.b16 %v293
    %v2361 = vunpack.c.l.b16 %v294
    %v2362 = vunpack.c.h.b16 %v294
    %v2363 = vunpack.c.l.b16 %v295
    %v2364 = vunpack.c.h.b16 %v295
    %v2365 = vunpack.c.l.b16 %v296
    %v2366 = vunpack.c.h.b16 %v296
    %v2367 = vunpack.c.l.b16 %v297
    %v2368 = vunpack.c.h.b16 %v297
    %v2369 = vunpack.c.l.b16 %v298
    %v2370 = vunpack.c.h.b16 %v298
    %v2371 = vunpack.c.l.b16 %v299
    %v2372 = vunpack.c.h.b16 %v299
    %v2373 = vunpack.c.l.b16 %v300
    %v2374 = vunpack.c.h.b16 %v300
    %v2375 = vunpack.c.l.b16 %v301
    %v2376 = vunpack.c.h.b16 %v301
    %v2377 = vunpack.c.l.b16 %v302
    %v2378 = vunpack.c.h.b16 %v302
    %v2379 = vunpack.c.l.b16 %v303
    %v2380 = vunpack.c.h.b16 %v303
    %v2381 = vunpack.c.l.b16 %v304
    %v2382 = vunpack.c.h.b16 %v304
    %v2383 = vunpack.c.l.b16 %v305
    %v2384 = vunpack.c.h.b16 %v305
    %v2385 = vunpack.c.l.b16 %v306
    %v2386 = vunpack.c.h.b16 %v306
    %v2387 = vunpack.c.l.b16 %v307
    %v2388 = vunpack.c.h.b16 %v307
    %v2389 = vunpack.c.l.b16 %v308
    %v2390 = vunpack.c.h.b16 %v308
    %v2391 = vunpack.c.l.b16 %v309
    %v2392 = vunpack.c.h.b16 %v309
    %v2393 = vunpack.c.l.b16 %v310
    %v2394 = vunpack.c.h.b16 %v310
    %v2395 = vunpack.c.l.b16 %v311
    %v2396 = vunpack.c.h.b16 %v311
    %v2397 = vunpack.c.l.b16 %v312
    %v2398 = vunpack.c.h.b16 %v312
    %v2399 = vunpack.c.l.b16 %v313
    %v2400 = vunpack.c.h.b16 %v313
    %v2401 = vunpack.c.l.b16 %v314
    %v2402 = vunpack.c.h.b16 %v314
    %v2403 = vunpack.c.l.b16 %v315
    %v2404 = vunpack.c.h.b16 %v315
    %v2405 = vunpack.c.l.b16 %v316
    %v2406 = vunpack.c.h.b16 %v316
    %v2407 = vunpack.c.l.b16 %v317
    %v2408 = vunpack.c.h.b16 %v317
    %v2409 = vunpack.c.l.b16 %v318
    %v2410 = vunpack.c.h.b16 %v318
    %v2411 = vunpack.c.l.b16 %v319
    %v2412 = vunpack.c.h.b16 %v319
    %v2413 = vunpack.c.l.b16 %v320
    %v2414 = vunpack.c.h.b16 %v320
    %v2415 = vunpack.c.l.b16 %v321
    %v2416 = vunpack.c.h.b16 %v321
    %v2417 = vunpack.c.l.b16 %v322
    %v2418 = vunpack.c.h.b16 %v322
    %v2419 = vunpack.c.l.b16 %v323
    %v2420 = vunpack.c.h.b16 %v323
    %v2421 = vunpack.c.l.b16 %v324
    %v2422 = vunpack.c.h.b16 %v324
    %v2423 = vunpack.c.l.b16 %v325
    %v2424 = vunpack.c.h.b16 %v325
    %v2425 = vunpack.c.l.b16 %v326
    %v2426 = vunpack.c.h.b16 %v326
    %v2427 = vunpack.c.l.b16 %v327
    %v2428 = vunpack.c.h.b16 %v327
    %v2429 = vunpack.c.l.b16 %v328
    %v2430 = vunpack.c.h.b16 %v328
    %v2431 = vunpack.c.l.b16 %v329
    %v2432 = vunpack.c.h.b16 %v329
    %v2433 = vunpack.c.l.b16 %v330
    %v2434 = vunpack.c.h.b16 %v330
    %v2435 = vunpack.c.l.b16 %v331
    %v2436 = vunpack.c.h.b16 %v331
    %v2437 = vunpack.c.l.b16 %v332
    %v2438 = vunpack.c.h.b16 %v332
    %v2439 = vunpack.c.l.b16 %v333
    %v2440 = vunpack.c.h.b16 %v333
    %v2441 = vunpack.c.l.b16 %v334
    %v2442 = vunpack.c.h.b16 %v334
    %v2443 = vunpack.c.l.b16 %v335
    %v2444 = vunpack.c.h.b16 %v335
    %v2445 = vunpack.c.l.b16 %v336
    %v2446 = vunpack.c.h.b16 %v336
    %v2447 = vunpack.c.l.b16 %v337
    %v2448 = vunpack.c.h.b16 %v337
    %v2449 = vunpack.c.l.b16 %v338
    %v2450 = vunpack.c.h.b16 %v338
    %v2451 = vunpack.c.l.b16 %v339
    %v2452 = vunpack.c.h.b16 %v339
    %v2453 = vunpack.c.l.b16 %v340
    %v2454 = vunpack.c.h.b16 %v340
    %v2455 = vunpack.c.l.b16 %v341
    %v2456 = vunpack.c.h.b16 %v341
    %v2457 = vunpack.c.l.b16 %v342
    %v2458 = vunpack.c.h.b16 %v342
    %v2459 = vunpack.c.l.b16 %v343
    %v2460 = vunpack.c.h.b16 %v343
    %v2461 = vunpack.c.l.b16 %v344
    %v2462 = vunpack.c.h.b16 %v344
    %v2463 = vunpack.c.l.b16 %v345
    %v2464 = vunpack.c.h.b16 %v345
    %v2465 = vunpack.c.l.b16 %v346
    %v2466 = vunpack.c.h.b16 %v346
    %v2467 = vunpack.c.l.b16 %v347
    %v2468 = vunpack.c.h.b16 %v347
    %v2469 = vunpack.c.l.b16 %v348
    %v2470 = vunpack.c.h.b16 %v348
    %v2471 = vunpack.c.l.b16 %v349
    %v2472 = vunpack.c.h.b16 %v349
    %v2473 = vunpack.c.l.b16 %v350
    %v2474 = vunpack.c.h.b16 %v350
    %v2475 = vunpack.c.l.b16 %v351
    %v2476 = vunpack.c.h.b16 %v351
    %v2477 = vunpack.c.l.b16 %v352
    %v2478 = vunpack.c.h.b16 %v352
    %v2479 = vunpack.c.l.b16 %v353
    %v2480 = vunpack.c.h.b16 %v353
    %v2481 = vunpack.c.l.b16 %v354
    %v2482 = vunpack.c.h.b16 %v354
    %v2483 = vunpack.c.l.b16 %v355
    %v2484 = vunpack.c.h.b16 %v355
    %v2485 = vunpack.c.l.b16 %v356
    %v2486 = vunpack.c.h.b16 %v356
    %v2487 = vunpack.c.l.b16 %v357
    %v2488 = vunpack.c.h.b16 %v357
    %v2489 = vunpack.c.l.b16 %v358
    %v2490 = vunpack.c.h.b16 %v358
    %v2491 = vunpack.c.l.b16 %v359
    %v2492 = vunpack.c.h.b16 %v359
    %v2493 = vunpack.c.l.b16 %v360
    %v2494 = vunpack.c.h.b16 %v360
    %v2495 = vunpack.c.l.b16 %v361
    %v2496 = vunpack.c.h.b16 %v361
    %v2497 = vunpack.c.l.b16 %v362
    %v2498 = vunpack.c.h.b16 %v362
    %v2499 = vunpack.c.l.b16 %v363
    %v2500 = vunpack.c.h.b16 %v363
    %v2501 = vunpack.c.l.b16 %v364
    %v2502 = vunpack.c.h.b16 %v364
    %v2503 = vunpack.c.l.b16 %v365
    %v2504 = vunpack.c.h.b16 %v365
    %v2505 = vunpack.c.l.b16 %v366
    %v2506 = vunpack.c.h.b16 %v366
    %v2507 = vunpack.c.l.b16 %v367
    %v2508 = vunpack.c.h.b16 %v367
    %v2509 = vunpack.c.l.b16 %v368
    %v2510 = vunpack.c.h.b16 %v368
    %v2511 = vunpack.c.l.b16 %v369
    %v2512 = vunpack.c.h.b16 %v369
    %v2513 = vunpack.c.l.b16 %v370
    %v2514 = vunpack.c.h.b16 %v370
    %v2515 = vunpack.c.l.b16 %v371
    %v2516 = vunpack.c.h.b16 %v371
    %v2517 = vunpack.c.l.b16 %v372
    %v2518 = vunpack.c.h.b16 %v372
    %v2519 = vunpack.c.l.b16 %v373
    %v2520 = vunpack.c.h.b16 %v373
    %v2521 = vunpack.c.l.b16 %v374
    %v2522 = vunpack.c.h.b16 %v374
    %v2523 = vunpack.c.l.b16 %v375
    %v2524 = vunpack.c.h.b16 %v375
    %v2525 = vunpack.c.l.b16 %v376
    %v2526 = vunpack.c.h.b16 %v376
    %v2527 = vunpack.c.l.b16 %v377
    %v2528 = vunpack.c.h.b16 %v377
    %v2529 = vunpack.c.l.b16 %v378
    %v2530 = vunpack.c.h.b16 %v378
    %v2531 = vunpack.c.l.b16 %v379
    %v2532 = vunpack.c.h.b16 %v379
    %v2533 = vunpack.c.l.b16 %v380
    %v2534 = vunpack.c.h.b16 %v380
    %v2535 = vunpack.c.l.b16 %v381
    %v2536 = vunpack.c.h.b16 %v381
    %v2537 = vunpack.c.l.b16 %v382
    %v2538 = vunpack.c.h.b16 %v382
    %v2539 = vunpack.c.l.b16 %v383
    %v2540 = vunpack.c.h.b16 %v383
    %v2541 = vunpack.c.l.b16 %v384
    %v2542 = vunpack.c.h.b16 %v384
    %v2543 = vunpack.c.l.b16 %v385
    %v2544 = vunpack.c.h.b16 %v385
    %v2545 = vunpack.c.l.b16 %v386
    %v2546 = vunpack.c.h.b16 %v386
    %v2547 = vunpack.c.l.b16 %v387
    %v2548 = vunpack.c.h.b16 %v387
    %v2549 = vunpack.c.l.b16 %v388
    %v2550 = vunpack.c.h.b16 %v388
    %v2551 = vunpack.c.l.b16 %v389
    %v2552 = vunpack.c.h.b16 %v389
    %v2553 = vunpack.c.l.b16 %v390
    %v2554 = vunpack.c.h.b16 %v390
    %v2555 = vunpack.c.l.b16 %v391
    %v2556 = vunpack.c.h.b16 %v391
    %v2557 = vunpack.c.l.b16 %v392
    %v2558 = vunpack.c.h.b16 %v392
    %v2559 = vunpack.c.l.b16 %v393
    %v2560 = vunpack.c.h.b16 %v393
    %v2561 = vunpack.c.l.b16 %v394
    %v2562 = vunpack.c.h.b16 %v394
    %v2563 = vunpack.c.l.b16 %v395
    %v2564 = vunpack.c.h.b16 %v395
    %v2565 = vunpack.c.l.b16 %v396
    %v2566 = vunpack.c.h.b16 %v396
    %v2567 = vunpack.c.l.b16 %v397
    %v2568 = vunpack.c.h.b16 %v397
    %v2569 = vunpack.c.l.b16 %v398
    %v2570 = vunpack.c.h.b16 %v398
    %v2571 = vunpack.c.l.b16 %v399
    %v2572 = vunpack.c.h.b16 %v399
    %v2573 = vunpack.c.l.b16 %v400
    %v2574 = vunpack.c.h.b16 %v400
    %v2575 = vunpack.c.l.b16 %v401
    %v2576 = vunpack.c.h.b16 %v401
    %v2577 = vunpack.c.l.b16 %v402
    %v2578 = vunpack.c.h.b16 %v402
    %v2579 = vunpack.c.l.b16 %v403
    %v2580 = vunpack.c.h.b16 %v403
    %v2581 = vunpack.c.l.b16 %v404
    %v2582 = vunpack.c.h.b16 %v404
    %v2583 = vunpack.c.l.b16 %v405
    %v2584 = vunpack.c.h.b16 %v405
    %v2585 = vunpack.c.l.b16 %v406
    %v2586 = vunpack.c.h.b16 %v406
    %v2587 = vunpack.c.l.b16 %v407
    %v2588 = vunpack.c.h.b16 %v407
    %v2589 = vunpack.c.l.b16 %v408
    %v2590 = vunpack.c.h.b16 %v408
    %v2591 = vunpack.c.l.b16 %v409
    %v2592 = vunpack.c.h.b16 %v409
    %v2593 = vunpack.c.l.b16 %v410
    %v2594 = vunpack.c.h.b16 %v410
    %v2595 = vunpack.c.l.b16 %v411
    %v2596 = vunpack.c.h.b16 %v411
    %v2597 = vunpack.c.l.b16 %v412
    %v2598 = vunpack.c.h.b16 %v412
    %v2599 = vunpack.c.l.b16 %v413
    %v2600 = vunpack.c.h.b16 %v413
    %v2601 = vunpack.c.l.b16 %v414
    %v2602 = vunpack.c.h.b16 %v414
    %v2603 = vunpack.c.l.b16 %v415
    %v2604 = vunpack.c.h.b16 %v415
    %v2605 = vunpack.c.l.b16 %v416
    %v2606 = vunpack.c.h.b16 %v416
    %v2607 = vunpack.c.l.b16 %v417
    %v2608 = vunpack.c.h.b16 %v417
    %v2609 = vunpack.c.l.b16 %v418
    %v2610 = vunpack.c.h.b16 %v418
    %v2611 = vunpack.c.l.b16 %v419
    %v2612 = vunpack.c.h.b16 %v419
    %v2613 = vunpack.c.l.b16 %v420
    %v2614 = vunpack.c.h.b16 %v420
    %v2615 = vunpack.c.l.b16 %v421
    %v2616 = vunpack.c.h.b16 %v421
    %v2617 = vunpack.c.l.b16 %v422
    %v2618 = vunpack.c.h.b16 %v422
    %v2619 = vunpack.c.l.b16 %v423
    %v2620 = vunpack.c.h.b16 %v423
    %v2621 = vunpack.c.l.b16 %v424
    %v2622 = vunpack.c.h.b16 %v424
    %v2623 = vunpack.c.l.b16 %v425
    %v2624 = vunpack.c.h.b16 %v425
    %v2625 = vunpack.c.l.b16 %v426
    %v2626 = vunpack.c.h.b16 %v426
    %v2627 = vunpack.c.l.b16 %v427
    %v2628 = vunpack.c.h.b16 %v427
    %v2629 = vunpack.c.l.b16 %v428
    %v2630 = vunpack.c.h.b16 %v428
    %v2631 = vunpack.c.l.b16 %v429
    %v2632 = vunpack.c.h.b16 %v429
    %v2633 = vunpack.c.l.b16 %v430
    %v2634 = vunpack.c.h.b16 %v430
    %v2635 = vunpack.c.l.b16 %v431
    %v2636 = vunpack.c.h.b16 %v431
    %v2637 = vunpack.c.l.b16 %v432
    %v2638 = vunpack.c.h.b16 %v432
    %v2639 = vunpack.c.l.b16 %v433
    %v2640 = vunpack.c.h.b16 %v433
    %v2641 = vunpack.c.l.b16 %v434
    %v2642 = vunpack.c.h.b16 %v434
    %v2643 = vunpack.c.l.b16 %v435
    %v2644 = vunpack.c.h.b16 %v435
    %v2645 = vunpack.c.l.b16 %v436
    %v2646 = vunpack.c.h.b16 %v436
    %v2647 = vunpack.c.l.b16 %v437
    %v2648 = vunpack.c.h.b16 %v437
    %v2649 = vunpack.c.l.b16 %v438
    %v2650 = vunpack.c.h.b16 %v438
    %v2651 = vunpack.c.l.b16 %v439
    %v2652 = vunpack.c.h.b16 %v439
    %v2653 = vunpack.c.l.b16 %v440
    %v2654 = vunpack.c.h.b16 %v440
    %v2655 = vunpack.c.l.b16 %v441
    %v2656 = vunpack.c.h.b16 %v441
    %v2657 = vunpack.c.l.b16 %v442
    %v2658 = vunpack.c.h.b16 %v442
    %v2659 = vunpack.c.l.b16 %v443
    %v2660 = vunpack.c.h.b16 %v443
    %v2661 = vunpack.c.l.b16 %v444
    %v2662 = vunpack.c.h.b16 %v444
    %v2663 = vunpack.c.l.b16 %v445
    %v2664 = vunpack.c.h.b16 %v445
    %v2665 = vunpack.c.l.b16 %v446
    %v2666 = vunpack.c.h.b16 %v446
    %v2667 = vunpack.c.l.b16 %v447
    %v2668 = vunpack.c.h.b16 %v447
    %v2669 = vunpack.c.l.b16 %v448
    %v2670 = vunpack.c.h.b16 %v448
    %v2671 = vunpack.c.l.b16 %v449
    %v2672 = vunpack.c.h.b16 %v449
    %v2673 = vunpack.c.l.b16 %v450
    %v2674 = vunpack.c.h.b16 %v450
    %v2675 = vunpack.c.l.b16 %v451
    %v2676 = vunpack.c.h.b16 %v451
    %v2677 = vunpack.c.l.b16 %v452
    %v2678 = vunpack.c.h.b16 %v452
    %v2679 = vunpack.c.l.b16 %v453
    %v2680 = vunpack.c.h.b16 %v453
    %v2681 = vunpack.c.l.b16 %v454
    %v2682 = vunpack.c.h.b16 %v454
    %v2683 = vunpack.c.l.b16 %v455
    %v2684 = vunpack.c.h.b16 %v455
    %v2685 = vunpack.c.l.b16 %v456
    %v2686 = vunpack.c.h.b16 %v456
    %v2687 = vunpack.c.l.b16 %v457
    %v2688 = vunpack.c.h.b16 %v457
    %v2689 = vunpack.c.l.b16 %v458
    %v2690 = vunpack.c.h.b16 %v458
    %v2691 = vunpack.c.l.b16 %v459
    %v2692 = vunpack.c.h.b16 %v459
    %v2693 = vunpack.c.l.b16 %v460
    %v2694 = vunpack.c.h.b16 %v460
    %v2695 = vunpack.c.l.b16 %v461
    %v2696 = vunpack.c.h.b16 %v461
    %v2697 = vunpack.c.l.b16 %v462
    %v2698 = vunpack.c.h.b16 %v462
    %v2699 = vunpack.c.l.b16 %v463
    %v2700 = vunpack.c.h.b16 %v463
    %v2701 = vunpack.c.l.b16 %v464
    %v2702 = vunpack.c.h.b16 %v464
    %v2703 = vunpack.c.l.b16 %v465
    %v2704 = vunpack.c.h.b16 %v465
    %v2705 = vunpack.c.l.b16 %v466
    %v2706 = vunpack.c.h.b16 %v466
    %v2707 = vunpack.c.l.b16 %v467
    %v2708 = vunpack.c.h.b16 %v467
    %v2709 = vunpack.c.l.b16 %v468
    %v2710 = vunpack.c.h.b16 %v468
    %v2711 = vunpack.c.l.b16 %v469
    %v2712 = vunpack.c.h.b16 %v469
    %v2713 = vunpack.c.l.b16 %v470
    %v2714 = vunpack.c.h.b16 %v470
    %v2715 = vunpack.c.l.b16 %v471
    %v2716 = vunpack.c.h.b16 %v471
    %v2717 = vunpack.c.l.b16 %v472
    %v2718 = vunpack.c.h.b16 %v472
    %v2719 = vunpack.c.l.b16 %v473
    %v2720 = vunpack.c.h.b16 %v473
    %v2721 = vunpack.c.l.b16 %v474
    %v2722 = vunpack.c.h.b16 %v474
    %v2723 = vunpack.c.l.b16 %v475
    %v2724 = vunpack.c.h.b16 %v475
    %v2725 = vunpack.c.l.b16 %v476
    %v2726 = vunpack.c.h.b16 %v476
    %v2727 = vunpack.c.l.b16 %v477
    %v2728 = vunpack.c.h.b16 %v477
    %v2729 = vunpack.c.l.b16 %v478
    %v2730 = vunpack.c.h.b16 %v478
    %v2731 = vunpack.c.l.b16 %v479
    %v2732 = vunpack.c.h.b16 %v479
    %v2733 = vunpack.c.l.b16 %v480
    %v2734 = vunpack.c.h.b16 %v480
    %v2735 = vunpack.c.l.b16 %v481
    %v2736 = vunpack.c.h.b16 %v481
    %v2737 = vunpack.c.l.b16 %v482
    %v2738 = vunpack.c.h.b16 %v482
    %v2739 = vunpack.c.l.b16 %v483
    %v2740 = vunpack.c.h.b16 %v483
    %v2741 = vunpack.c.l.b16 %v484
    %v2742 = vunpack.c.h.b16 %v484
    %v2743 = vunpack.c.l.b16 %v485
    %v2744 = vunpack.c.h.b16 %v485
    %v2745 = vunpack.c.l.b16 %v486
    %v2746 = vunpack.c.h.b16 %v486
    %v2747 = vunpack.c.l.b16 %v487
    %v2748 = vunpack.c.h.b16 %v487
    %v2749 = vunpack.c.l.b16 %v488
    %v2750 = vunpack.c.h.b16 %v488
    %v2751 = vunpack.c.l.b16 %v489
    %v2752 = vunpack.c.h.b16 %v489
    %v2753 = vunpack.c.l.b16 %v490
    %v2754 = vunpack.c.h.b16 %v490
    %v2755 = vunpack.c.l.b16 %v491
    %v2756 = vunpack.c.h.b16 %v491
    %v2757 = vunpack.c.l.b16 %v492
    %v2758 = vunpack.c.h.b16 %v492
    %v2759 = vunpack.c.l.b16 %v493
    %v2760 = vunpack.c.h.b16 %v493
    %v2761 = vunpack.c.l.b16 %v494
    %v2762 = vunpack.c.h.b16 %v494
    %v2763 = vunpack.c.l.b16 %v495
    %v2764 = vunpack.c.h.b16 %v495
    %v2765 = vunpack.c.l.b16 %v496
    %v2766 = vunpack.c.h.b16 %v496
    %v2767 = vunpack.c.l.b16 %v497
    %v2768 = vunpack.c.h.b16 %v497
    %v2769 = vunpack.c.l.b16 %v498
    %v2770 = vunpack.c.h.b16 %v498
    %v2771 = vunpack.c.l.b16 %v499
    %v2772 = vunpack.c.h.b16 %v499
    %v2773 = vunpack.c.l.b16 %v500
    %v2774 = vunpack.c.h.b16 %v500
    %v2775 = vunpack.c.l.b16 %v501
    %v2776 = vunpack.c.h.b16 %v501
    %v2777 = vunpack.c.l.b16 %v502
    %v2778 = vunpack.c.h.b16 %v502
    %v2779 = vunpack.c.l.b16 %v503
    %v2780 = vunpack.c.h.b16 %v503
    %v2781 = vunpack.c.l.b16 %v504
    %v2782 = vunpack.c.h.b16 %v504
    %v2783 = vunpack.c.l.b16 %v505
    %v2784 = vunpack.c.h.b16 %v505
    %v2785 = vunpack.c.l.b16 %v506
    %v2786 = vunpack.c.h.b16 %v506
    %v2787 = vunpack.c.l.b16 %v507
    %v2788 = vunpack.c.h.b16 %v507
    %v2789 = vunpack.c.l.b16 %v508
    %v2790 = vunpack.c.h.b16 %v508
    %v2791 = vunpack.c.l.b16 %v509
    %v2792 = vunpack.c.h.b16 %v509
    %v2793 = vunpack.c.l.b16 %v510
    %v2794 = vunpack.c.h.b16 %v510
    %v2795 = vunpack.c.l.b16 %v511
    %v2796 = vunpack.c.h.b16 %v511
    %v2797 = vunpack.c.l.b16 %v512
    %v2798 = vunpack.c.h.b16 %v512
    %v2799 = vunpack.c.l.b16 %v513
    %v2800 = vunpack.c.h.b16 %v513
    %v2801 = vunpack.c.l.b16 %v514
    %v2802 = vunpack.c.h.b16 %v514
    %v2803 = vunpack.c.l.b16 %v515
    %v2804 = vunpack.c.h.b16 %v515
    %v2805 = vunpack.c.l.b16 %v516
    %v2806 = vunpack.c.h.b16 %v516
    %v2807 = vunpack.c.l.b16 %v517
    %v2808 = vunpack.c.h.b16 %v517
    %v2809 = vunpack.c.l.b16 %v518
    %v2810 = vunpack.c.h.b16 %v518
    %v2811 = vunpack.c.l.b16 %v519
    %v2812 = vunpack.c.h.b16 %v519
    %v2813 = vunpack.c.l.b16 %v520
    %v2814 = vunpack.c.h.b16 %v520
    %v2815 = vunpack.c.l.b16 %v521
    %v2816 = vunpack.c.h.b16 %v521
    %v2817 = vunpack.c.l.b16 %v522
    %v2818 = vunpack.c.h.b16 %v522
    %v2819 = vunpack.c.l.b16 %v523
    %v2820 = vunpack.c.h.b16 %v523
    %v2821 = vunpack.c.l.b16 %v524
    %v2822 = vunpack.c.h.b16 %v524
    %v2823 = vunpack.c.l.b16 %v525
    %v2824 = vunpack.c.h.b16 %v525
    %v2825 = vunpack.c.l.b16 %v526
    %v2826 = vunpack.c.h.b16 %v526
    %v2827 = vunpack.c.l.b16 %v527
    %v2828 = vunpack.c.h.b16 %v527
    %v2829 = vunpack.c.l.b16 %v528
    %v2830 = vunpack.c.h.b16 %v528
    %v2831 = vunpack.c.l.b16 %v529
    %v2832 = vunpack.c.h.b16 %v529
    %v2833 = vunpack.c.l.b16 %v530
    %v2834 = vunpack.c.h.b16 %v530
    %v2835 = vunpack.c.l.b16 %v531
    %v2836 = vunpack.c.h.b16 %v531
    %v2837 = vunpack.c.l.b16 %v532
    %v2838 = vunpack.c.h.b16 %v532
    %v2839 = vunpack.c.l.b16 %v533
    %v2840 = vunpack.c.h.b16 %v533
    %v2841 = vunpack.c.l.b16 %v534
    %v2842 = vunpack.c.h.b16 %v534
    %v2843 = vunpack.c.l.b16 %v535
    %v2844 = vunpack.c.h.b16 %v535
    %v2845 = vunpack.c.l.b16 %v536
    %v2846 = vunpack.c.h.b16 %v536
    %v2847 = vunpack.c.l.b16 %v537
    %v2848 = vunpack.c.h.b16 %v537
    %v2849 = vunpack.c.l.b16 %v538
    %v2850 = vunpack.c.h.b16 %v538
    %v2851 = vunpack.c.l.b16 %v539
    %v2852 = vunpack.c.h.b16 %v539
    %v2853 = vunpack.c.l.b16 %v540
    %v2854 = vunpack.c.h.b16 %v540
    %v2855 = vunpack.c.l.b16 %v541
    %v2856 = vunpack.c.h.b16 %v541
    %v2857 = vunpack.c.l.b16 %v542
    %v2858 = vunpack.c.h.b16 %v542
    %v2859 = vunpack.c.l.b16 %v543
    %v2860 = vunpack.c.h.b16 %v543
    %v2861 = vunpack.c.l.b16 %v544
    %v2862 = vunpack.c.h.b16 %v544
    %v2863 = vunpack.c.l.b16 %v545
    %v2864 = vunpack.c.h.b16 %v545
    %v2865 = vunpack.c.l.b16 %v546
    %v2866 = vunpack.c.h.b16 %v546
    %v2867 = vunpack.c.l.b16 %v547
    %v2868 = vunpack.c.h.b16 %v547
    %v2869 = vunpack.c.l.b16 %v548
    %v2870 = vunpack.c.h.b16 %v548
    %v2871 = vunpack.c.l.b16 %v549
    %v2872 = vunpack.c.h.b16 %v549
    %v2873 = vunpack.c.l.b16 %v550
    %v2874 = vunpack.c.h.b16 %v550
    %v2875 = vunpack.c.l.b16 %v551
    %v2876 = vunpack.c.h.b16 %v551
    %v2877 = vunpack.c.l.b16 %v552
    %v2878 = vunpack.c.h.b16 %v552
    %v2879 = vunpack.c.l.b16 %v553
    %v2880 = vunpack.c.h.b16 %v553
    %v2881 = vunpack.c.l.b16 %v554
    %v2882 = vunpack.c.h.b16 %v554
    %v2883 = vunpack.c.l.b16 %v555
    %v2884 = vunpack.c.h.b16 %v555
    %v2885 = vunpack.c.l.b16 %v556
    %v2886 = vunpack.c.h.b16 %v556
    %v2887 = vunpack.c.l.b16 %v557
    %v2888 = vunpack.c.h.b16 %v557
    %v2889 = vunpack.c.l.b16 %v558
    %v2890 = vunpack.c.h.b16 %v558
    %v2891 = vunpack.c.l.b16 %v559
    %v2892 = vunpack.c.h.b16 %v559
    %v2893 = vunpack.c.l.b16 %v560
    %v2894 = vunpack.c.h.b16 %v560
    %v2895 = vunpack.c.l.b16 %v561
    %v2896 = vunpack.c.h.b16 %v561
    %v2897 = vunpack.c.l.b16 %v562
    %v2898 = vunpack.c.h.b16 %v562
    %v2899 = vunpack.c.l.b16 %v563
    %v2900 = vunpack.c.h.b16 %v563
    %v2901 = vunpack.c.l.b16 %v564
    %v2902 = vunpack.c.h.b16 %v564
    %v2903 = vunpack.c.l.b16 %v565
    %v2904 = vunpack.c.h.b16 %v565
    %v2905 = vunpack.c.l.b16 %v566
    %v2906 = vunpack.c.h.b16 %v566
    %v2907 = vunpack.c.l.b16 %v567
    %v2908 = vunpack.c.h.b16 %v567
    %v2909 = vunpack.c.l.b16 %v568
    %v2910 = vunpack.c.h.b16 %v568
    %v2911 = vunpack.c.l.b16 %v569
    %v2912 = vunpack.c.h.b16 %v569
    %v2913 = vunpack.c.l.b16 %v570
    %v2914 = vunpack.c.h.b16 %v570
    %v2915 = vunpack.c.l.b16 %v571
    %v2916 = vunpack.c.h.b16 %v571
    %v2917 = vunpack.c.l.b16 %v572
    %v2918 = vunpack.c.h.b16 %v572
    %v2919 = vunpack.c.l.b16 %v573
    %v2920 = vunpack.c.h.b16 %v573
    %v2921 = vunpack.c.l.b16 %v574
    %v2922 = vunpack.c.h.b16 %v574
    %v2923 = vunpack.c.l.b16 %v575
    %v2924 = vunpack.c.h.b16 %v575
    %v2925 = vunpack.c.l.b16 %v576
    %v2926 = vunpack.c.h.b16 %v576
    %v2927 = vunpack.c.l.b16 %v577
    %v2928 = vunpack.c.h.b16 %v577
    %v2929 = vunpack.c.l.b16 %v578
    %v2930 = vunpack.c.h.b16 %v578
    %v2931 = vunpack.c.l.b16 %v579
    %v2932 = vunpack.c.h.b16 %v579
    %v2933 = vunpack.c.l.b16 %v580
    %v2934 = vunpack.c.h.b16 %v580
    %v2935 = vunpack.c.l.b16 %v581
    %v2936 = vunpack.c.h.b16 %v581
    %v2937 = vunpack.c.l.b16 %v582
    %v2938 = vunpack.c.h.b16 %v582
    %v2939 = vunpack.c.l.b16 %v583
    %v2940 = vunpack.c.h.b16 %v583
    %v2941 = vunpack.c.l.b16 %v584
    %v2942 = vunpack.c.h.b16 %v584
    %v2943 = vunpack.c.l.b16 %v585
    %v2944 = vunpack.c.h.b16 %v585
    %v2945 = vunpack.c.l.b16 %v586
    %v2946 = vunpack.c.h.b16 %v586
    %v2947 = vunpack.c.l.b16 %v587
    %v2948 = vunpack.c.h.b16 %v587
    %v2949 = vunpack.c.l.b16 %v588
    %v2950 = vunpack.c.h.b16 %v588
    %v2951 = vunpack.c.l.b16 %v589
    %v2952 = vunpack.c.h.b16 %v589
    %v2953 = vunpack.c.l.b16 %v590
    %v2954 = vunpack.c.h.b16 %v590
    %v2955 = vunpack.c.l.b16 %v591
    %v2956 = vunpack.c.h.b16 %v591
    %v2957 = vunpack.c.l.b16 %v592
    %v2958 = vunpack.c.h.b16 %v592
    %v2959 = vunpack.c.l.b16 %v593
    %v2960 = vunpack.c.h.b16 %v593
    %v2961 = vunpack.c.l.b16 %v594
    %v2962 = vunpack.c.h.b16 %v594
    %v2963 = vunpack.c.l.b16 %v595
    %v2964 = vunpack.c.h.b16 %v595
    %v2965 = vunpack.c.l.b16 %v596
    %v2966 = vunpack.c.h.b16 %v596
    %v2967 = vunpack.c.l.b16 %v597
    %v2968 = vunpack.c.h.b16 %v597
    %v2969 = vunpack.c.l.b16 %v598
    %v2970 = vunpack.c.h.b16 %v598
    %v2971 = vunpack.c.l.b16 %v599
    %v2972 = vunpack.c.h.b16 %v599
    %v2973 = vunpack.c.l.b16 %v600
    %v2974 = vunpack.c.h.b16 %v600
    %v2975 = vunpack.c.l.b16 %v601
    %v2976 = vunpack.c.h.b16 %v601
    %v2977 = vunpack.c.l.b16 %v602
    %v2978 = vunpack.c.h.b16 %v602
    %v2979 = vunpack.c.l.b16 %v603
    %v2980 = vunpack.c.h.b16 %v603
    %v2981 = vunpack.c.l.b16 %v604
    %v2982 = vunpack.c.h.b16 %v604
    %v2983 = vunpack.c.l.b16 %v605
    %v2984 = vunpack.c.h.b16 %v605
    %v2985 = vunpack.c.l.b16 %v606
    %v2986 = vunpack.c.h.b16 %v606
    %v2987 = vunpack.c.l.b16 %v607
    %v2988 = vunpack.c.h.b16 %v607
    %v2989 = vunpack.c.l.b16 %v608
    %v2990 = vunpack.c.h.b16 %v608
    %v2991 = vunpack.c.l.b16 %v609
    %v2992 = vunpack.c.h.b16 %v609
    %v2993 = vunpack.c.l.b16 %v610
    %v2994 = vunpack.c.h.b16 %v610
    %v2995 = vunpack.c.l.b16 %v611
    %v2996 = vunpack.c.h.b16 %v611
    %v2997 = vunpack.c.l.b16 %v612
    %v2998 = vunpack.c.h.b16 %v612
    %v2999 = vunpack.c.l.b16 %v613
    %v3000 = vunpack.c.h.b16 %v613
    %v3001 = vunpack.c.l.b16 %v614
    %v3002 = vunpack.c.h.b16 %v614
    %v3003 = vunpack.c.l.b16 %v615
    %v3004 = vunpack.c.h.b16 %v615
    %v3005 = vunpack.c.l.b16 %v616
    %v3006 = vunpack.c.h.b16 %v616
    %v3007 = vunpack.c.l.b16 %v617
    %v3008 = vunpack.c.h.b16 %v617
    %v3009 = vunpack.c.l.b16 %v618
    %v3010 = vunpack.c.h.b16 %v618
    %v3011 = vunpack.c.l.b16 %v619
    %v3012 = vunpack.c.h.b16 %v619
    %v3013 = vunpack.c.l.b16 %v620
    %v3014 = vunpack.c.h.b16 %v620
    %v3015 = vunpack.c.l.b16 %v621
    %v3016 = vunpack.c.h.b16 %v621
    %v3017 = vunpack.c.l.b16 %v622
    %v3018 = vunpack.c.h.b16 %v622
    %v3019 = vunpack.c.l.b16 %v623
    %v3020 = vunpack.c.h.b16 %v623
    %v3021 = vunpack.c.l.b16 %v624
    %v3022 = vunpack.c.h.b16 %v624
    %v3023 = vunpack.c.l.b16 %v625
    %v3024 = vunpack.c.h.b16 %v625
    %v3025 = vunpack.c.l.b16 %v626
    %v3026 = vunpack.c.h.b16 %v626
    %v3027 = vunpack.c.l.b16 %v627
    %v3028 = vunpack.c.h.b16 %v627
    %v3029 = vunpack.c.l.b16 %v628
    %v3030 = vunpack.c.h.b16 %v628
    %v3031 = vunpack.c.l.b16 %v629
    %v3032 = vunpack.c.h.b16 %v629
    %v3033 = vunpack.c.l.b16 %v630
    %v3034 = vunpack.c.h.b16 %v630
    %v3035 = vunpack.c.l.b16 %v631
    %v3036 = vunpack.c.h.b16 %v631
    %v3037 = vunpack.c.l.b16 %v632
    %v3038 = vunpack.c.h.b16 %v632
    %v3039 = vunpack.c.l.b16 %v633
    %v3040 = vunpack.c.h.b16 %v633
    %v3041 = vunpack.c.l.b16 %v634
    %v3042 = vunpack.c.h.b16 %v634
    %v3043 = vunpack.c.l.b16 %v635
    %v3044 = vunpack.c.h.b16 %v635
    %v3045 = vunpack.c.l.b16 %v636
    %v3046 = vunpack.c.h.b16 %v636
    %v3047 = vunpack.c.l.b16 %v637
    %v3048 = vunpack.c.h.b16 %v637
    %v3049 = vunpack.c.l.b16 %v638
    %v3050 = vunpack.c.h.b16 %v638
    %v3051 = vunpack.c.l.b16 %v639
    %v3052 = vunpack.c.h.b16 %v639
    %v3053 = vunpack.c.l.b16 %v640
    %v3054 = vunpack.c.h.b16 %v640
    %v3055 = vunpack.c.l.b16 %v641
    %v3056 = vunpack.c.h.b16 %v641
    %v3057 = vunpack.c.l.b16 %v642
    %v3058 = vunpack.c.h.b16 %v642
    %v3059 = vunpack.c.l.b16 %v643
    %v3060 = vunpack.c.h.b16 %v643
    %v3061 = vunpack.c.l.b16 %v644
    %v3062 = vunpack.c.h.b16 %v644
    %v3063 = vunpack.c.l.b16 %v645
    %v3064 = vunpack.c.h.b16 %v645
    %v3065 = vunpack.c.l.b16 %v646
    %v3066 = vunpack.c.h.b16 %v646
    %v3067 = vunpack.c.l.b16 %v647
    %v3068 = vunpack.c.h.b16 %v647
    %v3069 = vunpack.c.l.b16 %v648
    %v3070 = vunpack.c.h.b16 %v648
    %v3071 = vunpack.c.l.b16 %v649
    %v3072 = vunpack.c.h.b16 %v649
    %v3073 = vunpack.c.l.b16 %v650
    %v3074 = vunpack.c.h.b16 %v650
    %v3075 = vunpack.c.l.b16 %v651
    %v3076 = vunpack.c.h.b16 %v651
    %v3077 = vunpack.c.l.b16 %v652
    %v3078 = vunpack.c.h.b16 %v652
    %v3079 = vunpack.c.l.b16 %v653
    %v3080 = vunpack.c.h.b16 %v653
    %v3081 = vunpack.c.l.b16 %v654
    %v3082 = vunpack.c.h.b16 %v654
    %v3083 = vunpack.c.l.b16 %v655
    %v3084 = vunpack.c.h.b16 %v655
    %v3085 = vunpack.c.l.b16 %v656
    %v3086 = vunpack.c.h.b16 %v656
    %v3087 = vunpack.c.l.b16 %v657
    %v3088 = vunpack.c.h.b16 %v657
    %v3089 = vunpack.c.l.b16 %v658
    %v3090 = vunpack.c.h.b16 %v658
    %v3091 = vunpack.c.l.b16 %v659
    %v3092 = vunpack.c.h.b16 %v659
    %v3093 = vunpack.c.l.b16 %v660
    %v3094 = vunpack.c.h.b16 %v660
    %v3095 = vunpack.c.l.b16 %v661
    %v3096 = vunpack.c.h.b16 %v661
    %v3097 = vunpack.c.l.b16 %v662
    %v3098 = vunpack.c.h.b16 %v662
    %v3099 = vunpack.c.l.b16 %v663
    %v3100 = vunpack.c.h.b16 %v663
    %v3101 = vunpack.c.l.b16 %v664
    %v3102 = vunpack.c.h.b16 %v664
    %v3103 = vunpack.c.l.b16 %v665
    %v3104 = vunpack.c.h.b16 %v665
    %v3105 = vunpack.c.l.b16 %v666
    %v3106 = vunpack.c.h.b16 %v666
    %v3107 = vunpack.c.l.b16 %v667
    %v3108 = vunpack.c.h.b16 %v667
    %v3109 = vunpack.c.l.b16 %v668
    %v3110 = vunpack.c.h.b16 %v668
    %v3111 = vunpack.c.l.b16 %v669
    %v3112 = vunpack.c.h.b16 %v669
    %v3113 = vunpack.c.l.b16 %v670
    %v3114 = vunpack.c.h.b16 %v670
    %v3115 = vunpack.c.l.b16 %v671
    %v3116 = vunpack.c.h.b16 %v671
    %v3117 = vunpack.c.l.b16 %v672
    %v3118 = vunpack.c.h.b16 %v672
    %v3119 = vunpack.c.l.b16 %v673
    %v3120 = vunpack.c.h.b16 %v673
    %v3121 = vunpack.c.l.b16 %v674
    %v3122 = vunpack.c.h.b16 %v674
    %v3123 = vunpack.c.l.b16 %v675
    %v3124 = vunpack.c.h.b16 %v675
    %v3125 = vunpack.c.l.b16 %v676
    %v3126 = vunpack.c.h.b16 %v676
    %v3127 = vunpack.c.l.b16 %v677
    %v3128 = vunpack.c.h.b16 %v677
    %v3129 = vunpack.c.l.b16 %v678
    %v3130 = vunpack.c.h.b16 %v678
    %v3131 = vunpack.c.l.b16 %v679
    %v3132 = vunpack.c.h.b16 %v679
    %v3133 = vunpack.c.l.b16 %v680
    %v3134 = vunpack.c.h.b16 %v680
    %v3135 = vunpack.c.l.b16 %v681
    %v3136 = vunpack.c.h.b16 %v681
    %v3137 = vunpack.c.l.b16 %v682
    %v3138 = vunpack.c.h.b16 %v682
    %v3139 = vunpack.c.l.b16 %v683
    %v3140 = vunpack.c.h.b16 %v683
    %v3141 = vunpack.c.l.b16 %v684
    %v3142 = vunpack.c.h.b16 %v684
    %v3143 = vunpack.c.l.b16 %v685
    %v3144 = vunpack.c.h.b16 %v685
    %v3145 = vunpack.c.l.b16 %v686
    %v3146 = vunpack.c.h.b16 %v686
    %v3147 = vunpack.c.l.b16 %v687
    %v3148 = vunpack.c.h.b16 %v687
    %v3149 = vunpack.c.l.b16 %v688
    %v3150 = vunpack.c.h.b16 %v688
    %v3151 = vunpack.c.l.b16 %v689
    %v3152 = vunpack.c.h.b16 %v689
    %v3153 = vunpack.c.l.b16 %v690
    %v3154 = vunpack.c.h.b16 %v690
    %v3155 = vunpack.c.l.b16 %v691
    %v3156 = vunpack.c.h.b16 %v691
    %v3157 = vunpack.c.l.b16 %v692
    %v3158 = vunpack.c.h.b16 %v692
    %v3159 = vunpack.c.l.b16 %v693
    %v3160 = vunpack.c.h.b16 %v693
    %v3161 = vunpack.c.l.b16 %v694
    %v3162 = vunpack.c.h.b16 %v694
    %v3163 = vunpack.c.l.b16 %v695
    %v3164 = vunpack.c.h.b16 %v695
    %v3165 = vunpack.c.l.b16 %v696
    %v3166 = vunpack.c.h.b16 %v696
    %v3167 = vunpack.c.l.b16 %v697
    %v3168 = vunpack.c.h.b16 %v697
    %v3169 = vunpack.c.l.b16 %v698
    %v3170 = vunpack.c.h.b16 %v698
    %v3171 = vunpack.c.l.b16 %v699
    %v3172 = vunpack.c.h.b16 %v699
    %v3173 = vunpack.c.l.b16 %v700
    %v3174 = vunpack.c.h.b16 %v700
    %v3175 = vunpack.c.l.b16 %v701
    %v3176 = vunpack.c.h.b16 %v701
    %v3177 = vunpack.c.l.b16 %v702
    %v3178 = vunpack.c.h.b16 %v702
    %v3179 = vunpack.c.l.b16 %v703
    %v3180 = vunpack.c.h.b16 %v703
    %v3181 = vunpack.c.l.b16 %v704
    %v3182 = vunpack.c.h.b16 %v704
    %v3183 = vunpack.c.l.b16 %v705
    %v3184 = vunpack.c.h.b16 %v705
    %v3185 = vunpack.c.l.b16 %v706
    %v3186 = vunpack.c.h.b16 %v706
    %v3187 = vunpack.c.l.b16 %v707
    %v3188 = vunpack.c.h.b16 %v707
    %v3189 = vunpack.c.l.b16 %v708
    %v3190 = vunpack.c.h.b16 %v708
    %v3191 = vunpack.c.l.b16 %v709
    %v3192 = vunpack.c.h.b16 %v709
    %v3193 = vunpack.c.l.b16 %v710
    %v3194 = vunpack.c.h.b16 %v710
    %v3195 = vunpack.c.l.b16 %v711
    %v3196 = vunpack.c.h.b16 %v711
    %v3197 = vunpack.c.l.b16 %v712
    %v3198 = vunpack.c.h.b16 %v712
    %v3199 = vunpack.c.l.b16 %v713
    %v3200 = vunpack.c.h.b16 %v713
    %v3201 = vunpack.c.l.b16 %v714
    %v3202 = vunpack.c.h.b16 %v714
    %v3203 = vunpack.c.l.b16 %v715
    %v3204 = vunpack.c.h.b16 %v715
    %v3205 = vunpack.c.l.b16 %v716
    %v3206 = vunpack.c.h.b16 %v716
    %v3207 = vunpack.c.l.b16 %v717
    %v3208 = vunpack.c.h.b16 %v717
    %v3209 = vunpack.c.l.b16 %v718
    %v3210 = vunpack.c.h.b16 %v718
    %v3211 = vunpack.c.l.b16 %v719
    %v3212 = vunpack.c.h.b16 %v719
    %v3213 = vunpack.c.l.b16 %v720
    %v3214 = vunpack.c.h.b16 %v720
    %v3215 = vunpack.c.l.b16 %v721
    %v3216 = vunpack.c.h.b16 %v721
    %v3217 = vunpack.c.l.b16 %v722
    %v3218 = vunpack.c.h.b16 %v722
    %v3219 = vunpack.c.l.b16 %v723
    %v3220 = vunpack.c.h.b16 %v723
    %v3221 = vunpack.c.l.b16 %v724
    %v3222 = vunpack.c.h.b16 %v724
    %v3223 = vunpack.c.l.b16 %v725
    %v3224 = vunpack.c.h.b16 %v725
    %v3225 = vunpack.c.l.b16 %v726
    %v3226 = vunpack.c.h.b16 %v726
    %v3227 = vunpack.c.l.b16 %v727
    %v3228 = vunpack.c.h.b16 %v727
    %v3229 = vunpack.c.l.b16 %v728
    %v3230 = vunpack.c.h.b16 %v728
    %v3231 = vunpack.c.l.b16 %v729
    %v3232 = vunpack.c.h.b16 %v729
    %v3233 = vunpack.c.l.b16 %v730
    %v3234 = vunpack.c.h.b16 %v730
    %v3235 = vunpack.c.l.b16 %v731
    %v3236 = vunpack.c.h.b16 %v731
    %v3237 = vunpack.c.l.b16 %v732
    %v3238 = vunpack.c.h.b16 %v732
    %v3239 = vunpack.c.l.b16 %v733
    %v3240 = vunpack.c.h.b16 %v733
    %v3241 = vunpack.c.l.b16 %v734
    %v3242 = vunpack.c.h.b16 %v734
    %v3243 = vunpack.c.l.b16 %v735
    %v3244 = vunpack.c.h.b16 %v735
    %v3245 = vunpack.c.l.b16 %v736
    %v3246 = vunpack.c.h.b16 %v736
    %v3247 = vunpack.c.l.b16 %v737
    %v3248 = vunpack.c.h.b16 %v737
    %v3249 = vunpack.c.l.b16 %v738
    %v3250 = vunpack.c.h.b16 %v738
    %v3251 = vunpack.c.l.b16 %v739
    %v3252 = vunpack.c.h.b16 %v739
    %v3253 = vunpack.c.l.b16 %v740
    %v3254 = vunpack.c.h.b16 %v740
    %v3255 = vunpack.c.l.b16 %v741
    %v3256 = vunpack.c.h.b16 %v741
    %v3257 = vunpack.c.l.b16 %v742
    %v3258 = vunpack.c.h.b16 %v742
    %v3259 = vunpack.c.l.b16 %v743
    %v3260 = vunpack.c.h.b16 %v743
    %v3261 = vunpack.c.l.b16 %v744
    %v3262 = vunpack.c.h.b16 %v744
    %v3263 = vunpack.c.l.b16 %v745
    %v3264 = vunpack.c.h.b16 %v745
    %v3265 = vunpack.c.l.b16 %v746
    %v3266 = vunpack.c.h.b16 %v746
    %v3267 = vunpack.c.l.b16 %v747
    %v3268 = vunpack.c.h.b16 %v747
    %v3269 = vunpack.c.l.b16 %v748
    %v3270 = vunpack.c.h.b16 %v748
    %v3271 = vunpack.c.l.b16 %v749
    %v3272 = vunpack.c.h.b16 %v749
    %v3273 = vunpack.c.l.b16 %v750
    %v3274 = vunpack.c.h.b16 %v750
    %v3275 = vunpack.c.l.b16 %v751
    %v3276 = vunpack.c.h.b16 %v751
    %v3277 = vunpack.c.l.b16 %v752
    %v3278 = vunpack.c.h.b16 %v752
    %v3279 = vunpack.c.l.b16 %v753
    %v3280 = vunpack.c.h.b16 %v753
    %v3281 = vunpack.c.l.b16 %v754
    %v3282 = vunpack.c.h.b16 %v754
    %v3283 = vunpack.c.l.b16 %v755
    %v3284 = vunpack.c.h.b16 %v755
    %v3285 = vunpack.c.l.b16 %v756
    %v3286 = vunpack.c.h.b16 %v756
    %v3287 = vunpack.c.l.b16 %v757
    %v3288 = vunpack.c.h.b16 %v757
    %v3289 = vunpack.c.l.b16 %v758
    %v3290 = vunpack.c.h.b16 %v758
    %v3291 = vunpack.c.l.b16 %v759
    %v3292 = vunpack.c.h.b16 %v759
    %v3293 = vunpack.c.l.b16 %v760
    %v3294 = vunpack.c.h.b16 %v760
    %v3295 = vunpack.c.l.b16 %v761
    %v3296 = vunpack.c.h.b16 %v761
    %v3297 = vunpack.c.l.b16 %v762
    %v3298 = vunpack.c.h.b16 %v762
    %v3299 = vunpack.c.l.b16 %v763
    %v3300 = vunpack.c.h.b16 %v763
    %v3301 = vunpack.c.l.b16 %v764
    %v3302 = vunpack.c.h.b16 %v764
    %v3303 = vunpack.c.l.b16 %v765
    %v3304 = vunpack.c.h.b16 %v765
    %v3305 = vunpack.c.l.b16 %v766
    %v3306 = vunpack.c.h.b16 %v766
    %v3307 = vunpack.c.l.b16 %v767
    %v3308 = vunpack.c.h.b16 %v767
    %v3309 = vunpack.c.l.b16 %v768
    %v3310 = vunpack.c.h.b16 %v768
    %v3311 = vunpack.c.l.b16 %v769
    %v3312 = vunpack.c.h.b16 %v769
    %v3313 = vunpack.c.l.b16 %v770
    %v3314 = vunpack.c.h.b16 %v770
    %v3315 = vunpack.c.l.b16 %v771
    %v3316 = vunpack.c.h.b16 %v771
    %v3317 = vunpack.c.l.b16 %v772
    %v3318 = vunpack.c.h.b16 %v772
    %v3319 = vunpack.c.l.b16 %v773
    %v3320 = vunpack.c.h.b16 %v773
    %v3321 = vunpack.c.l.b16 %v774
    %v3322 = vunpack.c.h.b16 %v774
    %v3323 = vunpack.c.l.b16 %v775
    %v3324 = vunpack.c.h.b16 %v775
    %v3325 = vunpack.c.l.b16 %v776
    %v3326 = vunpack.c.h.b16 %v776
    %v3327 = vunpack.c.l.b16 %v777
    %v3328 = vunpack.c.h.b16 %v777
    %v3329 = vunpack.c.l.b16 %v778
    %v3330 = vunpack.c.h.b16 %v778
    %v3331 = vunpack.c.l.b16 %v779
    %v3332 = vunpack.c.h.b16 %v779
    %v3333 = vunpack.c.l.b16 %v780
    %v3334 = vunpack.c.h.b16 %v780
    %v3335 = vunpack.c.l.b16 %v781
    %v3336 = vunpack.c.h.b16 %v781
    %v3337 = vunpack.c.l.b16 %v782
    %v3338 = vunpack.c.h.b16 %v782
    %v3339 = vunpack.c.l.b16 %v783
    %v3340 = vunpack.c.h.b16 %v783
    %v3341 = vunpack.c.l.b16 %v784
    %v3342 = vunpack.c.h.b16 %v784
    %v3343 = vunpack.c.l.b16 %v785
    %v3344 = vunpack.c.h.b16 %v785
    %v3345 = vunpack.c.l.b16 %v786
    %v3346 = vunpack.c.h.b16 %v786
    %v3347 = vunpack.c.l.b16 %v787
    %v3348 = vunpack.c.h.b16 %v787
    %v3349 = vunpack.c.l.b16 %v788
    %v3350 = vunpack.c.h.b16 %v788
    %v3351 = vunpack.c.l.b16 %v789
    %v3352 = vunpack.c.h.b16 %v789
    %v3353 = vunpack.c.l.b16 %v790
    %v3354 = vunpack.c.h.b16 %v790
    %v3355 = vunpack.c.l.b16 %v791
    %v3356 = vunpack.c.h.b16 %v791
    %v3357 = vunpack.c.l.b16 %v792
    %v3358 = vunpack.c.h.b16 %v792
    %v3359 = vunpack.c.l.b16 %v793
    %v3360 = vunpack.c.h.b16 %v793
    %v3361 = vunpack.c.l.b16 %v794
    %v3362 = vunpack.c.h.b16 %v794
    %v3363 = vunpack.c.l.b16 %v795
    %v3364 = vunpack.c.h.b16 %v795
    %v3365 = vunpack.c.l.b16 %v796
    %v3366 = vunpack.c.h.b16 %v796
    %v3367 = vunpack.c.l.b16 %v797
    %v3368 = vunpack.c.h.b16 %v797
    %v3369 = vunpack.c.l.b16 %v798
    %v3370 = vunpack.c.h.b16 %v798
    %v3371 = vunpack.c.l.b16 %v799
    %v3372 = vunpack.c.h.b16 %v799
    %v3373 = vunpack.c.l.b16 %v800
    %v3374 = vunpack.c.h.b16 %v800
    %v3375 = vunpack.c.l.b16 %v801
    %v3376 = vunpack.c.h.b16 %v801
    %v3377 = vunpack.c.l.b16 %v802
    %v3378 = vunpack.c.h.b16 %v802
    %v3379 = vunpack.c.l.b16 %v803
    %v3380 = vunpack.c.h.b16 %v803
    %v3381 = vunpack.c.l.b16 %v804
    %v3382 = vunpack.c.h.b16 %v804
    %v3383 = vunpack.c.l.b16 %v805
    %v3384 = vunpack.c.h.b16 %v805
    %v3385 = vunpack.c.l.b16 %v806
    %v3386 = vunpack.c.h.b16 %v806
    %v3387 = vunpack.c.l.b16 %v807
    %v3388 = vunpack.c.h.b16 %v807
    %v3389 = vunpack.c.l.b16 %v808
    %v3390 = vunpack.c.h.b16 %v808
    %v3391 = vunpack.c.l.b16 %v809
    %v3392 = vunpack.c.h.b16 %v809
    %v3393 = vunpack.c.l.b16 %v810
    %v3394 = vunpack.c.h.b16 %v810
    %v3395 = vunpack.c.l.b16 %v811
    %v3396 = vunpack.c.h.b16 %v811
    %v3397 = vunpack.c.l.b16 %v812
    %v3398 = vunpack.c.h.b16 %v812
    %v3399 = vunpack.c.l.b16 %v813
    %v3400 = vunpack.c.h.b16 %v813
    %v3401 = vunpack.c.l.b16 %v814
    %v3402 = vunpack.c.h.b16 %v814
    %v3403 = vunpack.c.l.b16 %v815
    %v3404 = vunpack.c.h.b16 %v815
    %v3405 = vunpack.c.l.b16 %v816
    %v3406 = vunpack.c.h.b16 %v816
    %v3407 = vunpack.c.l.b16 %v817
    %v3408 = vunpack.c.h.b16 %v817
    %v3409 = vunpack.c.l.b16 %v818
    %v3410 = vunpack.c.h.b16 %v818
    %v3411 = vunpack.c.l.b16 %v819
    %v3412 = vunpack.c.h.b16 %v819
    %v3413 = vunpack.c.l.b16 %v820
    %v3414 = vunpack.c.h.b16 %v820
    %v3415 = vunpack.c.l.b16 %v821
    %v3416 = vunpack.c.h.b16 %v821
    %v3417 = vunpack.c.l.b16 %v822
    %v3418 = vunpack.c.h.b16 %v822
    %v3419 = vunpack.c.l.b16 %v823
    %v3420 = vunpack.c.h.b16 %v823
    %v3421 = vunpack.c.l.b16 %v824
    %v3422 = vunpack.c.h.b16 %v824
    %v3423 = vunpack.c.l.b16 %v825
    %v3424 = vunpack.c.h.b16 %v825
    %v3425 = vunpack.c.l.b16 %v826
    %v3426 = vunpack.c.h.b16 %v826
    %v3427 = vunpack.c.l.b16 %v827
    %v3428 = vunpack.c.h.b16 %v827
    %v3429 = vunpack.c.l.b16 %v828
    %v3430 = vunpack.c.h.b16 %v828
    %v3431 = vunpack.c.l.b16 %v829
    %v3432 = vunpack.c.h.b16 %v829
    %v3433 = vunpack.c.l.b16 %v830
    %v3434 = vunpack.c.h.b16 %v830
    %v3435 = vunpack.c.l.b16 %v831
    %v3436 = vunpack.c.h.b16 %v831
    %v3437 = vunpack.c.l.b16 %v832
    %v3438 = vunpack.c.h.b16 %v832
    %v3439 = vunpack.c.l.b16 %v833
    %v3440 = vunpack.c.h.b16 %v833
    %v3441 = vunpack.c.l.b16 %v834
    %v3442 = vunpack.c.h.b16 %v834
    %v3443 = vunpack.c.l.b16 %v835
    %v3444 = vunpack.c.h.b16 %v835
    %v3445 = vunpack.c.l.b16 %v836
    %v3446 = vunpack.c.h.b16 %v836
    %v3447 = vunpack.c.l.b16 %v837
    %v3448 = vunpack.c.h.b16 %v837
    %v3449 = vunpack.c.l.b16 %v838
    %v3450 = vunpack.c.h.b16 %v838
    %v3451 = vunpack.c.l.b16 %v839
    %v3452 = vunpack.c.h.b16 %v839
    %v3453 = vunpack.c.l.b16 %v840
    %v3454 = vunpack.c.h.b16 %v840
    %v3455 = vunpack.c.l.b16 %v841
    %v3456 = vunpack.c.h.b16 %v841
    %v3457 = vunpack.c.l.b16 %v842
    %v3458 = vunpack.c.h.b16 %v842
    %v3459 = vunpack.c.l.b16 %v843
    %v3460 = vunpack.c.h.b16 %v843
    %v3461 = vunpack.c.l.b16 %v844
    %v3462 = vunpack.c.h.b16 %v844
    %v3463 = vunpack.c.l.b16 %v845
    %v3464 = vunpack.c.h.b16 %v845
    %v3465 = vunpack.c.l.b16 %v846
    %v3466 = vunpack.c.h.b16 %v846
    %v3467 = vunpack.c.l.b16 %v847
    %v3468 = vunpack.c.h.b16 %v847
    %v3469 = vunpack.c.l.b16 %v848
    %v3470 = vunpack.c.h.b16 %v848
    %v3471 = vunpack.c.l.b16 %v849
    %v3472 = vunpack.c.h.b16 %v849
    %v3473 = vunpack.c.l.b16 %v850
    %v3474 = vunpack.c.h.b16 %v850
    %v3475 = vunpack.c.l.b16 %v851
    %v3476 = vunpack.c.h.b16 %v851
    %v3477 = vunpack.c.l.b16 %v852
    %v3478 = vunpack.c.h.b16 %v852
    %v3479 = vunpack.c.l.b16 %v853
    %v3480 = vunpack.c.h.b16 %v853
    %v3481 = vunpack.c.l.b16 %v854
    %v3482 = vunpack.c.h.b16 %v854
    %v3483 = vunpack.c.l.b16 %v855
    %v3484 = vunpack.c.h.b16 %v855
    %v3485 = vunpack.c.l.b16 %v856
    %v3486 = vunpack.c.h.b16 %v856
    %v3487 = vunpack.c.l.b16 %v857
    %v3488 = vunpack.c.h.b16 %v857
    %v3489 = vunpack.c.l.b16 %v858
    %v3490 = vunpack.c.h.b16 %v858
    %v3491 = vunpack.c.l.b16 %v859
    %v3492 = vunpack.c.h.b16 %v859
    %v3493 = vunpack.c.l.b16 %v860
    %v3494 = vunpack.c.h.b16 %v860
    %v3495 = vunpack.c.l.b16 %v861
    %v3496 = vunpack.c.h.b16 %v861
    %v3497 = vunpack.c.l.b16 %v862
    %v3498 = vunpack.c.h.b16 %v862
    %v3499 = vunpack.c.l.b16 %v863
    %v3500 = vunpack.c.h.b16 %v863
    %v3501 = vunpack.c.l.b16 %v864
    %v3502 = vunpack.c.h.b16 %v864
    %v3503 = vunpack.c.l.b16 %v865
    %v3504 = vunpack.c.h.b16 %v865
    %v3505 = vunpack.c.l.b16 %v866
    %v3506 = vunpack.c.h.b16 %v866
    %v3507 = vunpack.c.l.b16 %v867
    %v3508 = vunpack.c.h.b16 %v867
    %v3509 = vunpack.c.l.b16 %v868
    %v3510 = vunpack.c.h.b16 %v868
    %v3511 = vunpack.c.l.b16 %v869
    %v3512 = vunpack.c.h.b16 %v869
    %v3513 = vunpack.c.l.b16 %v870
    %v3514 = vunpack.c.h.b16 %v870
    %v3515 = vunpack.c.l.b16 %v871
    %v3516 = vunpack.c.h.b16 %v871
    %v3517 = vunpack.c.l.b16 %v872
    %v3518 = vunpack.c.h.b16 %v872
    %v3519 = vunpack.c.l.b16 %v873
    %v3520 = vunpack.c.h.b16 %v873
    %v3521 = vunpack.c.l.b16 %v874
    %v3522 = vunpack.c.h.b16 %v874
    %v3523 = vunpack.c.l.b16 %v875
    %v3524 = vunpack.c.h.b16 %v875
    %v3525 = vunpack.c.l.b16 %v876
    %v3526 = vunpack.c.h.b16 %v876
    %v3527 = vunpack.c.l.b16 %v877
    %v3528 = vunpack.c.h.b16 %v877
    %v3529 = vunpack.c.l.b16 %v878
    %v3530 = vunpack.c.h.b16 %v878
    %v3531 = vunpack.c.l.b16 %v879
    %v3532 = vunpack.c.h.b16 %v879
    %v3533 = vunpack.c.l.b16 %v880
    %v3534 = vunpack.c.h.b16 %v880
    %v3535 = vunpack.c.l.b16 %v881
    %v3536 = vunpack.c.h.b16 %v881
    %v3537 = vunpack.c.l.b16 %v882
    %v3538 = vunpack.c.h.b16 %v882
    %v3539 = vunpack.c.l.b16 %v883
    %v3540 = vunpack.c.h.b16 %v883
    %v3541 = vunpack.c.l.b16 %v884
    %v3542 = vunpack.c.h.b16 %v884
    %v3543 = vunpack.c.l.b16 %v885
    %v3544 = vunpack.c.h.b16 %v885
    %v3545 = vunpack.c.l.b16 %v886
    %v3546 = vunpack.c.h.b16 %v886
    %v3547 = vunpack.c.l.b16 %v887
    %v3548 = vunpack.c.h.b16 %v887
    %v3549 = vunpack.c.l.b16 %v888
    %v3550 = vunpack.c.h.b16 %v888
    %v3551 = vunpack.c.l.b16 %v889
    %v3552 = vunpack.c.h.b16 %v889
    %v3553 = vunpack.c.l.b16 %v890
    %v3554 = vunpack.c.h.b16 %v890
    %v3555 = vunpack.c.l.b16 %v891
    %v3556 = vunpack.c.h.b16 %v891
    %v3557 = vunpack.c.l.b16 %v892
    %v3558 = vunpack.c.h.b16 %v892
    %v3559 = vunpack.c.l.b16 %v893
    %v3560 = vunpack.c.h.b16 %v893
    %v3561 = vunpack.c.l.b16 %v894
    %v3562 = vunpack.c.h.b16 %v894
    %v3563 = vunpack.c.l.b16 %v895
    %v3564 = vunpack.c.h.b16 %v895
    %v3565 = vunpack.c.l.b16 %v896
    %v3566 = vunpack.c.h.b16 %v896
    %v3567 = vunpack.c.l.b16 %v897
    %v3568 = vunpack.c.h.b16 %v897
    %v3569 = vunpack.c.l.b16 %v898
    %v3570 = vunpack.c.h.b16 %v898
    %v3571 = vunpack.c.l.b16 %v899
    %v3572 = vunpack.c.h.b16 %v899
    %v3573 = vunpack.c.l.b16 %v900
    %v3574 = vunpack.c.h.b16 %v900
    %v3575 = vunpack.c.l.b16 %v901
    %v3576 = vunpack.c.h.b16 %v901
    %v3577 = vunpack.c.l.b16 %v902
    %v3578 = vunpack.c.h.b16 %v902
    %v3579 = vunpack.c.l.b16 %v903
    %v3580 = vunpack.c.h.b16 %v903
    %v3581 = vunpack.c.l.b16 %v904
    %v3582 = vunpack.c.h.b16 %v904
    %v3583 = vunpack.c.l.b16 %v905
    %v3584 = vunpack.c.h.b16 %v905
    %v3585 = vunpack.c.l.b16 %v906
    %v3586 = vunpack.c.h.b16 %v906
    %v3587 = vunpack.c.l.b16 %v907
    %v3588 = vunpack.c.h.b16 %v907
    %v3589 = vunpack.c.l.b16 %v908
    %v3590 = vunpack.c.h.b16 %v908
    %v3591 = vunpack.c.l.b16 %v909
    %v3592 = vunpack.c.h.b16 %v909
    %v3593 = vunpack.c.l.b16 %v910
    %v3594 = vunpack.c.h.b16 %v910
    %v3595 = vunpack.c.l.b16 %v911
    %v3596 = vunpack.c.h.b16 %v911
    %v3597 = vunpack.c.l.b16 %v912
    %v3598 = vunpack.c.h.b16 %v912
    %v3599 = vunpack.c.l.b16 %v913
    %v3600 = vunpack.c.h.b16 %v913
    %v3601 = vunpack.c.l.b16 %v914
    %v3602 = vunpack.c.h.b16 %v914
    %v3603 = vunpack.c.l.b16 %v915
    %v3604 = vunpack.c.h.b16 %v915
    %v3605 = vunpack.c.l.b16 %v916
    %v3606 = vunpack.c.h.b16 %v916
    %v3607 = vunpack.c.l.b16 %v917
    %v3608 = vunpack.c.h.b16 %v917
    %v3609 = vunpack.c.l.b16 %v918
    %v3610 = vunpack.c.h.b16 %v918
    %v3611 = vunpack.c.l.b16 %v919
    %v3612 = vunpack.c.h.b16 %v919
    %v3613 = vunpack.c.l.b16 %v920
    %v3614 = vunpack.c.h.b16 %v920
    %v3615 = vunpack.c.l.b16 %v921
    %v3616 = vunpack.c.h.b16 %v921
    %v3617 = vunpack.c.l.b16 %v922
    %v3618 = vunpack.c.h.b16 %v922
    %v3619 = vunpack.c.l.b16 %v923
    %v3620 = vunpack.c.h.b16 %v923
    %v3621 = vunpack.c.l.b16 %v924
    %v3622 = vunpack.c.h.b16 %v924
    %v3623 = vunpack.c.l.b16 %v925
    %v3624 = vunpack.c.h.b16 %v925
    %v3625 = vunpack.c.l.b16 %v926
    %v3626 = vunpack.c.h.b16 %v926
    %v3627 = vunpack.c.l.b16 %v927
    %v3628 = vunpack.c.h.b16 %v927
    %v3629 = vunpack.c.l.b16 %v928
    %v3630 = vunpack.c.h.b16 %v928
    %v3631 = vunpack.c.l.b16 %v929
    %v3632 = vunpack.c.h.b16 %v929
    %v3633 = vunpack.c.l.b16 %v930
    %v3634 = vunpack.c.h.b16 %v930
    %v3635 = vunpack.c.l.b16 %v931
    %v3636 = vunpack.c.h.b16 %v931
    %v3637 = vunpack.c.l.b16 %v932
    %v3638 = vunpack.c.h.b16 %v932
    %v3639 = vunpack.c.l.b16 %v933
    %v3640 = vunpack.c.h.b16 %v933
    %v3641 = vunpack.c.l.b16 %v934
    %v3642 = vunpack.c.h.b16 %v934
    %v3643 = vunpack.c.l.b16 %v935
    %v3644 = vunpack.c.h.b16 %v935
    %v3645 = vunpack.c.l.b16 %v936
    %v3646 = vunpack.c.h.b16 %v936
    %v3647 = vunpack.c.l.b16 %v937
    %v3648 = vunpack.c.h.b16 %v937
    %v3649 = vunpack.c.l.b16 %v938
    %v3650 = vunpack.c.h.b16 %v938
    %v3651 = vunpack.c.l.b16 %v939
    %v3652 = vunpack.c.h.b16 %v939
    %v3653 = vunpack.c.l.b16 %v940
    %v3654 = vunpack.c.h.b16 %v940
    %v3655 = vunpack.c.l.b16 %v941
    %v3656 = vunpack.c.h.b16 %v941
    %v3657 = vunpack.c.l.b16 %v942
    %v3658 = vunpack.c.h.b16 %v942
    %v3659 = vunpack.c.l.b16 %v943
    %v3660 = vunpack.c.h.b16 %v943
    %v3661 = vunpack.c.l.b16 %v944
    %v3662 = vunpack.c.h.b16 %v944
    %v3663 = vunpack.c.l.b16 %v945
    %v3664 = vunpack.c.h.b16 %v945
    %v3665 = vunpack.c.l.b16 %v946
    %v3666 = vunpack.c.h.b16 %v946
    %v3667 = vunpack.c.l.b16 %v947
    %v3668 = vunpack.c.h.b16 %v947
    %v3669 = vunpack.c.l.b16 %v948
    %v3670 = vunpack.c.h.b16 %v948
    %v3671 = vunpack.c.l.b16 %v949
    %v3672 = vunpack.c.h.b16 %v949
    %v3673 = vunpack.c.l.b16 %v950
    %v3674 = vunpack.c.h.b16 %v950
    %v3675 = vunpack.c.l.b16 %v951
    %v3676 = vunpack.c.h.b16 %v951
    %v3677 = vunpack.c.l.b16 %v952
    %v3678 = vunpack.c.h.b16 %v952
    %v3679 = vunpack.c.l.b16 %v953
    %v3680 = vunpack.c.h.b16 %v953
    %v3681 = vunpack.c.l.b16 %v954
    %v3682 = vunpack.c.h.b16 %v954
    %v3683 = vunpack.c.l.b16 %v955
    %v3684 = vunpack.c.h.b16 %v955
    %v3685 = vunpack.c.l.b16 %v956
    %v3686 = vunpack.c.h.b16 %v956
    %v3687 = vunpack.c.l.b16 %v957
    %v3688 = vunpack.c.h.b16 %v957
    %v3689 = vunpack.c.l.b16 %v958
    %v3690 = vunpack.c.h.b16 %v958
    %v3691 = vunpack.c.l.b16 %v959
    %v3692 = vunpack.c.h.b16 %v959
    %v3693 = vunpack.c.l.b16 %v960
    %v3694 = vunpack.c.h.b16 %v960
    %v3695 = vunpack.c.l.b16 %v961
    %v3696 = vunpack.c.h.b16 %v961
    %v3697 = vunpack.c.l.b16 %v962
    %v3698 = vunpack.c.h.b16 %v962
    %v3699 = vunpack.c.l.b16 %v963
    %v3700 = vunpack.c.h.b16 %v963
    %v3701 = vunpack.c.l.b16 %v964
    %v3702 = vunpack.c.h.b16 %v964
    %v3703 = vunpack.c.l.b16 %v965
    %v3704 = vunpack.c.h.b16 %v965
    %v3705 = vunpack.c.l.b16 %v966
    %v3706 = vunpack.c.h.b16 %v966
    %v3707 = vunpack.c.l.b16 %v967
    %v3708 = vunpack.c.h.b16 %v967
    %v3709 = vunpack.c.l.b16 %v968
    %v3710 = vunpack.c.h.b16 %v968
    %v3711 = vunpack.c.l.b16 %v969
    %v3712 = vunpack.c.h.b16 %v969
    %v3713 = vunpack.c.l.b16 %v970
    %v3714 = vunpack.c.h.b16 %v970
    %v3715 = vunpack.c.l.b16 %v971
    %v3716 = vunpack.c.h.b16 %v971
    %v3717 = vunpack.c.l.b16 %v972
    %v3718 = vunpack.c.h.b16 %v972
    %v3719 = vunpack.c.l.b16 %v973
    %v3720 = vunpack.c.h.b16 %v973
    %v3721 = vunpack.c.l.b16 %v974
    %v3722 = vunpack.c.h.b16 %v974
    %v3723 = vunpack.c.l.b16 %v975
    %v3724 = vunpack.c.h.b16 %v975
    %v3725 = vunpack.c.l.b16 %v976
    %v3726 = vunpack.c.h.b16 %v976
    %v3727 = vunpack.c.l.b16 %v977
    %v3728 = vunpack.c.h.b16 %v977
    %v3729 = vunpack.c.l.b16 %v978
    %v3730 = vunpack.c.h.b16 %v978
    %v3731 = vunpack.c.l.b16 %v979
    %v3732 = vunpack.c.h.b16 %v979
    %v3733 = vunpack.c.l.b16 %v980
    %v3734 = vunpack.c.h.b16 %v980
    %v3735 = vunpack.c.l.b16 %v981
    %v3736 = vunpack.c.h.b16 %v981
    %v3737 = vpack.c.b16 %v1953, %v1945
    %v3738 = vpack.c.b16 %v1954, %v1946
    %v3739 = vpack.c.b16 %v1955, %v1947
    %v3740 = vpack.c.b16 %v1956, %v1948
    %v3741 = vpack.c.b16 %v1957, %v1949
    %v3742 = vpack.c.b16 %v1958, %v1950
    %v3743 = vpack.c.b16 %v1959, %v1951
    %v3744 = vpack.c.b16 %v1960, %v1952
    %v3745 = vpack.c.b16 %v1969, %v1961
    %v3746 = vpack.c.b16 %v1970, %v1962
    %v3747 = vpack.c.b16 %v1971, %v1963
    %v3748 = vpack.c.b16 %v1972, %v1964
    %v3749 = vpack.c.b16 %v1973, %v1965
    %v3750 = vpack.c.b16 %v1974, %v1966
    %v3751 = vpack.c.b16 %v1975, %v1967
    %v3752 = vpack.c.b16 %v1976, %v1968
    %v3753 = vpack.c.b16 %v1985, %v1977
    %v3754 = vpack.c.b16 %v1986, %v1978
    %v3755 = vpack.c.b16 %v1987, %v1979
    %v3756 = vpack.c.b16 %v1988, %v1980
    %v3757 = vpack.c.b16 %v1989, %v1981
    %v3758 = vpack.c.b16 %v1990, %v1982
    %v3759 = vpack.c.b16 %v1991, %v1983
    %v3760 = vpack.c.b16 %v1992, %v1984
    %v3761 = vpack.c.b16 %v2001, %v1993
    %v3762 = vpack.c.b16 %v2002, %v1994
    %v3763 = vpack.c.b16 %v2003, %v1995
    %v3764 = vpack.c.b16 %v2004, %v1996
    %v3765 = vpack.c.b16 %v2005, %v1997
    %v3766 = vpack.c.b16 %v2006, %v1998
    %v3767 = vpack.c.b16 %v2007, %v1999
    %v3768 = vpack.c.b16 %v2008, %v2000
    %v3769 = vpack.c.b16 %v2017, %v2009
    %v3770 = vpack.c.b16 %v2018, %v2010
    %v3771 = vpack.c.b16 %v2019, %v2011
    %v3772 = vpack.c.b16 %v2020, %v2012
    %v3773 = vpack.c.b16 %v2021, %v2013
    %v3774 = vpack.c.b16 %v2022, %v2014
    %v3775 = vpack.c.b16 %v2023, %v2015
    %v3776 = vpack.c.b16 %v2024, %v2016
    %v3777 = vpack.c.b16 %v2033, %v2025
    %v3778 = vpack.c.b16 %v2034, %v2026
    %v3779 = vpack.c.b16 %v2035, %v2027
    %v3780 = vpack.c.b16 %v2036, %v2028
    %v3781 = vpack.c.b16 %v2037, %v2029
    %v3782 = vpack.c.b16 %v2038, %v2030
    %v3783 = vpack.c.b16 %v2039, %v2031
    %v3784 = vpack.c.b16 %v2040, %v2032
    %v3785 = vpack.c.b16 %v2049, %v2041
    %v3786 = vpack.c.b16 %v2050, %v2042
    %v3787 = vpack.c.b16 %v2051, %v2043
    %v3788 = vpack.c.b16 %v2052, %v2044
    %v3789 = vpack.c.b16 %v2053, %v2045
    %v3790 = vpack.c.b16 %v2054, %v2046
    %v3791 = vpack.c.b16 %v2055, %v2047
    %v3792 = vpack.c.b16 %v2056, %v2048
    %v3793 = vpack.c.b16 %v2065, %v2057
    %v3794 = vpack.c.b16 %v2066, %v2058
    %v3795 = vpack.c.b16 %v2067, %v2059
    %v3796 = vpack.c.b16 %v2068, %v2060
    %v3797 = vpack.c.b16 %v2069, %v2061
    %v3798 = vpack.c.b16 %v2070, %v2062
    %v3799 = vpack.c.b16 %v2071, %v2063
    %v3800 = vpack.c.b16 %v2072, %v2064
    %v3801 = vpack.c.b16 %v2081, %v2073
    %v3802 = vpack.c.b16 %v2082, %v2074
    %v3803 = vpack.c.b16 %v2083, %v2075
    %v3804 = vpack.c.b16 %v2084, %v2076
    %v3805 = vpack.c.b16 %v2085, %v2077
    %v3806 = vpack.c.b16 %v2086, %v2078
    %v3807 = vpack.c.b16 %v2087, %v2079
    %v3808 = vpack.c.b16 %v2088, %v2080
    %v3809 = vpack.c.b16 %v2097, %v2089
    %v3810 = vpack.c.b16 %v2098, %v2090
    %v3811 = vpack.c.b16 %v2099, %v2091
    %v3812 = vpack.c.b16 %v2100, %v2092
    %v3813 = vpack.c.b16 %v2101, %v2093
    %v3814 = vpack.c.b16 %v2102, %v2094
    %v3815 = vpack.c.b16 %v2103, %v2095
    %v3816 = vpack.c.b16 %v2104, %v2096
    %v3817 = vpack.c.b16 %v2113, %v2105
    %v3818 = vpack.c.b16 %v2114, %v2106
    %v3819 = vpack.c.b16 %v2115, %v2107
    %v3820 = vpack.c.b16 %v2116, %v2108
    %v3821 = vpack.c.b16 %v2117, %v2109
    %v3822 = vpack.c.b16 %v2118, %v2110
    %v3823 = vpack.c.b16 %v2119, %v2111
    %v3824 = vpack.c.b16 %v2120, %v2112
    %v3825 = vpack.c.b16 %v2129, %v2121
    %v3826 = vpack.c.b16 %v2130, %v2122
    %v3827 = vpack.c.b16 %v2131, %v2123
    %v3828 = vpack.c.b16 %v2132, %v2124
    %v3829 = vpack.c.b16 %v2133, %v2125
    %v3830 = vpack.c.b16 %v2134, %v2126
    %v3831 = vpack.c.b16 %v2135, %v2127
    %v3832 = vpack.c.b16 %v2136, %v2128
    %v3833 = vpack.c.b16 %v2145, %v2137
    %v3834 = vpack.c.b16 %v2146, %v2138
    %v3835 = vpack.c.b16 %v2147, %v2139
    %v3836 = vpack.c.b16 %v2148, %v2140
    %v3837 = vpack.c.b16 %v2149, %v2141
    %v3838 = vpack.c.b16 %v2150, %v2142
    %v3839 = vpack.c.b16 %v2151, %v2143
    %v3840 = vpack.c.b16 %v2152, %v2144
    %v3841 = vpack.c.b16 %v2161, %v2153
    %v3842 = vpack.c.b16 %v2162, %v2154
    %v3843 = vpack.c.b16 %v2163, %v2155
    %v3844 = vpack.c.b16 %v2164, %v2156
    %v3845 = vpack.c.b16 %v2165, %v2157
    %v3846 = vpack.c.b16 %v2166, %v2158
    %v3847 = vpack.c.b16 %v2167, %v2159
    %v3848 = vpack.c.b16 %v2168, %v2160
    %v3849 = vpack.c.b16 %v2177, %v2169
    %v3850 = vpack.c.b16 %v2178, %v2170
    %v3851 = vpack.c.b16 %v2179, %v2171
    %v3852 = vpack.c.b16 %v2180, %v2172
    %v3853 = vpack.c.b16 %v2181, %v2173
    %v3854 = vpack.c.b16 %v2182, %v2174
    %v3855 = vpack.c.b16 %v2183, %v2175
    %v3856 = vpack.c.b16 %v2184, %v2176
    %v3857 = vpack.c.b16 %v2193, %v2185
    %v3858 = vpack.c.b16 %v2194, %v2186
    %v3859 = vpack.c.b16 %v2195, %v2187
    %v3860 = vpack.c.b16 %v2196, %v2188
    %v3861 = vpack.c.b16 %v2197, %v2189
    %v3862 = vpack.c.b16 %v2198, %v2190
    %v3863 = vpack.c.b16 %v2199, %v2191
    %v3864 = vpack.c.b16 %v2200, %v2192
    %v3865 = vpack.c.b16 %v2209, %v2201
    %v3866 = vpack.c.b16 %v2210, %v2202
    %v3867 = vpack.c.b16 %v2211, %v2203
    %v3868 = vpack.c.b16 %v2212, %v2204
    %v3869 = vpack.c.b16 %v2213, %v2205
    %v3870 = vpack.c.b16 %v2214, %v2206
    %v3871 = vpack.c.b16 %v2215, %v2207
    %v3872 = vpack.c.b16 %v2216, %v2208
    %v3873 = vpack.c.b16 %v2225, %v2217
    %v3874 = vpack.c.b16 %v2226, %v2218
    %v3875 = vpack.c.b16 %v2227, %v2219
    %v3876 = vpack.c.b16 %v2228, %v2220
    %v3877 = vpack.c.b16 %v2229, %v2221
    %v3878 = vpack.c.b16 %v2230, %v2222
    %v3879 = vpack.c.b16 %v2231, %v2223
    %v3880 = vpack.c.b16 %v2232, %v2224
    %v3881 = vpack.c.b16 %v2241, %v2233
    %v3882 = vpack.c.b16 %v2242, %v2234
    %v3883 = vpack.c.b16 %v2243, %v2235
    %v3884 = vpack.c.b16 %v2244, %v2236
    %v3885 = vpack.c.b16 %v2245, %v2237
    %v3886 = vpack.c.b16 %v2246, %v2238
    %v3887 = vpack.c.b16 %v2247, %v2239
    %v3888 = vpack.c.b16 %v2248, %v2240
    %v3889 = vpack.c.b16 %v2257, %v2249
    %v3890 = vpack.c.b16 %v2258, %v2250
    %v3891 = vpack.c.b16 %v2259, %v2251
    %v3892 = vpack.c.b16 %v2260, %v2252
    %v3893 = vpack.c.b16 %v2261, %v2253
    %v3894 = vpack.c.b16 %v2262, %v2254
    %v3895 = vpack.c.b16 %v2263, %v2255
    %v3896 = vpack.c.b16 %v2264, %v2256
    %v3897 = vpack.c.b16 %v2273, %v2265
    %v3898 = vpack.c.b16 %v2274, %v2266
    %v3899 = vpack.c.b16 %v2275, %v2267
    %v3900 = vpack.c.b16 %v2276, %v2268
    %v3901 = vpack.c.b16 %v2277, %v2269
    %v3902 = vpack.c.b16 %v2278, %v2270
    %v3903 = vpack.c.b16 %v2279, %v2271
    %v3904 = vpack.c.b16 %v2280, %v2272
    %v3905 = vpack.c.b16 %v2289, %v2281
    %v3906 = vpack.c.b16 %v2290, %v2282
    %v3907 = vpack.c.b16 %v2291, %v2283
    %v3908 = vpack.c.b16 %v2292, %v2284
    %v3909 = vpack.c.b16 %v2293, %v2285
    %v3910 = vpack.c.b16 %v2294, %v2286
    %v3911 = vpack.c.b16 %v2295, %v2287
    %v3912 = vpack.c.b16 %v2296, %v2288
    %v3913 = vpack.c.b16 %v2305, %v2297
    %v3914 = vpack.c.b16 %v2306, %v2298
    %v3915 = vpack.c.b16 %v2307, %v2299
    %v3916 = vpack.c.b16 %v2308, %v2300
    %v3917 = vpack.c.b16 %v2309, %v2301
    %v3918 = vpack.c.b16 %v2310, %v2302
    %v3919 = vpack.c.b16 %v2311, %v2303
    %v3920 = vpack.c.b16 %v2312, %v2304
    %v3921 = vpack.c.b16 %v2321, %v2313
    %v3922 = vpack.c.b16 %v2322, %v2314
    %v3923 = vpack.c.b16 %v2323, %v2315
    %v3924 = vpack.c.b16 %v2324, %v2316
    %v3925 = vpack.c.b16 %v2325, %v2317
    %v3926 = vpack.c.b16 %v2326, %v2318
    %v3927 = vpack.c.b16 %v2327, %v2319
    %v3928 = vpack.c.b16 %v2328, %v2320
    %v3929 = vpack.c.b16 %v2337, %v2329
    %v3930 = vpack.c.b16 %v2338, %v2330
    %v3931 = vpack.c.b16 %v2339, %v2331
    %v3932 = vpack.c.b16 %v2340, %v2332
    %v3933 = vpack.c.b16 %v2341, %v2333
    %v3934 = vpack.c.b16 %v2342, %v2334
    %v3935 = vpack.c.b16 %v2343, %v2335
    %v3936 = vpack.c.b16 %v2344, %v2336
    %v3937 = vpack.c.b16 %v2353, %v2345
    %v3938 = vpack.c.b16 %v2354, %v2346
    %v3939 = vpack.c.b16 %v2355, %v2347
    %v3940 = vpack.c.b16 %v2356, %v2348
    %v3941 = vpack.c.b16 %v2357, %v2349
    %v3942 = vpack.c.b16 %v2358, %v2350
    %v3943 = vpack.c.b16 %v2359, %v2351
    %v3944 = vpack.c.b16 %v2360, %v2352
    %v3945 = vpack.c.b16 %v2369, %v2361
    %v3946 = vpack.c.b16 %v2370, %v2362
    %v3947 = vpack.c.b16 %v2371, %v2363
    %v3948 = vpack.c.b16 %v2372, %v2364
    %v3949 = vpack.c.b16 %v2373, %v2365
    %v3950 = vpack.c.b16 %v2374, %v2366
    %v3951 = vpack.c.b16 %v2375, %v2367
    %v3952 = vpack.c.b16 %v2376, %v2368
    %v3953 = vpack.c.b16 %v2385, %v2377
    %v3954 = vpack.c.b16 %v2386, %v2378
    %v3955 = vpack.c.b16 %v2387, %v2379
    %v3956 = vpack.c.b16 %v2388, %v2380
    %v3957 = vpack.c.b16 %v2389, %v2381
    %v3958 = vpack.c.b16 %v2390, %v2382
    %v3959 = vpack.c.b16 %v2391, %v2383
    %v3960 = vpack.c.b16 %v2392, %v2384
    %v3961 = vpack.c.b16 %v2401, %v2393
    %v3962 = vpack.c.b16 %v2402, %v2394
    %v3963 = vpack.c.b16 %v2403, %v2395
    %v3964 = vpack.c.b16 %v2404, %v2396
    %v3965 = vpack.c.b16 %v2405, %v2397
    %v3966 = vpack.c.b16 %v2406, %v2398
    %v3967 = vpack.c.b16 %v2407, %v2399
    %v3968 = vpack.c.b16 %v2408, %v2400
    %v3969 = vpack.c.b16 %v2417, %v2409
    %v3970 = vpack.c.b16 %v2418, %v2410
    %v3971 = vpack.c.b16 %v2419, %v2411
    %v3972 = vpack.c.b16 %v2420, %v2412
    %v3973 = vpack.c.b16 %v2421, %v2413
    %v3974 = vpack.c.b16 %v2422, %v2414
    %v3975 = vpack.c.b16 %v2423, %v2415
    %v3976 = vpack.c.b16 %v2424, %v2416
    %v3977 = vpack.c.b16 %v2433, %v2425
    %v3978 = vpack.c.b16 %v2434, %v2426
    %v3979 = vpack.c.b16 %v2435, %v2427
    %v3980 = vpack.c.b16 %v2436, %v2428
    %v3981 = vpack.c.b16 %v2437, %v2429
    %v3982 = vpack.c.b16 %v2438, %v2430
    %v3983 = vpack.c.b16 %v2439, %v2431
    %v3984 = vpack.c.b16 %v2440, %v2432
    %v3985 = vpack.c.b16 %v2449, %v2441
    %v3986 = vpack.c.b16 %v2450, %v2442
    %v3987 = vpack.c.b16 %v2451, %v2443
    %v3988 = vpack.c.b16 %v2452, %v2444
    %v3989 = vpack.c.b16 %v2453, %v2445
    %v3990 = vpack.c.b16 %v2454, %v2446
    %v3991 = vpack.c.b16 %v2455, %v2447
    %v3992 = vpack.c.b16 %v2456, %v2448
    %v3993 = vpack.c.b16 %v2465, %v2457
    %v3994 = vpack.c.b16 %v2466, %v2458
    %v3995 = vpack.c.b16 %v2467, %v2459
    %v3996 = vpack.c.b16 %v2468, %v2460
    %v3997 = vpack.c.b16 %v2469, %v2461
    %v3998 = vpack.c.b16 %v2470, %v2462
    %v3999 = vpack.c.b16 %v2471, %v2463
    %v4000 = vpack.c.b16 %v2472, %v2464
    %v4001 = vpack.c.b16 %v2481, %v2473
    %v4002 = vpack.c.b16 %v2482, %v2474
    %v4003 = vpack.c.b16 %v2483, %v2475
    %v4004 = vpack.c.b16 %v2484, %v2476
    %v4005 = vpack.c.b16 %v2485, %v2477
    %v4006 = vpack.c.b16 %v2486, %v2478
    %v4007 = vpack.c.b16 %v2487, %v2479
    %v4008 = vpack.c.b16 %v2488, %v2480
    %v4009 = vpack.c.b16 %v2497, %v2489
    %v4010 = vpack.c.b16 %v2498, %v2490
    %v4011 = vpack.c.b16 %v2499, %v2491
    %v4012 = vpack.c.b16 %v2500, %v2492
    %v4013 = vpack.c.b16 %v2501, %v2493
    %v4014 = vpack.c.b16 %v2502, %v2494
    %v4015 = vpack.c.b16 %v2503, %v2495
    %v4016 = vpack.c.b16 %v2504, %v2496
    %v4017 = vpack.c.b16 %v2513, %v2505
    %v4018 = vpack.c.b16 %v2514, %v2506
    %v4019 = vpack.c.b16 %v2515, %v2507
    %v4020 = vpack.c.b16 %v2516, %v2508
    %v4021 = vpack.c.b16 %v2517, %v2509
    %v4022 = vpack.c.b16 %v2518, %v2510
    %v4023 = vpack.c.b16 %v2519, %v2511
    %v4024 = vpack.c.b16 %v2520, %v2512
    %v4025 = vpack.c.b16 %v2529, %v2521
    %v4026 = vpack.c.b16 %v2530, %v2522
    %v4027 = vpack.c.b16 %v2531, %v2523
    %v4028 = vpack.c.b16 %v2532, %v2524
    %v4029 = vpack.c.b16 %v2533, %v2525
    %v4030 = vpack.c.b16 %v2534, %v2526
    %v4031 = vpack.c.b16 %v2535, %v2527
    %v4032 = vpack.c.b16 %v2536, %v2528
    %v4033 = vpack.c.b16 %v2545, %v2537
    %v4034 = vpack.c.b16 %v2546, %v2538
    %v4035 = vpack.c.b16 %v2547, %v2539
    %v4036 = vpack.c.b16 %v2548, %v2540
    %v4037 = vpack.c.b16 %v2549, %v2541
    %v4038 = vpack.c.b16 %v2550, %v2542
    %v4039 = vpack.c.b16 %v2551, %v2543
    %v4040 = vpack.c.b16 %v2552, %v2544
    %v4041 = vpack.c.b16 %v2561, %v2553
    %v4042 = vpack.c.b16 %v2562, %v2554
    %v4043 = vpack.c.b16 %v2563, %v2555
    %v4044 = vpack.c.b16 %v2564, %v2556
    %v4045 = vpack.c.b16 %v2565, %v2557
    %v4046 = vpack.c.b16 %v2566, %v2558
    %v4047 = vpack.c.b16 %v2567, %v2559
    %v4048 = vpack.c.b16 %v2568, %v2560
    %v4049 = vpack.c.b16 %v2577, %v2569
    %v4050 = vpack.c.b16 %v2578, %v2570
    %v4051 = vpack.c.b16 %v2579, %v2571
    %v4052 = vpack.c.b16 %v2580, %v2572
    %v4053 = vpack.c.b16 %v2581, %v2573
    %v4054 = vpack.c.b16 %v2582, %v2574
    %v4055 = vpack.c.b16 %v2583, %v2575
    %v4056 = vpack.c.b16 %v2584, %v2576
    %v4057 = vpack.c.b16 %v2593, %v2585
    %v4058 = vpack.c.b16 %v2594, %v2586
    %v4059 = vpack.c.b16 %v2595, %v2587
    %v4060 = vpack.c.b16 %v2596, %v2588
    %v4061 = vpack.c.b16 %v2597, %v2589
    %v4062 = vpack.c.b16 %v2598, %v2590
    %v4063 = vpack.c.b16 %v2599, %v2591
    %v4064 = vpack.c.b16 %v2600, %v2592
    %v4065 = vpack.c.b16 %v2609, %v2601
    %v4066 = vpack.c.b16 %v2610, %v2602
    %v4067 = vpack.c.b16 %v2611, %v2603
    %v4068 = vpack.c.b16 %v2612, %v2604
    %v4069 = vpack.c.b16 %v2613, %v2605
    %v4070 = vpack.c.b16 %v2614, %v2606
    %v4071 = vpack.c.b16 %v2615, %v2607
    %v4072 = vpack.c.b16 %v2616, %v2608
    %v4073 = vpack.c.b16 %v2625, %v2617
    %v4074 = vpack.c.b16 %v2626, %v2618
    %v4075 = vpack.c.b16 %v2627, %v2619
    %v4076 = vpack.c.b16 %v2628, %v2620
    %v4077 = vpack.c.b16 %v2629, %v2621
    %v4078 = vpack.c.b16 %v2630, %v2622
    %v4079 = vpack.c.b16 %v2631, %v2623
    %v4080 = vpack.c.b16 %v2632, %v2624
    %v4081 = vpack.c.b16 %v2641, %v2633
    %v4082 = vpack.c.b16 %v2642, %v2634
    %v4083 = vpack.c.b16 %v2643, %v2635
    %v4084 = vpack.c.b16 %v2644, %v2636
    %v4085 = vpack.c.b16 %v2645, %v2637
    %v4086 = vpack.c.b16 %v2646, %v2638
    %v4087 = vpack.c.b16 %v2647, %v2639
    %v4088 = vpack.c.b16 %v2648, %v2640
    %v4089 = vpack.c.b16 %v2657, %v2649
    %v4090 = vpack.c.b16 %v2658, %v2650
    %v4091 = vpack.c.b16 %v2659, %v2651
    %v4092 = vpack.c.b16 %v2660, %v2652
    %v4093 = vpack.c.b16 %v2661, %v2653
    %v4094 = vpack.c.b16 %v2662, %v2654
    %v4095 = vpack.c.b16 %v2663, %v2655
    %v4096 = vpack.c.b16 %v2664, %v2656
    %v4097 = vpack.c.b16 %v2673, %v2665
    %v4098 = vpack.c.b16 %v2674, %v2666
    %v4099 = vpack.c.b16 %v2675, %v2667
    %v4100 = vpack.c.b16 %v2676, %v2668
    %v4101 = vpack.c.b16 %v2677, %v2669
    %v4102 = vpack.c.b16 %v2678, %v2670
    %v4103 = vpack.c.b16 %v2679, %v2671
    %v4104 = vpack.c.b16 %v2680, %v2672
    %v4105 = vpack.c.b16 %v2689, %v2681
    %v4106 = vpack.c.b16 %v2690, %v2682
    %v4107 = vpack.c.b16 %v2691, %v2683
    %v4108 = vpack.c.b16 %v2692, %v2684
    %v4109 = vpack.c.b16 %v2693, %v2685
    %v4110 = vpack.c.b16 %v2694, %v2686
    %v4111 = vpack.c.b16 %v2695, %v2687
    %v4112 = vpack.c.b16 %v2696, %v2688
    %v4113 = vpack.c.b16 %v2705, %v2697
    %v4114 = vpack.c.b16 %v2706, %v2698
    %v4115 = vpack.c.b16 %v2707, %v2699
    %v4116 = vpack.c.b16 %v2708, %v2700
    %v4117 = vpack.c.b16 %v2709, %v2701
    %v4118 = vpack.c.b16 %v2710, %v2702
    %v4119 = vpack.c.b16 %v2711, %v2703
    %v4120 = vpack.c.b16 %v2712, %v2704
    %v4121 = vpack.c.b16 %v2721, %v2713
    %v4122 = vpack.c.b16 %v2722, %v2714
    %v4123 = vpack.c.b16 %v2723, %v2715
    %v4124 = vpack.c.b16 %v2724, %v2716
    %v4125 = vpack.c.b16 %v2725, %v2717
    %v4126 = vpack.c.b16 %v2726, %v2718
    %v4127 = vpack.c.b16 %v2727, %v2719
    %v4128 = vpack.c.b16 %v2728, %v2720
    %v4129 = vpack.c.b16 %v2737, %v2729
    %v4130 = vpack.c.b16 %v2738, %v2730
    %v4131 = vpack.c.b16 %v2739, %v2731
    %v4132 = vpack.c.b16 %v2740, %v2732
    %v4133 = vpack.c.b16 %v2741, %v2733
    %v4134 = vpack.c.b16 %v2742, %v2734
    %v4135 = vpack.c.b16 %v2743, %v2735
    %v4136 = vpack.c.b16 %v2744, %v2736
    %v4137 = vpack.c.b16 %v2753, %v2745
    %v4138 = vpack.c.b16 %v2754, %v2746
    %v4139 = vpack.c.b16 %v2755, %v2747
    %v4140 = vpack.c.b16 %v2756, %v2748
    %v4141 = vpack.c.b16 %v2757, %v2749
    %v4142 = vpack.c.b16 %v2758, %v2750
    %v4143 = vpack.c.b16 %v2759, %v2751
    %v4144 = vpack.c.b16 %v2760, %v2752
    %v4145 = vpack.c.b16 %v2769, %v2761
    %v4146 = vpack.c.b16 %v2770, %v2762
    %v4147 = vpack.c.b16 %v2771, %v2763
    %v4148 = vpack.c.b16 %v2772, %v2764
    %v4149 = vpack.c.b16 %v2773, %v2765
    %v4150 = vpack.c.b16 %v2774, %v2766
    %v4151 = vpack.c.b16 %v2775, %v2767
    %v4152 = vpack.c.b16 %v2776, %v2768
    %v4153 = vpack.c.b16 %v2785, %v2777
    %v4154 = vpack.c.b16 %v2786, %v2778
    %v4155 = vpack.c.b16 %v2787, %v2779
    %v4156 = vpack.c.b16 %v2788, %v2780
    %v4157 = vpack.c.b16 %v2789, %v2781
    %v4158 = vpack.c.b16 %v2790, %v2782
    %v4159 = vpack.c.b16 %v2791, %v2783
    %v4160 = vpack.c.b16 %v2792, %v2784
    %v4161 = vpack.c.b16 %v2801, %v2793
    %v4162 = vpack.c.b16 %v2802, %v2794
    %v4163 = vpack.c.b16 %v2803, %v2795
    %v4164 = vpack.c.b16 %v2804, %v2796
    %v4165 = vpack.c.b16 %v2805, %v2797
    %v4166 = vpack.c.b16 %v2806, %v2798
    %v4167 = vpack.c.b16 %v2807, %v2799
    %v4168 = vpack.c.b16 %v2808, %v2800
    %v4169 = vpack.c.b16 %v2817, %v2809
    %v4170 = vpack.c.b16 %v2818, %v2810
    %v4171 = vpack.c.b16 %v2819, %v2811
    %v4172 = vpack.c.b16 %v2820, %v2812
    %v4173 = vpack.c.b16 %v2821, %v2813
    %v4174 = vpack.c.b16 %v2822, %v2814
    %v4175 = vpack.c.b16 %v2823, %v2815
    %v4176 = vpack.c.b16 %v2824, %v2816
    %v4177 = vpack.c.b16 %v2833, %v2825
    %v4178 = vpack.c.b16 %v2834, %v2826
    %v4179 = vpack.c.b16 %v2835, %v2827
    %v4180 = vpack.c.b16 %v2836, %v2828
    %v4181 = vpack.c.b16 %v2837, %v2829
    %v4182 = vpack.c.b16 %v2838, %v2830
    %v4183 = vpack.c.b16 %v2839, %v2831
    %v4184 = vpack.c.b16 %v2840, %v2832
    %v4185 = vpack.c.b16 %v2849, %v2841
    %v4186 = vpack.c.b16 %v2850, %v2842
    %v4187 = vpack.c.b16 %v2851, %v2843
    %v4188 = vpack.c.b16 %v2852, %v2844
    %v4189 = vpack.c.b16 %v2853, %v2845
    %v4190 = vpack.c.b16 %v2854, %v2846
    %v4191 = vpack.c.b16 %v2855, %v2847
    %v4192 = vpack.c.b16 %v2856, %v2848
    %v4193 = vpack.c.b16 %v2865, %v2857
    %v4194 = vpack.c.b16 %v2866, %v2858
    %v4195 = vpack.c.b16 %v2867, %v2859
    %v4196 = vpack.c.b16 %v2868, %v2860
    %v4197 = vpack.c.b16 %v2869, %v2861
    %v4198 = vpack.c.b16 %v2870, %v2862
    %v4199 = vpack.c.b16 %v2871, %v2863
    %v4200 = vpack.c.b16 %v2872, %v2864
    %v4201 = vpack.c.b16 %v2881, %v2873
    %v4202 = vpack.c.b16 %v2882, %v2874
    %v4203 = vpack.c.b16 %v2883, %v2875
    %v4204 = vpack.c.b16 %v2884, %v2876
    %v4205 = vpack.c.b16 %v2885, %v2877
    %v4206 = vpack.c.b16 %v2886, %v2878
    %v4207 = vpack.c.b16 %v2887, %v2879
    %v4208 = vpack.c.b16 %v2888, %v2880
    %v4209 = vpack.c.b16 %v2897, %v2889
    %v4210 = vpack.c.b16 %v2898, %v2890
    %v4211 = vpack.c.b16 %v2899, %v2891
    %v4212 = vpack.c.b16 %v2900, %v2892
    %v4213 = vpack.c.b16 %v2901, %v2893
    %v4214 = vpack.c.b16 %v2902, %v2894
    %v4215 = vpack.c.b16 %v2903, %v2895
    %v4216 = vpack.c.b16 %v2904, %v2896
    %v4217 = vpack.c.b16 %v2913, %v2905
    %v4218 = vpack.c.b16 %v2914, %v2906
    %v4219 = vpack.c.b16 %v2915, %v2907
    %v4220 = vpack.c.b16 %v2916, %v2908
    %v4221 = vpack.c.b16 %v2917, %v2909
    %v4222 = vpack.c.b16 %v2918, %v2910
    %v4223 = vpack.c.b16 %v2919, %v2911
    %v4224 = vpack.c.b16 %v2920, %v2912
    %v4225 = vpack.c.b16 %v2929, %v2921
    %v4226 = vpack.c.b16 %v2930, %v2922
    %v4227 = vpack.c.b16 %v2931, %v2923
    %v4228 = vpack.c.b16 %v2932, %v2924
    %v4229 = vpack.c.b16 %v2933, %v2925
    %v4230 = vpack.c.b16 %v2934, %v2926
    %v4231 = vpack.c.b16 %v2935, %v2927
    %v4232 = vpack.c.b16 %v2936, %v2928
    %v4233 = vpack.c.b16 %v2945, %v2937
    %v4234 = vpack.c.b16 %v2946, %v2938
    %v4235 = vpack.c.b16 %v2947, %v2939
    %v4236 = vpack.c.b16 %v2948, %v2940
    %v4237 = vpack.c.b16 %v2949, %v2941
    %v4238 = vpack.c.b16 %v2950, %v2942
    %v4239 = vpack.c.b16 %v2951, %v2943
    %v4240 = vpack.c.b16 %v2952, %v2944
    %v4241 = vpack.c.b16 %v2961, %v2953
    %v4242 = vpack.c.b16 %v2962, %v2954
    %v4243 = vpack.c.b16 %v2963, %v2955
    %v4244 = vpack.c.b16 %v2964, %v2956
    %v4245 = vpack.c.b16 %v2965, %v2957
    %v4246 = vpack.c.b16 %v2966, %v2958
    %v4247 = vpack.c.b16 %v2967, %v2959
    %v4248 = vpack.c.b16 %v2968, %v2960
    %v4249 = vpack.c.b16 %v2977, %v2969
    %v4250 = vpack.c.b16 %v2978, %v2970
    %v4251 = vpack.c.b16 %v2979, %v2971
    %v4252 = vpack.c.b16 %v2980, %v2972
    %v4253 = vpack.c.b16 %v2981, %v2973
    %v4254 = vpack.c.b16 %v2982, %v2974
    %v4255 = vpack.c.b16 %v2983, %v2975
    %v4256 = vpack.c.b16 %v2984, %v2976
    %v4257 = vpack.c.b16 %v2993, %v2985
    %v4258 = vpack.c.b16 %v2994, %v2986
    %v4259 = vpack.c.b16 %v2995, %v2987
    %v4260 = vpack.c.b16 %v2996, %v2988
    %v4261 = vpack.c.b16 %v2997, %v2989
    %v4262 = vpack.c.b16 %v2998, %v2990
    %v4263 = vpack.c.b16 %v2999, %v2991
    %v4264 = vpack.c.b16 %v3000, %v2992
    %v4265 = vpack.c.b16 %v3009, %v3001
    %v4266 = vpack.c.b16 %v3010, %v3002
    %v4267 = vpack.c.b16 %v3011, %v3003
    %v4268 = vpack.c.b16 %v3012, %v3004
    %v4269 = vpack.c.b16 %v3013, %v3005
    %v4270 = vpack.c.b16 %v3014, %v3006
    %v4271 = vpack.c.b16 %v3015, %v3007
    %v4272 = vpack.c.b16 %v3016, %v3008
    %v4273 = vpack.c.b16 %v3025, %v3017
    %v4274 = vpack.c.b16 %v3026, %v3018
    %v4275 = vpack.c.b16 %v3027, %v3019
    %v4276 = vpack.c.b16 %v3028, %v3020
    %v4277 = vpack.c.b16 %v3029, %v3021
    %v4278 = vpack.c.b16 %v3030, %v3022
    %v4279 = vpack.c.b16 %v3031, %v3023
    %v4280 = vpack.c.b16 %v3032, %v3024
    %v4281 = vpack.c.b16 %v3041, %v3033
    %v4282 = vpack.c.b16 %v3042, %v3034
    %v4283 = vpack.c.b16 %v3043, %v3035
    %v4284 = vpack.c.b16 %v3044, %v3036
    %v4285 = vpack.c.b16 %v3045, %v3037
    %v4286 = vpack.c.b16 %v3046, %v3038
    %v4287 = vpack.c.b16 %v3047, %v3039
    %v4288 = vpack.c.b16 %v3048, %v3040
    %v4289 = vpack.c.b16 %v3057, %v3049
    %v4290 = vpack.c.b16 %v3058, %v3050
    %v4291 = vpack.c.b16 %v3059, %v3051
    %v4292 = vpack.c.b16 %v3060, %v3052
    %v4293 = vpack.c.b16 %v3061, %v3053
    %v4294 = vpack.c.b16 %v3062, %v3054
    %v4295 = vpack.c.b16 %v3063, %v3055
    %v4296 = vpack.c.b16 %v3064, %v3056
    %v4297 = vpack.c.b16 %v3073, %v3065
    %v4298 = vpack.c.b16 %v3074, %v3066
    %v4299 = vpack.c.b16 %v3075, %v3067
    %v4300 = vpack.c.b16 %v3076, %v3068
    %v4301 = vpack.c.b16 %v3077, %v3069
    %v4302 = vpack.c.b16 %v3078, %v3070
    %v4303 = vpack.c.b16 %v3079, %v3071
    %v4304 = vpack.c.b16 %v3080, %v3072
    %v4305 = vpack.c.b16 %v3089, %v3081
    %v4306 = vpack.c.b16 %v3090, %v3082
    %v4307 = vpack.c.b16 %v3091, %v3083
    %v4308 = vpack.c.b16 %v3092, %v3084
    %v4309 = vpack.c.b16 %v3093, %v3085
    %v4310 = vpack.c.b16 %v3094, %v3086
    %v4311 = vpack.c.b16 %v3095, %v3087
    %v4312 = vpack.c.b16 %v3096, %v3088
    %v4313 = vpack.c.b16 %v3105, %v3097
    %v4314 = vpack.c.b16 %v3106, %v3098
    %v4315 = vpack.c.b16 %v3107, %v3099
    %v4316 = vpack.c.b16 %v3108, %v3100
    %v4317 = vpack.c.b16 %v3109, %v3101
    %v4318 = vpack.c.b16 %v3110, %v3102
    %v4319 = vpack.c.b16 %v3111, %v3103
    %v4320 = vpack.c.b16 %v3112, %v3104
    %v4321 = vpack.c.b16 %v3121, %v3113
    %v4322 = vpack.c.b16 %v3122, %v3114
    %v4323 = vpack.c.b16 %v3123, %v3115
    %v4324 = vpack.c.b16 %v3124, %v3116
    %v4325 = vpack.c.b16 %v3125, %v3117
    %v4326 = vpack.c.b16 %v3126, %v3118
    %v4327 = vpack.c.b16 %v3127, %v3119
    %v4328 = vpack.c.b16 %v3128, %v3120
    %v4329 = vpack.c.b16 %v3137, %v3129
    %v4330 = vpack.c.b16 %v3138, %v3130
    %v4331 = vpack.c.b16 %v3139, %v3131
    %v4332 = vpack.c.b16 %v3140, %v3132
    %v4333 = vpack.c.b16 %v3141, %v3133
    %v4334 = vpack.c.b16 %v3142, %v3134
    %v4335 = vpack.c.b16 %v3143, %v3135
    %v4336 = vpack.c.b16 %v3144, %v3136
    %v4337 = vpack.c.b16 %v3153, %v3145
    %v4338 = vpack.c.b16 %v3154, %v3146
    %v4339 = vpack.c.b16 %v3155, %v3147
    %v4340 = vpack.c.b16 %v3156, %v3148
    %v4341 = vpack.c.b16 %v3157, %v3149
    %v4342 = vpack.c.b16 %v3158, %v3150
    %v4343 = vpack.c.b16 %v3159, %v3151
    %v4344 = vpack.c.b16 %v3160, %v3152
    %v4345 = vpack.c.b16 %v3169, %v3161
    %v4346 = vpack.c.b16 %v3170, %v3162
    %v4347 = vpack.c.b16 %v3171, %v3163
    %v4348 = vpack.c.b16 %v3172, %v3164
    %v4349 = vpack.c.b16 %v3173, %v3165
    %v4350 = vpack.c.b16 %v3174, %v3166
    %v4351 = vpack.c.b16 %v3175, %v3167
    %v4352 = vpack.c.b16 %v3176, %v3168
    %v4353 = vpack.c.b16 %v3185, %v3177
    %v4354 = vpack.c.b16 %v3186, %v3178
    %v4355 = vpack.c.b16 %v3187, %v3179
    %v4356 = vpack.c.b16 %v3188, %v3180
    %v4357 = vpack.c.b16 %v3189, %v3181
    %v4358 = vpack.c.b16 %v3190, %v3182
    %v4359 = vpack.c.b16 %v3191, %v3183
    %v4360 = vpack.c.b16 %v3192, %v3184
    %v4361 = vpack.c.b16 %v3201, %v3193
    %v4362 = vpack.c.b16 %v3202, %v3194
    %v4363 = vpack.c.b16 %v3203, %v3195
    %v4364 = vpack.c.b16 %v3204, %v3196
    %v4365 = vpack.c.b16 %v3205, %v3197
    %v4366 = vpack.c.b16 %v3206, %v3198
    %v4367 = vpack.c.b16 %v3207, %v3199
    %v4368 = vpack.c.b16 %v3208, %v3200
    %v4369 = vpack.c.b16 %v3217, %v3209
    %v4370 = vpack.c.b16 %v3218, %v3210
    %v4371 = vpack.c.b16 %v3219, %v3211
    %v4372 = vpack.c.b16 %v3220, %v3212
    %v4373 = vpack.c.b16 %v3221, %v3213
    %v4374 = vpack.c.b16 %v3222, %v3214
    %v4375 = vpack.c.b16 %v3223, %v3215
    %v4376 = vpack.c.b16 %v3224, %v3216
    %v4377 = vpack.c.b16 %v3233, %v3225
    %v4378 = vpack.c.b16 %v3234, %v3226
    %v4379 = vpack.c.b16 %v3235, %v3227
    %v4380 = vpack.c.b16 %v3236, %v3228
    %v4381 = vpack.c.b16 %v3237, %v3229
    %v4382 = vpack.c.b16 %v3238, %v3230
    %v4383 = vpack.c.b16 %v3239, %v3231
    %v4384 = vpack.c.b16 %v3240, %v3232
    %v4385 = vpack.c.b16 %v3249, %v3241
    %v4386 = vpack.c.b16 %v3250, %v3242
    %v4387 = vpack.c.b16 %v3251, %v3243
    %v4388 = vpack.c.b16 %v3252, %v3244
    %v4389 = vpack.c.b16 %v3253, %v3245
    %v4390 = vpack.c.b16 %v3254, %v3246
    %v4391 = vpack.c.b16 %v3255, %v3247
    %v4392 = vpack.c.b16 %v3256, %v3248
    %v4393 = vpack.c.b16 %v3265, %v3257
    %v4394 = vpack.c.b16 %v3266, %v3258
    %v4395 = vpack.c.b16 %v3267, %v3259
    %v4396 = vpack.c.b16 %v3268, %v3260
    %v4397 = vpack.c.b16 %v3269, %v3261
    %v4398 = vpack.c.b16 %v3270, %v3262
    %v4399 = vpack.c.b16 %v3271, %v3263
    %v4400 = vpack.c.b16 %v3272, %v3264
    %v4401 = vpack.c.b16 %v3281, %v3273
    %v4402 = vpack.c.b16 %v3282, %v3274
    %v4403 = vpack.c.b16 %v3283, %v3275
    %v4404 = vpack.c.b16 %v3284, %v3276
    %v4405 = vpack.c.b16 %v3285, %v3277
    %v4406 = vpack.c.b16 %v3286, %v3278
    %v4407 = vpack.c.b16 %v3287, %v3279
    %v4408 = vpack.c.b16 %v3288, %v3280
    %v4409 = vpack.c.b16 %v3297, %v3289
    %v4410 = vpack.c.b16 %v3298, %v3290
    %v4411 = vpack.c.b16 %v3299, %v3291
    %v4412 = vpack.c.b16 %v3300, %v3292
    %v4413 = vpack.c.b16 %v3301, %v3293
    %v4414 = vpack.c.b16 %v3302, %v3294
    %v4415 = vpack.c.b16 %v3303, %v3295
    %v4416 = vpack.c.b16 %v3304, %v3296
    %v4417 = vpack.c.b16 %v3313, %v3305
    %v4418 = vpack.c.b16 %v3314, %v3306
    %v4419 = vpack.c.b16 %v3315, %v3307
    %v4420 = vpack.c.b16 %v3316, %v3308
    %v4421 = vpack.c.b16 %v3317, %v3309
    %v4422 = vpack.c.b16 %v3318, %v3310
    %v4423 = vpack.c.b16 %v3319, %v3311
    %v4424 = vpack.c.b16 %v3320, %v3312
    %v4425 = vpack.c.b16 %v3329, %v3321
    %v4426 = vpack.c.b16 %v3330, %v3322
    %v4427 = vpack.c.b16 %v3331, %v3323
    %v4428 = vpack.c.b16 %v3332, %v3324
    %v4429 = vpack.c.b16 %v3333, %v3325
    %v4430 = vpack.c.b16 %v3334, %v3326
    %v4431 = vpack.c.b16 %v3335, %v3327
    %v4432 = vpack.c.b16 %v3336, %v3328
    %v4433 = vpack.c.b16 %v3345, %v3337
    %v4434 = vpack.c.b16 %v3346, %v3338
    %v4435 = vpack.c.b16 %v3347, %v3339
    %v4436 = vpack.c.b16 %v3348, %v3340
    %v4437 = vpack.c.b16 %v3349, %v3341
    %v4438 = vpack.c.b16 %v3350, %v3342
    %v4439 = vpack.c.b16 %v3351, %v3343
    %v4440 = vpack.c.b16 %v3352, %v3344
    %v4441 = vpack.c.b16 %v3361, %v3353
    %v4442 = vpack.c.b16 %v3362, %v3354
    %v4443 = vpack.c.b16 %v3363, %v3355
    %v4444 = vpack.c.b16 %v3364, %v3356
    %v4445 = vpack.c.b16 %v3365, %v3357
    %v4446 = vpack.c.b16 %v3366, %v3358
    %v4447 = vpack.c.b16 %v3367, %v3359
    %v4448 = vpack.c.b16 %v3368, %v3360
    %v4449 = vpack.c.b16 %v3377, %v3369
    %v4450 = vpack.c.b16 %v3378, %v3370
    %v4451 = vpack.c.b16 %v3379, %v3371
    %v4452 = vpack.c.b16 %v3380, %v3372
    %v4453 = vpack.c.b16 %v3381, %v3373
    %v4454 = vpack.c.b16 %v3382, %v3374
    %v4455 = vpack.c.b16 %v3383, %v3375
    %v4456 = vpack.c.b16 %v3384, %v3376
    %v4457 = vpack.c.b16 %v3393, %v3385
    %v4458 = vpack.c.b16 %v3394, %v3386
    %v4459 = vpack.c.b16 %v3395, %v3387
    %v4460 = vpack.c.b16 %v3396, %v3388
    %v4461 = vpack.c.b16 %v3397, %v3389
    %v4462 = vpack.c.b16 %v3398, %v3390
    %v4463 = vpack.c.b16 %v3399, %v3391
    %v4464 = vpack.c.b16 %v3400, %v3392
    %v4465 = vpack.c.b16 %v3409, %v3401
    %v4466 = vpack.c.b16 %v3410, %v3402
    %v4467 = vpack.c.b16 %v3411, %v3403
    %v4468 = vpack.c.b16 %v3412, %v3404
    %v4469 = vpack.c.b16 %v3413, %v3405
    %v4470 = vpack.c.b16 %v3414, %v3406
    %v4471 = vpack.c.b16 %v3415, %v3407
    %v4472 = vpack.c.b16 %v3416, %v3408
    %v4473 = vpack.c.b16 %v3425, %v3417
    %v4474 = vpack.c.b16 %v3426, %v3418
    %v4475 = vpack.c.b16 %v3427, %v3419
    %v4476 = vpack.c.b16 %v3428, %v3420
    %v4477 = vpack.c.b16 %v3429, %v3421
    %v4478 = vpack.c.b16 %v3430, %v3422
    %v4479 = vpack.c.b16 %v3431, %v3423
    %v4480 = vpack.c.b16 %v3432, %v3424
    %v4481 = vpack.c.b16 %v3441, %v3433
    %v4482 = vpack.c.b16 %v3442, %v3434
    %v4483 = vpack.c.b16 %v3443, %v3435
    %v4484 = vpack.c.b16 %v3444, %v3436
    %v4485 = vpack.c.b16 %v3445, %v3437
    %v4486 = vpack.c.b16 %v3446, %v3438
    %v4487 = vpack.c.b16 %v3447, %v3439
    %v4488 = vpack.c.b16 %v3448, %v3440
    %v4489 = vpack.c.b16 %v3457, %v3449
    %v4490 = vpack.c.b16 %v3458, %v3450
    %v4491 = vpack.c.b16 %v3459, %v3451
    %v4492 = vpack.c.b16 %v3460, %v3452
    %v4493 = vpack.c.b16 %v3461, %v3453
    %v4494 = vpack.c.b16 %v3462, %v3454
    %v4495 = vpack.c.b16 %v3463, %v3455
    %v4496 = vpack.c.b16 %v3464, %v3456
    %v4497 = vpack.c.b16 %v3473, %v3465
    %v4498 = vpack.c.b16 %v3474, %v3466
    %v4499 = vpack.c.b16 %v3475, %v3467
    %v4500 = vpack.c.b16 %v3476, %v3468
    %v4501 = vpack.c.b16 %v3477, %v3469
    %v4502 = vpack.c.b16 %v3478, %v3470
    %v4503 = vpack.c.b16 %v3479, %v3471
    %v4504 = vpack.c.b16 %v3480, %v3472
    %v4505 = vpack.c.b16 %v3489, %v3481
    %v4506 = vpack.c.b16 %v3490, %v3482
    %v4507 = vpack.c.b16 %v3491, %v3483
    %v4508 = vpack.c.b16 %v3492, %v3484
    %v4509 = vpack.c.b16 %v3493, %v3485
    %v4510 = vpack.c.b16 %v3494, %v3486
    %v4511 = vpack.c.b16 %v3495, %v3487
    %v4512 = vpack.c.b16 %v3496, %v3488
    %v4513 = vpack.c.b16 %v3505, %v3497
    %v4514 = vpack.c.b16 %v3506, %v3498
    %v4515 = vpack.c.b16 %v3507, %v3499
    %v4516 = vpack.c.b16 %v3508, %v3500
    %v4517 = vpack.c.b16 %v3509, %v3501
    %v4518 = vpack.c.b16 %v3510, %v3502
    %v4519 = vpack.c.b16 %v3511, %v3503
    %v4520 = vpack.c.b16 %v3512, %v3504
    %v4521 = vpack.c.b16 %v3521, %v3513
    %v4522 = vpack.c.b16 %v3522, %v3514
    %v4523 = vpack.c.b16 %v3523, %v3515
    %v4524 = vpack.c.b16 %v3524, %v3516
    %v4525 = vpack.c.b16 %v3525, %v3517
    %v4526 = vpack.c.b16 %v3526, %v3518
    %v4527 = vpack.c.b16 %v3527, %v3519
    %v4528 = vpack.c.b16 %v3528, %v3520
    %v4529 = vpack.c.b16 %v3537, %v3529
    %v4530 = vpack.c.b16 %v3538, %v3530
    %v4531 = vpack.c.b16 %v3539, %v3531
    %v4532 = vpack.c.b16 %v3540, %v3532
    %v4533 = vpack.c.b16 %v3541, %v3533
    %v4534 = vpack.c.b16 %v3542, %v3534
    %v4535 = vpack.c.b16 %v3543, %v3535
    %v4536 = vpack.c.b16 %v3544, %v3536
    %v4537 = vpack.c.b16 %v3553, %v3545
    %v4538 = vpack.c.b16 %v3554, %v3546
    %v4539 = vpack.c.b16 %v3555, %v3547
    %v4540 = vpack.c.b16 %v3556, %v3548
    %v4541 = vpack.c.b16 %v3557, %v3549
    %v4542 = vpack.c.b16 %v3558, %v3550
    %v4543 = vpack.c.b16 %v3559, %v3551
    %v4544 = vpack.c.b16 %v3560, %v3552
    %v4545 = vpack.c.b16 %v3569, %v3561
    %v4546 = vpack.c.b16 %v3570, %v3562
    %v4547 = vpack.c.b16 %v3571, %v3563
    %v4548 = vpack.c.b16 %v3572, %v3564
    %v4549 = vpack.c.b16 %v3573, %v3565
    %v4550 = vpack.c.b16 %v3574, %v3566
    %v4551 = vpack.c.b16 %v3575, %v3567
    %v4552 = vpack.c.b16 %v3576, %v3568
    %v4553 = vpack.c.b16 %v3585, %v3577
    %v4554 = vpack.c.b16 %v3586, %v3578
    %v4555 = vpack.c.b16 %v3587, %v3579
    %v4556 = vpack.c.b16 %v3588, %v3580
    %v4557 = vpack.c.b16 %v3589, %v3581
    %v4558 = vpack.c.b16 %v3590, %v3582
    %v4559 = vpack.c.b16 %v3591, %v3583
    %v4560 = vpack.c.b16 %v3592, %v3584
    %v4561 = vpack.c.b16 %v3601, %v3593
    %v4562 = vpack.c.b16 %v3602, %v3594
    %v4563 = vpack.c.b16 %v3603, %v3595
    %v4564 = vpack.c.b16 %v3604, %v3596
    %v4565 = vpack.c.b16 %v3605, %v3597
    %v4566 = vpack.c.b16 %v3606, %v3598
    %v4567 = vpack.c.b16 %v3607, %v3599
    %v4568 = vpack.c.b16 %v3608, %v3600
    %v4569 = vpack.c.b16 %v3617, %v3609
    %v4570 = vpack.c.b16 %v3618, %v3610
    %v4571 = vpack.c.b16 %v3619, %v3611
    %v4572 = vpack.c.b16 %v3620, %v3612
    %v4573 = vpack.c.b16 %v3621, %v3613
    %v4574 = vpack.c.b16 %v3622, %v3614
    %v4575 = vpack.c.b16 %v3623, %v3615
    %v4576 = vpack.c.b16 %v3624, %v3616
    %v4577 = vpack.c.b16 %v3633, %v3625
    %v4578 = vpack.c.b16 %v3634, %v3626
    %v4579 = vpack.c.b16 %v3635, %v3627
    %v4580 = vpack.c.b16 %v3636, %v3628
    %v4581 = vpack.c.b16 %v3637, %v3629
    %v4582 = vpack.c.b16 %v3638, %v3630
    %v4583 = vpack.c.b16 %v3639, %v3631
    %v4584 = vpack.c.b16 %v3640, %v3632
    %v4585 = vpack.c.b16 %v3649, %v3641
    %v4586 = vpack.c.b16 %v3650, %v3642
    %v4587 = vpack.c.b16 %v3651, %v3643
    %v4588 = vpack.c.b16 %v3652, %v3644
    %v4589 = vpack.c.b16 %v3653, %v3645
    %v4590 = vpack.c.b16 %v3654, %v3646
    %v4591 = vpack.c.b16 %v3655, %v3647
    %v4592 = vpack.c.b16 %v3656, %v3648
    %v4593 = vpack.c.b16 %v3665, %v3657
    %v4594 = vpack.c.b16 %v3666, %v3658
    %v4595 = vpack.c.b16 %v3667, %v3659
    %v4596 = vpack.c.b16 %v3668, %v3660
    %v4597 = vpack.c.b16 %v3669, %v3661
    %v4598 = vpack.c.b16 %v3670, %v3662
    %v4599 = vpack.c.b16 %v3671, %v3663
    %v4600 = vpack.c.b16 %v3672, %v3664
    %v4601 = vpack.c.b16 %v3681, %v3673
    %v4602 = vpack.c.b16 %v3682, %v3674
    %v4603 = vpack.c.b16 %v3683, %v3675
    %v4604 = vpack.c.b16 %v3684, %v3676
    %v4605 = vpack.c.b16 %v3685, %v3677
    %v4606 = vpack.c.b16 %v3686, %v3678
    %v4607 = vpack.c.b16 %v3687, %v3679
    %v4608 = vpack.c.b16 %v3688, %v3680
    %v4609 = vpack.c.b16 %v3697, %v3689
    %v4610 = vpack.c.b16 %v3698, %v3690
    %v4611 = vpack.c.b16 %v3699, %v3691
    %v4612 = vpack.c.b16 %v3700, %v3692
    %v4613 = vpack.c.b16 %v3701, %v3693
    %v4614 = vpack.c.b16 %v3702, %v3694
    %v4615 = vpack.c.b16 %v3703, %v3695
    %v4616 = vpack.c.b16 %v3704, %v3696
    %v4617 = vpack.c.b16 %v3713, %v3705
    %v4618 = vpack.c.b16 %v3714, %v3706
    %v4619 = vpack.c.b16 %v3715, %v3707
    %v4620 = vpack.c.b16 %v3716, %v3708
    %v4621 = vpack.c.b16 %v3717, %v3709
    %v4622 = vpack.c.b16 %v3718, %v3710
    %v4623 = vpack.c.b16 %v3719, %v3711
    %v4624 = vpack.c.b16 %v3720, %v3712
    %v4625 = vpack.c.b16 %v3729, %v3721
    %v4626 = vpack.c.b16 %v3730, %v3722
    %v4627 = vpack.c.b16 %v3731, %v3723
    %v4628 = vpack.c.b16 %v3732, %v3724
    %v4629 = vpack.c.b16 %v3733, %v3725
    %v4630 = vpack.c.b16 %v3734, %v3726
    %v4631 = vpack.c.b16 %v3735, %v3727
    %v4632 = vpack.c.b16 %v3736, %v3728
    %5529 = vmatpush.bf16.msra.mxu0 %v3793
    %5530 = vmatpush.bf16.msra.mxu0 %v3785
    %5531 = vmatpush.bf16.msra.mxu0 %v3777
    %5532 = vmatpush.bf16.msra.mxu0 %v3769
    %5533 = vmatpush.bf16.msra.mxu0 %v3761
    %5534 = vmatpush.bf16.msra.mxu0 %v3753
    %5535 = vmatpush.bf16.msra.mxu0 %v3745
    %5536 = vmatpush.bf16.msra.mxu0 %v3737
    %5537 = vmatmul.bf16.gmra.mxu0 %v1021
    %v5538 = vpop.f32.mrf.mxu0
    %v5539 = vadd.f32 %v984, %v5538
    %v5540 = vpop.f32.mrf.mxu0
    %5541 = vdwg.mxu0
    %5542 = vmatpush.bf16.msra.mxu0 %v3857
    %5543 = vmatpush.bf16.msra.mxu0 %v3849
    %5544 = vmatpush.bf16.msra.mxu0 %v3841
    %5545 = vmatpush.bf16.msra.mxu0 %v3833
    %5546 = vmatpush.bf16.msra.mxu0 %v3825
    %5547 = vmatpush.bf16.msra.mxu0 %v3817
    %5548 = vmatpush.bf16.msra.mxu0 %v3809
    %5549 = vmatpush.bf16.msra.mxu0 %v3801
    %5550 = vmatmul.bf16.gmra.mxu0 %v1022
    %v5551 = vpop.f32.mrf.mxu0
    %v5552 = vadd.f32 %v5539, %v5551
    %v5553 = vpop.f32.mrf.mxu0
    %5554 = vdwg.mxu0
    %5555 = vmatpush.bf16.msra.mxu0 %v3921
    %5556 = vmatpush.bf16.msra.mxu0 %v3913
    %5557 = vmatpush.bf16.msra.mxu0 %v3905
    %5558 = vmatpush.bf16.msra.mxu0 %v3897
    %5559 = vmatpush.bf16.msra.mxu0 %v3889
    %5560 = vmatpush.bf16.msra.mxu0 %v3881
    %5561 = vmatpush.bf16.msra.mxu0 %v3873
    %5562 = vmatpush.bf16.msra.mxu0 %v3865
    %5563 = vmatmul.bf16.gmra.mxu0 %v1023
    %v5564 = vpop.f32.mrf.mxu0
    %v5565 = vadd.f32 %v5552, %v5564
    %v5566 = vpop.f32.mrf.mxu0
    %5567 = vdwg.mxu0
    %5568 = vmatpush.bf16.msra.mxu0 %v3985
    %5569 = vmatpush.bf16.msra.mxu0 %v3977
    %5570 = vmatpush.bf16.msra.mxu0 %v3969
    %5571 = vmatpush.bf16.msra.mxu0 %v3961
    %5572 = vmatpush.bf16.msra.mxu0 %v3953
    %5573 = vmatpush.bf16.msra.mxu0 %v3945
    %5574 = vmatpush.bf16.msra.mxu0 %v3937
    %5575 = vmatpush.bf16.msra.mxu0 %v3929
    %5576 = vmatmul.bf16.gmra.mxu0 %v1024
    %v5577 = vpop.f32.mrf.mxu0
    %v5578 = vadd.f32 %v5565, %v5577
    %v5579 = vpop.f32.mrf.mxu0
    %5580 = vdwg.mxu0
    %5581 = vmatpush.bf16.msra.mxu0 %v4049
    %5582 = vmatpush.bf16.msra.mxu0 %v4041
    %5583 = vmatpush.bf16.msra.mxu0 %v4033
    %5584 = vmatpush.bf16.msra.mxu0 %v4025
    %5585 = vmatpush.bf16.msra.mxu0 %v4017
    %5586 = vmatpush.bf16.msra.mxu0 %v4009
    %5587 = vmatpush.bf16.msra.mxu0 %v4001
    %5588 = vmatpush.bf16.msra.mxu0 %v3993
    %5589 = vmatmul.bf16.gmra.mxu0 %v1025
    %v5590 = vpop.f32.mrf.mxu0
    %v5591 = vadd.f32 %v5578, %v5590
    %v5592 = vpop.f32.mrf.mxu0
    %5593 = vdwg.mxu0
    %5594 = vmatpush.bf16.msra.mxu0 %v4113
    %5595 = vmatpush.bf16.msra.mxu0 %v4105
    %5596 = vmatpush.bf16.msra.mxu0 %v4097
    %5597 = vmatpush.bf16.msra.mxu0 %v4089
    %5598 = vmatpush.bf16.msra.mxu0 %v4081
    %5599 = vmatpush.bf16.msra.mxu0 %v4073
    %5600 = vmatpush.bf16.msra.mxu0 %v4065
    %5601 = vmatpush.bf16.msra.mxu0 %v4057
    %5602 = vmatmul.bf16.gmra.mxu0 %v1026
    %v5603 = vpop.f32.mrf.mxu0
    %v5604 = vadd.f32 %v5591, %v5603
    %v5605 = vpop.f32.mrf.mxu0
    %5606 = vdwg.mxu0
    %5607 = vmatpush.bf16.msra.mxu0 %v4177
    %5608 = vmatpush.bf16.msra.mxu0 %v4169
    %5609 = vmatpush.bf16.msra.mxu0 %v4161
    %5610 = vmatpush.bf16.msra.mxu0 %v4153
    %5611 = vmatpush.bf16.msra.mxu0 %v4145
    %5612 = vmatpush.bf16.msra.mxu0 %v4137
    %5613 = vmatpush.bf16.msra.mxu0 %v4129
    %5614 = vmatpush.bf16.msra.mxu0 %v4121
    %5615 = vmatmul.bf16.gmra.mxu0 %v1027
    %v5616 = vpop.f32.mrf.mxu0
    %v5617 = vadd.f32 %v5604, %v5616
    %v5618 = vpop.f32.mrf.mxu0
    %5619 = vdwg.mxu0
    %5620 = vmatpush.bf16.msra.mxu0 %v4241
    %5621 = vmatpush.bf16.msra.mxu0 %v4233
    %5622 = vmatpush.bf16.msra.mxu0 %v4225
    %5623 = vmatpush.bf16.msra.mxu0 %v4217
    %5624 = vmatpush.bf16.msra.mxu0 %v4209
    %5625 = vmatpush.bf16.msra.mxu0 %v4201
    %5626 = vmatpush.bf16.msra.mxu0 %v4193
    %5627 = vmatpush.bf16.msra.mxu0 %v4185
    %5628 = vmatmul.bf16.gmra.mxu0 %v1028
    %v5629 = vpop.f32.mrf.mxu0
    %v5630 = vadd.f32 %v5617, %v5629
    %v5631 = vpop.f32.mrf.mxu0
    %5632 = vdwg.mxu0
    %5633 = vmatpush.bf16.msra.mxu0 %v4305
    %5634 = vmatpush.bf16.msra.mxu0 %v4297
    %5635 = vmatpush.bf16.msra.mxu0 %v4289
    %5636 = vmatpush.bf16.msra.mxu0 %v4281
    %5637 = vmatpush.bf16.msra.mxu0 %v4273
    %5638 = vmatpush.bf16.msra.mxu0 %v4265
    %5639 = vmatpush.bf16.msra.mxu0 %v4257
    %5640 = vmatpush.bf16.msra.mxu0 %v4249
    %5641 = vmatmul.bf16.gmra.mxu0 %v1029
    %v5642 = vpop.f32.mrf.mxu0
    %v5643 = vadd.f32 %v5630, %v5642
    %v5644 = vpop.f32.mrf.mxu0
    %5645 = vdwg.mxu0
    %5646 = vmatpush.bf16.msra.mxu0 %v4369
    %5647 = vmatpush.bf16.msra.mxu0 %v4361
    %5648 = vmatpush.bf16.msra.mxu0 %v4353
    %5649 = vmatpush.bf16.msra.mxu0 %v4345
    %5650 = vmatpush.bf16.msra.mxu0 %v4337
    %5651 = vmatpush.bf16.msra.mxu0 %v4329
    %5652 = vmatpush.bf16.msra.mxu0 %v4321
    %5653 = vmatpush.bf16.msra.mxu0 %v4313
    %5654 = vmatmul.bf16.gmra.mxu0 %v1030
    %v5655 = vpop.f32.mrf.mxu0
    %v5656 = vadd.f32 %v5643, %v5655
    %v5657 = vpop.f32.mrf.mxu0
    %5658 = vdwg.mxu0
    %5659 = vmatpush.bf16.msra.mxu0 %v4433
    %5660 = vmatpush.bf16.msra.mxu0 %v4425
    %5661 = vmatpush.bf16.msra.mxu0 %v4417
    %5662 = vmatpush.bf16.msra.mxu0 %v4409
    %5663 = vmatpush.bf16.msra.mxu0 %v4401
    %5664 = vmatpush.bf16.msra.mxu0 %v4393
    %5665 = vmatpush.bf16.msra.mxu0 %v4385
    %5666 = vmatpush.bf16.msra.mxu0 %v4377
    %5667 = vmatmul.bf16.gmra.mxu0 %v1031
    %v5668 = vpop.f32.mrf.mxu0
    %v5669 = vadd.f32 %v5656, %v5668
    %v5670 = vpop.f32.mrf.mxu0
    %5671 = vdwg.mxu0
    %5672 = vmatpush.bf16.msra.mxu0 %v4497
    %5673 = vmatpush.bf16.msra.mxu0 %v4489
    %5674 = vmatpush.bf16.msra.mxu0 %v4481
    %5675 = vmatpush.bf16.msra.mxu0 %v4473
    %5676 = vmatpush.bf16.msra.mxu0 %v4465
    %5677 = vmatpush.bf16.msra.mxu0 %v4457
    %5678 = vmatpush.bf16.msra.mxu0 %v4449
    %5679 = vmatpush.bf16.msra.mxu0 %v4441
    %5680 = vmatmul.bf16.gmra.mxu0 %v1032
    %v5681 = vpop.f32.mrf.mxu0
    %v5682 = vadd.f32 %v5669, %v5681
    %v5683 = vpop.f32.mrf.mxu0
    %5684 = vdwg.mxu0
    %5685 = vmatpush.bf16.msra.mxu0 %v4561
    %5686 = vmatpush.bf16.msra.mxu0 %v4553
    %5687 = vmatpush.bf16.msra.mxu0 %v4545
    %5688 = vmatpush.bf16.msra.mxu0 %v4537
    %5689 = vmatpush.bf16.msra.mxu0 %v4529
    %5690 = vmatpush.bf16.msra.mxu0 %v4521
    %5691 = vmatpush.bf16.msra.mxu0 %v4513
    %5692 = vmatpush.bf16.msra.mxu0 %v4505
    %5693 = vmatmul.bf16.gmra.mxu0 %v1033
    %v5694 = vpop.f32.mrf.mxu0
    %v5695 = vadd.f32 %v5682, %v5694
    %v5696 = vpop.f32.mrf.mxu0
    %5697 = vdwg.mxu0
    %5698 = vmatpush.bf16.msra.mxu0 %v4625
    %5699 = vmatpush.bf16.msra.mxu0 %v4617
    %5700 = vmatpush.bf16.msra.mxu0 %v4609
    %5701 = vmatpush.bf16.msra.mxu0 %v4601
    %5702 = vmatpush.bf16.msra.mxu0 %v4593
    %5703 = vmatpush.bf16.msra.mxu0 %v4585
    %5704 = vmatpush.bf16.msra.mxu0 %v4577
    %5705 = vmatpush.bf16.msra.mxu0 %v4569
    %5706 = vmatmul.bf16.gmra.mxu0 %v1034
    %v5707 = vpop.f32.mrf.mxu0
    %v5708 = vadd.f32 %v5695, %v5707
    %v5709 = vpop.f32.mrf.mxu0
    %5710 = vdwg.mxu0
    %5711 = vmatpush.bf16.msra.mxu0 %v3794
    %5712 = vmatpush.bf16.msra.mxu0 %v3786
    %5713 = vmatpush.bf16.msra.mxu0 %v3778
    %5714 = vmatpush.bf16.msra.mxu0 %v3770
    %5715 = vmatpush.bf16.msra.mxu0 %v3762
    %5716 = vmatpush.bf16.msra.mxu0 %v3754
    %5717 = vmatpush.bf16.msra.mxu0 %v3746
    %5718 = vmatpush.bf16.msra.mxu0 %v3738
    %5719 = vmatmul.bf16.gmra.mxu0 %v1021
    %v5720 = vpop.f32.mrf.mxu0
    %v5721 = vadd.f32 %v985, %v5720
    %v5722 = vpop.f32.mrf.mxu0
    %5723 = vdwg.mxu0
    %5724 = vmatpush.bf16.msra.mxu0 %v3858
    %5725 = vmatpush.bf16.msra.mxu0 %v3850
    %5726 = vmatpush.bf16.msra.mxu0 %v3842
    %5727 = vmatpush.bf16.msra.mxu0 %v3834
    %5728 = vmatpush.bf16.msra.mxu0 %v3826
    %5729 = vmatpush.bf16.msra.mxu0 %v3818
    %5730 = vmatpush.bf16.msra.mxu0 %v3810
    %5731 = vmatpush.bf16.msra.mxu0 %v3802
    %5732 = vmatmul.bf16.gmra.mxu0 %v1022
    %v5733 = vpop.f32.mrf.mxu0
    %v5734 = vadd.f32 %v5721, %v5733
    %v5735 = vpop.f32.mrf.mxu0
    %5736 = vdwg.mxu0
    %5737 = vmatpush.bf16.msra.mxu0 %v3922
    %5738 = vmatpush.bf16.msra.mxu0 %v3914
    %5739 = vmatpush.bf16.msra.mxu0 %v3906
    %5740 = vmatpush.bf16.msra.mxu0 %v3898
    %5741 = vmatpush.bf16.msra.mxu0 %v3890
    %5742 = vmatpush.bf16.msra.mxu0 %v3882
    %5743 = vmatpush.bf16.msra.mxu0 %v3874
    %5744 = vmatpush.bf16.msra.mxu0 %v3866
    %5745 = vmatmul.bf16.gmra.mxu0 %v1023
    %v5746 = vpop.f32.mrf.mxu0
    %v5747 = vadd.f32 %v5734, %v5746
    %v5748 = vpop.f32.mrf.mxu0
    %5749 = vdwg.mxu0
    %5750 = vmatpush.bf16.msra.mxu0 %v3986
    %5751 = vmatpush.bf16.msra.mxu0 %v3978
    %5752 = vmatpush.bf16.msra.mxu0 %v3970
    %5753 = vmatpush.bf16.msra.mxu0 %v3962
    %5754 = vmatpush.bf16.msra.mxu0 %v3954
    %5755 = vmatpush.bf16.msra.mxu0 %v3946
    %5756 = vmatpush.bf16.msra.mxu0 %v3938
    %5757 = vmatpush.bf16.msra.mxu0 %v3930
    %5758 = vmatmul.bf16.gmra.mxu0 %v1024
    %v5759 = vpop.f32.mrf.mxu0
    %v5760 = vadd.f32 %v5747, %v5759
    %v5761 = vpop.f32.mrf.mxu0
    %5762 = vdwg.mxu0
    %5763 = vmatpush.bf16.msra.mxu0 %v4050
    %5764 = vmatpush.bf16.msra.mxu0 %v4042
    %5765 = vmatpush.bf16.msra.mxu0 %v4034
    %5766 = vmatpush.bf16.msra.mxu0 %v4026
    %5767 = vmatpush.bf16.msra.mxu0 %v4018
    %5768 = vmatpush.bf16.msra.mxu0 %v4010
    %5769 = vmatpush.bf16.msra.mxu0 %v4002
    %5770 = vmatpush.bf16.msra.mxu0 %v3994
    %5771 = vmatmul.bf16.gmra.mxu0 %v1025
    %v5772 = vpop.f32.mrf.mxu0
    %v5773 = vadd.f32 %v5760, %v5772
    %v5774 = vpop.f32.mrf.mxu0
    %5775 = vdwg.mxu0
    %5776 = vmatpush.bf16.msra.mxu0 %v4114
    %5777 = vmatpush.bf16.msra.mxu0 %v4106
    %5778 = vmatpush.bf16.msra.mxu0 %v4098
    %5779 = vmatpush.bf16.msra.mxu0 %v4090
    %5780 = vmatpush.bf16.msra.mxu0 %v4082
    %5781 = vmatpush.bf16.msra.mxu0 %v4074
    %5782 = vmatpush.bf16.msra.mxu0 %v4066
    %5783 = vmatpush.bf16.msra.mxu0 %v4058
    %5784 = vmatmul.bf16.gmra.mxu0 %v1026
    %v5785 = vpop.f32.mrf.mxu0
    %v5786 = vadd.f32 %v5773, %v5785
    %v5787 = vpop.f32.mrf.mxu0
    %5788 = vdwg.mxu0
    %5789 = vmatpush.bf16.msra.mxu0 %v4178
    %5790 = vmatpush.bf16.msra.mxu0 %v4170
    %5791 = vmatpush.bf16.msra.mxu0 %v4162
    %5792 = vmatpush.bf16.msra.mxu0 %v4154
    %5793 = vmatpush.bf16.msra.mxu0 %v4146
    %5794 = vmatpush.bf16.msra.mxu0 %v4138
    %5795 = vmatpush.bf16.msra.mxu0 %v4130
    %5796 = vmatpush.bf16.msra.mxu0 %v4122
    %5797 = vmatmul.bf16.gmra.mxu0 %v1027
    %v5798 = vpop.f32.mrf.mxu0
    %v5799 = vadd.f32 %v5786, %v5798
    %v5800 = vpop.f32.mrf.mxu0
    %5801 = vdwg.mxu0
    %5802 = vmatpush.bf16.msra.mxu0 %v4242
    %5803 = vmatpush.bf16.msra.mxu0 %v4234
    %5804 = vmatpush.bf16.msra.mxu0 %v4226
    %5805 = vmatpush.bf16.msra.mxu0 %v4218
    %5806 = vmatpush.bf16.msra.mxu0 %v4210
    %5807 = vmatpush.bf16.msra.mxu0 %v4202
    %5808 = vmatpush.bf16.msra.mxu0 %v4194
    %5809 = vmatpush.bf16.msra.mxu0 %v4186
    %5810 = vmatmul.bf16.gmra.mxu0 %v1028
    %v5811 = vpop.f32.mrf.mxu0
    %v5812 = vadd.f32 %v5799, %v5811
    %v5813 = vpop.f32.mrf.mxu0
    %5814 = vdwg.mxu0
    %5815 = vmatpush.bf16.msra.mxu0 %v4306
    %5816 = vmatpush.bf16.msra.mxu0 %v4298
    %5817 = vmatpush.bf16.msra.mxu0 %v4290
    %5818 = vmatpush.bf16.msra.mxu0 %v4282
    %5819 = vmatpush.bf16.msra.mxu0 %v4274
    %5820 = vmatpush.bf16.msra.mxu0 %v4266
    %5821 = vmatpush.bf16.msra.mxu0 %v4258
    %5822 = vmatpush.bf16.msra.mxu0 %v4250
    %5823 = vmatmul.bf16.gmra.mxu0 %v1029
    %v5824 = vpop.f32.mrf.mxu0
    %v5825 = vadd.f32 %v5812, %v5824
    %v5826 = vpop.f32.mrf.mxu0
    %5827 = vdwg.mxu0
    %5828 = vmatpush.bf16.msra.mxu0 %v4370
    %5829 = vmatpush.bf16.msra.mxu0 %v4362
    %5830 = vmatpush.bf16.msra.mxu0 %v4354
    %5831 = vmatpush.bf16.msra.mxu0 %v4346
    %5832 = vmatpush.bf16.msra.mxu0 %v4338
    %5833 = vmatpush.bf16.msra.mxu0 %v4330
    %5834 = vmatpush.bf16.msra.mxu0 %v4322
    %5835 = vmatpush.bf16.msra.mxu0 %v4314
    %5836 = vmatmul.bf16.gmra.mxu0 %v1030
    %v5837 = vpop.f32.mrf.mxu0
    %v5838 = vadd.f32 %v5825, %v5837
    %v5839 = vpop.f32.mrf.mxu0
    %5840 = vdwg.mxu0
    %5841 = vmatpush.bf16.msra.mxu0 %v4434
    %5842 = vmatpush.bf16.msra.mxu0 %v4426
    %5843 = vmatpush.bf16.msra.mxu0 %v4418
    %5844 = vmatpush.bf16.msra.mxu0 %v4410
    %5845 = vmatpush.bf16.msra.mxu0 %v4402
    %5846 = vmatpush.bf16.msra.mxu0 %v4394
    %5847 = vmatpush.bf16.msra.mxu0 %v4386
    %5848 = vmatpush.bf16.msra.mxu0 %v4378
    %5849 = vmatmul.bf16.gmra.mxu0 %v1031
    %v5850 = vpop.f32.mrf.mxu0
    %v5851 = vadd.f32 %v5838, %v5850
    %v5852 = vpop.f32.mrf.mxu0
    %5853 = vdwg.mxu0
    %5854 = vmatpush.bf16.msra.mxu0 %v4498
    %5855 = vmatpush.bf16.msra.mxu0 %v4490
    %5856 = vmatpush.bf16.msra.mxu0 %v4482
    %5857 = vmatpush.bf16.msra.mxu0 %v4474
    %5858 = vmatpush.bf16.msra.mxu0 %v4466
    %5859 = vmatpush.bf16.msra.mxu0 %v4458
    %5860 = vmatpush.bf16.msra.mxu0 %v4450
    %5861 = vmatpush.bf16.msra.mxu0 %v4442
    %5862 = vmatmul.bf16.gmra.mxu0 %v1032
    %v5863 = vpop.f32.mrf.mxu0
    %v5864 = vadd.f32 %v5851, %v5863
    %v5865 = vpop.f32.mrf.mxu0
    %5866 = vdwg.mxu0
    %5867 = vmatpush.bf16.msra.mxu0 %v4562
    %5868 = vmatpush.bf16.msra.mxu0 %v4554
    %5869 = vmatpush.bf16.msra.mxu0 %v4546
    %5870 = vmatpush.bf16.msra.mxu0 %v4538
    %5871 = vmatpush.bf16.msra.mxu0 %v4530
    %5872 = vmatpush.bf16.msra.mxu0 %v4522
    %5873 = vmatpush.bf16.msra.mxu0 %v4514
    %5874 = vmatpush.bf16.msra.mxu0 %v4506
    %5875 = vmatmul.bf16.gmra.mxu0 %v1033
    %v5876 = vpop.f32.mrf.mxu0
    %v5877 = vadd.f32 %v5864, %v5876
    %v5878 = vpop.f32.mrf.mxu0
    %5879 = vdwg.mxu0
    %5880 = vmatpush.bf16.msra.mxu0 %v4626
    %5881 = vmatpush.bf16.msra.mxu0 %v4618
    %5882 = vmatpush.bf16.msra.mxu0 %v4610
    %5883 = vmatpush.bf16.msra.mxu0 %v4602
    %5884 = vmatpush.bf16.msra.mxu0 %v4594
    %5885 = vmatpush.bf16.msra.mxu0 %v4586
    %5886 = vmatpush.bf16.msra.mxu0 %v4578
    %5887 = vmatpush.bf16.msra.mxu0 %v4570
    %5888 = vmatmul.bf16.gmra.mxu0 %v1034
    %v5889 = vpop.f32.mrf.mxu0
    %v5890 = vadd.f32 %v5877, %v5889
    %v5891 = vpop.f32.mrf.mxu0
    %5892 = vdwg.mxu0
    %5893 = vmatpush.bf16.msra.mxu0 %v3795
    %5894 = vmatpush.bf16.msra.mxu0 %v3787
    %5895 = vmatpush.bf16.msra.mxu0 %v3779
    %5896 = vmatpush.bf16.msra.mxu0 %v3771
    %5897 = vmatpush.bf16.msra.mxu0 %v3763
    %5898 = vmatpush.bf16.msra.mxu0 %v3755
    %5899 = vmatpush.bf16.msra.mxu0 %v3747
    %5900 = vmatpush.bf16.msra.mxu0 %v3739
    %5901 = vmatmul.bf16.gmra.mxu0 %v1021
    %v5902 = vpop.f32.mrf.mxu0
    %v5903 = vadd.f32 %v986, %v5902
    %v5904 = vpop.f32.mrf.mxu0
    %5905 = vdwg.mxu0
    %5906 = vmatpush.bf16.msra.mxu0 %v3859
    %5907 = vmatpush.bf16.msra.mxu0 %v3851
    %5908 = vmatpush.bf16.msra.mxu0 %v3843
    %5909 = vmatpush.bf16.msra.mxu0 %v3835
    %5910 = vmatpush.bf16.msra.mxu0 %v3827
    %5911 = vmatpush.bf16.msra.mxu0 %v3819
    %5912 = vmatpush.bf16.msra.mxu0 %v3811
    %5913 = vmatpush.bf16.msra.mxu0 %v3803
    %5914 = vmatmul.bf16.gmra.mxu0 %v1022
    %v5915 = vpop.f32.mrf.mxu0
    %v5916 = vadd.f32 %v5903, %v5915
    %v5917 = vpop.f32.mrf.mxu0
    %5918 = vdwg.mxu0
    %5919 = vmatpush.bf16.msra.mxu0 %v3923
    %5920 = vmatpush.bf16.msra.mxu0 %v3915
    %5921 = vmatpush.bf16.msra.mxu0 %v3907
    %5922 = vmatpush.bf16.msra.mxu0 %v3899
    %5923 = vmatpush.bf16.msra.mxu0 %v3891
    %5924 = vmatpush.bf16.msra.mxu0 %v3883
    %5925 = vmatpush.bf16.msra.mxu0 %v3875
    %5926 = vmatpush.bf16.msra.mxu0 %v3867
    %5927 = vmatmul.bf16.gmra.mxu0 %v1023
    %v5928 = vpop.f32.mrf.mxu0
    %v5929 = vadd.f32 %v5916, %v5928
    %v5930 = vpop.f32.mrf.mxu0
    %5931 = vdwg.mxu0
    %5932 = vmatpush.bf16.msra.mxu0 %v3987
    %5933 = vmatpush.bf16.msra.mxu0 %v3979
    %5934 = vmatpush.bf16.msra.mxu0 %v3971
    %5935 = vmatpush.bf16.msra.mxu0 %v3963
    %5936 = vmatpush.bf16.msra.mxu0 %v3955
    %5937 = vmatpush.bf16.msra.mxu0 %v3947
    %5938 = vmatpush.bf16.msra.mxu0 %v3939
    %5939 = vmatpush.bf16.msra.mxu0 %v3931
    %5940 = vmatmul.bf16.gmra.mxu0 %v1024
    %v5941 = vpop.f32.mrf.mxu0
    %v5942 = vadd.f32 %v5929, %v5941
    %v5943 = vpop.f32.mrf.mxu0
    %5944 = vdwg.mxu0
    %5945 = vmatpush.bf16.msra.mxu0 %v4051
    %5946 = vmatpush.bf16.msra.mxu0 %v4043
    %5947 = vmatpush.bf16.msra.mxu0 %v4035
    %5948 = vmatpush.bf16.msra.mxu0 %v4027
    %5949 = vmatpush.bf16.msra.mxu0 %v4019
    %5950 = vmatpush.bf16.msra.mxu0 %v4011
    %5951 = vmatpush.bf16.msra.mxu0 %v4003
    %5952 = vmatpush.bf16.msra.mxu0 %v3995
    %5953 = vmatmul.bf16.gmra.mxu0 %v1025
    %v5954 = vpop.f32.mrf.mxu0
    %v5955 = vadd.f32 %v5942, %v5954
    %v5956 = vpop.f32.mrf.mxu0
    %5957 = vdwg.mxu0
    %5958 = vmatpush.bf16.msra.mxu0 %v4115
    %5959 = vmatpush.bf16.msra.mxu0 %v4107
    %5960 = vmatpush.bf16.msra.mxu0 %v4099
    %5961 = vmatpush.bf16.msra.mxu0 %v4091
    %5962 = vmatpush.bf16.msra.mxu0 %v4083
    %5963 = vmatpush.bf16.msra.mxu0 %v4075
    %5964 = vmatpush.bf16.msra.mxu0 %v4067
    %5965 = vmatpush.bf16.msra.mxu0 %v4059
    %5966 = vmatmul.bf16.gmra.mxu0 %v1026
    %v5967 = vpop.f32.mrf.mxu0
    %v5968 = vadd.f32 %v5955, %v5967
    %v5969 = vpop.f32.mrf.mxu0
    %5970 = vdwg.mxu0
    %5971 = vmatpush.bf16.msra.mxu0 %v4179
    %5972 = vmatpush.bf16.msra.mxu0 %v4171
    %5973 = vmatpush.bf16.msra.mxu0 %v4163
    %5974 = vmatpush.bf16.msra.mxu0 %v4155
    %5975 = vmatpush.bf16.msra.mxu0 %v4147
    %5976 = vmatpush.bf16.msra.mxu0 %v4139
    %5977 = vmatpush.bf16.msra.mxu0 %v4131
    %5978 = vmatpush.bf16.msra.mxu0 %v4123
    %5979 = vmatmul.bf16.gmra.mxu0 %v1027
    %v5980 = vpop.f32.mrf.mxu0
    %v5981 = vadd.f32 %v5968, %v5980
    %v5982 = vpop.f32.mrf.mxu0
    %5983 = vdwg.mxu0
    %5984 = vmatpush.bf16.msra.mxu0 %v4243
    %5985 = vmatpush.bf16.msra.mxu0 %v4235
    %5986 = vmatpush.bf16.msra.mxu0 %v4227
    %5987 = vmatpush.bf16.msra.mxu0 %v4219
    %5988 = vmatpush.bf16.msra.mxu0 %v4211
    %5989 = vmatpush.bf16.msra.mxu0 %v4203
    %5990 = vmatpush.bf16.msra.mxu0 %v4195
    %5991 = vmatpush.bf16.msra.mxu0 %v4187
    %5992 = vmatmul.bf16.gmra.mxu0 %v1028
    %v5993 = vpop.f32.mrf.mxu0
    %v5994 = vadd.f32 %v5981, %v5993
    %v5995 = vpop.f32.mrf.mxu0
    %5996 = vdwg.mxu0
    %5997 = vmatpush.bf16.msra.mxu0 %v4307
    %5998 = vmatpush.bf16.msra.mxu0 %v4299
    %5999 = vmatpush.bf16.msra.mxu0 %v4291
    %6000 = vmatpush.bf16.msra.mxu0 %v4283
    %6001 = vmatpush.bf16.msra.mxu0 %v4275
    %6002 = vmatpush.bf16.msra.mxu0 %v4267
    %6003 = vmatpush.bf16.msra.mxu0 %v4259
    %6004 = vmatpush.bf16.msra.mxu0 %v4251
    %6005 = vmatmul.bf16.gmra.mxu0 %v1029
    %v6006 = vpop.f32.mrf.mxu0
    %v6007 = vadd.f32 %v5994, %v6006
    %v6008 = vpop.f32.mrf.mxu0
    %6009 = vdwg.mxu0
    %6010 = vmatpush.bf16.msra.mxu0 %v4371
    %6011 = vmatpush.bf16.msra.mxu0 %v4363
    %6012 = vmatpush.bf16.msra.mxu0 %v4355
    %6013 = vmatpush.bf16.msra.mxu0 %v4347
    %6014 = vmatpush.bf16.msra.mxu0 %v4339
    %6015 = vmatpush.bf16.msra.mxu0 %v4331
    %6016 = vmatpush.bf16.msra.mxu0 %v4323
    %6017 = vmatpush.bf16.msra.mxu0 %v4315
    %6018 = vmatmul.bf16.gmra.mxu0 %v1030
    %v6019 = vpop.f32.mrf.mxu0
    %v6020 = vadd.f32 %v6007, %v6019
    %v6021 = vpop.f32.mrf.mxu0
    %6022 = vdwg.mxu0
    %6023 = vmatpush.bf16.msra.mxu0 %v4435
    %6024 = vmatpush.bf16.msra.mxu0 %v4427
    %6025 = vmatpush.bf16.msra.mxu0 %v4419
    %6026 = vmatpush.bf16.msra.mxu0 %v4411
    %6027 = vmatpush.bf16.msra.mxu0 %v4403
    %6028 = vmatpush.bf16.msra.mxu0 %v4395
    %6029 = vmatpush.bf16.msra.mxu0 %v4387
    %6030 = vmatpush.bf16.msra.mxu0 %v4379
    %6031 = vmatmul.bf16.gmra.mxu0 %v1031
    %v6032 = vpop.f32.mrf.mxu0
    %v6033 = vadd.f32 %v6020, %v6032
    %v6034 = vpop.f32.mrf.mxu0
    %6035 = vdwg.mxu0
    %6036 = vmatpush.bf16.msra.mxu0 %v4499
    %6037 = vmatpush.bf16.msra.mxu0 %v4491
    %6038 = vmatpush.bf16.msra.mxu0 %v4483
    %6039 = vmatpush.bf16.msra.mxu0 %v4475
    %6040 = vmatpush.bf16.msra.mxu0 %v4467
    %6041 = vmatpush.bf16.msra.mxu0 %v4459
    %6042 = vmatpush.bf16.msra.mxu0 %v4451
    %6043 = vmatpush.bf16.msra.mxu0 %v4443
    %6044 = vmatmul.bf16.gmra.mxu0 %v1032
    %v6045 = vpop.f32.mrf.mxu0
    %v6046 = vadd.f32 %v6033, %v6045
    %v6047 = vpop.f32.mrf.mxu0
    %6048 = vdwg.mxu0
    %6049 = vmatpush.bf16.msra.mxu0 %v4563
    %6050 = vmatpush.bf16.msra.mxu0 %v4555
    %6051 = vmatpush.bf16.msra.mxu0 %v4547
    %6052 = vmatpush.bf16.msra.mxu0 %v4539
    %6053 = vmatpush.bf16.msra.mxu0 %v4531
    %6054 = vmatpush.bf16.msra.mxu0 %v4523
    %6055 = vmatpush.bf16.msra.mxu0 %v4515
    %6056 = vmatpush.bf16.msra.mxu0 %v4507
    %6057 = vmatmul.bf16.gmra.mxu0 %v1033
    %v6058 = vpop.f32.mrf.mxu0
    %v6059 = vadd.f32 %v6046, %v6058
    %v6060 = vpop.f32.mrf.mxu0
    %6061 = vdwg.mxu0
    %6062 = vmatpush.bf16.msra.mxu0 %v4627
    %6063 = vmatpush.bf16.msra.mxu0 %v4619
    %6064 = vmatpush.bf16.msra.mxu0 %v4611
    %6065 = vmatpush.bf16.msra.mxu0 %v4603
    %6066 = vmatpush.bf16.msra.mxu0 %v4595
    %6067 = vmatpush.bf16.msra.mxu0 %v4587
    %6068 = vmatpush.bf16.msra.mxu0 %v4579
    %6069 = vmatpush.bf16.msra.mxu0 %v4571
    %6070 = vmatmul.bf16.gmra.mxu0 %v1034
    %v6071 = vpop.f32.mrf.mxu0
    %v6072 = vadd.f32 %v6059, %v6071
    %v6073 = vpop.f32.mrf.mxu0
    %6074 = vdwg.mxu0
    %6075 = vmatpush.bf16.msra.mxu0 %v3796
    %6076 = vmatpush.bf16.msra.mxu0 %v3788
    %6077 = vmatpush.bf16.msra.mxu0 %v3780
    %6078 = vmatpush.bf16.msra.mxu0 %v3772
    %6079 = vmatpush.bf16.msra.mxu0 %v3764
    %6080 = vmatpush.bf16.msra.mxu0 %v3756
    %6081 = vmatpush.bf16.msra.mxu0 %v3748
    %6082 = vmatpush.bf16.msra.mxu0 %v3740
    %6083 = vmatmul.bf16.gmra.mxu0 %v1021
    %v6084 = vpop.f32.mrf.mxu0
    %v6085 = vadd.f32 %v987, %v6084
    %v6086 = vpop.f32.mrf.mxu0
    %6087 = vdwg.mxu0
    %6088 = vmatpush.bf16.msra.mxu0 %v3860
    %6089 = vmatpush.bf16.msra.mxu0 %v3852
    %6090 = vmatpush.bf16.msra.mxu0 %v3844
    %6091 = vmatpush.bf16.msra.mxu0 %v3836
    %6092 = vmatpush.bf16.msra.mxu0 %v3828
    %6093 = vmatpush.bf16.msra.mxu0 %v3820
    %6094 = vmatpush.bf16.msra.mxu0 %v3812
    %6095 = vmatpush.bf16.msra.mxu0 %v3804
    %6096 = vmatmul.bf16.gmra.mxu0 %v1022
    %v6097 = vpop.f32.mrf.mxu0
    %v6098 = vadd.f32 %v6085, %v6097
    %v6099 = vpop.f32.mrf.mxu0
    %6100 = vdwg.mxu0
    %6101 = vmatpush.bf16.msra.mxu0 %v3924
    %6102 = vmatpush.bf16.msra.mxu0 %v3916
    %6103 = vmatpush.bf16.msra.mxu0 %v3908
    %6104 = vmatpush.bf16.msra.mxu0 %v3900
    %6105 = vmatpush.bf16.msra.mxu0 %v3892
    %6106 = vmatpush.bf16.msra.mxu0 %v3884
    %6107 = vmatpush.bf16.msra.mxu0 %v3876
    %6108 = vmatpush.bf16.msra.mxu0 %v3868
    %6109 = vmatmul.bf16.gmra.mxu0 %v1023
    %v6110 = vpop.f32.mrf.mxu0
    %v6111 = vadd.f32 %v6098, %v6110
    %v6112 = vpop.f32.mrf.mxu0
    %6113 = vdwg.mxu0
    %6114 = vmatpush.bf16.msra.mxu0 %v3988
    %6115 = vmatpush.bf16.msra.mxu0 %v3980
    %6116 = vmatpush.bf16.msra.mxu0 %v3972
    %6117 = vmatpush.bf16.msra.mxu0 %v3964
    %6118 = vmatpush.bf16.msra.mxu0 %v3956
    %6119 = vmatpush.bf16.msra.mxu0 %v3948
    %6120 = vmatpush.bf16.msra.mxu0 %v3940
    %6121 = vmatpush.bf16.msra.mxu0 %v3932
    %6122 = vmatmul.bf16.gmra.mxu0 %v1024
    %v6123 = vpop.f32.mrf.mxu0
    %v6124 = vadd.f32 %v6111, %v6123
    %v6125 = vpop.f32.mrf.mxu0
    %6126 = vdwg.mxu0
    %6127 = vmatpush.bf16.msra.mxu0 %v4052
    %6128 = vmatpush.bf16.msra.mxu0 %v4044
    %6129 = vmatpush.bf16.msra.mxu0 %v4036
    %6130 = vmatpush.bf16.msra.mxu0 %v4028
    %6131 = vmatpush.bf16.msra.mxu0 %v4020
    %6132 = vmatpush.bf16.msra.mxu0 %v4012
    %6133 = vmatpush.bf16.msra.mxu0 %v4004
    %6134 = vmatpush.bf16.msra.mxu0 %v3996
    %6135 = vmatmul.bf16.gmra.mxu0 %v1025
    %v6136 = vpop.f32.mrf.mxu0
    %v6137 = vadd.f32 %v6124, %v6136
    %v6138 = vpop.f32.mrf.mxu0
    %6139 = vdwg.mxu0
    %6140 = vmatpush.bf16.msra.mxu0 %v4116
    %6141 = vmatpush.bf16.msra.mxu0 %v4108
    %6142 = vmatpush.bf16.msra.mxu0 %v4100
    %6143 = vmatpush.bf16.msra.mxu0 %v4092
    %6144 = vmatpush.bf16.msra.mxu0 %v4084
    %6145 = vmatpush.bf16.msra.mxu0 %v4076
    %6146 = vmatpush.bf16.msra.mxu0 %v4068
    %6147 = vmatpush.bf16.msra.mxu0 %v4060
    %6148 = vmatmul.bf16.gmra.mxu0 %v1026
    %v6149 = vpop.f32.mrf.mxu0
    %v6150 = vadd.f32 %v6137, %v6149
    %v6151 = vpop.f32.mrf.mxu0
    %6152 = vdwg.mxu0
    %6153 = vmatpush.bf16.msra.mxu0 %v4180
    %6154 = vmatpush.bf16.msra.mxu0 %v4172
    %6155 = vmatpush.bf16.msra.mxu0 %v4164
    %6156 = vmatpush.bf16.msra.mxu0 %v4156
    %6157 = vmatpush.bf16.msra.mxu0 %v4148
    %6158 = vmatpush.bf16.msra.mxu0 %v4140
    %6159 = vmatpush.bf16.msra.mxu0 %v4132
    %6160 = vmatpush.bf16.msra.mxu0 %v4124
    %6161 = vmatmul.bf16.gmra.mxu0 %v1027
    %v6162 = vpop.f32.mrf.mxu0
    %v6163 = vadd.f32 %v6150, %v6162
    %v6164 = vpop.f32.mrf.mxu0
    %6165 = vdwg.mxu0
    %6166 = vmatpush.bf16.msra.mxu0 %v4244
    %6167 = vmatpush.bf16.msra.mxu0 %v4236
    %6168 = vmatpush.bf16.msra.mxu0 %v4228
    %6169 = vmatpush.bf16.msra.mxu0 %v4220
    %6170 = vmatpush.bf16.msra.mxu0 %v4212
    %6171 = vmatpush.bf16.msra.mxu0 %v4204
    %6172 = vmatpush.bf16.msra.mxu0 %v4196
    %6173 = vmatpush.bf16.msra.mxu0 %v4188
    %6174 = vmatmul.bf16.gmra.mxu0 %v1028
    %v6175 = vpop.f32.mrf.mxu0
    %v6176 = vadd.f32 %v6163, %v6175
    %v6177 = vpop.f32.mrf.mxu0
    %6178 = vdwg.mxu0
    %6179 = vmatpush.bf16.msra.mxu0 %v4308
    %6180 = vmatpush.bf16.msra.mxu0 %v4300
    %6181 = vmatpush.bf16.msra.mxu0 %v4292
    %6182 = vmatpush.bf16.msra.mxu0 %v4284
    %6183 = vmatpush.bf16.msra.mxu0 %v4276
    %6184 = vmatpush.bf16.msra.mxu0 %v4268
    %6185 = vmatpush.bf16.msra.mxu0 %v4260
    %6186 = vmatpush.bf16.msra.mxu0 %v4252
    %6187 = vmatmul.bf16.gmra.mxu0 %v1029
    %v6188 = vpop.f32.mrf.mxu0
    %v6189 = vadd.f32 %v6176, %v6188
    %v6190 = vpop.f32.mrf.mxu0
    %6191 = vdwg.mxu0
    %6192 = vmatpush.bf16.msra.mxu0 %v4372
    %6193 = vmatpush.bf16.msra.mxu0 %v4364
    %6194 = vmatpush.bf16.msra.mxu0 %v4356
    %6195 = vmatpush.bf16.msra.mxu0 %v4348
    %6196 = vmatpush.bf16.msra.mxu0 %v4340
    %6197 = vmatpush.bf16.msra.mxu0 %v4332
    %6198 = vmatpush.bf16.msra.mxu0 %v4324
    %6199 = vmatpush.bf16.msra.mxu0 %v4316
    %6200 = vmatmul.bf16.gmra.mxu0 %v1030
    %v6201 = vpop.f32.mrf.mxu0
    %v6202 = vadd.f32 %v6189, %v6201
    %v6203 = vpop.f32.mrf.mxu0
    %6204 = vdwg.mxu0
    %6205 = vmatpush.bf16.msra.mxu0 %v4436
    %6206 = vmatpush.bf16.msra.mxu0 %v4428
    %6207 = vmatpush.bf16.msra.mxu0 %v4420
    %6208 = vmatpush.bf16.msra.mxu0 %v4412
    %6209 = vmatpush.bf16.msra.mxu0 %v4404
    %6210 = vmatpush.bf16.msra.mxu0 %v4396
    %6211 = vmatpush.bf16.msra.mxu0 %v4388
    %6212 = vmatpush.bf16.msra.mxu0 %v4380
    %6213 = vmatmul.bf16.gmra.mxu0 %v1031
    %v6214 = vpop.f32.mrf.mxu0
    %v6215 = vadd.f32 %v6202, %v6214
    %v6216 = vpop.f32.mrf.mxu0
    %6217 = vdwg.mxu0
    %6218 = vmatpush.bf16.msra.mxu0 %v4500
    %6219 = vmatpush.bf16.msra.mxu0 %v4492
    %6220 = vmatpush.bf16.msra.mxu0 %v4484
    %6221 = vmatpush.bf16.msra.mxu0 %v4476
    %6222 = vmatpush.bf16.msra.mxu0 %v4468
    %6223 = vmatpush.bf16.msra.mxu0 %v4460
    %6224 = vmatpush.bf16.msra.mxu0 %v4452
    %6225 = vmatpush.bf16.msra.mxu0 %v4444
    %6226 = vmatmul.bf16.gmra.mxu0 %v1032
    %v6227 = vpop.f32.mrf.mxu0
    %v6228 = vadd.f32 %v6215, %v6227
    %v6229 = vpop.f32.mrf.mxu0
    %6230 = vdwg.mxu0
    %6231 = vmatpush.bf16.msra.mxu0 %v4564
    %6232 = vmatpush.bf16.msra.mxu0 %v4556
    %6233 = vmatpush.bf16.msra.mxu0 %v4548
    %6234 = vmatpush.bf16.msra.mxu0 %v4540
    %6235 = vmatpush.bf16.msra.mxu0 %v4532
    %6236 = vmatpush.bf16.msra.mxu0 %v4524
    %6237 = vmatpush.bf16.msra.mxu0 %v4516
    %6238 = vmatpush.bf16.msra.mxu0 %v4508
    %6239 = vmatmul.bf16.gmra.mxu0 %v1033
    %v6240 = vpop.f32.mrf.mxu0
    %v6241 = vadd.f32 %v6228, %v6240
    %v6242 = vpop.f32.mrf.mxu0
    %6243 = vdwg.mxu0
    %6244 = vmatpush.bf16.msra.mxu0 %v4628
    %6245 = vmatpush.bf16.msra.mxu0 %v4620
    %6246 = vmatpush.bf16.msra.mxu0 %v4612
    %6247 = vmatpush.bf16.msra.mxu0 %v4604
    %6248 = vmatpush.bf16.msra.mxu0 %v4596
    %6249 = vmatpush.bf16.msra.mxu0 %v4588
    %6250 = vmatpush.bf16.msra.mxu0 %v4580
    %6251 = vmatpush.bf16.msra.mxu0 %v4572
    %6252 = vmatmul.bf16.gmra.mxu0 %v1034
    %v6253 = vpop.f32.mrf.mxu0
    %v6254 = vadd.f32 %v6241, %v6253
    %v6255 = vpop.f32.mrf.mxu0
    %6256 = vdwg.mxu0
    %6257 = vmatpush.bf16.msra.mxu0 %v3797
    %6258 = vmatpush.bf16.msra.mxu0 %v3789
    %6259 = vmatpush.bf16.msra.mxu0 %v3781
    %6260 = vmatpush.bf16.msra.mxu0 %v3773
    %6261 = vmatpush.bf16.msra.mxu0 %v3765
    %6262 = vmatpush.bf16.msra.mxu0 %v3757
    %6263 = vmatpush.bf16.msra.mxu0 %v3749
    %6264 = vmatpush.bf16.msra.mxu0 %v3741
    %6265 = vmatmul.bf16.gmra.mxu0 %v1021
    %v6266 = vpop.f32.mrf.mxu0
    %v6267 = vadd.f32 %v988, %v6266
    %v6268 = vpop.f32.mrf.mxu0
    %6269 = vdwg.mxu0
    %6270 = vmatpush.bf16.msra.mxu0 %v3861
    %6271 = vmatpush.bf16.msra.mxu0 %v3853
    %6272 = vmatpush.bf16.msra.mxu0 %v3845
    %6273 = vmatpush.bf16.msra.mxu0 %v3837
    %6274 = vmatpush.bf16.msra.mxu0 %v3829
    %6275 = vmatpush.bf16.msra.mxu0 %v3821
    %6276 = vmatpush.bf16.msra.mxu0 %v3813
    %6277 = vmatpush.bf16.msra.mxu0 %v3805
    %6278 = vmatmul.bf16.gmra.mxu0 %v1022
    %v6279 = vpop.f32.mrf.mxu0
    %v6280 = vadd.f32 %v6267, %v6279
    %v6281 = vpop.f32.mrf.mxu0
    %6282 = vdwg.mxu0
    %6283 = vmatpush.bf16.msra.mxu0 %v3925
    %6284 = vmatpush.bf16.msra.mxu0 %v3917
    %6285 = vmatpush.bf16.msra.mxu0 %v3909
    %6286 = vmatpush.bf16.msra.mxu0 %v3901
    %6287 = vmatpush.bf16.msra.mxu0 %v3893
    %6288 = vmatpush.bf16.msra.mxu0 %v3885
    %6289 = vmatpush.bf16.msra.mxu0 %v3877
    %6290 = vmatpush.bf16.msra.mxu0 %v3869
    %6291 = vmatmul.bf16.gmra.mxu0 %v1023
    %v6292 = vpop.f32.mrf.mxu0
    %v6293 = vadd.f32 %v6280, %v6292
    %v6294 = vpop.f32.mrf.mxu0
    %6295 = vdwg.mxu0
    %6296 = vmatpush.bf16.msra.mxu0 %v3989
    %6297 = vmatpush.bf16.msra.mxu0 %v3981
    %6298 = vmatpush.bf16.msra.mxu0 %v3973
    %6299 = vmatpush.bf16.msra.mxu0 %v3965
    %6300 = vmatpush.bf16.msra.mxu0 %v3957
    %6301 = vmatpush.bf16.msra.mxu0 %v3949
    %6302 = vmatpush.bf16.msra.mxu0 %v3941
    %6303 = vmatpush.bf16.msra.mxu0 %v3933
    %6304 = vmatmul.bf16.gmra.mxu0 %v1024
    %v6305 = vpop.f32.mrf.mxu0
    %v6306 = vadd.f32 %v6293, %v6305
    %v6307 = vpop.f32.mrf.mxu0
    %6308 = vdwg.mxu0
    %6309 = vmatpush.bf16.msra.mxu0 %v4053
    %6310 = vmatpush.bf16.msra.mxu0 %v4045
    %6311 = vmatpush.bf16.msra.mxu0 %v4037
    %6312 = vmatpush.bf16.msra.mxu0 %v4029
    %6313 = vmatpush.bf16.msra.mxu0 %v4021
    %6314 = vmatpush.bf16.msra.mxu0 %v4013
    %6315 = vmatpush.bf16.msra.mxu0 %v4005
    %6316 = vmatpush.bf16.msra.mxu0 %v3997
    %6317 = vmatmul.bf16.gmra.mxu0 %v1025
    %v6318 = vpop.f32.mrf.mxu0
    %v6319 = vadd.f32 %v6306, %v6318
    %v6320 = vpop.f32.mrf.mxu0
    %6321 = vdwg.mxu0
    %6322 = vmatpush.bf16.msra.mxu0 %v4117
    %6323 = vmatpush.bf16.msra.mxu0 %v4109
    %6324 = vmatpush.bf16.msra.mxu0 %v4101
    %6325 = vmatpush.bf16.msra.mxu0 %v4093
    %6326 = vmatpush.bf16.msra.mxu0 %v4085
    %6327 = vmatpush.bf16.msra.mxu0 %v4077
    %6328 = vmatpush.bf16.msra.mxu0 %v4069
    %6329 = vmatpush.bf16.msra.mxu0 %v4061
    %6330 = vmatmul.bf16.gmra.mxu0 %v1026
    %v6331 = vpop.f32.mrf.mxu0
    %v6332 = vadd.f32 %v6319, %v6331
    %v6333 = vpop.f32.mrf.mxu0
    %6334 = vdwg.mxu0
    %6335 = vmatpush.bf16.msra.mxu0 %v4181
    %6336 = vmatpush.bf16.msra.mxu0 %v4173
    %6337 = vmatpush.bf16.msra.mxu0 %v4165
    %6338 = vmatpush.bf16.msra.mxu0 %v4157
    %6339 = vmatpush.bf16.msra.mxu0 %v4149
    %6340 = vmatpush.bf16.msra.mxu0 %v4141
    %6341 = vmatpush.bf16.msra.mxu0 %v4133
    %6342 = vmatpush.bf16.msra.mxu0 %v4125
    %6343 = vmatmul.bf16.gmra.mxu0 %v1027
    %v6344 = vpop.f32.mrf.mxu0
    %v6345 = vadd.f32 %v6332, %v6344
    %v6346 = vpop.f32.mrf.mxu0
    %6347 = vdwg.mxu0
    %6348 = vmatpush.bf16.msra.mxu0 %v4245
    %6349 = vmatpush.bf16.msra.mxu0 %v4237
    %6350 = vmatpush.bf16.msra.mxu0 %v4229
    %6351 = vmatpush.bf16.msra.mxu0 %v4221
    %6352 = vmatpush.bf16.msra.mxu0 %v4213
    %6353 = vmatpush.bf16.msra.mxu0 %v4205
    %6354 = vmatpush.bf16.msra.mxu0 %v4197
    %6355 = vmatpush.bf16.msra.mxu0 %v4189
    %6356 = vmatmul.bf16.gmra.mxu0 %v1028
    %v6357 = vpop.f32.mrf.mxu0
    %v6358 = vadd.f32 %v6345, %v6357
    %v6359 = vpop.f32.mrf.mxu0
    %6360 = vdwg.mxu0
    %6361 = vmatpush.bf16.msra.mxu0 %v4309
    %6362 = vmatpush.bf16.msra.mxu0 %v4301
    %6363 = vmatpush.bf16.msra.mxu0 %v4293
    %6364 = vmatpush.bf16.msra.mxu0 %v4285
    %6365 = vmatpush.bf16.msra.mxu0 %v4277
    %6366 = vmatpush.bf16.msra.mxu0 %v4269
    %6367 = vmatpush.bf16.msra.mxu0 %v4261
    %6368 = vmatpush.bf16.msra.mxu0 %v4253
    %6369 = vmatmul.bf16.gmra.mxu0 %v1029
    %v6370 = vpop.f32.mrf.mxu0
    %v6371 = vadd.f32 %v6358, %v6370
    %v6372 = vpop.f32.mrf.mxu0
    %6373 = vdwg.mxu0
    %6374 = vmatpush.bf16.msra.mxu0 %v4373
    %6375 = vmatpush.bf16.msra.mxu0 %v4365
    %6376 = vmatpush.bf16.msra.mxu0 %v4357
    %6377 = vmatpush.bf16.msra.mxu0 %v4349
    %6378 = vmatpush.bf16.msra.mxu0 %v4341
    %6379 = vmatpush.bf16.msra.mxu0 %v4333
    %6380 = vmatpush.bf16.msra.mxu0 %v4325
    %6381 = vmatpush.bf16.msra.mxu0 %v4317
    %6382 = vmatmul.bf16.gmra.mxu0 %v1030
    %v6383 = vpop.f32.mrf.mxu0
    %v6384 = vadd.f32 %v6371, %v6383
    %v6385 = vpop.f32.mrf.mxu0
    %6386 = vdwg.mxu0
    %6387 = vmatpush.bf16.msra.mxu0 %v4437
    %6388 = vmatpush.bf16.msra.mxu0 %v4429
    %6389 = vmatpush.bf16.msra.mxu0 %v4421
    %6390 = vmatpush.bf16.msra.mxu0 %v4413
    %6391 = vmatpush.bf16.msra.mxu0 %v4405
    %6392 = vmatpush.bf16.msra.mxu0 %v4397
    %6393 = vmatpush.bf16.msra.mxu0 %v4389
    %6394 = vmatpush.bf16.msra.mxu0 %v4381
    %6395 = vmatmul.bf16.gmra.mxu0 %v1031
    %v6396 = vpop.f32.mrf.mxu0
    %v6397 = vadd.f32 %v6384, %v6396
    %v6398 = vpop.f32.mrf.mxu0
    %6399 = vdwg.mxu0
    %6400 = vmatpush.bf16.msra.mxu0 %v4501
    %6401 = vmatpush.bf16.msra.mxu0 %v4493
    %6402 = vmatpush.bf16.msra.mxu0 %v4485
    %6403 = vmatpush.bf16.msra.mxu0 %v4477
    %6404 = vmatpush.bf16.msra.mxu0 %v4469
    %6405 = vmatpush.bf16.msra.mxu0 %v4461
    %6406 = vmatpush.bf16.msra.mxu0 %v4453
    %6407 = vmatpush.bf16.msra.mxu0 %v4445
    %6408 = vmatmul.bf16.gmra.mxu0 %v1032
    %v6409 = vpop.f32.mrf.mxu0
    %v6410 = vadd.f32 %v6397, %v6409
    %v6411 = vpop.f32.mrf.mxu0
    %6412 = vdwg.mxu0
    %6413 = vmatpush.bf16.msra.mxu0 %v4565
    %6414 = vmatpush.bf16.msra.mxu0 %v4557
    %6415 = vmatpush.bf16.msra.mxu0 %v4549
    %6416 = vmatpush.bf16.msra.mxu0 %v4541
    %6417 = vmatpush.bf16.msra.mxu0 %v4533
    %6418 = vmatpush.bf16.msra.mxu0 %v4525
    %6419 = vmatpush.bf16.msra.mxu0 %v4517
    %6420 = vmatpush.bf16.msra.mxu0 %v4509
    %6421 = vmatmul.bf16.gmra.mxu0 %v1033
    %v6422 = vpop.f32.mrf.mxu0
    %v6423 = vadd.f32 %v6410, %v6422
    %v6424 = vpop.f32.mrf.mxu0
    %6425 = vdwg.mxu0
    %6426 = vmatpush.bf16.msra.mxu0 %v4629
    %6427 = vmatpush.bf16.msra.mxu0 %v4621
    %6428 = vmatpush.bf16.msra.mxu0 %v4613
    %6429 = vmatpush.bf16.msra.mxu0 %v4605
    %6430 = vmatpush.bf16.msra.mxu0 %v4597
    %6431 = vmatpush.bf16.msra.mxu0 %v4589
    %6432 = vmatpush.bf16.msra.mxu0 %v4581
    %6433 = vmatpush.bf16.msra.mxu0 %v4573
    %6434 = vmatmul.bf16.gmra.mxu0 %v1034
    %v6435 = vpop.f32.mrf.mxu0
    %v6436 = vadd.f32 %v6423, %v6435
    %v6437 = vpop.f32.mrf.mxu0
    %6438 = vdwg.mxu0
    %6439 = vmatpush.bf16.msra.mxu0 %v3798
    %6440 = vmatpush.bf16.msra.mxu0 %v3790
    %6441 = vmatpush.bf16.msra.mxu0 %v3782
    %6442 = vmatpush.bf16.msra.mxu0 %v3774
    %6443 = vmatpush.bf16.msra.mxu0 %v3766
    %6444 = vmatpush.bf16.msra.mxu0 %v3758
    %6445 = vmatpush.bf16.msra.mxu0 %v3750
    %6446 = vmatpush.bf16.msra.mxu0 %v3742
    %6447 = vmatmul.bf16.gmra.mxu0 %v1021
    %v6448 = vpop.f32.mrf.mxu0
    %v6449 = vadd.f32 %v989, %v6448
    %v6450 = vpop.f32.mrf.mxu0
    %6451 = vdwg.mxu0
    %6452 = vmatpush.bf16.msra.mxu0 %v3862
    %6453 = vmatpush.bf16.msra.mxu0 %v3854
    %6454 = vmatpush.bf16.msra.mxu0 %v3846
    %6455 = vmatpush.bf16.msra.mxu0 %v3838
    %6456 = vmatpush.bf16.msra.mxu0 %v3830
    %6457 = vmatpush.bf16.msra.mxu0 %v3822
    %6458 = vmatpush.bf16.msra.mxu0 %v3814
    %6459 = vmatpush.bf16.msra.mxu0 %v3806
    %6460 = vmatmul.bf16.gmra.mxu0 %v1022
    %v6461 = vpop.f32.mrf.mxu0
    %v6462 = vadd.f32 %v6449, %v6461
    %v6463 = vpop.f32.mrf.mxu0
    %6464 = vdwg.mxu0
    %6465 = vmatpush.bf16.msra.mxu0 %v3926
    %6466 = vmatpush.bf16.msra.mxu0 %v3918
    %6467 = vmatpush.bf16.msra.mxu0 %v3910
    %6468 = vmatpush.bf16.msra.mxu0 %v3902
    %6469 = vmatpush.bf16.msra.mxu0 %v3894
    %6470 = vmatpush.bf16.msra.mxu0 %v3886
    %6471 = vmatpush.bf16.msra.mxu0 %v3878
    %6472 = vmatpush.bf16.msra.mxu0 %v3870
    %6473 = vmatmul.bf16.gmra.mxu0 %v1023
    %v6474 = vpop.f32.mrf.mxu0
    %v6475 = vadd.f32 %v6462, %v6474
    %v6476 = vpop.f32.mrf.mxu0
    %6477 = vdwg.mxu0
    %6478 = vmatpush.bf16.msra.mxu0 %v3990
    %6479 = vmatpush.bf16.msra.mxu0 %v3982
    %6480 = vmatpush.bf16.msra.mxu0 %v3974
    %6481 = vmatpush.bf16.msra.mxu0 %v3966
    %6482 = vmatpush.bf16.msra.mxu0 %v3958
    %6483 = vmatpush.bf16.msra.mxu0 %v3950
    %6484 = vmatpush.bf16.msra.mxu0 %v3942
    %6485 = vmatpush.bf16.msra.mxu0 %v3934
    %6486 = vmatmul.bf16.gmra.mxu0 %v1024
    %v6487 = vpop.f32.mrf.mxu0
    %v6488 = vadd.f32 %v6475, %v6487
    %v6489 = vpop.f32.mrf.mxu0
    %6490 = vdwg.mxu0
    %6491 = vmatpush.bf16.msra.mxu0 %v4054
    %6492 = vmatpush.bf16.msra.mxu0 %v4046
    %6493 = vmatpush.bf16.msra.mxu0 %v4038
    %6494 = vmatpush.bf16.msra.mxu0 %v4030
    %6495 = vmatpush.bf16.msra.mxu0 %v4022
    %6496 = vmatpush.bf16.msra.mxu0 %v4014
    %6497 = vmatpush.bf16.msra.mxu0 %v4006
    %6498 = vmatpush.bf16.msra.mxu0 %v3998
    %6499 = vmatmul.bf16.gmra.mxu0 %v1025
    %v6500 = vpop.f32.mrf.mxu0
    %v6501 = vadd.f32 %v6488, %v6500
    %v6502 = vpop.f32.mrf.mxu0
    %6503 = vdwg.mxu0
    %6504 = vmatpush.bf16.msra.mxu0 %v4118
    %6505 = vmatpush.bf16.msra.mxu0 %v4110
    %6506 = vmatpush.bf16.msra.mxu0 %v4102
    %6507 = vmatpush.bf16.msra.mxu0 %v4094
    %6508 = vmatpush.bf16.msra.mxu0 %v4086
    %6509 = vmatpush.bf16.msra.mxu0 %v4078
    %6510 = vmatpush.bf16.msra.mxu0 %v4070
    %6511 = vmatpush.bf16.msra.mxu0 %v4062
    %6512 = vmatmul.bf16.gmra.mxu0 %v1026
    %v6513 = vpop.f32.mrf.mxu0
    %v6514 = vadd.f32 %v6501, %v6513
    %v6515 = vpop.f32.mrf.mxu0
    %6516 = vdwg.mxu0
    %6517 = vmatpush.bf16.msra.mxu0 %v4182
    %6518 = vmatpush.bf16.msra.mxu0 %v4174
    %6519 = vmatpush.bf16.msra.mxu0 %v4166
    %6520 = vmatpush.bf16.msra.mxu0 %v4158
    %6521 = vmatpush.bf16.msra.mxu0 %v4150
    %6522 = vmatpush.bf16.msra.mxu0 %v4142
    %6523 = vmatpush.bf16.msra.mxu0 %v4134
    %6524 = vmatpush.bf16.msra.mxu0 %v4126
    %6525 = vmatmul.bf16.gmra.mxu0 %v1027
    %v6526 = vpop.f32.mrf.mxu0
    %v6527 = vadd.f32 %v6514, %v6526
    %v6528 = vpop.f32.mrf.mxu0
    %6529 = vdwg.mxu0
    %6530 = vmatpush.bf16.msra.mxu0 %v4246
    %6531 = vmatpush.bf16.msra.mxu0 %v4238
    %6532 = vmatpush.bf16.msra.mxu0 %v4230
    %6533 = vmatpush.bf16.msra.mxu0 %v4222
    %6534 = vmatpush.bf16.msra.mxu0 %v4214
    %6535 = vmatpush.bf16.msra.mxu0 %v4206
    %6536 = vmatpush.bf16.msra.mxu0 %v4198
    %6537 = vmatpush.bf16.msra.mxu0 %v4190
    %6538 = vmatmul.bf16.gmra.mxu0 %v1028
    %v6539 = vpop.f32.mrf.mxu0
    %v6540 = vadd.f32 %v6527, %v6539
    %v6541 = vpop.f32.mrf.mxu0
    %6542 = vdwg.mxu0
    %6543 = vmatpush.bf16.msra.mxu0 %v4310
    %6544 = vmatpush.bf16.msra.mxu0 %v4302
    %6545 = vmatpush.bf16.msra.mxu0 %v4294
    %6546 = vmatpush.bf16.msra.mxu0 %v4286
    %6547 = vmatpush.bf16.msra.mxu0 %v4278
    %6548 = vmatpush.bf16.msra.mxu0 %v4270
    %6549 = vmatpush.bf16.msra.mxu0 %v4262
    %6550 = vmatpush.bf16.msra.mxu0 %v4254
    %6551 = vmatmul.bf16.gmra.mxu0 %v1029
    %v6552 = vpop.f32.mrf.mxu0
    %v6553 = vadd.f32 %v6540, %v6552
    %v6554 = vpop.f32.mrf.mxu0
    %6555 = vdwg.mxu0
    %6556 = vmatpush.bf16.msra.mxu0 %v4374
    %6557 = vmatpush.bf16.msra.mxu0 %v4366
    %6558 = vmatpush.bf16.msra.mxu0 %v4358
    %6559 = vmatpush.bf16.msra.mxu0 %v4350
    %6560 = vmatpush.bf16.msra.mxu0 %v4342
    %6561 = vmatpush.bf16.msra.mxu0 %v4334
    %6562 = vmatpush.bf16.msra.mxu0 %v4326
    %6563 = vmatpush.bf16.msra.mxu0 %v4318
    %6564 = vmatmul.bf16.gmra.mxu0 %v1030
    %v6565 = vpop.f32.mrf.mxu0
    %v6566 = vadd.f32 %v6553, %v6565
    %v6567 = vpop.f32.mrf.mxu0
    %6568 = vdwg.mxu0
    %6569 = vmatpush.bf16.msra.mxu0 %v4438
    %6570 = vmatpush.bf16.msra.mxu0 %v4430
    %6571 = vmatpush.bf16.msra.mxu0 %v4422
    %6572 = vmatpush.bf16.msra.mxu0 %v4414
    %6573 = vmatpush.bf16.msra.mxu0 %v4406
    %6574 = vmatpush.bf16.msra.mxu0 %v4398
    %6575 = vmatpush.bf16.msra.mxu0 %v4390
    %6576 = vmatpush.bf16.msra.mxu0 %v4382
    %6577 = vmatmul.bf16.gmra.mxu0 %v1031
    %v6578 = vpop.f32.mrf.mxu0
    %v6579 = vadd.f32 %v6566, %v6578
    %v6580 = vpop.f32.mrf.mxu0
    %6581 = vdwg.mxu0
    %6582 = vmatpush.bf16.msra.mxu0 %v4502
    %6583 = vmatpush.bf16.msra.mxu0 %v4494
    %6584 = vmatpush.bf16.msra.mxu0 %v4486
    %6585 = vmatpush.bf16.msra.mxu0 %v4478
    %6586 = vmatpush.bf16.msra.mxu0 %v4470
    %6587 = vmatpush.bf16.msra.mxu0 %v4462
    %6588 = vmatpush.bf16.msra.mxu0 %v4454
    %6589 = vmatpush.bf16.msra.mxu0 %v4446
    %6590 = vmatmul.bf16.gmra.mxu0 %v1032
    %v6591 = vpop.f32.mrf.mxu0
    %v6592 = vadd.f32 %v6579, %v6591
    %v6593 = vpop.f32.mrf.mxu0
    %6594 = vdwg.mxu0
    %6595 = vmatpush.bf16.msra.mxu0 %v4566
    %6596 = vmatpush.bf16.msra.mxu0 %v4558
    %6597 = vmatpush.bf16.msra.mxu0 %v4550
    %6598 = vmatpush.bf16.msra.mxu0 %v4542
    %6599 = vmatpush.bf16.msra.mxu0 %v4534
    %6600 = vmatpush.bf16.msra.mxu0 %v4526
    %6601 = vmatpush.bf16.msra.mxu0 %v4518
    %6602 = vmatpush.bf16.msra.mxu0 %v4510
    %6603 = vmatmul.bf16.gmra.mxu0 %v1033
    %v6604 = vpop.f32.mrf.mxu0
    %v6605 = vadd.f32 %v6592, %v6604
    %v6606 = vpop.f32.mrf.mxu0
    %6607 = vdwg.mxu0
    %6608 = vmatpush.bf16.msra.mxu0 %v4630
    %6609 = vmatpush.bf16.msra.mxu0 %v4622
    %6610 = vmatpush.bf16.msra.mxu0 %v4614
    %6611 = vmatpush.bf16.msra.mxu0 %v4606
    %6612 = vmatpush.bf16.msra.mxu0 %v4598
    %6613 = vmatpush.bf16.msra.mxu0 %v4590
    %6614 = vmatpush.bf16.msra.mxu0 %v4582
    %6615 = vmatpush.bf16.msra.mxu0 %v4574
    %6616 = vmatmul.bf16.gmra.mxu0 %v1034
    %v6617 = vpop.f32.mrf.mxu0
    %v6618 = vadd.f32 %v6605, %v6617
    %v6619 = vpop.f32.mrf.mxu0
    %6620 = vdwg.mxu0
    %6621 = vmatpush.bf16.msra.mxu0 %v3799
    %6622 = vmatpush.bf16.msra.mxu0 %v3791
    %6623 = vmatpush.bf16.msra.mxu0 %v3783
    %6624 = vmatpush.bf16.msra.mxu0 %v3775
    %6625 = vmatpush.bf16.msra.mxu0 %v3767
    %6626 = vmatpush.bf16.msra.mxu0 %v3759
    %6627 = vmatpush.bf16.msra.mxu0 %v3751
    %6628 = vmatpush.bf16.msra.mxu0 %v3743
    %6629 = vmatmul.bf16.gmra.mxu0 %v1021
    %v6630 = vpop.f32.mrf.mxu0
    %v6631 = vadd.f32 %v990, %v6630
    %v6632 = vpop.f32.mrf.mxu0
    %6633 = vdwg.mxu0
    %6634 = vmatpush.bf16.msra.mxu0 %v3863
    %6635 = vmatpush.bf16.msra.mxu0 %v3855
    %6636 = vmatpush.bf16.msra.mxu0 %v3847
    %6637 = vmatpush.bf16.msra.mxu0 %v3839
    %6638 = vmatpush.bf16.msra.mxu0 %v3831
    %6639 = vmatpush.bf16.msra.mxu0 %v3823
    %6640 = vmatpush.bf16.msra.mxu0 %v3815
    %6641 = vmatpush.bf16.msra.mxu0 %v3807
    %6642 = vmatmul.bf16.gmra.mxu0 %v1022
    %v6643 = vpop.f32.mrf.mxu0
    %v6644 = vadd.f32 %v6631, %v6643
    %v6645 = vpop.f32.mrf.mxu0
    %6646 = vdwg.mxu0
    %6647 = vmatpush.bf16.msra.mxu0 %v3927
    %6648 = vmatpush.bf16.msra.mxu0 %v3919
    %6649 = vmatpush.bf16.msra.mxu0 %v3911
    %6650 = vmatpush.bf16.msra.mxu0 %v3903
    %6651 = vmatpush.bf16.msra.mxu0 %v3895
    %6652 = vmatpush.bf16.msra.mxu0 %v3887
    %6653 = vmatpush.bf16.msra.mxu0 %v3879
    %6654 = vmatpush.bf16.msra.mxu0 %v3871
    %6655 = vmatmul.bf16.gmra.mxu0 %v1023
    %v6656 = vpop.f32.mrf.mxu0
    %v6657 = vadd.f32 %v6644, %v6656
    %v6658 = vpop.f32.mrf.mxu0
    %6659 = vdwg.mxu0
    %6660 = vmatpush.bf16.msra.mxu0 %v3991
    %6661 = vmatpush.bf16.msra.mxu0 %v3983
    %6662 = vmatpush.bf16.msra.mxu0 %v3975
    %6663 = vmatpush.bf16.msra.mxu0 %v3967
    %6664 = vmatpush.bf16.msra.mxu0 %v3959
    %6665 = vmatpush.bf16.msra.mxu0 %v3951
    %6666 = vmatpush.bf16.msra.mxu0 %v3943
    %6667 = vmatpush.bf16.msra.mxu0 %v3935
    %6668 = vmatmul.bf16.gmra.mxu0 %v1024
    %v6669 = vpop.f32.mrf.mxu0
    %v6670 = vadd.f32 %v6657, %v6669
    %v6671 = vpop.f32.mrf.mxu0
    %6672 = vdwg.mxu0
    %6673 = vmatpush.bf16.msra.mxu0 %v4055
    %6674 = vmatpush.bf16.msra.mxu0 %v4047
    %6675 = vmatpush.bf16.msra.mxu0 %v4039
    %6676 = vmatpush.bf16.msra.mxu0 %v4031
    %6677 = vmatpush.bf16.msra.mxu0 %v4023
    %6678 = vmatpush.bf16.msra.mxu0 %v4015
    %6679 = vmatpush.bf16.msra.mxu0 %v4007
    %6680 = vmatpush.bf16.msra.mxu0 %v3999
    %6681 = vmatmul.bf16.gmra.mxu0 %v1025
    %v6682 = vpop.f32.mrf.mxu0
    %v6683 = vadd.f32 %v6670, %v6682
    %v6684 = vpop.f32.mrf.mxu0
    %6685 = vdwg.mxu0
    %6686 = vmatpush.bf16.msra.mxu0 %v4119
    %6687 = vmatpush.bf16.msra.mxu0 %v4111
    %6688 = vmatpush.bf16.msra.mxu0 %v4103
    %6689 = vmatpush.bf16.msra.mxu0 %v4095
    %6690 = vmatpush.bf16.msra.mxu0 %v4087
    %6691 = vmatpush.bf16.msra.mxu0 %v4079
    %6692 = vmatpush.bf16.msra.mxu0 %v4071
    %6693 = vmatpush.bf16.msra.mxu0 %v4063
    %6694 = vmatmul.bf16.gmra.mxu0 %v1026
    %v6695 = vpop.f32.mrf.mxu0
    %v6696 = vadd.f32 %v6683, %v6695
    %v6697 = vpop.f32.mrf.mxu0
    %6698 = vdwg.mxu0
    %6699 = vmatpush.bf16.msra.mxu0 %v4183
    %6700 = vmatpush.bf16.msra.mxu0 %v4175
    %6701 = vmatpush.bf16.msra.mxu0 %v4167
    %6702 = vmatpush.bf16.msra.mxu0 %v4159
    %6703 = vmatpush.bf16.msra.mxu0 %v4151
    %6704 = vmatpush.bf16.msra.mxu0 %v4143
    %6705 = vmatpush.bf16.msra.mxu0 %v4135
    %6706 = vmatpush.bf16.msra.mxu0 %v4127
    %6707 = vmatmul.bf16.gmra.mxu0 %v1027
    %v6708 = vpop.f32.mrf.mxu0
    %v6709 = vadd.f32 %v6696, %v6708
    %v6710 = vpop.f32.mrf.mxu0
    %6711 = vdwg.mxu0
    %6712 = vmatpush.bf16.msra.mxu0 %v4247
    %6713 = vmatpush.bf16.msra.mxu0 %v4239
    %6714 = vmatpush.bf16.msra.mxu0 %v4231
    %6715 = vmatpush.bf16.msra.mxu0 %v4223
    %6716 = vmatpush.bf16.msra.mxu0 %v4215
    %6717 = vmatpush.bf16.msra.mxu0 %v4207
    %6718 = vmatpush.bf16.msra.mxu0 %v4199
    %6719 = vmatpush.bf16.msra.mxu0 %v4191
    %6720 = vmatmul.bf16.gmra.mxu0 %v1028
    %v6721 = vpop.f32.mrf.mxu0
    %v6722 = vadd.f32 %v6709, %v6721
    %v6723 = vpop.f32.mrf.mxu0
    %6724 = vdwg.mxu0
    %6725 = vmatpush.bf16.msra.mxu0 %v4311
    %6726 = vmatpush.bf16.msra.mxu0 %v4303
    %6727 = vmatpush.bf16.msra.mxu0 %v4295
    %6728 = vmatpush.bf16.msra.mxu0 %v4287
    %6729 = vmatpush.bf16.msra.mxu0 %v4279
    %6730 = vmatpush.bf16.msra.mxu0 %v4271
    %6731 = vmatpush.bf16.msra.mxu0 %v4263
    %6732 = vmatpush.bf16.msra.mxu0 %v4255
    %6733 = vmatmul.bf16.gmra.mxu0 %v1029
    %v6734 = vpop.f32.mrf.mxu0
    %v6735 = vadd.f32 %v6722, %v6734
    %v6736 = vpop.f32.mrf.mxu0
    %6737 = vdwg.mxu0
    %6738 = vmatpush.bf16.msra.mxu0 %v4375
    %6739 = vmatpush.bf16.msra.mxu0 %v4367
    %6740 = vmatpush.bf16.msra.mxu0 %v4359
    %6741 = vmatpush.bf16.msra.mxu0 %v4351
    %6742 = vmatpush.bf16.msra.mxu0 %v4343
    %6743 = vmatpush.bf16.msra.mxu0 %v4335
    %6744 = vmatpush.bf16.msra.mxu0 %v4327
    %6745 = vmatpush.bf16.msra.mxu0 %v4319
    %6746 = vmatmul.bf16.gmra.mxu0 %v1030
    %v6747 = vpop.f32.mrf.mxu0
    %v6748 = vadd.f32 %v6735, %v6747
    %v6749 = vpop.f32.mrf.mxu0
    %6750 = vdwg.mxu0
    %6751 = vmatpush.bf16.msra.mxu0 %v4439
    %6752 = vmatpush.bf16.msra.mxu0 %v4431
    %6753 = vmatpush.bf16.msra.mxu0 %v4423
    %6754 = vmatpush.bf16.msra.mxu0 %v4415
    %6755 = vmatpush.bf16.msra.mxu0 %v4407
    %6756 = vmatpush.bf16.msra.mxu0 %v4399
    %6757 = vmatpush.bf16.msra.mxu0 %v4391
    %6758 = vmatpush.bf16.msra.mxu0 %v4383
    %6759 = vmatmul.bf16.gmra.mxu0 %v1031
    %v6760 = vpop.f32.mrf.mxu0
    %v6761 = vadd.f32 %v6748, %v6760
    %v6762 = vpop.f32.mrf.mxu0
    %6763 = vdwg.mxu0
    %6764 = vmatpush.bf16.msra.mxu0 %v4503
    %6765 = vmatpush.bf16.msra.mxu0 %v4495
    %6766 = vmatpush.bf16.msra.mxu0 %v4487
    %6767 = vmatpush.bf16.msra.mxu0 %v4479
    %6768 = vmatpush.bf16.msra.mxu0 %v4471
    %6769 = vmatpush.bf16.msra.mxu0 %v4463
    %6770 = vmatpush.bf16.msra.mxu0 %v4455
    %6771 = vmatpush.bf16.msra.mxu0 %v4447
    %6772 = vmatmul.bf16.gmra.mxu0 %v1032
    %v6773 = vpop.f32.mrf.mxu0
    %v6774 = vadd.f32 %v6761, %v6773
    %v6775 = vpop.f32.mrf.mxu0
    %6776 = vdwg.mxu0
    %6777 = vmatpush.bf16.msra.mxu0 %v4567
    %6778 = vmatpush.bf16.msra.mxu0 %v4559
    %6779 = vmatpush.bf16.msra.mxu0 %v4551
    %6780 = vmatpush.bf16.msra.mxu0 %v4543
    %6781 = vmatpush.bf16.msra.mxu0 %v4535
    %6782 = vmatpush.bf16.msra.mxu0 %v4527
    %6783 = vmatpush.bf16.msra.mxu0 %v4519
    %6784 = vmatpush.bf16.msra.mxu0 %v4511
    %6785 = vmatmul.bf16.gmra.mxu0 %v1033
    %v6786 = vpop.f32.mrf.mxu0
    %v6787 = vadd.f32 %v6774, %v6786
    %v6788 = vpop.f32.mrf.mxu0
    %6789 = vdwg.mxu0
    %6790 = vmatpush.bf16.msra.mxu0 %v4631
    %6791 = vmatpush.bf16.msra.mxu0 %v4623
    %6792 = vmatpush.bf16.msra.mxu0 %v4615
    %6793 = vmatpush.bf16.msra.mxu0 %v4607
    %6794 = vmatpush.bf16.msra.mxu0 %v4599
    %6795 = vmatpush.bf16.msra.mxu0 %v4591
    %6796 = vmatpush.bf16.msra.mxu0 %v4583
    %6797 = vmatpush.bf16.msra.mxu0 %v4575
    %6798 = vmatmul.bf16.gmra.mxu0 %v1034
    %v6799 = vpop.f32.mrf.mxu0
    %v6800 = vadd.f32 %v6787, %v6799
    %v6801 = vpop.f32.mrf.mxu0
    %6802 = vdwg.mxu0
    %6803 = vmatpush.bf16.msra.mxu0 %v3800
    %6804 = vmatpush.bf16.msra.mxu0 %v3792
    %6805 = vmatpush.bf16.msra.mxu0 %v3784
    %6806 = vmatpush.bf16.msra.mxu0 %v3776
    %6807 = vmatpush.bf16.msra.mxu0 %v3768
    %6808 = vmatpush.bf16.msra.mxu0 %v3760
    %6809 = vmatpush.bf16.msra.mxu0 %v3752
    %6810 = vmatpush.bf16.msra.mxu0 %v3744
    %6811 = vmatmul.bf16.gmra.mxu0 %v1021
    %v6812 = vpop.f32.mrf.mxu0
    %v6813 = vadd.f32 %v991, %v6812
    %v6814 = vpop.f32.mrf.mxu0
    %6815 = vdwg.mxu0
    %6816 = vmatpush.bf16.msra.mxu0 %v3864
    %6817 = vmatpush.bf16.msra.mxu0 %v3856
    %6818 = vmatpush.bf16.msra.mxu0 %v3848
    %6819 = vmatpush.bf16.msra.mxu0 %v3840
    %6820 = vmatpush.bf16.msra.mxu0 %v3832
    %6821 = vmatpush.bf16.msra.mxu0 %v3824
    %6822 = vmatpush.bf16.msra.mxu0 %v3816
    %6823 = vmatpush.bf16.msra.mxu0 %v3808
    %6824 = vmatmul.bf16.gmra.mxu0 %v1022
    %v6825 = vpop.f32.mrf.mxu0
    %v6826 = vadd.f32 %v6813, %v6825
    %v6827 = vpop.f32.mrf.mxu0
    %6828 = vdwg.mxu0
    %6829 = vmatpush.bf16.msra.mxu0 %v3928
    %6830 = vmatpush.bf16.msra.mxu0 %v3920
    %6831 = vmatpush.bf16.msra.mxu0 %v3912
    %6832 = vmatpush.bf16.msra.mxu0 %v3904
    %6833 = vmatpush.bf16.msra.mxu0 %v3896
    %6834 = vmatpush.bf16.msra.mxu0 %v3888
    %6835 = vmatpush.bf16.msra.mxu0 %v3880
    %6836 = vmatpush.bf16.msra.mxu0 %v3872
    %6837 = vmatmul.bf16.gmra.mxu0 %v1023
    %v6838 = vpop.f32.mrf.mxu0
    %v6839 = vadd.f32 %v6826, %v6838
    %v6840 = vpop.f32.mrf.mxu0
    %6841 = vdwg.mxu0
    %6842 = vmatpush.bf16.msra.mxu0 %v3992
    %6843 = vmatpush.bf16.msra.mxu0 %v3984
    %6844 = vmatpush.bf16.msra.mxu0 %v3976
    %6845 = vmatpush.bf16.msra.mxu0 %v3968
    %6846 = vmatpush.bf16.msra.mxu0 %v3960
    %6847 = vmatpush.bf16.msra.mxu0 %v3952
    %6848 = vmatpush.bf16.msra.mxu0 %v3944
    %6849 = vmatpush.bf16.msra.mxu0 %v3936
    %6850 = vmatmul.bf16.gmra.mxu0 %v1024
    %v6851 = vpop.f32.mrf.mxu0
    %v6852 = vadd.f32 %v6839, %v6851
    %v6853 = vpop.f32.mrf.mxu0
    %6854 = vdwg.mxu0
    %6855 = vmatpush.bf16.msra.mxu0 %v4056
    %6856 = vmatpush.bf16.msra.mxu0 %v4048
    %6857 = vmatpush.bf16.msra.mxu0 %v4040
    %6858 = vmatpush.bf16.msra.mxu0 %v4032
    %6859 = vmatpush.bf16.msra.mxu0 %v4024
    %6860 = vmatpush.bf16.msra.mxu0 %v4016
    %6861 = vmatpush.bf16.msra.mxu0 %v4008
    %6862 = vmatpush.bf16.msra.mxu0 %v4000
    %6863 = vmatmul.bf16.gmra.mxu0 %v1025
    %v6864 = vpop.f32.mrf.mxu0
    %v6865 = vadd.f32 %v6852, %v6864
    %v6866 = vpop.f32.mrf.mxu0
    %6867 = vdwg.mxu0
    %6868 = vmatpush.bf16.msra.mxu0 %v4120
    %6869 = vmatpush.bf16.msra.mxu0 %v4112
    %6870 = vmatpush.bf16.msra.mxu0 %v4104
    %6871 = vmatpush.bf16.msra.mxu0 %v4096
    %6872 = vmatpush.bf16.msra.mxu0 %v4088
    %6873 = vmatpush.bf16.msra.mxu0 %v4080
    %6874 = vmatpush.bf16.msra.mxu0 %v4072
    %6875 = vmatpush.bf16.msra.mxu0 %v4064
    %6876 = vmatmul.bf16.gmra.mxu0 %v1026
    %v6877 = vpop.f32.mrf.mxu0
    %v6878 = vadd.f32 %v6865, %v6877
    %v6879 = vpop.f32.mrf.mxu0
    %6880 = vdwg.mxu0
    %6881 = vmatpush.bf16.msra.mxu0 %v4184
    %6882 = vmatpush.bf16.msra.mxu0 %v4176
    %6883 = vmatpush.bf16.msra.mxu0 %v4168
    %6884 = vmatpush.bf16.msra.mxu0 %v4160
    %6885 = vmatpush.bf16.msra.mxu0 %v4152
    %6886 = vmatpush.bf16.msra.mxu0 %v4144
    %6887 = vmatpush.bf16.msra.mxu0 %v4136
    %6888 = vmatpush.bf16.msra.mxu0 %v4128
    %6889 = vmatmul.bf16.gmra.mxu0 %v1027
    %v6890 = vpop.f32.mrf.mxu0
    %v6891 = vadd.f32 %v6878, %v6890
    %v6892 = vpop.f32.mrf.mxu0
    %6893 = vdwg.mxu0
    %6894 = vmatpush.bf16.msra.mxu0 %v4248
    %6895 = vmatpush.bf16.msra.mxu0 %v4240
    %6896 = vmatpush.bf16.msra.mxu0 %v4232
    %6897 = vmatpush.bf16.msra.mxu0 %v4224
    %6898 = vmatpush.bf16.msra.mxu0 %v4216
    %6899 = vmatpush.bf16.msra.mxu0 %v4208
    %6900 = vmatpush.bf16.msra.mxu0 %v4200
    %6901 = vmatpush.bf16.msra.mxu0 %v4192
    %6902 = vmatmul.bf16.gmra.mxu0 %v1028
    %v6903 = vpop.f32.mrf.mxu0
    %v6904 = vadd.f32 %v6891, %v6903
    %v6905 = vpop.f32.mrf.mxu0
    %6906 = vdwg.mxu0
    %6907 = vmatpush.bf16.msra.mxu0 %v4312
    %6908 = vmatpush.bf16.msra.mxu0 %v4304
    %6909 = vmatpush.bf16.msra.mxu0 %v4296
    %6910 = vmatpush.bf16.msra.mxu0 %v4288
    %6911 = vmatpush.bf16.msra.mxu0 %v4280
    %6912 = vmatpush.bf16.msra.mxu0 %v4272
    %6913 = vmatpush.bf16.msra.mxu0 %v4264
    %6914 = vmatpush.bf16.msra.mxu0 %v4256
    %6915 = vmatmul.bf16.gmra.mxu0 %v1029
    %v6916 = vpop.f32.mrf.mxu0
    %v6917 = vadd.f32 %v6904, %v6916
    %v6918 = vpop.f32.mrf.mxu0
    %6919 = vdwg.mxu0
    %6920 = vmatpush.bf16.msra.mxu0 %v4376
    %6921 = vmatpush.bf16.msra.mxu0 %v4368
    %6922 = vmatpush.bf16.msra.mxu0 %v4360
    %6923 = vmatpush.bf16.msra.mxu0 %v4352
    %6924 = vmatpush.bf16.msra.mxu0 %v4344
    %6925 = vmatpush.bf16.msra.mxu0 %v4336
    %6926 = vmatpush.bf16.msra.mxu0 %v4328
    %6927 = vmatpush.bf16.msra.mxu0 %v4320
    %6928 = vmatmul.bf16.gmra.mxu0 %v1030
    %v6929 = vpop.f32.mrf.mxu0
    %v6930 = vadd.f32 %v6917, %v6929
    %v6931 = vpop.f32.mrf.mxu0
    %6932 = vdwg.mxu0
    %6933 = vmatpush.bf16.msra.mxu0 %v4440
    %6934 = vmatpush.bf16.msra.mxu0 %v4432
    %6935 = vmatpush.bf16.msra.mxu0 %v4424
    %6936 = vmatpush.bf16.msra.mxu0 %v4416
    %6937 = vmatpush.bf16.msra.mxu0 %v4408
    %6938 = vmatpush.bf16.msra.mxu0 %v4400
    %6939 = vmatpush.bf16.msra.mxu0 %v4392
    %6940 = vmatpush.bf16.msra.mxu0 %v4384
    %6941 = vmatmul.bf16.gmra.mxu0 %v1031
    %v6942 = vpop.f32.mrf.mxu0
    %v6943 = vadd.f32 %v6930, %v6942
    %v6944 = vpop.f32.mrf.mxu0
    %6945 = vdwg.mxu0
    %6946 = vmatpush.bf16.msra.mxu0 %v4504
    %6947 = vmatpush.bf16.msra.mxu0 %v4496
    %6948 = vmatpush.bf16.msra.mxu0 %v4488
    %6949 = vmatpush.bf16.msra.mxu0 %v4480
    %6950 = vmatpush.bf16.msra.mxu0 %v4472
    %6951 = vmatpush.bf16.msra.mxu0 %v4464
    %6952 = vmatpush.bf16.msra.mxu0 %v4456
    %6953 = vmatpush.bf16.msra.mxu0 %v4448
    %6954 = vmatmul.bf16.gmra.mxu0 %v1032
    %v6955 = vpop.f32.mrf.mxu0
    %v6956 = vadd.f32 %v6943, %v6955
    %v6957 = vpop.f32.mrf.mxu0
    %6958 = vdwg.mxu0
    %6959 = vmatpush.bf16.msra.mxu0 %v4568
    %6960 = vmatpush.bf16.msra.mxu0 %v4560
    %6961 = vmatpush.bf16.msra.mxu0 %v4552
    %6962 = vmatpush.bf16.msra.mxu0 %v4544
    %6963 = vmatpush.bf16.msra.mxu0 %v4536
    %6964 = vmatpush.bf16.msra.mxu0 %v4528
    %6965 = vmatpush.bf16.msra.mxu0 %v4520
    %6966 = vmatpush.bf16.msra.mxu0 %v4512
    %6967 = vmatmul.bf16.gmra.mxu0 %v1033
    %v6968 = vpop.f32.mrf.mxu0
    %v6969 = vadd.f32 %v6956, %v6968
    %v6970 = vpop.f32.mrf.mxu0
    %6971 = vdwg.mxu0
    %6972 = vmatpush.bf16.msra.mxu0 %v4632
    %6973 = vmatpush.bf16.msra.mxu0 %v4624
    %6974 = vmatpush.bf16.msra.mxu0 %v4616
    %6975 = vmatpush.bf16.msra.mxu0 %v4608
    %6976 = vmatpush.bf16.msra.mxu0 %v4600
    %6977 = vmatpush.bf16.msra.mxu0 %v4592
    %6978 = vmatpush.bf16.msra.mxu0 %v4584
    %6979 = vmatpush.bf16.msra.mxu0 %v4576
    %6980 = vmatmul.bf16.gmra.mxu0 %v1034
    %v6981 = vpop.f32.mrf.mxu0
    %v6982 = vadd.f32 %v6969, %v6981
    %v6983 = vpop.f32.mrf.mxu0
    %6984 = vdwg.mxu0
    %v6985 = vmax.f32 %v5708, 0.0
    %v6986 = vmax.f32 %v5890, 0.0
    %v6987 = vmax.f32 %v6072, 0.0
    %v6988 = vmax.f32 %v6254, 0.0
    %v6989 = vmax.f32 %v6436, 0.0
    %v6990 = vmax.f32 %v6618, 0.0
    %v6991 = vmax.f32 %v6800, 0.0
    %v6992 = vmax.f32 %v6982, 0.0
    %v6993 = vpack.c.bf16 %v6985, %v6985
    %v6994 = vpack.c.bf16 %v6986, %v6986
    %v6995 = vpack.c.bf16 %v6987, %v6987
    %v6996 = vpack.c.bf16 %v6988, %v6988
    %v6997 = vpack.c.bf16 %v6989, %v6989
    %v6998 = vpack.c.bf16 %v6990, %v6990
    %v6999 = vpack.c.bf16 %v6991, %v6991
    %v7000 = vpack.c.bf16 %v6992, %v6992
    %v7001 = vld [vmem:[#allocation6] sm:$0xff]
    %v7002 = vld [vmem:[#allocation6 + $0x8] sm:$0xff]
    %v7003 = vld [vmem:[#allocation6 + $0x10] sm:$0xff]
    %v7004 = vld [vmem:[#allocation6 + $0x18] sm:$0xf]
    %v7005 = vld [vmem:[#allocation6 + $0x1c] sm:$0xff]
    %v7006 = vld [vmem:[#allocation6 + $0x24] sm:$0xff]
    %v7007 = vld [vmem:[#allocation6 + $0x2c] sm:$0xff]
    %v7008 = vld [vmem:[#allocation6 + $0x34] sm:$0xf]
    %v7009 = vld [vmem:[#allocation6 + $0x38] sm:$0xff]
    %v7010 = vld [vmem:[#allocation6 + $0x40] sm:$0xff]
    %v7011 = vld [vmem:[#allocation6 + $0x48] sm:$0xff]
    %v7012 = vld [vmem:[#allocation6 + $0x50] sm:$0xf]
    %v7013 = vld [vmem:[#allocation6 + $0x54] sm:$0xff]
    %v7014 = vld [vmem:[#allocation6 + $0x5c] sm:$0xff]
    %v7015 = vld [vmem:[#allocation6 + $0x64] sm:$0xff]
    %v7016 = vld [vmem:[#allocation6 + $0x6c] sm:$0xf]
    %v7017 = vld [vmem:[#allocation6 + $0x70] sm:$0xff]
    %v7018 = vld [vmem:[#allocation6 + $0x78] sm:$0xff]
    %v7019 = vld [vmem:[#allocation6 + $0x80] sm:$0xff]
    %v7020 = vld [vmem:[#allocation6 + $0x88] sm:$0xf]
    %v7021 = vld [vmem:[#allocation6 + $0x8c] sm:$0xff]
    %v7022 = vld [vmem:[#allocation6 + $0x94] sm:$0xff]
    %v7023 = vld [vmem:[#allocation6 + $0x9c] sm:$0xff]
    %v7024 = vld [vmem:[#allocation6 + $0xa4] sm:$0xf]
    %v7025 = vld [vmem:[#allocation6 + $0xa8] sm:$0xff]
    %v7026 = vld [vmem:[#allocation6 + $0xb0] sm:$0xff]
    %v7027 = vld [vmem:[#allocation6 + $0xb8] sm:$0xff]
    %v7028 = vld [vmem:[#allocation6 + $0xc0] sm:$0xf]
    %v7029 = vld [vmem:[#allocation6 + $0xc4] sm:$0xff]
    %v7030 = vld [vmem:[#allocation6 + $0xcc] sm:$0xff]
    %v7031 = vld [vmem:[#allocation6 + $0xd4] sm:$0xff]
    %v7032 = vld [vmem:[#allocation6 + $0xdc] sm:$0xf]
    %v7033 = vld [vmem:[#allocation6 + $0xe0] sm:$0xff]
    %v7034 = vld [vmem:[#allocation6 + $0xe8] sm:$0xff]
    %v7035 = vld [vmem:[#allocation6 + $0xf0] sm:$0xff]
    %v7036 = vld [vmem:[#allocation6 + $0xf8] sm:$0xf]
    %v7037 = vld [vmem:[#allocation6 + $0xfc] sm:$0xff]
    %v7038 = vld [vmem:[#allocation6 + $0x104] sm:$0xff]
    %v7039 = vld [vmem:[#allocation6 + $0x10c] sm:$0xff]
    %v7040 = vld [vmem:[#allocation6 + $0x114] sm:$0xf]
    %v7041 = vld [vmem:[#allocation6 + $0x118] sm:$0xff]
    %v7042 = vld [vmem:[#allocation6 + $0x120] sm:$0xff]
    %v7043 = vld [vmem:[#allocation6 + $0x128] sm:$0xff]
    %v7044 = vld [vmem:[#allocation6 + $0x130] sm:$0xf]
    %v7045 = vld [vmem:[#allocation6 + $0x134] sm:$0xff]
    %v7046 = vld [vmem:[#allocation6 + $0x13c] sm:$0xff]
    %v7047 = vld [vmem:[#allocation6 + $0x144] sm:$0xff]
    %v7048 = vld [vmem:[#allocation6 + $0x14c] sm:$0xf]
    %v7049 = vld [vmem:[#allocation6 + $0x150] sm:$0xff]
    %v7050 = vld [vmem:[#allocation6 + $0x158] sm:$0xff]
    %v7051 = vld [vmem:[#allocation6 + $0x160] sm:$0xff]
    %v7052 = vld [vmem:[#allocation6 + $0x168] sm:$0xf]
    %v7053 = vld [vmem:[#allocation6 + $0x16c] sm:$0xff]
    %v7054 = vld [vmem:[#allocation6 + $0x174] sm:$0xff]
    %v7055 = vld [vmem:[#allocation6 + $0x17c] sm:$0xff]
    %v7056 = vld [vmem:[#allocation6 + $0x184] sm:$0xf]
    %v7057 = vld [vmem:[#allocation6 + $0x188] sm:$0xff]
    %v7058 = vld [vmem:[#allocation6 + $0x190] sm:$0xff]
    %v7059 = vld [vmem:[#allocation6 + $0x198] sm:$0xff]
    %v7060 = vld [vmem:[#allocation6 + $0x1a0] sm:$0xf]
    %v7061 = vld [vmem:[#allocation6 + $0x1a4] sm:$0xff]
    %v7062 = vld [vmem:[#allocation6 + $0x1ac] sm:$0xff]
    %v7063 = vld [vmem:[#allocation6 + $0x1b4] sm:$0xff]
    %v7064 = vld [vmem:[#allocation6 + $0x1bc] sm:$0xf]
    %v7065 = vld [vmem:[#allocation6 + $0x1c0] sm:$0xff]
    %v7066 = vld [vmem:[#allocation6 + $0x1c8] sm:$0xff]
    %v7067 = vld [vmem:[#allocation6 + $0x1d0] sm:$0xff]
    %v7068 = vld [vmem:[#allocation6 + $0x1d8] sm:$0xf]
    %v7069 = vld [vmem:[#allocation6 + $0x1dc] sm:$0xff]
    %v7070 = vld [vmem:[#allocation6 + $0x1e4] sm:$0xff]
    %v7071 = vld [vmem:[#allocation6 + $0x1ec] sm:$0xff]
    %v7072 = vld [vmem:[#allocation6 + $0x1f4] sm:$0xf]
    %v7073 = vld [vmem:[#allocation6 + $0x1f8] sm:$0xff]
    %v7074 = vld [vmem:[#allocation6 + $0x200] sm:$0xff]
    %v7075 = vld [vmem:[#allocation6 + $0x208] sm:$0xff]
    %v7076 = vld [vmem:[#allocation6 + $0x210] sm:$0xf]
    %v7077 = vld [vmem:[#allocation6 + $0x214] sm:$0xff]
    %v7078 = vld [vmem:[#allocation6 + $0x21c] sm:$0xff]
    %v7079 = vld [vmem:[#allocation6 + $0x224] sm:$0xff]
    %v7080 = vld [vmem:[#allocation6 + $0x22c] sm:$0xf]
    %v7081 = vld [vmem:[#allocation6 + $0x230] sm:$0xff]
    %v7082 = vld [vmem:[#allocation6 + $0x238] sm:$0xff]
    %v7083 = vld [vmem:[#allocation6 + $0x240] sm:$0xff]
    %v7084 = vld [vmem:[#allocation6 + $0x248] sm:$0xf]
    %v7085 = vld [vmem:[#allocation6 + $0x24c] sm:$0xff]
    %v7086 = vld [vmem:[#allocation6 + $0x254] sm:$0xff]
    %v7087 = vld [vmem:[#allocation6 + $0x25c] sm:$0xff]
    %v7088 = vld [vmem:[#allocation6 + $0x264] sm:$0xf]
    %v7089 = vld [vmem:[#allocation6 + $0x268] sm:$0xff]
    %v7090 = vld [vmem:[#allocation6 + $0x270] sm:$0xff]
    %v7091 = vld [vmem:[#allocation6 + $0x278] sm:$0xff]
    %v7092 = vld [vmem:[#allocation6 + $0x280] sm:$0xf]
    %v7093 = vld [vmem:[#allocation6 + $0x284] sm:$0xff]
    %v7094 = vld [vmem:[#allocation6 + $0x28c] sm:$0xff]
    %v7095 = vld [vmem:[#allocation6 + $0x294] sm:$0xff]
    %v7096 = vld [vmem:[#allocation6 + $0x29c] sm:$0xf]
    %v7097 = vld [vmem:[#allocation6 + $0x2a0] sm:$0xff]
    %v7098 = vld [vmem:[#allocation6 + $0x2a8] sm:$0xff]
    %v7099 = vld [vmem:[#allocation6 + $0x2b0] sm:$0xff]
    %v7100 = vld [vmem:[#allocation6 + $0x2b8] sm:$0xf]
    %v7101 = vld [vmem:[#allocation6 + $0x2bc] sm:$0xff]
    %v7102 = vld [vmem:[#allocation6 + $0x2c4] sm:$0xff]
    %v7103 = vld [vmem:[#allocation6 + $0x2cc] sm:$0xff]
    %v7104 = vld [vmem:[#allocation6 + $0x2d4] sm:$0xf]
    %v7105 = vld [vmem:[#allocation6 + $0x2d8] sm:$0xff]
    %v7106 = vld [vmem:[#allocation6 + $0x2e0] sm:$0xff]
    %v7107 = vld [vmem:[#allocation6 + $0x2e8] sm:$0xff]
    %v7108 = vld [vmem:[#allocation6 + $0x2f0] sm:$0xf]
    %v7109 = vld [vmem:[#allocation6 + $0x2f4] sm:$0xff]
    %v7110 = vld [vmem:[#allocation6 + $0x2fc] sm:$0xff]
    %v7111 = vld [vmem:[#allocation6 + $0x304] sm:$0xff]
    %v7112 = vld [vmem:[#allocation6 + $0x30c] sm:$0xf]
    %v7113 = vld [vmem:[#allocation6 + $0x310] sm:$0xff]
    %v7114 = vld [vmem:[#allocation6 + $0x318] sm:$0xff]
    %v7115 = vld [vmem:[#allocation6 + $0x320] sm:$0xff]
    %v7116 = vld [vmem:[#allocation6 + $0x328] sm:$0xf]
    %v7117 = vld [vmem:[#allocation6 + $0x32c] sm:$0xff]
    %v7118 = vld [vmem:[#allocation6 + $0x334] sm:$0xff]
    %v7119 = vld [vmem:[#allocation6 + $0x33c] sm:$0xff]
    %v7120 = vld [vmem:[#allocation6 + $0x344] sm:$0xf]
    %v7121 = vld [vmem:[#allocation6 + $0x348] sm:$0xff]
    %v7122 = vld [vmem:[#allocation6 + $0x350] sm:$0xff]
    %v7123 = vld [vmem:[#allocation6 + $0x358] sm:$0xff]
    %v7124 = vld [vmem:[#allocation6 + $0x360] sm:$0xf]
    %v7125 = vld [vmem:[#allocation6 + $0x364] sm:$0xff]
    %v7126 = vld [vmem:[#allocation6 + $0x36c] sm:$0xff]
    %v7127 = vld [vmem:[#allocation6 + $0x374] sm:$0xff]
    %v7128 = vld [vmem:[#allocation6 + $0x37c] sm:$0xf]
    %v7129 = vld [vmem:[#allocation6 + $0x380] sm:$0xff]
    %v7130 = vld [vmem:[#allocation6 + $0x388] sm:$0xff]
    %v7131 = vld [vmem:[#allocation6 + $0x390] sm:$0xff]
    %v7132 = vld [vmem:[#allocation6 + $0x398] sm:$0xf]
    %v7133 = vld [vmem:[#allocation6 + $0x39c] sm:$0xff]
    %v7134 = vld [vmem:[#allocation6 + $0x3a4] sm:$0xff]
    %v7135 = vld [vmem:[#allocation6 + $0x3ac] sm:$0xff]
    %v7136 = vld [vmem:[#allocation6 + $0x3b4] sm:$0xf]
    %v7137 = vld [vmem:[#allocation6 + $0x3b8] sm:$0xff]
    %v7138 = vld [vmem:[#allocation6 + $0x3c0] sm:$0xff]
    %v7139 = vld [vmem:[#allocation6 + $0x3c8] sm:$0xff]
    %v7140 = vld [vmem:[#allocation6 + $0x3d0] sm:$0xf]
    %v7141 = vld [vmem:[#allocation6 + $0x3d4] sm:$0xff]
    %v7142 = vld [vmem:[#allocation6 + $0x3dc] sm:$0xff]
    %v7143 = vld [vmem:[#allocation6 + $0x3e4] sm:$0xff]
    %v7144 = vld [vmem:[#allocation6 + $0x3ec] sm:$0xf]
    %v7145 = vld [vmem:[#allocation6 + $0x3f0] sm:$0xff]
    %v7146 = vld [vmem:[#allocation6 + $0x3f8] sm:$0xff]
    %v7147 = vld [vmem:[#allocation6 + $0x400] sm:$0xff]
    %v7148 = vld [vmem:[#allocation6 + $0x408] sm:$0xf]
    %v7149 = vld [vmem:[#allocation6 + $0x40c] sm:$0xff]
    %v7150 = vld [vmem:[#allocation6 + $0x414] sm:$0xff]
    %v7151 = vld [vmem:[#allocation6 + $0x41c] sm:$0xff]
    %v7152 = vld [vmem:[#allocation6 + $0x424] sm:$0xf]
    %v7153 = vld [vmem:[#allocation6 + $0x428] sm:$0xff]
    %v7154 = vld [vmem:[#allocation6 + $0x430] sm:$0xff]
    %v7155 = vld [vmem:[#allocation6 + $0x438] sm:$0xff]
    %v7156 = vld [vmem:[#allocation6 + $0x440] sm:$0xf]
    %v7157 = vld [vmem:[#allocation6 + $0x444] sm:$0xff]
    %v7158 = vld [vmem:[#allocation6 + $0x44c] sm:$0xff]
    %v7159 = vld [vmem:[#allocation6 + $0x454] sm:$0xff]
    %v7160 = vld [vmem:[#allocation6 + $0x45c] sm:$0xf]
    %v7161 = vld [vmem:[#allocation6 + $0x460] sm:$0xff]
    %v7162 = vld [vmem:[#allocation6 + $0x468] sm:$0xff]
    %v7163 = vld [vmem:[#allocation6 + $0x470] sm:$0xff]
    %v7164 = vld [vmem:[#allocation6 + $0x478] sm:$0xf]
    %v7165 = vld [vmem:[#allocation6 + $0x47c] sm:$0xff]
    %v7166 = vld [vmem:[#allocation6 + $0x484] sm:$0xff]
    %v7167 = vld [vmem:[#allocation6 + $0x48c] sm:$0xff]
    %v7168 = vld [vmem:[#allocation6 + $0x494] sm:$0xf]
    %v7169 = vld [vmem:[#allocation6 + $0x498] sm:$0xff]
    %v7170 = vld [vmem:[#allocation6 + $0x4a0] sm:$0xff]
    %v7171 = vld [vmem:[#allocation6 + $0x4a8] sm:$0xff]
    %v7172 = vld [vmem:[#allocation6 + $0x4b0] sm:$0xf]
    %v7173 = vld [vmem:[#allocation6 + $0x4b4] sm:$0xff]
    %v7174 = vld [vmem:[#allocation6 + $0x4bc] sm:$0xff]
    %v7175 = vld [vmem:[#allocation6 + $0x4c4] sm:$0xff]
    %v7176 = vld [vmem:[#allocation6 + $0x4cc] sm:$0xf]
    %v7177 = vld [vmem:[#allocation6 + $0x4d0] sm:$0xff]
    %v7178 = vld [vmem:[#allocation6 + $0x4d8] sm:$0xff]
    %v7179 = vld [vmem:[#allocation6 + $0x4e0] sm:$0xff]
    %v7180 = vld [vmem:[#allocation6 + $0x4e8] sm:$0xf]
    %v7181 = vld [vmem:[#allocation6 + $0x4ec] sm:$0xff]
    %v7182 = vld [vmem:[#allocation6 + $0x4f4] sm:$0xff]
    %v7183 = vld [vmem:[#allocation6 + $0x4fc] sm:$0xff]
    %v7184 = vld [vmem:[#allocation6 + $0x504] sm:$0xf]
    %v7185 = vld [vmem:[#allocation6 + $0x508] sm:$0xff]
    %v7186 = vld [vmem:[#allocation6 + $0x510] sm:$0xff]
    %v7187 = vld [vmem:[#allocation6 + $0x518] sm:$0xff]
    %v7188 = vld [vmem:[#allocation6 + $0x520] sm:$0xf]
    %v7189 = vld [vmem:[#allocation6 + $0x524] sm:$0xff]
    %v7190 = vld [vmem:[#allocation6 + $0x52c] sm:$0xff]
    %v7191 = vld [vmem:[#allocation6 + $0x534] sm:$0xff]
    %v7192 = vld [vmem:[#allocation6 + $0x53c] sm:$0xf]
    %v7193 = vld [vmem:[#allocation6 + $0x540] sm:$0xff]
    %v7194 = vld [vmem:[#allocation6 + $0x548] sm:$0xff]
    %v7195 = vld [vmem:[#allocation6 + $0x550] sm:$0xff]
    %v7196 = vld [vmem:[#allocation6 + $0x558] sm:$0xf]
    %v7197 = vld [vmem:[#allocation6 + $0x55c] sm:$0xff]
    %v7198 = vld [vmem:[#allocation6 + $0x564] sm:$0xff]
    %v7199 = vld [vmem:[#allocation6 + $0x56c] sm:$0xff]
    %v7200 = vld [vmem:[#allocation6 + $0x574] sm:$0xf]
    %v7201 = vld [vmem:[#allocation6 + $0x578] sm:$0xff]
    %v7202 = vld [vmem:[#allocation6 + $0x580] sm:$0xff]
    %v7203 = vld [vmem:[#allocation6 + $0x588] sm:$0xff]
    %v7204 = vld [vmem:[#allocation6 + $0x590] sm:$0xf]
    %v7205 = vld [vmem:[#allocation6 + $0x594] sm:$0xff]
    %v7206 = vld [vmem:[#allocation6 + $0x59c] sm:$0xff]
    %v7207 = vld [vmem:[#allocation6 + $0x5a4] sm:$0xff]
    %v7208 = vld [vmem:[#allocation6 + $0x5ac] sm:$0xf]
    %v7209 = vld [vmem:[#allocation6 + $0x5b0] sm:$0xff]
    %v7210 = vld [vmem:[#allocation6 + $0x5b8] sm:$0xff]
    %v7211 = vld [vmem:[#allocation6 + $0x5c0] sm:$0xff]
    %v7212 = vld [vmem:[#allocation6 + $0x5c8] sm:$0xf]
    %v7213 = vld [vmem:[#allocation6 + $0x5cc] sm:$0xff]
    %v7214 = vld [vmem:[#allocation6 + $0x5d4] sm:$0xff]
    %v7215 = vld [vmem:[#allocation6 + $0x5dc] sm:$0xff]
    %v7216 = vld [vmem:[#allocation6 + $0x5e4] sm:$0xf]
    %v7217 = vld [vmem:[#allocation6 + $0x5e8] sm:$0xff]
    %v7218 = vld [vmem:[#allocation6 + $0x5f0] sm:$0xff]
    %v7219 = vld [vmem:[#allocation6 + $0x5f8] sm:$0xff]
    %v7220 = vld [vmem:[#allocation6 + $0x600] sm:$0xf]
    %v7221 = vld [vmem:[#allocation6 + $0x604] sm:$0xff]
    %v7222 = vld [vmem:[#allocation6 + $0x60c] sm:$0xff]
    %v7223 = vld [vmem:[#allocation6 + $0x614] sm:$0xff]
    %v7224 = vld [vmem:[#allocation6 + $0x61c] sm:$0xf]
    %v7225 = vld [vmem:[#allocation6 + $0x620] sm:$0xff]
    %v7226 = vld [vmem:[#allocation6 + $0x628] sm:$0xff]
    %v7227 = vld [vmem:[#allocation6 + $0x630] sm:$0xff]
    %v7228 = vld [vmem:[#allocation6 + $0x638] sm:$0xf]
    %v7229 = vld [vmem:[#allocation6 + $0x63c] sm:$0xff]
    %v7230 = vld [vmem:[#allocation6 + $0x644] sm:$0xff]
    %v7231 = vld [vmem:[#allocation6 + $0x64c] sm:$0xff]
    %v7232 = vld [vmem:[#allocation6 + $0x654] sm:$0xf]
    %v7233 = vld [vmem:[#allocation6 + $0x658] sm:$0xff]
    %v7234 = vld [vmem:[#allocation6 + $0x660] sm:$0xff]
    %v7235 = vld [vmem:[#allocation6 + $0x668] sm:$0xff]
    %v7236 = vld [vmem:[#allocation6 + $0x670] sm:$0xf]
    %v7237 = vld [vmem:[#allocation6 + $0x674] sm:$0xff]
    %v7238 = vld [vmem:[#allocation6 + $0x67c] sm:$0xff]
    %v7239 = vld [vmem:[#allocation6 + $0x684] sm:$0xff]
    %v7240 = vld [vmem:[#allocation6 + $0x68c] sm:$0xf]
    %v7241 = vld [vmem:[#allocation6 + $0x690] sm:$0xff]
    %v7242 = vld [vmem:[#allocation6 + $0x698] sm:$0xff]
    %v7243 = vld [vmem:[#allocation6 + $0x6a0] sm:$0xff]
    %v7244 = vld [vmem:[#allocation6 + $0x6a8] sm:$0xf]
    %v7245 = vld [vmem:[#allocation6 + $0x6ac] sm:$0xff]
    %v7246 = vld [vmem:[#allocation6 + $0x6b4] sm:$0xff]
    %v7247 = vld [vmem:[#allocation6 + $0x6bc] sm:$0xff]
    %v7248 = vld [vmem:[#allocation6 + $0x6c4] sm:$0xf]
    %v7249 = vld [vmem:[#allocation6 + $0x6c8] sm:$0xff]
    %v7250 = vld [vmem:[#allocation6 + $0x6d0] sm:$0xff]
    %v7251 = vld [vmem:[#allocation6 + $0x6d8] sm:$0xff]
    %v7252 = vld [vmem:[#allocation6 + $0x6e0] sm:$0xf]
    %v7253 = vld [vmem:[#allocation6 + $0x6e4] sm:$0xff]
    %v7254 = vld [vmem:[#allocation6 + $0x6ec] sm:$0xff]
    %v7255 = vld [vmem:[#allocation6 + $0x6f4] sm:$0xff]
    %v7256 = vld [vmem:[#allocation6 + $0x6fc] sm:$0xf]
    %v7257 = vld [vmem:[#allocation6 + $0x700] sm:$0xff]
    %v7258 = vld [vmem:[#allocation6 + $0x708] sm:$0xff]
    %v7259 = vld [vmem:[#allocation6 + $0x710] sm:$0xff]
    %v7260 = vld [vmem:[#allocation6 + $0x718] sm:$0xf]
    %v7261 = vld [vmem:[#allocation6 + $0x71c] sm:$0xff]
    %v7262 = vld [vmem:[#allocation6 + $0x724] sm:$0xff]
    %v7263 = vld [vmem:[#allocation6 + $0x72c] sm:$0xff]
    %v7264 = vld [vmem:[#allocation6 + $0x734] sm:$0xf]
    %v7265 = vld [vmem:[#allocation6 + $0x738] sm:$0xff]
    %v7266 = vld [vmem:[#allocation6 + $0x740] sm:$0xff]
    %v7267 = vld [vmem:[#allocation6 + $0x748] sm:$0xff]
    %v7268 = vld [vmem:[#allocation6 + $0x750] sm:$0xf]
    %v7269 = vld [vmem:[#allocation6 + $0x754] sm:$0xff]
    %v7270 = vld [vmem:[#allocation6 + $0x75c] sm:$0xff]
    %v7271 = vld [vmem:[#allocation6 + $0x764] sm:$0xff]
    %v7272 = vld [vmem:[#allocation6 + $0x76c] sm:$0xf]
    %v7273 = vld [vmem:[#allocation6 + $0x770] sm:$0xff]
    %v7274 = vld [vmem:[#allocation6 + $0x778] sm:$0xff]
    %v7275 = vld [vmem:[#allocation6 + $0x780] sm:$0xff]
    %v7276 = vld [vmem:[#allocation6 + $0x788] sm:$0xf]
    %v7277 = vld [vmem:[#allocation6 + $0x78c] sm:$0xff]
    %v7278 = vld [vmem:[#allocation6 + $0x794] sm:$0xff]
    %v7279 = vld [vmem:[#allocation6 + $0x79c] sm:$0xff]
    %v7280 = vld [vmem:[#allocation6 + $0x7a4] sm:$0xf]
    %v7281 = vld [vmem:[#allocation6 + $0x7a8] sm:$0xff]
    %v7282 = vld [vmem:[#allocation6 + $0x7b0] sm:$0xff]
    %v7283 = vld [vmem:[#allocation6 + $0x7b8] sm:$0xff]
    %v7284 = vld [vmem:[#allocation6 + $0x7c0] sm:$0xf]
    %v7285 = vld [vmem:[#allocation6 + $0x7c4] sm:$0xff]
    %v7286 = vld [vmem:[#allocation6 + $0x7cc] sm:$0xff]
    %v7287 = vld [vmem:[#allocation6 + $0x7d4] sm:$0xff]
    %v7288 = vld [vmem:[#allocation6 + $0x7dc] sm:$0xf]
    %v7289 = vld [vmem:[#allocation6 + $0x7e0] sm:$0xff]
    %v7290 = vld [vmem:[#allocation6 + $0x7e8] sm:$0xff]
    %v7291 = vld [vmem:[#allocation6 + $0x7f0] sm:$0xff]
    %v7292 = vld [vmem:[#allocation6 + $0x7f8] sm:$0xf]
    %v7293 = vld [vmem:[#allocation6 + $0x7fc] sm:$0xff]
    %v7294 = vld [vmem:[#allocation6 + $0x804] sm:$0xff]
    %v7295 = vld [vmem:[#allocation6 + $0x80c] sm:$0xff]
    %v7296 = vld [vmem:[#allocation6 + $0x814] sm:$0xf]
    %v7297 = vld [vmem:[#allocation6 + $0x818] sm:$0xff]
    %v7298 = vld [vmem:[#allocation6 + $0x820] sm:$0xff]
    %v7299 = vld [vmem:[#allocation6 + $0x828] sm:$0xff]
    %v7300 = vld [vmem:[#allocation6 + $0x830] sm:$0xf]
    %v7301 = vld [vmem:[#allocation6 + $0x834] sm:$0xff]
    %v7302 = vld [vmem:[#allocation6 + $0x83c] sm:$0xff]
    %v7303 = vld [vmem:[#allocation6 + $0x844] sm:$0xff]
    %v7304 = vld [vmem:[#allocation6 + $0x84c] sm:$0xf]
    %v7305 = vld [vmem:[#allocation6 + $0x850] sm:$0xff]
    %v7306 = vld [vmem:[#allocation6 + $0x858] sm:$0xff]
    %v7307 = vld [vmem:[#allocation6 + $0x860] sm:$0xff]
    %v7308 = vld [vmem:[#allocation6 + $0x868] sm:$0xf]
    %v7309 = vld [vmem:[#allocation6 + $0x86c] sm:$0xff]
    %v7310 = vld [vmem:[#allocation6 + $0x874] sm:$0xff]
    %v7311 = vld [vmem:[#allocation6 + $0x87c] sm:$0xff]
    %v7312 = vld [vmem:[#allocation6 + $0x884] sm:$0xf]
    %v7313 = vld [vmem:[#allocation6 + $0x888] sm:$0xff]
    %v7314 = vld [vmem:[#allocation6 + $0x890] sm:$0xff]
    %v7315 = vld [vmem:[#allocation6 + $0x898] sm:$0xff]
    %v7316 = vld [vmem:[#allocation6 + $0x8a0] sm:$0xf]
    %v7317 = vld [vmem:[#allocation6 + $0x8a4] sm:$0xff]
    %v7318 = vld [vmem:[#allocation6 + $0x8ac] sm:$0xff]
    %v7319 = vld [vmem:[#allocation6 + $0x8b4] sm:$0xff]
    %v7320 = vld [vmem:[#allocation6 + $0x8bc] sm:$0xf]
    %v7321 = vld [vmem:[#allocation6 + $0x8c0] sm:$0xff]
    %v7322 = vld [vmem:[#allocation6 + $0x8c8] sm:$0xff]
    %v7323 = vld [vmem:[#allocation6 + $0x8d0] sm:$0xff]
    %v7324 = vld [vmem:[#allocation6 + $0x8d8] sm:$0xf]
    %v7325 = vld [vmem:[#allocation6 + $0x8dc] sm:$0xff]
    %v7326 = vld [vmem:[#allocation6 + $0x8e4] sm:$0xff]
    %v7327 = vld [vmem:[#allocation6 + $0x8ec] sm:$0xff]
    %v7328 = vld [vmem:[#allocation6 + $0x8f4] sm:$0xf]
    %v7329 = vld [vmem:[#allocation6 + $0x8f8] sm:$0xff]
    %v7330 = vld [vmem:[#allocation6 + $0x900] sm:$0xff]
    %v7331 = vld [vmem:[#allocation6 + $0x908] sm:$0xff]
    %v7332 = vld [vmem:[#allocation6 + $0x910] sm:$0xf]
    %v7333 = vld [vmem:[#allocation6 + $0x914] sm:$0xff]
    %v7334 = vld [vmem:[#allocation6 + $0x91c] sm:$0xff]
    %v7335 = vld [vmem:[#allocation6 + $0x924] sm:$0xff]
    %v7336 = vld [vmem:[#allocation6 + $0x92c] sm:$0xf]
    %v7337 = vld [vmem:[#allocation6 + $0x930] sm:$0xff]
    %v7338 = vld [vmem:[#allocation6 + $0x938] sm:$0xff]
    %v7339 = vld [vmem:[#allocation6 + $0x940] sm:$0xff]
    %v7340 = vld [vmem:[#allocation6 + $0x948] sm:$0xf]
    %v7341 = vld [vmem:[#allocation6 + $0x94c] sm:$0xff]
    %v7342 = vld [vmem:[#allocation6 + $0x954] sm:$0xff]
    %v7343 = vld [vmem:[#allocation6 + $0x95c] sm:$0xff]
    %v7344 = vld [vmem:[#allocation6 + $0x964] sm:$0xf]
    %v7345 = vld [vmem:[#allocation6 + $0x968] sm:$0xff]
    %v7346 = vld [vmem:[#allocation6 + $0x970] sm:$0xff]
    %v7347 = vld [vmem:[#allocation6 + $0x978] sm:$0xff]
    %v7348 = vld [vmem:[#allocation6 + $0x980] sm:$0xf]
    %v7349 = vld [vmem:[#allocation6 + $0x984] sm:$0xff]
    %v7350 = vld [vmem:[#allocation6 + $0x98c] sm:$0xff]
    %v7351 = vld [vmem:[#allocation6 + $0x994] sm:$0xff]
    %v7352 = vld [vmem:[#allocation6 + $0x99c] sm:$0xf]
    %v7353 = vld [vmem:[#allocation6 + $0x9a0] sm:$0xff]
    %v7354 = vld [vmem:[#allocation6 + $0x9a8] sm:$0xff]
    %v7355 = vld [vmem:[#allocation6 + $0x9b0] sm:$0xff]
    %v7356 = vld [vmem:[#allocation6 + $0x9b8] sm:$0xf]
    %v7357 = vld [vmem:[#allocation6 + $0x9bc] sm:$0xff]
    %v7358 = vld [vmem:[#allocation6 + $0x9c4] sm:$0xff]
    %v7359 = vld [vmem:[#allocation6 + $0x9cc] sm:$0xff]
    %v7360 = vld [vmem:[#allocation6 + $0x9d4] sm:$0xf]
    %v7361 = vld [vmem:[#allocation6 + $0x9d8] sm:$0xff]
    %v7362 = vld [vmem:[#allocation6 + $0x9e0] sm:$0xff]
    %v7363 = vld [vmem:[#allocation6 + $0x9e8] sm:$0xff]
    %v7364 = vld [vmem:[#allocation6 + $0x9f0] sm:$0xf]
    %v7365 = vld [vmem:[#allocation6 + $0x9f4] sm:$0xff]
    %v7366 = vld [vmem:[#allocation6 + $0x9fc] sm:$0xff]
    %v7367 = vld [vmem:[#allocation6 + $0xa04] sm:$0xff]
    %v7368 = vld [vmem:[#allocation6 + $0xa0c] sm:$0xf]
    %v7369 = vld [vmem:[#allocation6 + $0xa10] sm:$0xff]
    %v7370 = vld [vmem:[#allocation6 + $0xa18] sm:$0xff]
    %v7371 = vld [vmem:[#allocation6 + $0xa20] sm:$0xff]
    %v7372 = vld [vmem:[#allocation6 + $0xa28] sm:$0xf]
    %v7373 = vld [vmem:[#allocation6 + $0xa2c] sm:$0xff]
    %v7374 = vld [vmem:[#allocation6 + $0xa34] sm:$0xff]
    %v7375 = vld [vmem:[#allocation6 + $0xa3c] sm:$0xff]
    %v7376 = vld [vmem:[#allocation6 + $0xa44] sm:$0xf]
    %v7377 = vld [vmem:[#allocation6 + $0xa48] sm:$0xff]
    %v7378 = vld [vmem:[#allocation6 + $0xa50] sm:$0xff]
    %v7379 = vld [vmem:[#allocation6 + $0xa58] sm:$0xff]
    %v7380 = vld [vmem:[#allocation6 + $0xa60] sm:$0xf]
    %v7381 = vld [vmem:[#allocation6 + $0xa64] sm:$0xff]
    %v7382 = vld [vmem:[#allocation6 + $0xa6c] sm:$0xff]
    %v7383 = vld [vmem:[#allocation6 + $0xa74] sm:$0xff]
    %v7384 = vld [vmem:[#allocation6 + $0xa7c] sm:$0xf]
    %v7385 = vld [vmem:[#allocation6 + $0xa80] sm:$0xff]
    %v7386 = vld [vmem:[#allocation6 + $0xa88] sm:$0xff]
    %v7387 = vld [vmem:[#allocation6 + $0xa90] sm:$0xff]
    %v7388 = vld [vmem:[#allocation6 + $0xa98] sm:$0xf]
    %v7389 = vld [vmem:[#allocation6 + $0xa9c] sm:$0xff]
    %v7390 = vld [vmem:[#allocation6 + $0xaa4] sm:$0xff]
    %v7391 = vld [vmem:[#allocation6 + $0xaac] sm:$0xff]
    %v7392 = vld [vmem:[#allocation6 + $0xab4] sm:$0xf]
    %v7393 = vld [vmem:[#allocation6 + $0xab8] sm:$0xff]
    %v7394 = vld [vmem:[#allocation6 + $0xac0] sm:$0xff]
    %v7395 = vld [vmem:[#allocation6 + $0xac8] sm:$0xff]
    %v7396 = vld [vmem:[#allocation6 + $0xad0] sm:$0xf]
    %v7397 = vld [vmem:[#allocation6 + $0xad4] sm:$0xff]
    %v7398 = vld [vmem:[#allocation6 + $0xadc] sm:$0xff]
    %v7399 = vld [vmem:[#allocation6 + $0xae4] sm:$0xff]
    %v7400 = vld [vmem:[#allocation6 + $0xaec] sm:$0xf]
    %v7401 = vld [vmem:[#allocation6 + $0xaf0] sm:$0xff]
    %v7402 = vld [vmem:[#allocation6 + $0xaf8] sm:$0xff]
    %v7403 = vld [vmem:[#allocation6 + $0xb00] sm:$0xff]
    %v7404 = vld [vmem:[#allocation6 + $0xb08] sm:$0xf]
    %v7405 = vld [vmem:[#allocation6 + $0xb0c] sm:$0xff]
    %v7406 = vld [vmem:[#allocation6 + $0xb14] sm:$0xff]
    %v7407 = vld [vmem:[#allocation6 + $0xb1c] sm:$0xff]
    %v7408 = vld [vmem:[#allocation6 + $0xb24] sm:$0xf]
    %v7409 = vld [vmem:[#allocation6 + $0xb28] sm:$0xff]
    %v7410 = vld [vmem:[#allocation6 + $0xb30] sm:$0xff]
    %v7411 = vld [vmem:[#allocation6 + $0xb38] sm:$0xff]
    %v7412 = vld [vmem:[#allocation6 + $0xb40] sm:$0xf]
    %v7413 = vld [vmem:[#allocation6 + $0xb44] sm:$0xff]
    %v7414 = vld [vmem:[#allocation6 + $0xb4c] sm:$0xff]
    %v7415 = vld [vmem:[#allocation6 + $0xb54] sm:$0xff]
    %v7416 = vld [vmem:[#allocation6 + $0xb5c] sm:$0xf]
    %v7417 = vld [vmem:[#allocation6 + $0xb60] sm:$0xff]
    %v7418 = vld [vmem:[#allocation6 + $0xb68] sm:$0xff]
    %v7419 = vld [vmem:[#allocation6 + $0xb70] sm:$0xff]
    %v7420 = vld [vmem:[#allocation6 + $0xb78] sm:$0xf]
    %v7421 = vld [vmem:[#allocation6 + $0xb7c] sm:$0xff]
    %v7422 = vld [vmem:[#allocation6 + $0xb84] sm:$0xff]
    %v7423 = vld [vmem:[#allocation6 + $0xb8c] sm:$0xff]
    %v7424 = vld [vmem:[#allocation6 + $0xb94] sm:$0xf]
    %v7425 = vld [vmem:[#allocation6 + $0xb98] sm:$0xff]
    %v7426 = vld [vmem:[#allocation6 + $0xba0] sm:$0xff]
    %v7427 = vld [vmem:[#allocation6 + $0xba8] sm:$0xff]
    %v7428 = vld [vmem:[#allocation6 + $0xbb0] sm:$0xf]
    %v7429 = vld [vmem:[#allocation6 + $0xbb4] sm:$0xff]
    %v7430 = vld [vmem:[#allocation6 + $0xbbc] sm:$0xff]
    %v7431 = vld [vmem:[#allocation6 + $0xbc4] sm:$0xff]
    %v7432 = vld [vmem:[#allocation6 + $0xbcc] sm:$0xf]
    %v7433 = vld [vmem:[#allocation6 + $0xbd0] sm:$0xff]
    %v7434 = vld [vmem:[#allocation6 + $0xbd8] sm:$0xff]
    %v7435 = vld [vmem:[#allocation6 + $0xbe0] sm:$0xff]
    %v7436 = vld [vmem:[#allocation6 + $0xbe8] sm:$0xf]
    %v7437 = vld [vmem:[#allocation6 + $0xbec] sm:$0xff]
    %v7438 = vld [vmem:[#allocation6 + $0xbf4] sm:$0xff]
    %v7439 = vld [vmem:[#allocation6 + $0xbfc] sm:$0xff]
    %v7440 = vld [vmem:[#allocation6 + $0xc04] sm:$0xf]
    %v7441 = vld [vmem:[#allocation6 + $0xc08] sm:$0xff]
    %v7442 = vld [vmem:[#allocation6 + $0xc10] sm:$0xff]
    %v7443 = vld [vmem:[#allocation6 + $0xc18] sm:$0xff]
    %v7444 = vld [vmem:[#allocation6 + $0xc20] sm:$0xf]
    %v7445 = vld [vmem:[#allocation6 + $0xc24] sm:$0xff]
    %v7446 = vld [vmem:[#allocation6 + $0xc2c] sm:$0xff]
    %v7447 = vld [vmem:[#allocation6 + $0xc34] sm:$0xff]
    %v7448 = vld [vmem:[#allocation6 + $0xc3c] sm:$0xf]
    %v7449 = vld [vmem:[#allocation6 + $0xc40] sm:$0xff]
    %v7450 = vld [vmem:[#allocation6 + $0xc48] sm:$0xff]
    %v7451 = vld [vmem:[#allocation6 + $0xc50] sm:$0xff]
    %v7452 = vld [vmem:[#allocation6 + $0xc58] sm:$0xf]
    %v7453 = vld [vmem:[#allocation6 + $0xc5c] sm:$0xff]
    %v7454 = vld [vmem:[#allocation6 + $0xc64] sm:$0xff]
    %v7455 = vld [vmem:[#allocation6 + $0xc6c] sm:$0xff]
    %v7456 = vld [vmem:[#allocation6 + $0xc74] sm:$0xf]
    %v7457 = vld [vmem:[#allocation6 + $0xc78] sm:$0xff]
    %v7458 = vld [vmem:[#allocation6 + $0xc80] sm:$0xff]
    %v7459 = vld [vmem:[#allocation6 + $0xc88] sm:$0xff]
    %v7460 = vld [vmem:[#allocation6 + $0xc90] sm:$0xf]
    %v7461 = vld [vmem:[#allocation6 + $0xc94] sm:$0xff]
    %v7462 = vld [vmem:[#allocation6 + $0xc9c] sm:$0xff]
    %v7463 = vld [vmem:[#allocation6 + $0xca4] sm:$0xff]
    %v7464 = vld [vmem:[#allocation6 + $0xcac] sm:$0xf]
    %v7465 = vld [vmem:[#allocation6 + $0xcb0] sm:$0xff]
    %v7466 = vld [vmem:[#allocation6 + $0xcb8] sm:$0xff]
    %v7467 = vld [vmem:[#allocation6 + $0xcc0] sm:$0xff]
    %v7468 = vld [vmem:[#allocation6 + $0xcc8] sm:$0xf]
    %v7469 = vld [vmem:[#allocation6 + $0xccc] sm:$0xff]
    %v7470 = vld [vmem:[#allocation6 + $0xcd4] sm:$0xff]
    %v7471 = vld [vmem:[#allocation6 + $0xcdc] sm:$0xff]
    %v7472 = vld [vmem:[#allocation6 + $0xce4] sm:$0xf]
    %v7473 = vld [vmem:[#allocation6 + $0xce8] sm:$0xff]
    %v7474 = vld [vmem:[#allocation6 + $0xcf0] sm:$0xff]
    %v7475 = vld [vmem:[#allocation6 + $0xcf8] sm:$0xff]
    %v7476 = vld [vmem:[#allocation6 + $0xd00] sm:$0xf]
    %v7477 = vld [vmem:[#allocation6 + $0xd04] sm:$0xff]
    %v7478 = vld [vmem:[#allocation6 + $0xd0c] sm:$0xff]
    %v7479 = vld [vmem:[#allocation6 + $0xd14] sm:$0xff]
    %v7480 = vld [vmem:[#allocation6 + $0xd1c] sm:$0xf]
    %v7481 = vld [vmem:[#allocation6 + $0xd20] sm:$0xff]
    %v7482 = vld [vmem:[#allocation6 + $0xd28] sm:$0xff]
    %v7483 = vld [vmem:[#allocation6 + $0xd30] sm:$0xff]
    %v7484 = vld [vmem:[#allocation6 + $0xd38] sm:$0xf]
    %v7485 = vld [vmem:[#allocation6 + $0xd3c] sm:$0xff]
    %v7486 = vld [vmem:[#allocation6 + $0xd44] sm:$0xff]
    %v7487 = vld [vmem:[#allocation6 + $0xd4c] sm:$0xff]
    %v7488 = vld [vmem:[#allocation6 + $0xd54] sm:$0xf]
    %v7489 = vld [vmem:[#allocation6 + $0xd58] sm:$0xff]
    %v7490 = vld [vmem:[#allocation6 + $0xd60] sm:$0xff]
    %v7491 = vld [vmem:[#allocation6 + $0xd68] sm:$0xff]
    %v7492 = vld [vmem:[#allocation6 + $0xd70] sm:$0xf]
    %v7493 = vld [vmem:[#allocation6 + $0xd74] sm:$0xff]
    %v7494 = vld [vmem:[#allocation6 + $0xd7c] sm:$0xff]
    %v7495 = vld [vmem:[#allocation6 + $0xd84] sm:$0xff]
    %v7496 = vld [vmem:[#allocation6 + $0xd8c] sm:$0xf]
    %v7497 = vld [vmem:[#allocation6 + $0xd90] sm:$0xff]
    %v7498 = vld [vmem:[#allocation6 + $0xd98] sm:$0xff]
    %v7499 = vld [vmem:[#allocation6 + $0xda0] sm:$0xff]
    %v7500 = vld [vmem:[#allocation6 + $0xda8] sm:$0xf]
    %v7501 = vld [vmem:[#allocation6 + $0xdac] sm:$0xff]
    %v7502 = vld [vmem:[#allocation6 + $0xdb4] sm:$0xff]
    %v7503 = vld [vmem:[#allocation6 + $0xdbc] sm:$0xff]
    %v7504 = vld [vmem:[#allocation6 + $0xdc4] sm:$0xf]
    %v7505 = vld [vmem:[#allocation6 + $0xdc8] sm:$0xff]
    %v7506 = vld [vmem:[#allocation6 + $0xdd0] sm:$0xff]
    %v7507 = vld [vmem:[#allocation6 + $0xdd8] sm:$0xff]
    %v7508 = vld [vmem:[#allocation6 + $0xde0] sm:$0xf]
    %v7509 = vld [vmem:[#allocation6 + $0xde4] sm:$0xff]
    %v7510 = vld [vmem:[#allocation6 + $0xdec] sm:$0xff]
    %v7511 = vld [vmem:[#allocation6 + $0xdf4] sm:$0xff]
    %v7512 = vld [vmem:[#allocation6 + $0xdfc] sm:$0xf]
    %v7513 = vld [vmem:[#allocation7] sm:$0xff]
    %v7515 = vperm.slane %v7513, 0
    %v7516 = vperm.slane %v7513, 1
    %v7517 = vperm.slane %v7513, 2
    %v7518 = vperm.slane %v7513, 3
    %v7519 = vperm.slane %v7513, 4
    %v7520 = vperm.slane %v7513, 5
    %v7521 = vperm.slane %v7513, 6
    %v8041 = vunpack.c.l.b16 %v7001
    %v8042 = vunpack.c.h.b16 %v7001
    %v8043 = vunpack.c.l.b16 %v7002
    %v8044 = vunpack.c.h.b16 %v7002
    %v8045 = vunpack.c.l.b16 %v7003
    %v8046 = vunpack.c.h.b16 %v7003
    %v8047 = vunpack.c.l.b16 %v7004
    %v8048 = vunpack.c.l.b16 %v7005
    %v8049 = vunpack.c.h.b16 %v7005
    %v8050 = vunpack.c.l.b16 %v7006
    %v8051 = vunpack.c.h.b16 %v7006
    %v8052 = vunpack.c.l.b16 %v7007
    %v8053 = vunpack.c.h.b16 %v7007
    %v8054 = vunpack.c.l.b16 %v7008
    %v8055 = vunpack.c.l.b16 %v7009
    %v8056 = vunpack.c.h.b16 %v7009
    %v8057 = vunpack.c.l.b16 %v7010
    %v8058 = vunpack.c.h.b16 %v7010
    %v8059 = vunpack.c.l.b16 %v7011
    %v8060 = vunpack.c.h.b16 %v7011
    %v8061 = vunpack.c.l.b16 %v7012
    %v8062 = vunpack.c.l.b16 %v7013
    %v8063 = vunpack.c.h.b16 %v7013
    %v8064 = vunpack.c.l.b16 %v7014
    %v8065 = vunpack.c.h.b16 %v7014
    %v8066 = vunpack.c.l.b16 %v7015
    %v8067 = vunpack.c.h.b16 %v7015
    %v8068 = vunpack.c.l.b16 %v7016
    %v8069 = vunpack.c.l.b16 %v7017
    %v8070 = vunpack.c.h.b16 %v7017
    %v8071 = vunpack.c.l.b16 %v7018
    %v8072 = vunpack.c.h.b16 %v7018
    %v8073 = vunpack.c.l.b16 %v7019
    %v8074 = vunpack.c.h.b16 %v7019
    %v8075 = vunpack.c.l.b16 %v7020
    %v8076 = vunpack.c.l.b16 %v7021
    %v8077 = vunpack.c.h.b16 %v7021
    %v8078 = vunpack.c.l.b16 %v7022
    %v8079 = vunpack.c.h.b16 %v7022
    %v8080 = vunpack.c.l.b16 %v7023
    %v8081 = vunpack.c.h.b16 %v7023
    %v8082 = vunpack.c.l.b16 %v7024
    %v8083 = vunpack.c.l.b16 %v7025
    %v8084 = vunpack.c.h.b16 %v7025
    %v8085 = vunpack.c.l.b16 %v7026
    %v8086 = vunpack.c.h.b16 %v7026
    %v8087 = vunpack.c.l.b16 %v7027
    %v8088 = vunpack.c.h.b16 %v7027
    %v8089 = vunpack.c.l.b16 %v7028
    %v8090 = vunpack.c.l.b16 %v7029
    %v8091 = vunpack.c.h.b16 %v7029
    %v8092 = vunpack.c.l.b16 %v7030
    %v8093 = vunpack.c.h.b16 %v7030
    %v8094 = vunpack.c.l.b16 %v7031
    %v8095 = vunpack.c.h.b16 %v7031
    %v8096 = vunpack.c.l.b16 %v7032
    %v8097 = vunpack.c.l.b16 %v7033
    %v8098 = vunpack.c.h.b16 %v7033
    %v8099 = vunpack.c.l.b16 %v7034
    %v8100 = vunpack.c.h.b16 %v7034
    %v8101 = vunpack.c.l.b16 %v7035
    %v8102 = vunpack.c.h.b16 %v7035
    %v8103 = vunpack.c.l.b16 %v7036
    %v8104 = vunpack.c.l.b16 %v7037
    %v8105 = vunpack.c.h.b16 %v7037
    %v8106 = vunpack.c.l.b16 %v7038
    %v8107 = vunpack.c.h.b16 %v7038
    %v8108 = vunpack.c.l.b16 %v7039
    %v8109 = vunpack.c.h.b16 %v7039
    %v8110 = vunpack.c.l.b16 %v7040
    %v8111 = vunpack.c.l.b16 %v7041
    %v8112 = vunpack.c.h.b16 %v7041
    %v8113 = vunpack.c.l.b16 %v7042
    %v8114 = vunpack.c.h.b16 %v7042
    %v8115 = vunpack.c.l.b16 %v7043
    %v8116 = vunpack.c.h.b16 %v7043
    %v8117 = vunpack.c.l.b16 %v7044
    %v8118 = vunpack.c.l.b16 %v7045
    %v8119 = vunpack.c.h.b16 %v7045
    %v8120 = vunpack.c.l.b16 %v7046
    %v8121 = vunpack.c.h.b16 %v7046
    %v8122 = vunpack.c.l.b16 %v7047
    %v8123 = vunpack.c.h.b16 %v7047
    %v8124 = vunpack.c.l.b16 %v7048
    %v8125 = vunpack.c.l.b16 %v7049
    %v8126 = vunpack.c.h.b16 %v7049
    %v8127 = vunpack.c.l.b16 %v7050
    %v8128 = vunpack.c.h.b16 %v7050
    %v8129 = vunpack.c.l.b16 %v7051
    %v8130 = vunpack.c.h.b16 %v7051
    %v8131 = vunpack.c.l.b16 %v7052
    %v8132 = vunpack.c.l.b16 %v7053
    %v8133 = vunpack.c.h.b16 %v7053
    %v8134 = vunpack.c.l.b16 %v7054
    %v8135 = vunpack.c.h.b16 %v7054
    %v8136 = vunpack.c.l.b16 %v7055
    %v8137 = vunpack.c.h.b16 %v7055
    %v8138 = vunpack.c.l.b16 %v7056
    %v8139 = vunpack.c.l.b16 %v7057
    %v8140 = vunpack.c.h.b16 %v7057
    %v8141 = vunpack.c.l.b16 %v7058
    %v8142 = vunpack.c.h.b16 %v7058
    %v8143 = vunpack.c.l.b16 %v7059
    %v8144 = vunpack.c.h.b16 %v7059
    %v8145 = vunpack.c.l.b16 %v7060
    %v8146 = vunpack.c.l.b16 %v7061
    %v8147 = vunpack.c.h.b16 %v7061
    %v8148 = vunpack.c.l.b16 %v7062
    %v8149 = vunpack.c.h.b16 %v7062
    %v8150 = vunpack.c.l.b16 %v7063
    %v8151 = vunpack.c.h.b16 %v7063
    %v8152 = vunpack.c.l.b16 %v7064
    %v8153 = vunpack.c.l.b16 %v7065
    %v8154 = vunpack.c.h.b16 %v7065
    %v8155 = vunpack.c.l.b16 %v7066
    %v8156 = vunpack.c.h.b16 %v7066
    %v8157 = vunpack.c.l.b16 %v7067
    %v8158 = vunpack.c.h.b16 %v7067
    %v8159 = vunpack.c.l.b16 %v7068
    %v8160 = vunpack.c.l.b16 %v7069
    %v8161 = vunpack.c.h.b16 %v7069
    %v8162 = vunpack.c.l.b16 %v7070
    %v8163 = vunpack.c.h.b16 %v7070
    %v8164 = vunpack.c.l.b16 %v7071
    %v8165 = vunpack.c.h.b16 %v7071
    %v8166 = vunpack.c.l.b16 %v7072
    %v8167 = vunpack.c.l.b16 %v7073
    %v8168 = vunpack.c.h.b16 %v7073
    %v8169 = vunpack.c.l.b16 %v7074
    %v8170 = vunpack.c.h.b16 %v7074
    %v8171 = vunpack.c.l.b16 %v7075
    %v8172 = vunpack.c.h.b16 %v7075
    %v8173 = vunpack.c.l.b16 %v7076
    %v8174 = vunpack.c.l.b16 %v7077
    %v8175 = vunpack.c.h.b16 %v7077
    %v8176 = vunpack.c.l.b16 %v7078
    %v8177 = vunpack.c.h.b16 %v7078
    %v8178 = vunpack.c.l.b16 %v7079
    %v8179 = vunpack.c.h.b16 %v7079
    %v8180 = vunpack.c.l.b16 %v7080
    %v8181 = vunpack.c.l.b16 %v7081
    %v8182 = vunpack.c.h.b16 %v7081
    %v8183 = vunpack.c.l.b16 %v7082
    %v8184 = vunpack.c.h.b16 %v7082
    %v8185 = vunpack.c.l.b16 %v7083
    %v8186 = vunpack.c.h.b16 %v7083
    %v8187 = vunpack.c.l.b16 %v7084
    %v8188 = vunpack.c.l.b16 %v7085
    %v8189 = vunpack.c.h.b16 %v7085
    %v8190 = vunpack.c.l.b16 %v7086
    %v8191 = vunpack.c.h.b16 %v7086
    %v8192 = vunpack.c.l.b16 %v7087
    %v8193 = vunpack.c.h.b16 %v7087
    %v8194 = vunpack.c.l.b16 %v7088
    %v8195 = vunpack.c.l.b16 %v7089
    %v8196 = vunpack.c.h.b16 %v7089
    %v8197 = vunpack.c.l.b16 %v7090
    %v8198 = vunpack.c.h.b16 %v7090
    %v8199 = vunpack.c.l.b16 %v7091
    %v8200 = vunpack.c.h.b16 %v7091
    %v8201 = vunpack.c.l.b16 %v7092
    %v8202 = vunpack.c.l.b16 %v7093
    %v8203 = vunpack.c.h.b16 %v7093
    %v8204 = vunpack.c.l.b16 %v7094
    %v8205 = vunpack.c.h.b16 %v7094
    %v8206 = vunpack.c.l.b16 %v7095
    %v8207 = vunpack.c.h.b16 %v7095
    %v8208 = vunpack.c.l.b16 %v7096
    %v8209 = vunpack.c.l.b16 %v7097
    %v8210 = vunpack.c.h.b16 %v7097
    %v8211 = vunpack.c.l.b16 %v7098
    %v8212 = vunpack.c.h.b16 %v7098
    %v8213 = vunpack.c.l.b16 %v7099
    %v8214 = vunpack.c.h.b16 %v7099
    %v8215 = vunpack.c.l.b16 %v7100
    %v8216 = vunpack.c.l.b16 %v7101
    %v8217 = vunpack.c.h.b16 %v7101
    %v8218 = vunpack.c.l.b16 %v7102
    %v8219 = vunpack.c.h.b16 %v7102
    %v8220 = vunpack.c.l.b16 %v7103
    %v8221 = vunpack.c.h.b16 %v7103
    %v8222 = vunpack.c.l.b16 %v7104
    %v8223 = vunpack.c.l.b16 %v7105
    %v8224 = vunpack.c.h.b16 %v7105
    %v8225 = vunpack.c.l.b16 %v7106
    %v8226 = vunpack.c.h.b16 %v7106
    %v8227 = vunpack.c.l.b16 %v7107
    %v8228 = vunpack.c.h.b16 %v7107
    %v8229 = vunpack.c.l.b16 %v7108
    %v8230 = vunpack.c.l.b16 %v7109
    %v8231 = vunpack.c.h.b16 %v7109
    %v8232 = vunpack.c.l.b16 %v7110
    %v8233 = vunpack.c.h.b16 %v7110
    %v8234 = vunpack.c.l.b16 %v7111
    %v8235 = vunpack.c.h.b16 %v7111
    %v8236 = vunpack.c.l.b16 %v7112
    %v8237 = vunpack.c.l.b16 %v7113
    %v8238 = vunpack.c.h.b16 %v7113
    %v8239 = vunpack.c.l.b16 %v7114
    %v8240 = vunpack.c.h.b16 %v7114
    %v8241 = vunpack.c.l.b16 %v7115
    %v8242 = vunpack.c.h.b16 %v7115
    %v8243 = vunpack.c.l.b16 %v7116
    %v8244 = vunpack.c.l.b16 %v7117
    %v8245 = vunpack.c.h.b16 %v7117
    %v8246 = vunpack.c.l.b16 %v7118
    %v8247 = vunpack.c.h.b16 %v7118
    %v8248 = vunpack.c.l.b16 %v7119
    %v8249 = vunpack.c.h.b16 %v7119
    %v8250 = vunpack.c.l.b16 %v7120
    %v8251 = vunpack.c.l.b16 %v7121
    %v8252 = vunpack.c.h.b16 %v7121
    %v8253 = vunpack.c.l.b16 %v7122
    %v8254 = vunpack.c.h.b16 %v7122
    %v8255 = vunpack.c.l.b16 %v7123
    %v8256 = vunpack.c.h.b16 %v7123
    %v8257 = vunpack.c.l.b16 %v7124
    %v8258 = vunpack.c.l.b16 %v7125
    %v8259 = vunpack.c.h.b16 %v7125
    %v8260 = vunpack.c.l.b16 %v7126
    %v8261 = vunpack.c.h.b16 %v7126
    %v8262 = vunpack.c.l.b16 %v7127
    %v8263 = vunpack.c.h.b16 %v7127
    %v8264 = vunpack.c.l.b16 %v7128
    %v8265 = vunpack.c.l.b16 %v7129
    %v8266 = vunpack.c.h.b16 %v7129
    %v8267 = vunpack.c.l.b16 %v7130
    %v8268 = vunpack.c.h.b16 %v7130
    %v8269 = vunpack.c.l.b16 %v7131
    %v8270 = vunpack.c.h.b16 %v7131
    %v8271 = vunpack.c.l.b16 %v7132
    %v8272 = vunpack.c.l.b16 %v7133
    %v8273 = vunpack.c.h.b16 %v7133
    %v8274 = vunpack.c.l.b16 %v7134
    %v8275 = vunpack.c.h.b16 %v7134
    %v8276 = vunpack.c.l.b16 %v7135
    %v8277 = vunpack.c.h.b16 %v7135
    %v8278 = vunpack.c.l.b16 %v7136
    %v8279 = vunpack.c.l.b16 %v7137
    %v8280 = vunpack.c.h.b16 %v7137
    %v8281 = vunpack.c.l.b16 %v7138
    %v8282 = vunpack.c.h.b16 %v7138
    %v8283 = vunpack.c.l.b16 %v7139
    %v8284 = vunpack.c.h.b16 %v7139
    %v8285 = vunpack.c.l.b16 %v7140
    %v8286 = vunpack.c.l.b16 %v7141
    %v8287 = vunpack.c.h.b16 %v7141
    %v8288 = vunpack.c.l.b16 %v7142
    %v8289 = vunpack.c.h.b16 %v7142
    %v8290 = vunpack.c.l.b16 %v7143
    %v8291 = vunpack.c.h.b16 %v7143
    %v8292 = vunpack.c.l.b16 %v7144
    %v8293 = vunpack.c.l.b16 %v7145
    %v8294 = vunpack.c.h.b16 %v7145
    %v8295 = vunpack.c.l.b16 %v7146
    %v8296 = vunpack.c.h.b16 %v7146
    %v8297 = vunpack.c.l.b16 %v7147
    %v8298 = vunpack.c.h.b16 %v7147
    %v8299 = vunpack.c.l.b16 %v7148
    %v8300 = vunpack.c.l.b16 %v7149
    %v8301 = vunpack.c.h.b16 %v7149
    %v8302 = vunpack.c.l.b16 %v7150
    %v8303 = vunpack.c.h.b16 %v7150
    %v8304 = vunpack.c.l.b16 %v7151
    %v8305 = vunpack.c.h.b16 %v7151
    %v8306 = vunpack.c.l.b16 %v7152
    %v8307 = vunpack.c.l.b16 %v7153
    %v8308 = vunpack.c.h.b16 %v7153
    %v8309 = vunpack.c.l.b16 %v7154
    %v8310 = vunpack.c.h.b16 %v7154
    %v8311 = vunpack.c.l.b16 %v7155
    %v8312 = vunpack.c.h.b16 %v7155
    %v8313 = vunpack.c.l.b16 %v7156
    %v8314 = vunpack.c.l.b16 %v7157
    %v8315 = vunpack.c.h.b16 %v7157
    %v8316 = vunpack.c.l.b16 %v7158
    %v8317 = vunpack.c.h.b16 %v7158
    %v8318 = vunpack.c.l.b16 %v7159
    %v8319 = vunpack.c.h.b16 %v7159
    %v8320 = vunpack.c.l.b16 %v7160
    %v8321 = vunpack.c.l.b16 %v7161
    %v8322 = vunpack.c.h.b16 %v7161
    %v8323 = vunpack.c.l.b16 %v7162
    %v8324 = vunpack.c.h.b16 %v7162
    %v8325 = vunpack.c.l.b16 %v7163
    %v8326 = vunpack.c.h.b16 %v7163
    %v8327 = vunpack.c.l.b16 %v7164
    %v8328 = vunpack.c.l.b16 %v7165
    %v8329 = vunpack.c.h.b16 %v7165
    %v8330 = vunpack.c.l.b16 %v7166
    %v8331 = vunpack.c.h.b16 %v7166
    %v8332 = vunpack.c.l.b16 %v7167
    %v8333 = vunpack.c.h.b16 %v7167
    %v8334 = vunpack.c.l.b16 %v7168
    %v8335 = vunpack.c.l.b16 %v7169
    %v8336 = vunpack.c.h.b16 %v7169
    %v8337 = vunpack.c.l.b16 %v7170
    %v8338 = vunpack.c.h.b16 %v7170
    %v8339 = vunpack.c.l.b16 %v7171
    %v8340 = vunpack.c.h.b16 %v7171
    %v8341 = vunpack.c.l.b16 %v7172
    %v8342 = vunpack.c.l.b16 %v7173
    %v8343 = vunpack.c.h.b16 %v7173
    %v8344 = vunpack.c.l.b16 %v7174
    %v8345 = vunpack.c.h.b16 %v7174
    %v8346 = vunpack.c.l.b16 %v7175
    %v8347 = vunpack.c.h.b16 %v7175
    %v8348 = vunpack.c.l.b16 %v7176
    %v8349 = vunpack.c.l.b16 %v7177
    %v8350 = vunpack.c.h.b16 %v7177
    %v8351 = vunpack.c.l.b16 %v7178
    %v8352 = vunpack.c.h.b16 %v7178
    %v8353 = vunpack.c.l.b16 %v7179
    %v8354 = vunpack.c.h.b16 %v7179
    %v8355 = vunpack.c.l.b16 %v7180
    %v8356 = vunpack.c.l.b16 %v7181
    %v8357 = vunpack.c.h.b16 %v7181
    %v8358 = vunpack.c.l.b16 %v7182
    %v8359 = vunpack.c.h.b16 %v7182
    %v8360 = vunpack.c.l.b16 %v7183
    %v8361 = vunpack.c.h.b16 %v7183
    %v8362 = vunpack.c.l.b16 %v7184
    %v8363 = vunpack.c.l.b16 %v7185
    %v8364 = vunpack.c.h.b16 %v7185
    %v8365 = vunpack.c.l.b16 %v7186
    %v8366 = vunpack.c.h.b16 %v7186
    %v8367 = vunpack.c.l.b16 %v7187
    %v8368 = vunpack.c.h.b16 %v7187
    %v8369 = vunpack.c.l.b16 %v7188
    %v8370 = vunpack.c.l.b16 %v7189
    %v8371 = vunpack.c.h.b16 %v7189
    %v8372 = vunpack.c.l.b16 %v7190
    %v8373 = vunpack.c.h.b16 %v7190
    %v8374 = vunpack.c.l.b16 %v7191
    %v8375 = vunpack.c.h.b16 %v7191
    %v8376 = vunpack.c.l.b16 %v7192
    %v8377 = vunpack.c.l.b16 %v7193
    %v8378 = vunpack.c.h.b16 %v7193
    %v8379 = vunpack.c.l.b16 %v7194
    %v8380 = vunpack.c.h.b16 %v7194
    %v8381 = vunpack.c.l.b16 %v7195
    %v8382 = vunpack.c.h.b16 %v7195
    %v8383 = vunpack.c.l.b16 %v7196
    %v8384 = vunpack.c.l.b16 %v7197
    %v8385 = vunpack.c.h.b16 %v7197
    %v8386 = vunpack.c.l.b16 %v7198
    %v8387 = vunpack.c.h.b16 %v7198
    %v8388 = vunpack.c.l.b16 %v7199
    %v8389 = vunpack.c.h.b16 %v7199
    %v8390 = vunpack.c.l.b16 %v7200
    %v8391 = vunpack.c.l.b16 %v7201
    %v8392 = vunpack.c.h.b16 %v7201
    %v8393 = vunpack.c.l.b16 %v7202
    %v8394 = vunpack.c.h.b16 %v7202
    %v8395 = vunpack.c.l.b16 %v7203
    %v8396 = vunpack.c.h.b16 %v7203
    %v8397 = vunpack.c.l.b16 %v7204
    %v8398 = vunpack.c.l.b16 %v7205
    %v8399 = vunpack.c.h.b16 %v7205
    %v8400 = vunpack.c.l.b16 %v7206
    %v8401 = vunpack.c.h.b16 %v7206
    %v8402 = vunpack.c.l.b16 %v7207
    %v8403 = vunpack.c.h.b16 %v7207
    %v8404 = vunpack.c.l.b16 %v7208
    %v8405 = vunpack.c.l.b16 %v7209
    %v8406 = vunpack.c.h.b16 %v7209
    %v8407 = vunpack.c.l.b16 %v7210
    %v8408 = vunpack.c.h.b16 %v7210
    %v8409 = vunpack.c.l.b16 %v7211
    %v8410 = vunpack.c.h.b16 %v7211
    %v8411 = vunpack.c.l.b16 %v7212
    %v8412 = vunpack.c.l.b16 %v7213
    %v8413 = vunpack.c.h.b16 %v7213
    %v8414 = vunpack.c.l.b16 %v7214
    %v8415 = vunpack.c.h.b16 %v7214
    %v8416 = vunpack.c.l.b16 %v7215
    %v8417 = vunpack.c.h.b16 %v7215
    %v8418 = vunpack.c.l.b16 %v7216
    %v8419 = vunpack.c.l.b16 %v7217
    %v8420 = vunpack.c.h.b16 %v7217
    %v8421 = vunpack.c.l.b16 %v7218
    %v8422 = vunpack.c.h.b16 %v7218
    %v8423 = vunpack.c.l.b16 %v7219
    %v8424 = vunpack.c.h.b16 %v7219
    %v8425 = vunpack.c.l.b16 %v7220
    %v8426 = vunpack.c.l.b16 %v7221
    %v8427 = vunpack.c.h.b16 %v7221
    %v8428 = vunpack.c.l.b16 %v7222
    %v8429 = vunpack.c.h.b16 %v7222
    %v8430 = vunpack.c.l.b16 %v7223
    %v8431 = vunpack.c.h.b16 %v7223
    %v8432 = vunpack.c.l.b16 %v7224
    %v8433 = vunpack.c.l.b16 %v7225
    %v8434 = vunpack.c.h.b16 %v7225
    %v8435 = vunpack.c.l.b16 %v7226
    %v8436 = vunpack.c.h.b16 %v7226
    %v8437 = vunpack.c.l.b16 %v7227
    %v8438 = vunpack.c.h.b16 %v7227
    %v8439 = vunpack.c.l.b16 %v7228
    %v8440 = vunpack.c.l.b16 %v7229
    %v8441 = vunpack.c.h.b16 %v7229
    %v8442 = vunpack.c.l.b16 %v7230
    %v8443 = vunpack.c.h.b16 %v7230
    %v8444 = vunpack.c.l.b16 %v7231
    %v8445 = vunpack.c.h.b16 %v7231
    %v8446 = vunpack.c.l.b16 %v7232
    %v8447 = vunpack.c.l.b16 %v7233
    %v8448 = vunpack.c.h.b16 %v7233
    %v8449 = vunpack.c.l.b16 %v7234
    %v8450 = vunpack.c.h.b16 %v7234
    %v8451 = vunpack.c.l.b16 %v7235
    %v8452 = vunpack.c.h.b16 %v7235
    %v8453 = vunpack.c.l.b16 %v7236
    %v8454 = vunpack.c.l.b16 %v7237
    %v8455 = vunpack.c.h.b16 %v7237
    %v8456 = vunpack.c.l.b16 %v7238
    %v8457 = vunpack.c.h.b16 %v7238
    %v8458 = vunpack.c.l.b16 %v7239
    %v8459 = vunpack.c.h.b16 %v7239
    %v8460 = vunpack.c.l.b16 %v7240
    %v8461 = vunpack.c.l.b16 %v7241
    %v8462 = vunpack.c.h.b16 %v7241
    %v8463 = vunpack.c.l.b16 %v7242
    %v8464 = vunpack.c.h.b16 %v7242
    %v8465 = vunpack.c.l.b16 %v7243
    %v8466 = vunpack.c.h.b16 %v7243
    %v8467 = vunpack.c.l.b16 %v7244
    %v8468 = vunpack.c.l.b16 %v7245
    %v8469 = vunpack.c.h.b16 %v7245
    %v8470 = vunpack.c.l.b16 %v7246
    %v8471 = vunpack.c.h.b16 %v7246
    %v8472 = vunpack.c.l.b16 %v7247
    %v8473 = vunpack.c.h.b16 %v7247
    %v8474 = vunpack.c.l.b16 %v7248
    %v8475 = vunpack.c.l.b16 %v7249
    %v8476 = vunpack.c.h.b16 %v7249
    %v8477 = vunpack.c.l.b16 %v7250
    %v8478 = vunpack.c.h.b16 %v7250
    %v8479 = vunpack.c.l.b16 %v7251
    %v8480 = vunpack.c.h.b16 %v7251
    %v8481 = vunpack.c.l.b16 %v7252
    %v8482 = vunpack.c.l.b16 %v7253
    %v8483 = vunpack.c.h.b16 %v7253
    %v8484 = vunpack.c.l.b16 %v7254
    %v8485 = vunpack.c.h.b16 %v7254
    %v8486 = vunpack.c.l.b16 %v7255
    %v8487 = vunpack.c.h.b16 %v7255
    %v8488 = vunpack.c.l.b16 %v7256
    %v8489 = vunpack.c.l.b16 %v7257
    %v8490 = vunpack.c.h.b16 %v7257
    %v8491 = vunpack.c.l.b16 %v7258
    %v8492 = vunpack.c.h.b16 %v7258
    %v8493 = vunpack.c.l.b16 %v7259
    %v8494 = vunpack.c.h.b16 %v7259
    %v8495 = vunpack.c.l.b16 %v7260
    %v8496 = vunpack.c.l.b16 %v7261
    %v8497 = vunpack.c.h.b16 %v7261
    %v8498 = vunpack.c.l.b16 %v7262
    %v8499 = vunpack.c.h.b16 %v7262
    %v8500 = vunpack.c.l.b16 %v7263
    %v8501 = vunpack.c.h.b16 %v7263
    %v8502 = vunpack.c.l.b16 %v7264
    %v8503 = vunpack.c.l.b16 %v7265
    %v8504 = vunpack.c.h.b16 %v7265
    %v8505 = vunpack.c.l.b16 %v7266
    %v8506 = vunpack.c.h.b16 %v7266
    %v8507 = vunpack.c.l.b16 %v7267
    %v8508 = vunpack.c.h.b16 %v7267
    %v8509 = vunpack.c.l.b16 %v7268
    %v8510 = vunpack.c.l.b16 %v7269
    %v8511 = vunpack.c.h.b16 %v7269
    %v8512 = vunpack.c.l.b16 %v7270
    %v8513 = vunpack.c.h.b16 %v7270
    %v8514 = vunpack.c.l.b16 %v7271
    %v8515 = vunpack.c.h.b16 %v7271
    %v8516 = vunpack.c.l.b16 %v7272
    %v8517 = vunpack.c.l.b16 %v7273
    %v8518 = vunpack.c.h.b16 %v7273
    %v8519 = vunpack.c.l.b16 %v7274
    %v8520 = vunpack.c.h.b16 %v7274
    %v8521 = vunpack.c.l.b16 %v7275
    %v8522 = vunpack.c.h.b16 %v7275
    %v8523 = vunpack.c.l.b16 %v7276
    %v8524 = vunpack.c.l.b16 %v7277
    %v8525 = vunpack.c.h.b16 %v7277
    %v8526 = vunpack.c.l.b16 %v7278
    %v8527 = vunpack.c.h.b16 %v7278
    %v8528 = vunpack.c.l.b16 %v7279
    %v8529 = vunpack.c.h.b16 %v7279
    %v8530 = vunpack.c.l.b16 %v7280
    %v8531 = vunpack.c.l.b16 %v7281
    %v8532 = vunpack.c.h.b16 %v7281
    %v8533 = vunpack.c.l.b16 %v7282
    %v8534 = vunpack.c.h.b16 %v7282
    %v8535 = vunpack.c.l.b16 %v7283
    %v8536 = vunpack.c.h.b16 %v7283
    %v8537 = vunpack.c.l.b16 %v7284
    %v8538 = vunpack.c.l.b16 %v7285
    %v8539 = vunpack.c.h.b16 %v7285
    %v8540 = vunpack.c.l.b16 %v7286
    %v8541 = vunpack.c.h.b16 %v7286
    %v8542 = vunpack.c.l.b16 %v7287
    %v8543 = vunpack.c.h.b16 %v7287
    %v8544 = vunpack.c.l.b16 %v7288
    %v8545 = vunpack.c.l.b16 %v7289
    %v8546 = vunpack.c.h.b16 %v7289
    %v8547 = vunpack.c.l.b16 %v7290
    %v8548 = vunpack.c.h.b16 %v7290
    %v8549 = vunpack.c.l.b16 %v7291
    %v8550 = vunpack.c.h.b16 %v7291
    %v8551 = vunpack.c.l.b16 %v7292
    %v8552 = vunpack.c.l.b16 %v7293
    %v8553 = vunpack.c.h.b16 %v7293
    %v8554 = vunpack.c.l.b16 %v7294
    %v8555 = vunpack.c.h.b16 %v7294
    %v8556 = vunpack.c.l.b16 %v7295
    %v8557 = vunpack.c.h.b16 %v7295
    %v8558 = vunpack.c.l.b16 %v7296
    %v8559 = vunpack.c.l.b16 %v7297
    %v8560 = vunpack.c.h.b16 %v7297
    %v8561 = vunpack.c.l.b16 %v7298
    %v8562 = vunpack.c.h.b16 %v7298
    %v8563 = vunpack.c.l.b16 %v7299
    %v8564 = vunpack.c.h.b16 %v7299
    %v8565 = vunpack.c.l.b16 %v7300
    %v8566 = vunpack.c.l.b16 %v7301
    %v8567 = vunpack.c.h.b16 %v7301
    %v8568 = vunpack.c.l.b16 %v7302
    %v8569 = vunpack.c.h.b16 %v7302
    %v8570 = vunpack.c.l.b16 %v7303
    %v8571 = vunpack.c.h.b16 %v7303
    %v8572 = vunpack.c.l.b16 %v7304
    %v8573 = vunpack.c.l.b16 %v7305
    %v8574 = vunpack.c.h.b16 %v7305
    %v8575 = vunpack.c.l.b16 %v7306
    %v8576 = vunpack.c.h.b16 %v7306
    %v8577 = vunpack.c.l.b16 %v7307
    %v8578 = vunpack.c.h.b16 %v7307
    %v8579 = vunpack.c.l.b16 %v7308
    %v8580 = vunpack.c.l.b16 %v7309
    %v8581 = vunpack.c.h.b16 %v7309
    %v8582 = vunpack.c.l.b16 %v7310
    %v8583 = vunpack.c.h.b16 %v7310
    %v8584 = vunpack.c.l.b16 %v7311
    %v8585 = vunpack.c.h.b16 %v7311
    %v8586 = vunpack.c.l.b16 %v7312
    %v8587 = vunpack.c.l.b16 %v7313
    %v8588 = vunpack.c.h.b16 %v7313
    %v8589 = vunpack.c.l.b16 %v7314
    %v8590 = vunpack.c.h.b16 %v7314
    %v8591 = vunpack.c.l.b16 %v7315
    %v8592 = vunpack.c.h.b16 %v7315
    %v8593 = vunpack.c.l.b16 %v7316
    %v8594 = vunpack.c.l.b16 %v7317
    %v8595 = vunpack.c.h.b16 %v7317
    %v8596 = vunpack.c.l.b16 %v7318
    %v8597 = vunpack.c.h.b16 %v7318
    %v8598 = vunpack.c.l.b16 %v7319
    %v8599 = vunpack.c.h.b16 %v7319
    %v8600 = vunpack.c.l.b16 %v7320
    %v8601 = vunpack.c.l.b16 %v7321
    %v8602 = vunpack.c.h.b16 %v7321
    %v8603 = vunpack.c.l.b16 %v7322
    %v8604 = vunpack.c.h.b16 %v7322
    %v8605 = vunpack.c.l.b16 %v7323
    %v8606 = vunpack.c.h.b16 %v7323
    %v8607 = vunpack.c.l.b16 %v7324
    %v8608 = vunpack.c.l.b16 %v7325
    %v8609 = vunpack.c.h.b16 %v7325
    %v8610 = vunpack.c.l.b16 %v7326
    %v8611 = vunpack.c.h.b16 %v7326
    %v8612 = vunpack.c.l.b16 %v7327
    %v8613 = vunpack.c.h.b16 %v7327
    %v8614 = vunpack.c.l.b16 %v7328
    %v8615 = vunpack.c.l.b16 %v7329
    %v8616 = vunpack.c.h.b16 %v7329
    %v8617 = vunpack.c.l.b16 %v7330
    %v8618 = vunpack.c.h.b16 %v7330
    %v8619 = vunpack.c.l.b16 %v7331
    %v8620 = vunpack.c.h.b16 %v7331
    %v8621 = vunpack.c.l.b16 %v7332
    %v8622 = vunpack.c.l.b16 %v7333
    %v8623 = vunpack.c.h.b16 %v7333
    %v8624 = vunpack.c.l.b16 %v7334
    %v8625 = vunpack.c.h.b16 %v7334
    %v8626 = vunpack.c.l.b16 %v7335
    %v8627 = vunpack.c.h.b16 %v7335
    %v8628 = vunpack.c.l.b16 %v7336
    %v8629 = vunpack.c.l.b16 %v7337
    %v8630 = vunpack.c.h.b16 %v7337
    %v8631 = vunpack.c.l.b16 %v7338
    %v8632 = vunpack.c.h.b16 %v7338
    %v8633 = vunpack.c.l.b16 %v7339
    %v8634 = vunpack.c.h.b16 %v7339
    %v8635 = vunpack.c.l.b16 %v7340
    %v8636 = vunpack.c.l.b16 %v7341
    %v8637 = vunpack.c.h.b16 %v7341
    %v8638 = vunpack.c.l.b16 %v7342
    %v8639 = vunpack.c.h.b16 %v7342
    %v8640 = vunpack.c.l.b16 %v7343
    %v8641 = vunpack.c.h.b16 %v7343
    %v8642 = vunpack.c.l.b16 %v7344
    %v8643 = vunpack.c.l.b16 %v7345
    %v8644 = vunpack.c.h.b16 %v7345
    %v8645 = vunpack.c.l.b16 %v7346
    %v8646 = vunpack.c.h.b16 %v7346
    %v8647 = vunpack.c.l.b16 %v7347
    %v8648 = vunpack.c.h.b16 %v7347
    %v8649 = vunpack.c.l.b16 %v7348
    %v8650 = vunpack.c.l.b16 %v7349
    %v8651 = vunpack.c.h.b16 %v7349
    %v8652 = vunpack.c.l.b16 %v7350
    %v8653 = vunpack.c.h.b16 %v7350
    %v8654 = vunpack.c.l.b16 %v7351
    %v8655 = vunpack.c.h.b16 %v7351
    %v8656 = vunpack.c.l.b16 %v7352
    %v8657 = vunpack.c.l.b16 %v7353
    %v8658 = vunpack.c.h.b16 %v7353
    %v8659 = vunpack.c.l.b16 %v7354
    %v8660 = vunpack.c.h.b16 %v7354
    %v8661 = vunpack.c.l.b16 %v7355
    %v8662 = vunpack.c.h.b16 %v7355
    %v8663 = vunpack.c.l.b16 %v7356
    %v8664 = vunpack.c.l.b16 %v7357
    %v8665 = vunpack.c.h.b16 %v7357
    %v8666 = vunpack.c.l.b16 %v7358
    %v8667 = vunpack.c.h.b16 %v7358
    %v8668 = vunpack.c.l.b16 %v7359
    %v8669 = vunpack.c.h.b16 %v7359
    %v8670 = vunpack.c.l.b16 %v7360
    %v8671 = vunpack.c.l.b16 %v7361
    %v8672 = vunpack.c.h.b16 %v7361
    %v8673 = vunpack.c.l.b16 %v7362
    %v8674 = vunpack.c.h.b16 %v7362
    %v8675 = vunpack.c.l.b16 %v7363
    %v8676 = vunpack.c.h.b16 %v7363
    %v8677 = vunpack.c.l.b16 %v7364
    %v8678 = vunpack.c.l.b16 %v7365
    %v8679 = vunpack.c.h.b16 %v7365
    %v8680 = vunpack.c.l.b16 %v7366
    %v8681 = vunpack.c.h.b16 %v7366
    %v8682 = vunpack.c.l.b16 %v7367
    %v8683 = vunpack.c.h.b16 %v7367
    %v8684 = vunpack.c.l.b16 %v7368
    %v8685 = vunpack.c.l.b16 %v7369
    %v8686 = vunpack.c.h.b16 %v7369
    %v8687 = vunpack.c.l.b16 %v7370
    %v8688 = vunpack.c.h.b16 %v7370
    %v8689 = vunpack.c.l.b16 %v7371
    %v8690 = vunpack.c.h.b16 %v7371
    %v8691 = vunpack.c.l.b16 %v7372
    %v8692 = vunpack.c.l.b16 %v7373
    %v8693 = vunpack.c.h.b16 %v7373
    %v8694 = vunpack.c.l.b16 %v7374
    %v8695 = vunpack.c.h.b16 %v7374
    %v8696 = vunpack.c.l.b16 %v7375
    %v8697 = vunpack.c.h.b16 %v7375
    %v8698 = vunpack.c.l.b16 %v7376
    %v8699 = vunpack.c.l.b16 %v7377
    %v8700 = vunpack.c.h.b16 %v7377
    %v8701 = vunpack.c.l.b16 %v7378
    %v8702 = vunpack.c.h.b16 %v7378
    %v8703 = vunpack.c.l.b16 %v7379
    %v8704 = vunpack.c.h.b16 %v7379
    %v8705 = vunpack.c.l.b16 %v7380
    %v8706 = vunpack.c.l.b16 %v7381
    %v8707 = vunpack.c.h.b16 %v7381
    %v8708 = vunpack.c.l.b16 %v7382
    %v8709 = vunpack.c.h.b16 %v7382
    %v8710 = vunpack.c.l.b16 %v7383
    %v8711 = vunpack.c.h.b16 %v7383
    %v8712 = vunpack.c.l.b16 %v7384
    %v8713 = vunpack.c.l.b16 %v7385
    %v8714 = vunpack.c.h.b16 %v7385
    %v8715 = vunpack.c.l.b16 %v7386
    %v8716 = vunpack.c.h.b16 %v7386
    %v8717 = vunpack.c.l.b16 %v7387
    %v8718 = vunpack.c.h.b16 %v7387
    %v8719 = vunpack.c.l.b16 %v7388
    %v8720 = vunpack.c.l.b16 %v7389
    %v8721 = vunpack.c.h.b16 %v7389
    %v8722 = vunpack.c.l.b16 %v7390
    %v8723 = vunpack.c.h.b16 %v7390
    %v8724 = vunpack.c.l.b16 %v7391
    %v8725 = vunpack.c.h.b16 %v7391
    %v8726 = vunpack.c.l.b16 %v7392
    %v8727 = vunpack.c.l.b16 %v7393
    %v8728 = vunpack.c.h.b16 %v7393
    %v8729 = vunpack.c.l.b16 %v7394
    %v8730 = vunpack.c.h.b16 %v7394
    %v8731 = vunpack.c.l.b16 %v7395
    %v8732 = vunpack.c.h.b16 %v7395
    %v8733 = vunpack.c.l.b16 %v7396
    %v8734 = vunpack.c.l.b16 %v7397
    %v8735 = vunpack.c.h.b16 %v7397
    %v8736 = vunpack.c.l.b16 %v7398
    %v8737 = vunpack.c.h.b16 %v7398
    %v8738 = vunpack.c.l.b16 %v7399
    %v8739 = vunpack.c.h.b16 %v7399
    %v8740 = vunpack.c.l.b16 %v7400
    %v8741 = vunpack.c.l.b16 %v7401
    %v8742 = vunpack.c.h.b16 %v7401
    %v8743 = vunpack.c.l.b16 %v7402
    %v8744 = vunpack.c.h.b16 %v7402
    %v8745 = vunpack.c.l.b16 %v7403
    %v8746 = vunpack.c.h.b16 %v7403
    %v8747 = vunpack.c.l.b16 %v7404
    %v8748 = vunpack.c.l.b16 %v7405
    %v8749 = vunpack.c.h.b16 %v7405
    %v8750 = vunpack.c.l.b16 %v7406
    %v8751 = vunpack.c.h.b16 %v7406
    %v8752 = vunpack.c.l.b16 %v7407
    %v8753 = vunpack.c.h.b16 %v7407
    %v8754 = vunpack.c.l.b16 %v7408
    %v8755 = vunpack.c.l.b16 %v7409
    %v8756 = vunpack.c.h.b16 %v7409
    %v8757 = vunpack.c.l.b16 %v7410
    %v8758 = vunpack.c.h.b16 %v7410
    %v8759 = vunpack.c.l.b16 %v7411
    %v8760 = vunpack.c.h.b16 %v7411
    %v8761 = vunpack.c.l.b16 %v7412
    %v8762 = vunpack.c.l.b16 %v7413
    %v8763 = vunpack.c.h.b16 %v7413
    %v8764 = vunpack.c.l.b16 %v7414
    %v8765 = vunpack.c.h.b16 %v7414
    %v8766 = vunpack.c.l.b16 %v7415
    %v8767 = vunpack.c.h.b16 %v7415
    %v8768 = vunpack.c.l.b16 %v7416
    %v8769 = vunpack.c.l.b16 %v7417
    %v8770 = vunpack.c.h.b16 %v7417
    %v8771 = vunpack.c.l.b16 %v7418
    %v8772 = vunpack.c.h.b16 %v7418
    %v8773 = vunpack.c.l.b16 %v7419
    %v8774 = vunpack.c.h.b16 %v7419
    %v8775 = vunpack.c.l.b16 %v7420
    %v8776 = vunpack.c.l.b16 %v7421
    %v8777 = vunpack.c.h.b16 %v7421
    %v8778 = vunpack.c.l.b16 %v7422
    %v8779 = vunpack.c.h.b16 %v7422
    %v8780 = vunpack.c.l.b16 %v7423
    %v8781 = vunpack.c.h.b16 %v7423
    %v8782 = vunpack.c.l.b16 %v7424
    %v8783 = vunpack.c.l.b16 %v7425
    %v8784 = vunpack.c.h.b16 %v7425
    %v8785 = vunpack.c.l.b16 %v7426
    %v8786 = vunpack.c.h.b16 %v7426
    %v8787 = vunpack.c.l.b16 %v7427
    %v8788 = vunpack.c.h.b16 %v7427
    %v8789 = vunpack.c.l.b16 %v7428
    %v8790 = vunpack.c.l.b16 %v7429
    %v8791 = vunpack.c.h.b16 %v7429
    %v8792 = vunpack.c.l.b16 %v7430
    %v8793 = vunpack.c.h.b16 %v7430
    %v8794 = vunpack.c.l.b16 %v7431
    %v8795 = vunpack.c.h.b16 %v7431
    %v8796 = vunpack.c.l.b16 %v7432
    %v8797 = vunpack.c.l.b16 %v7433
    %v8798 = vunpack.c.h.b16 %v7433
    %v8799 = vunpack.c.l.b16 %v7434
    %v8800 = vunpack.c.h.b16 %v7434
    %v8801 = vunpack.c.l.b16 %v7435
    %v8802 = vunpack.c.h.b16 %v7435
    %v8803 = vunpack.c.l.b16 %v7436
    %v8804 = vunpack.c.l.b16 %v7437
    %v8805 = vunpack.c.h.b16 %v7437
    %v8806 = vunpack.c.l.b16 %v7438
    %v8807 = vunpack.c.h.b16 %v7438
    %v8808 = vunpack.c.l.b16 %v7439
    %v8809 = vunpack.c.h.b16 %v7439
    %v8810 = vunpack.c.l.b16 %v7440
    %v8811 = vunpack.c.l.b16 %v7441
    %v8812 = vunpack.c.h.b16 %v7441
    %v8813 = vunpack.c.l.b16 %v7442
    %v8814 = vunpack.c.h.b16 %v7442
    %v8815 = vunpack.c.l.b16 %v7443
    %v8816 = vunpack.c.h.b16 %v7443
    %v8817 = vunpack.c.l.b16 %v7444
    %v8818 = vunpack.c.l.b16 %v7445
    %v8819 = vunpack.c.h.b16 %v7445
    %v8820 = vunpack.c.l.b16 %v7446
    %v8821 = vunpack.c.h.b16 %v7446
    %v8822 = vunpack.c.l.b16 %v7447
    %v8823 = vunpack.c.h.b16 %v7447
    %v8824 = vunpack.c.l.b16 %v7448
    %v8825 = vunpack.c.l.b16 %v7449
    %v8826 = vunpack.c.h.b16 %v7449
    %v8827 = vunpack.c.l.b16 %v7450
    %v8828 = vunpack.c.h.b16 %v7450
    %v8829 = vunpack.c.l.b16 %v7451
    %v8830 = vunpack.c.h.b16 %v7451
    %v8831 = vunpack.c.l.b16 %v7452
    %v8832 = vunpack.c.l.b16 %v7453
    %v8833 = vunpack.c.h.b16 %v7453
    %v8834 = vunpack.c.l.b16 %v7454
    %v8835 = vunpack.c.h.b16 %v7454
    %v8836 = vunpack.c.l.b16 %v7455
    %v8837 = vunpack.c.h.b16 %v7455
    %v8838 = vunpack.c.l.b16 %v7456
    %v8839 = vunpack.c.l.b16 %v7457
    %v8840 = vunpack.c.h.b16 %v7457
    %v8841 = vunpack.c.l.b16 %v7458
    %v8842 = vunpack.c.h.b16 %v7458
    %v8843 = vunpack.c.l.b16 %v7459
    %v8844 = vunpack.c.h.b16 %v7459
    %v8845 = vunpack.c.l.b16 %v7460
    %v8846 = vunpack.c.l.b16 %v7461
    %v8847 = vunpack.c.h.b16 %v7461
    %v8848 = vunpack.c.l.b16 %v7462
    %v8849 = vunpack.c.h.b16 %v7462
    %v8850 = vunpack.c.l.b16 %v7463
    %v8851 = vunpack.c.h.b16 %v7463
    %v8852 = vunpack.c.l.b16 %v7464
    %v8853 = vunpack.c.l.b16 %v7465
    %v8854 = vunpack.c.h.b16 %v7465
    %v8855 = vunpack.c.l.b16 %v7466
    %v8856 = vunpack.c.h.b16 %v7466
    %v8857 = vunpack.c.l.b16 %v7467
    %v8858 = vunpack.c.h.b16 %v7467
    %v8859 = vunpack.c.l.b16 %v7468
    %v8860 = vunpack.c.l.b16 %v7469
    %v8861 = vunpack.c.h.b16 %v7469
    %v8862 = vunpack.c.l.b16 %v7470
    %v8863 = vunpack.c.h.b16 %v7470
    %v8864 = vunpack.c.l.b16 %v7471
    %v8865 = vunpack.c.h.b16 %v7471
    %v8866 = vunpack.c.l.b16 %v7472
    %v8867 = vunpack.c.l.b16 %v7473
    %v8868 = vunpack.c.h.b16 %v7473
    %v8869 = vunpack.c.l.b16 %v7474
    %v8870 = vunpack.c.h.b16 %v7474
    %v8871 = vunpack.c.l.b16 %v7475
    %v8872 = vunpack.c.h.b16 %v7475
    %v8873 = vunpack.c.l.b16 %v7476
    %v8874 = vunpack.c.l.b16 %v7477
    %v8875 = vunpack.c.h.b16 %v7477
    %v8876 = vunpack.c.l.b16 %v7478
    %v8877 = vunpack.c.h.b16 %v7478
    %v8878 = vunpack.c.l.b16 %v7479
    %v8879 = vunpack.c.h.b16 %v7479
    %v8880 = vunpack.c.l.b16 %v7480
    %v8881 = vunpack.c.l.b16 %v7481
    %v8882 = vunpack.c.h.b16 %v7481
    %v8883 = vunpack.c.l.b16 %v7482
    %v8884 = vunpack.c.h.b16 %v7482
    %v8885 = vunpack.c.l.b16 %v7483
    %v8886 = vunpack.c.h.b16 %v7483
    %v8887 = vunpack.c.l.b16 %v7484
    %v8888 = vunpack.c.l.b16 %v7485
    %v8889 = vunpack.c.h.b16 %v7485
    %v8890 = vunpack.c.l.b16 %v7486
    %v8891 = vunpack.c.h.b16 %v7486
    %v8892 = vunpack.c.l.b16 %v7487
    %v8893 = vunpack.c.h.b16 %v7487
    %v8894 = vunpack.c.l.b16 %v7488
    %v8895 = vunpack.c.l.b16 %v7489
    %v8896 = vunpack.c.h.b16 %v7489
    %v8897 = vunpack.c.l.b16 %v7490
    %v8898 = vunpack.c.h.b16 %v7490
    %v8899 = vunpack.c.l.b16 %v7491
    %v8900 = vunpack.c.h.b16 %v7491
    %v8901 = vunpack.c.l.b16 %v7492
    %v8902 = vunpack.c.l.b16 %v7493
    %v8903 = vunpack.c.h.b16 %v7493
    %v8904 = vunpack.c.l.b16 %v7494
    %v8905 = vunpack.c.h.b16 %v7494
    %v8906 = vunpack.c.l.b16 %v7495
    %v8907 = vunpack.c.h.b16 %v7495
    %v8908 = vunpack.c.l.b16 %v7496
    %v8909 = vunpack.c.l.b16 %v7497
    %v8910 = vunpack.c.h.b16 %v7497
    %v8911 = vunpack.c.l.b16 %v7498
    %v8912 = vunpack.c.h.b16 %v7498
    %v8913 = vunpack.c.l.b16 %v7499
    %v8914 = vunpack.c.h.b16 %v7499
    %v8915 = vunpack.c.l.b16 %v7500
    %v8916 = vunpack.c.l.b16 %v7501
    %v8917 = vunpack.c.h.b16 %v7501
    %v8918 = vunpack.c.l.b16 %v7502
    %v8919 = vunpack.c.h.b16 %v7502
    %v8920 = vunpack.c.l.b16 %v7503
    %v8921 = vunpack.c.h.b16 %v7503
    %v8922 = vunpack.c.l.b16 %v7504
    %v8923 = vunpack.c.l.b16 %v7505
    %v8924 = vunpack.c.h.b16 %v7505
    %v8925 = vunpack.c.l.b16 %v7506
    %v8926 = vunpack.c.h.b16 %v7506
    %v8927 = vunpack.c.l.b16 %v7507
    %v8928 = vunpack.c.h.b16 %v7507
    %v8929 = vunpack.c.l.b16 %v7508
    %v8930 = vunpack.c.l.b16 %v7509
    %v8931 = vunpack.c.h.b16 %v7509
    %v8932 = vunpack.c.l.b16 %v7510
    %v8933 = vunpack.c.h.b16 %v7510
    %v8934 = vunpack.c.l.b16 %v7511
    %v8935 = vunpack.c.h.b16 %v7511
    %v8936 = vunpack.c.l.b16 %v7512
    %v8937 = vpack.c.b16 %v8048, %v8041
    %v8938 = vpack.c.b16 %v8049, %v8042
    %v8939 = vpack.c.b16 %v8050, %v8043
    %v8940 = vpack.c.b16 %v8051, %v8044
    %v8941 = vpack.c.b16 %v8052, %v8045
    %v8942 = vpack.c.b16 %v8053, %v8046
    %v8943 = vpack.c.b16 %v8054, %v8047
    %v8944 = vpack.c.b16 %v8062, %v8055
    %v8945 = vpack.c.b16 %v8063, %v8056
    %v8946 = vpack.c.b16 %v8064, %v8057
    %v8947 = vpack.c.b16 %v8065, %v8058
    %v8948 = vpack.c.b16 %v8066, %v8059
    %v8949 = vpack.c.b16 %v8067, %v8060
    %v8950 = vpack.c.b16 %v8068, %v8061
    %v8951 = vpack.c.b16 %v8076, %v8069
    %v8952 = vpack.c.b16 %v8077, %v8070
    %v8953 = vpack.c.b16 %v8078, %v8071
    %v8954 = vpack.c.b16 %v8079, %v8072
    %v8955 = vpack.c.b16 %v8080, %v8073
    %v8956 = vpack.c.b16 %v8081, %v8074
    %v8957 = vpack.c.b16 %v8082, %v8075
    %v8958 = vpack.c.b16 %v8090, %v8083
    %v8959 = vpack.c.b16 %v8091, %v8084
    %v8960 = vpack.c.b16 %v8092, %v8085
    %v8961 = vpack.c.b16 %v8093, %v8086
    %v8962 = vpack.c.b16 %v8094, %v8087
    %v8963 = vpack.c.b16 %v8095, %v8088
    %v8964 = vpack.c.b16 %v8096, %v8089
    %v8965 = vpack.c.b16 %v8104, %v8097
    %v8966 = vpack.c.b16 %v8105, %v8098
    %v8967 = vpack.c.b16 %v8106, %v8099
    %v8968 = vpack.c.b16 %v8107, %v8100
    %v8969 = vpack.c.b16 %v8108, %v8101
    %v8970 = vpack.c.b16 %v8109, %v8102
    %v8971 = vpack.c.b16 %v8110, %v8103
    %v8972 = vpack.c.b16 %v8118, %v8111
    %v8973 = vpack.c.b16 %v8119, %v8112
    %v8974 = vpack.c.b16 %v8120, %v8113
    %v8975 = vpack.c.b16 %v8121, %v8114
    %v8976 = vpack.c.b16 %v8122, %v8115
    %v8977 = vpack.c.b16 %v8123, %v8116
    %v8978 = vpack.c.b16 %v8124, %v8117
    %v8979 = vpack.c.b16 %v8132, %v8125
    %v8980 = vpack.c.b16 %v8133, %v8126
    %v8981 = vpack.c.b16 %v8134, %v8127
    %v8982 = vpack.c.b16 %v8135, %v8128
    %v8983 = vpack.c.b16 %v8136, %v8129
    %v8984 = vpack.c.b16 %v8137, %v8130
    %v8985 = vpack.c.b16 %v8138, %v8131
    %v8986 = vpack.c.b16 %v8146, %v8139
    %v8987 = vpack.c.b16 %v8147, %v8140
    %v8988 = vpack.c.b16 %v8148, %v8141
    %v8989 = vpack.c.b16 %v8149, %v8142
    %v8990 = vpack.c.b16 %v8150, %v8143
    %v8991 = vpack.c.b16 %v8151, %v8144
    %v8992 = vpack.c.b16 %v8152, %v8145
    %v8993 = vpack.c.b16 %v8160, %v8153
    %v8994 = vpack.c.b16 %v8161, %v8154
    %v8995 = vpack.c.b16 %v8162, %v8155
    %v8996 = vpack.c.b16 %v8163, %v8156
    %v8997 = vpack.c.b16 %v8164, %v8157
    %v8998 = vpack.c.b16 %v8165, %v8158
    %v8999 = vpack.c.b16 %v8166, %v8159
    %v9000 = vpack.c.b16 %v8174, %v8167
    %v9001 = vpack.c.b16 %v8175, %v8168
    %v9002 = vpack.c.b16 %v8176, %v8169
    %v9003 = vpack.c.b16 %v8177, %v8170
    %v9004 = vpack.c.b16 %v8178, %v8171
    %v9005 = vpack.c.b16 %v8179, %v8172
    %v9006 = vpack.c.b16 %v8180, %v8173
    %v9007 = vpack.c.b16 %v8188, %v8181
    %v9008 = vpack.c.b16 %v8189, %v8182
    %v9009 = vpack.c.b16 %v8190, %v8183
    %v9010 = vpack.c.b16 %v8191, %v8184
    %v9011 = vpack.c.b16 %v8192, %v8185
    %v9012 = vpack.c.b16 %v8193, %v8186
    %v9013 = vpack.c.b16 %v8194, %v8187
    %v9014 = vpack.c.b16 %v8202, %v8195
    %v9015 = vpack.c.b16 %v8203, %v8196
    %v9016 = vpack.c.b16 %v8204, %v8197
    %v9017 = vpack.c.b16 %v8205, %v8198
    %v9018 = vpack.c.b16 %v8206, %v8199
    %v9019 = vpack.c.b16 %v8207, %v8200
    %v9020 = vpack.c.b16 %v8208, %v8201
    %v9021 = vpack.c.b16 %v8216, %v8209
    %v9022 = vpack.c.b16 %v8217, %v8210
    %v9023 = vpack.c.b16 %v8218, %v8211
    %v9024 = vpack.c.b16 %v8219, %v8212
    %v9025 = vpack.c.b16 %v8220, %v8213
    %v9026 = vpack.c.b16 %v8221, %v8214
    %v9027 = vpack.c.b16 %v8222, %v8215
    %v9028 = vpack.c.b16 %v8230, %v8223
    %v9029 = vpack.c.b16 %v8231, %v8224
    %v9030 = vpack.c.b16 %v8232, %v8225
    %v9031 = vpack.c.b16 %v8233, %v8226
    %v9032 = vpack.c.b16 %v8234, %v8227
    %v9033 = vpack.c.b16 %v8235, %v8228
    %v9034 = vpack.c.b16 %v8236, %v8229
    %v9035 = vpack.c.b16 %v8244, %v8237
    %v9036 = vpack.c.b16 %v8245, %v8238
    %v9037 = vpack.c.b16 %v8246, %v8239
    %v9038 = vpack.c.b16 %v8247, %v8240
    %v9039 = vpack.c.b16 %v8248, %v8241
    %v9040 = vpack.c.b16 %v8249, %v8242
    %v9041 = vpack.c.b16 %v8250, %v8243
    %v9042 = vpack.c.b16 %v8258, %v8251
    %v9043 = vpack.c.b16 %v8259, %v8252
    %v9044 = vpack.c.b16 %v8260, %v8253
    %v9045 = vpack.c.b16 %v8261, %v8254
    %v9046 = vpack.c.b16 %v8262, %v8255
    %v9047 = vpack.c.b16 %v8263, %v8256
    %v9048 = vpack.c.b16 %v8264, %v8257
    %v9049 = vpack.c.b16 %v8272, %v8265
    %v9050 = vpack.c.b16 %v8273, %v8266
    %v9051 = vpack.c.b16 %v8274, %v8267
    %v9052 = vpack.c.b16 %v8275, %v8268
    %v9053 = vpack.c.b16 %v8276, %v8269
    %v9054 = vpack.c.b16 %v8277, %v8270
    %v9055 = vpack.c.b16 %v8278, %v8271
    %v9056 = vpack.c.b16 %v8286, %v8279
    %v9057 = vpack.c.b16 %v8287, %v8280
    %v9058 = vpack.c.b16 %v8288, %v8281
    %v9059 = vpack.c.b16 %v8289, %v8282
    %v9060 = vpack.c.b16 %v8290, %v8283
    %v9061 = vpack.c.b16 %v8291, %v8284
    %v9062 = vpack.c.b16 %v8292, %v8285
    %v9063 = vpack.c.b16 %v8300, %v8293
    %v9064 = vpack.c.b16 %v8301, %v8294
    %v9065 = vpack.c.b16 %v8302, %v8295
    %v9066 = vpack.c.b16 %v8303, %v8296
    %v9067 = vpack.c.b16 %v8304, %v8297
    %v9068 = vpack.c.b16 %v8305, %v8298
    %v9069 = vpack.c.b16 %v8306, %v8299
    %v9070 = vpack.c.b16 %v8314, %v8307
    %v9071 = vpack.c.b16 %v8315, %v8308
    %v9072 = vpack.c.b16 %v8316, %v8309
    %v9073 = vpack.c.b16 %v8317, %v8310
    %v9074 = vpack.c.b16 %v8318, %v8311
    %v9075 = vpack.c.b16 %v8319, %v8312
    %v9076 = vpack.c.b16 %v8320, %v8313
    %v9077 = vpack.c.b16 %v8328, %v8321
    %v9078 = vpack.c.b16 %v8329, %v8322
    %v9079 = vpack.c.b16 %v8330, %v8323
    %v9080 = vpack.c.b16 %v8331, %v8324
    %v9081 = vpack.c.b16 %v8332, %v8325
    %v9082 = vpack.c.b16 %v8333, %v8326
    %v9083 = vpack.c.b16 %v8334, %v8327
    %v9084 = vpack.c.b16 %v8342, %v8335
    %v9085 = vpack.c.b16 %v8343, %v8336
    %v9086 = vpack.c.b16 %v8344, %v8337
    %v9087 = vpack.c.b16 %v8345, %v8338
    %v9088 = vpack.c.b16 %v8346, %v8339
    %v9089 = vpack.c.b16 %v8347, %v8340
    %v9090 = vpack.c.b16 %v8348, %v8341
    %v9091 = vpack.c.b16 %v8356, %v8349
    %v9092 = vpack.c.b16 %v8357, %v8350
    %v9093 = vpack.c.b16 %v8358, %v8351
    %v9094 = vpack.c.b16 %v8359, %v8352
    %v9095 = vpack.c.b16 %v8360, %v8353
    %v9096 = vpack.c.b16 %v8361, %v8354
    %v9097 = vpack.c.b16 %v8362, %v8355
    %v9098 = vpack.c.b16 %v8370, %v8363
    %v9099 = vpack.c.b16 %v8371, %v8364
    %v9100 = vpack.c.b16 %v8372, %v8365
    %v9101 = vpack.c.b16 %v8373, %v8366
    %v9102 = vpack.c.b16 %v8374, %v8367
    %v9103 = vpack.c.b16 %v8375, %v8368
    %v9104 = vpack.c.b16 %v8376, %v8369
    %v9105 = vpack.c.b16 %v8384, %v8377
    %v9106 = vpack.c.b16 %v8385, %v8378
    %v9107 = vpack.c.b16 %v8386, %v8379
    %v9108 = vpack.c.b16 %v8387, %v8380
    %v9109 = vpack.c.b16 %v8388, %v8381
    %v9110 = vpack.c.b16 %v8389, %v8382
    %v9111 = vpack.c.b16 %v8390, %v8383
    %v9112 = vpack.c.b16 %v8398, %v8391
    %v9113 = vpack.c.b16 %v8399, %v8392
    %v9114 = vpack.c.b16 %v8400, %v8393
    %v9115 = vpack.c.b16 %v8401, %v8394
    %v9116 = vpack.c.b16 %v8402, %v8395
    %v9117 = vpack.c.b16 %v8403, %v8396
    %v9118 = vpack.c.b16 %v8404, %v8397
    %v9119 = vpack.c.b16 %v8412, %v8405
    %v9120 = vpack.c.b16 %v8413, %v8406
    %v9121 = vpack.c.b16 %v8414, %v8407
    %v9122 = vpack.c.b16 %v8415, %v8408
    %v9123 = vpack.c.b16 %v8416, %v8409
    %v9124 = vpack.c.b16 %v8417, %v8410
    %v9125 = vpack.c.b16 %v8418, %v8411
    %v9126 = vpack.c.b16 %v8426, %v8419
    %v9127 = vpack.c.b16 %v8427, %v8420
    %v9128 = vpack.c.b16 %v8428, %v8421
    %v9129 = vpack.c.b16 %v8429, %v8422
    %v9130 = vpack.c.b16 %v8430, %v8423
    %v9131 = vpack.c.b16 %v8431, %v8424
    %v9132 = vpack.c.b16 %v8432, %v8425
    %v9133 = vpack.c.b16 %v8440, %v8433
    %v9134 = vpack.c.b16 %v8441, %v8434
    %v9135 = vpack.c.b16 %v8442, %v8435
    %v9136 = vpack.c.b16 %v8443, %v8436
    %v9137 = vpack.c.b16 %v8444, %v8437
    %v9138 = vpack.c.b16 %v8445, %v8438
    %v9139 = vpack.c.b16 %v8446, %v8439
    %v9140 = vpack.c.b16 %v8454, %v8447
    %v9141 = vpack.c.b16 %v8455, %v8448
    %v9142 = vpack.c.b16 %v8456, %v8449
    %v9143 = vpack.c.b16 %v8457, %v8450
    %v9144 = vpack.c.b16 %v8458, %v8451
    %v9145 = vpack.c.b16 %v8459, %v8452
    %v9146 = vpack.c.b16 %v8460, %v8453
    %v9147 = vpack.c.b16 %v8468, %v8461
    %v9148 = vpack.c.b16 %v8469, %v8462
    %v9149 = vpack.c.b16 %v8470, %v8463
    %v9150 = vpack.c.b16 %v8471, %v8464
    %v9151 = vpack.c.b16 %v8472, %v8465
    %v9152 = vpack.c.b16 %v8473, %v8466
    %v9153 = vpack.c.b16 %v8474, %v8467
    %v9154 = vpack.c.b16 %v8482, %v8475
    %v9155 = vpack.c.b16 %v8483, %v8476
    %v9156 = vpack.c.b16 %v8484, %v8477
    %v9157 = vpack.c.b16 %v8485, %v8478
    %v9158 = vpack.c.b16 %v8486, %v8479
    %v9159 = vpack.c.b16 %v8487, %v8480
    %v9160 = vpack.c.b16 %v8488, %v8481
    %v9161 = vpack.c.b16 %v8496, %v8489
    %v9162 = vpack.c.b16 %v8497, %v8490
    %v9163 = vpack.c.b16 %v8498, %v8491
    %v9164 = vpack.c.b16 %v8499, %v8492
    %v9165 = vpack.c.b16 %v8500, %v8493
    %v9166 = vpack.c.b16 %v8501, %v8494
    %v9167 = vpack.c.b16 %v8502, %v8495
    %v9168 = vpack.c.b16 %v8510, %v8503
    %v9169 = vpack.c.b16 %v8511, %v8504
    %v9170 = vpack.c.b16 %v8512, %v8505
    %v9171 = vpack.c.b16 %v8513, %v8506
    %v9172 = vpack.c.b16 %v8514, %v8507
    %v9173 = vpack.c.b16 %v8515, %v8508
    %v9174 = vpack.c.b16 %v8516, %v8509
    %v9175 = vpack.c.b16 %v8524, %v8517
    %v9176 = vpack.c.b16 %v8525, %v8518
    %v9177 = vpack.c.b16 %v8526, %v8519
    %v9178 = vpack.c.b16 %v8527, %v8520
    %v9179 = vpack.c.b16 %v8528, %v8521
    %v9180 = vpack.c.b16 %v8529, %v8522
    %v9181 = vpack.c.b16 %v8530, %v8523
    %v9182 = vpack.c.b16 %v8538, %v8531
    %v9183 = vpack.c.b16 %v8539, %v8532
    %v9184 = vpack.c.b16 %v8540, %v8533
    %v9185 = vpack.c.b16 %v8541, %v8534
    %v9186 = vpack.c.b16 %v8542, %v8535
    %v9187 = vpack.c.b16 %v8543, %v8536
    %v9188 = vpack.c.b16 %v8544, %v8537
    %v9189 = vpack.c.b16 %v8552, %v8545
    %v9190 = vpack.c.b16 %v8553, %v8546
    %v9191 = vpack.c.b16 %v8554, %v8547
    %v9192 = vpack.c.b16 %v8555, %v8548
    %v9193 = vpack.c.b16 %v8556, %v8549
    %v9194 = vpack.c.b16 %v8557, %v8550
    %v9195 = vpack.c.b16 %v8558, %v8551
    %v9196 = vpack.c.b16 %v8566, %v8559
    %v9197 = vpack.c.b16 %v8567, %v8560
    %v9198 = vpack.c.b16 %v8568, %v8561
    %v9199 = vpack.c.b16 %v8569, %v8562
    %v9200 = vpack.c.b16 %v8570, %v8563
    %v9201 = vpack.c.b16 %v8571, %v8564
    %v9202 = vpack.c.b16 %v8572, %v8565
    %v9203 = vpack.c.b16 %v8580, %v8573
    %v9204 = vpack.c.b16 %v8581, %v8574
    %v9205 = vpack.c.b16 %v8582, %v8575
    %v9206 = vpack.c.b16 %v8583, %v8576
    %v9207 = vpack.c.b16 %v8584, %v8577
    %v9208 = vpack.c.b16 %v8585, %v8578
    %v9209 = vpack.c.b16 %v8586, %v8579
    %v9210 = vpack.c.b16 %v8594, %v8587
    %v9211 = vpack.c.b16 %v8595, %v8588
    %v9212 = vpack.c.b16 %v8596, %v8589
    %v9213 = vpack.c.b16 %v8597, %v8590
    %v9214 = vpack.c.b16 %v8598, %v8591
    %v9215 = vpack.c.b16 %v8599, %v8592
    %v9216 = vpack.c.b16 %v8600, %v8593
    %v9217 = vpack.c.b16 %v8608, %v8601
    %v9218 = vpack.c.b16 %v8609, %v8602
    %v9219 = vpack.c.b16 %v8610, %v8603
    %v9220 = vpack.c.b16 %v8611, %v8604
    %v9221 = vpack.c.b16 %v8612, %v8605
    %v9222 = vpack.c.b16 %v8613, %v8606
    %v9223 = vpack.c.b16 %v8614, %v8607
    %v9224 = vpack.c.b16 %v8622, %v8615
    %v9225 = vpack.c.b16 %v8623, %v8616
    %v9226 = vpack.c.b16 %v8624, %v8617
    %v9227 = vpack.c.b16 %v8625, %v8618
    %v9228 = vpack.c.b16 %v8626, %v8619
    %v9229 = vpack.c.b16 %v8627, %v8620
    %v9230 = vpack.c.b16 %v8628, %v8621
    %v9231 = vpack.c.b16 %v8636, %v8629
    %v9232 = vpack.c.b16 %v8637, %v8630
    %v9233 = vpack.c.b16 %v8638, %v8631
    %v9234 = vpack.c.b16 %v8639, %v8632
    %v9235 = vpack.c.b16 %v8640, %v8633
    %v9236 = vpack.c.b16 %v8641, %v8634
    %v9237 = vpack.c.b16 %v8642, %v8635
    %v9238 = vpack.c.b16 %v8650, %v8643
    %v9239 = vpack.c.b16 %v8651, %v8644
    %v9240 = vpack.c.b16 %v8652, %v8645
    %v9241 = vpack.c.b16 %v8653, %v8646
    %v9242 = vpack.c.b16 %v8654, %v8647
    %v9243 = vpack.c.b16 %v8655, %v8648
    %v9244 = vpack.c.b16 %v8656, %v8649
    %v9245 = vpack.c.b16 %v8664, %v8657
    %v9246 = vpack.c.b16 %v8665, %v8658
    %v9247 = vpack.c.b16 %v8666, %v8659
    %v9248 = vpack.c.b16 %v8667, %v8660
    %v9249 = vpack.c.b16 %v8668, %v8661
    %v9250 = vpack.c.b16 %v8669, %v8662
    %v9251 = vpack.c.b16 %v8670, %v8663
    %v9252 = vpack.c.b16 %v8678, %v8671
    %v9253 = vpack.c.b16 %v8679, %v8672
    %v9254 = vpack.c.b16 %v8680, %v8673
    %v9255 = vpack.c.b16 %v8681, %v8674
    %v9256 = vpack.c.b16 %v8682, %v8675
    %v9257 = vpack.c.b16 %v8683, %v8676
    %v9258 = vpack.c.b16 %v8684, %v8677
    %v9259 = vpack.c.b16 %v8692, %v8685
    %v9260 = vpack.c.b16 %v8693, %v8686
    %v9261 = vpack.c.b16 %v8694, %v8687
    %v9262 = vpack.c.b16 %v8695, %v8688
    %v9263 = vpack.c.b16 %v8696, %v8689
    %v9264 = vpack.c.b16 %v8697, %v8690
    %v9265 = vpack.c.b16 %v8698, %v8691
    %v9266 = vpack.c.b16 %v8706, %v8699
    %v9267 = vpack.c.b16 %v8707, %v8700
    %v9268 = vpack.c.b16 %v8708, %v8701
    %v9269 = vpack.c.b16 %v8709, %v8702
    %v9270 = vpack.c.b16 %v8710, %v8703
    %v9271 = vpack.c.b16 %v8711, %v8704
    %v9272 = vpack.c.b16 %v8712, %v8705
    %v9273 = vpack.c.b16 %v8720, %v8713
    %v9274 = vpack.c.b16 %v8721, %v8714
    %v9275 = vpack.c.b16 %v8722, %v8715
    %v9276 = vpack.c.b16 %v8723, %v8716
    %v9277 = vpack.c.b16 %v8724, %v8717
    %v9278 = vpack.c.b16 %v8725, %v8718
    %v9279 = vpack.c.b16 %v8726, %v8719
    %v9280 = vpack.c.b16 %v8734, %v8727
    %v9281 = vpack.c.b16 %v8735, %v8728
    %v9282 = vpack.c.b16 %v8736, %v8729
    %v9283 = vpack.c.b16 %v8737, %v8730
    %v9284 = vpack.c.b16 %v8738, %v8731
    %v9285 = vpack.c.b16 %v8739, %v8732
    %v9286 = vpack.c.b16 %v8740, %v8733
    %v9287 = vpack.c.b16 %v8748, %v8741
    %v9288 = vpack.c.b16 %v8749, %v8742
    %v9289 = vpack.c.b16 %v8750, %v8743
    %v9290 = vpack.c.b16 %v8751, %v8744
    %v9291 = vpack.c.b16 %v8752, %v8745
    %v9292 = vpack.c.b16 %v8753, %v8746
    %v9293 = vpack.c.b16 %v8754, %v8747
    %v9294 = vpack.c.b16 %v8762, %v8755
    %v9295 = vpack.c.b16 %v8763, %v8756
    %v9296 = vpack.c.b16 %v8764, %v8757
    %v9297 = vpack.c.b16 %v8765, %v8758
    %v9298 = vpack.c.b16 %v8766, %v8759
    %v9299 = vpack.c.b16 %v8767, %v8760
    %v9300 = vpack.c.b16 %v8768, %v8761
    %v9301 = vpack.c.b16 %v8776, %v8769
    %v9302 = vpack.c.b16 %v8777, %v8770
    %v9303 = vpack.c.b16 %v8778, %v8771
    %v9304 = vpack.c.b16 %v8779, %v8772
    %v9305 = vpack.c.b16 %v8780, %v8773
    %v9306 = vpack.c.b16 %v8781, %v8774
    %v9307 = vpack.c.b16 %v8782, %v8775
    %v9308 = vpack.c.b16 %v8790, %v8783
    %v9309 = vpack.c.b16 %v8791, %v8784
    %v9310 = vpack.c.b16 %v8792, %v8785
    %v9311 = vpack.c.b16 %v8793, %v8786
    %v9312 = vpack.c.b16 %v8794, %v8787
    %v9313 = vpack.c.b16 %v8795, %v8788
    %v9314 = vpack.c.b16 %v8796, %v8789
    %v9315 = vpack.c.b16 %v8804, %v8797
    %v9316 = vpack.c.b16 %v8805, %v8798
    %v9317 = vpack.c.b16 %v8806, %v8799
    %v9318 = vpack.c.b16 %v8807, %v8800
    %v9319 = vpack.c.b16 %v8808, %v8801
    %v9320 = vpack.c.b16 %v8809, %v8802
    %v9321 = vpack.c.b16 %v8810, %v8803
    %v9322 = vpack.c.b16 %v8818, %v8811
    %v9323 = vpack.c.b16 %v8819, %v8812
    %v9324 = vpack.c.b16 %v8820, %v8813
    %v9325 = vpack.c.b16 %v8821, %v8814
    %v9326 = vpack.c.b16 %v8822, %v8815
    %v9327 = vpack.c.b16 %v8823, %v8816
    %v9328 = vpack.c.b16 %v8824, %v8817
    %v9329 = vpack.c.b16 %v8832, %v8825
    %v9330 = vpack.c.b16 %v8833, %v8826
    %v9331 = vpack.c.b16 %v8834, %v8827
    %v9332 = vpack.c.b16 %v8835, %v8828
    %v9333 = vpack.c.b16 %v8836, %v8829
    %v9334 = vpack.c.b16 %v8837, %v8830
    %v9335 = vpack.c.b16 %v8838, %v8831
    %v9336 = vpack.c.b16 %v8846, %v8839
    %v9337 = vpack.c.b16 %v8847, %v8840
    %v9338 = vpack.c.b16 %v8848, %v8841
    %v9339 = vpack.c.b16 %v8849, %v8842
    %v9340 = vpack.c.b16 %v8850, %v8843
    %v9341 = vpack.c.b16 %v8851, %v8844
    %v9342 = vpack.c.b16 %v8852, %v8845
    %v9343 = vpack.c.b16 %v8860, %v8853
    %v9344 = vpack.c.b16 %v8861, %v8854
    %v9345 = vpack.c.b16 %v8862, %v8855
    %v9346 = vpack.c.b16 %v8863, %v8856
    %v9347 = vpack.c.b16 %v8864, %v8857
    %v9348 = vpack.c.b16 %v8865, %v8858
    %v9349 = vpack.c.b16 %v8866, %v8859
    %v9350 = vpack.c.b16 %v8874, %v8867
    %v9351 = vpack.c.b16 %v8875, %v8868
    %v9352 = vpack.c.b16 %v8876, %v8869
    %v9353 = vpack.c.b16 %v8877, %v8870
    %v9354 = vpack.c.b16 %v8878, %v8871
    %v9355 = vpack.c.b16 %v8879, %v8872
    %v9356 = vpack.c.b16 %v8880, %v8873
    %v9357 = vpack.c.b16 %v8888, %v8881
    %v9358 = vpack.c.b16 %v8889, %v8882
    %v9359 = vpack.c.b16 %v8890, %v8883
    %v9360 = vpack.c.b16 %v8891, %v8884
    %v9361 = vpack.c.b16 %v8892, %v8885
    %v9362 = vpack.c.b16 %v8893, %v8886
    %v9363 = vpack.c.b16 %v8894, %v8887
    %v9364 = vpack.c.b16 %v8902, %v8895
    %v9365 = vpack.c.b16 %v8903, %v8896
    %v9366 = vpack.c.b16 %v8904, %v8897
    %v9367 = vpack.c.b16 %v8905, %v8898
    %v9368 = vpack.c.b16 %v8906, %v8899
    %v9369 = vpack.c.b16 %v8907, %v8900
    %v9370 = vpack.c.b16 %v8908, %v8901
    %v9371 = vpack.c.b16 %v8916, %v8909
    %v9372 = vpack.c.b16 %v8917, %v8910
    %v9373 = vpack.c.b16 %v8918, %v8911
    %v9374 = vpack.c.b16 %v8919, %v8912
    %v9375 = vpack.c.b16 %v8920, %v8913
    %v9376 = vpack.c.b16 %v8921, %v8914
    %v9377 = vpack.c.b16 %v8922, %v8915
    %v9378 = vpack.c.b16 %v8930, %v8923
    %v9379 = vpack.c.b16 %v8931, %v8924
    %v9380 = vpack.c.b16 %v8932, %v8925
    %v9381 = vpack.c.b16 %v8933, %v8926
    %v9382 = vpack.c.b16 %v8934, %v8927
    %v9383 = vpack.c.b16 %v8935, %v8928
    %v9384 = vpack.c.b16 %v8936, %v8929
    %9833 = vmatpush.bf16.msra.mxu0 %v8986
    %9834 = vmatpush.bf16.msra.mxu0 %v8979
    %9835 = vmatpush.bf16.msra.mxu0 %v8972
    %9836 = vmatpush.bf16.msra.mxu0 %v8965
    %9837 = vmatpush.bf16.msra.mxu0 %v8958
    %9838 = vmatpush.bf16.msra.mxu0 %v8951
    %9839 = vmatpush.bf16.msra.mxu0 %v8944
    %9840 = vmatpush.bf16.msra.mxu0 %v8937
    %9841 = vmatmul.bf16.gmra.mxu0 %v6993
    %v9842 = vpop.f32.mrf.mxu0
    %v9843 = vadd.f32 %v7515, %v9842
    %v9844 = vpop.f32.mrf.mxu0
    %9845 = vdwg.mxu0
    %9846 = vmatpush.bf16.msra.mxu0 %v9042
    %9847 = vmatpush.bf16.msra.mxu0 %v9035
    %9848 = vmatpush.bf16.msra.mxu0 %v9028
    %9849 = vmatpush.bf16.msra.mxu0 %v9021
    %9850 = vmatpush.bf16.msra.mxu0 %v9014
    %9851 = vmatpush.bf16.msra.mxu0 %v9007
    %9852 = vmatpush.bf16.msra.mxu0 %v9000
    %9853 = vmatpush.bf16.msra.mxu0 %v8993
    %9854 = vmatmul.bf16.gmra.mxu0 %v6994
    %v9855 = vpop.f32.mrf.mxu0
    %v9856 = vadd.f32 %v9843, %v9855
    %v9857 = vpop.f32.mrf.mxu0
    %9858 = vdwg.mxu0
    %9859 = vmatpush.bf16.msra.mxu0 %v9098
    %9860 = vmatpush.bf16.msra.mxu0 %v9091
    %9861 = vmatpush.bf16.msra.mxu0 %v9084
    %9862 = vmatpush.bf16.msra.mxu0 %v9077
    %9863 = vmatpush.bf16.msra.mxu0 %v9070
    %9864 = vmatpush.bf16.msra.mxu0 %v9063
    %9865 = vmatpush.bf16.msra.mxu0 %v9056
    %9866 = vmatpush.bf16.msra.mxu0 %v9049
    %9867 = vmatmul.bf16.gmra.mxu0 %v6995
    %v9868 = vpop.f32.mrf.mxu0
    %v9869 = vadd.f32 %v9856, %v9868
    %v9870 = vpop.f32.mrf.mxu0
    %9871 = vdwg.mxu0
    %9872 = vmatpush.bf16.msra.mxu0 %v9154
    %9873 = vmatpush.bf16.msra.mxu0 %v9147
    %9874 = vmatpush.bf16.msra.mxu0 %v9140
    %9875 = vmatpush.bf16.msra.mxu0 %v9133
    %9876 = vmatpush.bf16.msra.mxu0 %v9126
    %9877 = vmatpush.bf16.msra.mxu0 %v9119
    %9878 = vmatpush.bf16.msra.mxu0 %v9112
    %9879 = vmatpush.bf16.msra.mxu0 %v9105
    %9880 = vmatmul.bf16.gmra.mxu0 %v6996
    %v9881 = vpop.f32.mrf.mxu0
    %v9882 = vadd.f32 %v9869, %v9881
    %v9883 = vpop.f32.mrf.mxu0
    %9884 = vdwg.mxu0
    %9885 = vmatpush.bf16.msra.mxu0 %v9210
    %9886 = vmatpush.bf16.msra.mxu0 %v9203
    %9887 = vmatpush.bf16.msra.mxu0 %v9196
    %9888 = vmatpush.bf16.msra.mxu0 %v9189
    %9889 = vmatpush.bf16.msra.mxu0 %v9182
    %9890 = vmatpush.bf16.msra.mxu0 %v9175
    %9891 = vmatpush.bf16.msra.mxu0 %v9168
    %9892 = vmatpush.bf16.msra.mxu0 %v9161
    %9893 = vmatmul.bf16.gmra.mxu0 %v6997
    %v9894 = vpop.f32.mrf.mxu0
    %v9895 = vadd.f32 %v9882, %v9894
    %v9896 = vpop.f32.mrf.mxu0
    %9897 = vdwg.mxu0
    %9898 = vmatpush.bf16.msra.mxu0 %v9266
    %9899 = vmatpush.bf16.msra.mxu0 %v9259
    %9900 = vmatpush.bf16.msra.mxu0 %v9252
    %9901 = vmatpush.bf16.msra.mxu0 %v9245
    %9902 = vmatpush.bf16.msra.mxu0 %v9238
    %9903 = vmatpush.bf16.msra.mxu0 %v9231
    %9904 = vmatpush.bf16.msra.mxu0 %v9224
    %9905 = vmatpush.bf16.msra.mxu0 %v9217
    %9906 = vmatmul.bf16.gmra.mxu0 %v6998
    %v9907 = vpop.f32.mrf.mxu0
    %v9908 = vadd.f32 %v9895, %v9907
    %v9909 = vpop.f32.mrf.mxu0
    %9910 = vdwg.mxu0
    %9911 = vmatpush.bf16.msra.mxu0 %v9322
    %9912 = vmatpush.bf16.msra.mxu0 %v9315
    %9913 = vmatpush.bf16.msra.mxu0 %v9308
    %9914 = vmatpush.bf16.msra.mxu0 %v9301
    %9915 = vmatpush.bf16.msra.mxu0 %v9294
    %9916 = vmatpush.bf16.msra.mxu0 %v9287
    %9917 = vmatpush.bf16.msra.mxu0 %v9280
    %9918 = vmatpush.bf16.msra.mxu0 %v9273
    %9919 = vmatmul.bf16.gmra.mxu0 %v6999
    %v9920 = vpop.f32.mrf.mxu0
    %v9921 = vadd.f32 %v9908, %v9920
    %v9922 = vpop.f32.mrf.mxu0
    %9923 = vdwg.mxu0
    %9924 = vmatpush.bf16.msra.mxu0 %v9378
    %9925 = vmatpush.bf16.msra.mxu0 %v9371
    %9926 = vmatpush.bf16.msra.mxu0 %v9364
    %9927 = vmatpush.bf16.msra.mxu0 %v9357
    %9928 = vmatpush.bf16.msra.mxu0 %v9350
    %9929 = vmatpush.bf16.msra.mxu0 %v9343
    %9930 = vmatpush.bf16.msra.mxu0 %v9336
    %9931 = vmatpush.bf16.msra.mxu0 %v9329
    %9932 = vmatmul.bf16.gmra.mxu0 %v7000
    %v9933 = vpop.f32.mrf.mxu0
    %v9934 = vadd.f32 %v9921, %v9933
    %v9935 = vpop.f32.mrf.mxu0
    %9936 = vdwg.mxu0
    %9937 = vmatpush.bf16.msra.mxu0 %v8987
    %9938 = vmatpush.bf16.msra.mxu0 %v8980
    %9939 = vmatpush.bf16.msra.mxu0 %v8973
    %9940 = vmatpush.bf16.msra.mxu0 %v8966
    %9941 = vmatpush.bf16.msra.mxu0 %v8959
    %9942 = vmatpush.bf16.msra.mxu0 %v8952
    %9943 = vmatpush.bf16.msra.mxu0 %v8945
    %9944 = vmatpush.bf16.msra.mxu0 %v8938
    %9945 = vmatmul.bf16.gmra.mxu0 %v6993
    %v9946 = vpop.f32.mrf.mxu0
    %v9947 = vadd.f32 %v7516, %v9946
    %v9948 = vpop.f32.mrf.mxu0
    %9949 = vdwg.mxu0
    %9950 = vmatpush.bf16.msra.mxu0 %v9043
    %9951 = vmatpush.bf16.msra.mxu0 %v9036
    %9952 = vmatpush.bf16.msra.mxu0 %v9029
    %9953 = vmatpush.bf16.msra.mxu0 %v9022
    %9954 = vmatpush.bf16.msra.mxu0 %v9015
    %9955 = vmatpush.bf16.msra.mxu0 %v9008
    %9956 = vmatpush.bf16.msra.mxu0 %v9001
    %9957 = vmatpush.bf16.msra.mxu0 %v8994
    %9958 = vmatmul.bf16.gmra.mxu0 %v6994
    %v9959 = vpop.f32.mrf.mxu0
    %v9960 = vadd.f32 %v9947, %v9959
    %v9961 = vpop.f32.mrf.mxu0
    %9962 = vdwg.mxu0
    %9963 = vmatpush.bf16.msra.mxu0 %v9099
    %9964 = vmatpush.bf16.msra.mxu0 %v9092
    %9965 = vmatpush.bf16.msra.mxu0 %v9085
    %9966 = vmatpush.bf16.msra.mxu0 %v9078
    %9967 = vmatpush.bf16.msra.mxu0 %v9071
    %9968 = vmatpush.bf16.msra.mxu0 %v9064
    %9969 = vmatpush.bf16.msra.mxu0 %v9057
    %9970 = vmatpush.bf16.msra.mxu0 %v9050
    %9971 = vmatmul.bf16.gmra.mxu0 %v6995
    %v9972 = vpop.f32.mrf.mxu0
    %v9973 = vadd.f32 %v9960, %v9972
    %v9974 = vpop.f32.mrf.mxu0
    %9975 = vdwg.mxu0
    %9976 = vmatpush.bf16.msra.mxu0 %v9155
    %9977 = vmatpush.bf16.msra.mxu0 %v9148
    %9978 = vmatpush.bf16.msra.mxu0 %v9141
    %9979 = vmatpush.bf16.msra.mxu0 %v9134
    %9980 = vmatpush.bf16.msra.mxu0 %v9127
    %9981 = vmatpush.bf16.msra.mxu0 %v9120
    %9982 = vmatpush.bf16.msra.mxu0 %v9113
    %9983 = vmatpush.bf16.msra.mxu0 %v9106
    %9984 = vmatmul.bf16.gmra.mxu0 %v6996
    %v9985 = vpop.f32.mrf.mxu0
    %v9986 = vadd.f32 %v9973, %v9985
    %v9987 = vpop.f32.mrf.mxu0
    %9988 = vdwg.mxu0
    %9989 = vmatpush.bf16.msra.mxu0 %v9211
    %9990 = vmatpush.bf16.msra.mxu0 %v9204
    %9991 = vmatpush.bf16.msra.mxu0 %v9197
    %9992 = vmatpush.bf16.msra.mxu0 %v9190
    %9993 = vmatpush.bf16.msra.mxu0 %v9183
    %9994 = vmatpush.bf16.msra.mxu0 %v9176
    %9995 = vmatpush.bf16.msra.mxu0 %v9169
    %9996 = vmatpush.bf16.msra.mxu0 %v9162
    %9997 = vmatmul.bf16.gmra.mxu0 %v6997
    %v9998 = vpop.f32.mrf.mxu0
    %v9999 = vadd.f32 %v9986, %v9998
    %v10000 = vpop.f32.mrf.mxu0
    %10001 = vdwg.mxu0
    %10002 = vmatpush.bf16.msra.mxu0 %v9267
    %10003 = vmatpush.bf16.msra.mxu0 %v9260
    %10004 = vmatpush.bf16.msra.mxu0 %v9253
    %10005 = vmatpush.bf16.msra.mxu0 %v9246
    %10006 = vmatpush.bf16.msra.mxu0 %v9239
    %10007 = vmatpush.bf16.msra.mxu0 %v9232
    %10008 = vmatpush.bf16.msra.mxu0 %v9225
    %10009 = vmatpush.bf16.msra.mxu0 %v9218
    %10010 = vmatmul.bf16.gmra.mxu0 %v6998
    %v10011 = vpop.f32.mrf.mxu0
    %v10012 = vadd.f32 %v9999, %v10011
    %v10013 = vpop.f32.mrf.mxu0
    %10014 = vdwg.mxu0
    %10015 = vmatpush.bf16.msra.mxu0 %v9323
    %10016 = vmatpush.bf16.msra.mxu0 %v9316
    %10017 = vmatpush.bf16.msra.mxu0 %v9309
    %10018 = vmatpush.bf16.msra.mxu0 %v9302
    %10019 = vmatpush.bf16.msra.mxu0 %v9295
    %10020 = vmatpush.bf16.msra.mxu0 %v9288
    %10021 = vmatpush.bf16.msra.mxu0 %v9281
    %10022 = vmatpush.bf16.msra.mxu0 %v9274
    %10023 = vmatmul.bf16.gmra.mxu0 %v6999
    %v10024 = vpop.f32.mrf.mxu0
    %v10025 = vadd.f32 %v10012, %v10024
    %v10026 = vpop.f32.mrf.mxu0
    %10027 = vdwg.mxu0
    %10028 = vmatpush.bf16.msra.mxu0 %v9379
    %10029 = vmatpush.bf16.msra.mxu0 %v9372
    %10030 = vmatpush.bf16.msra.mxu0 %v9365
    %10031 = vmatpush.bf16.msra.mxu0 %v9358
    %10032 = vmatpush.bf16.msra.mxu0 %v9351
    %10033 = vmatpush.bf16.msra.mxu0 %v9344
    %10034 = vmatpush.bf16.msra.mxu0 %v9337
    %10035 = vmatpush.bf16.msra.mxu0 %v9330
    %10036 = vmatmul.bf16.gmra.mxu0 %v7000
    %v10037 = vpop.f32.mrf.mxu0
    %v10038 = vadd.f32 %v10025, %v10037
    %v10039 = vpop.f32.mrf.mxu0
    %10040 = vdwg.mxu0
    %10041 = vmatpush.bf16.msra.mxu0 %v8988
    %10042 = vmatpush.bf16.msra.mxu0 %v8981
    %10043 = vmatpush.bf16.msra.mxu0 %v8974
    %10044 = vmatpush.bf16.msra.mxu0 %v8967
    %10045 = vmatpush.bf16.msra.mxu0 %v8960
    %10046 = vmatpush.bf16.msra.mxu0 %v8953
    %10047 = vmatpush.bf16.msra.mxu0 %v8946
    %10048 = vmatpush.bf16.msra.mxu0 %v8939
    %10049 = vmatmul.bf16.gmra.mxu0 %v6993
    %v10050 = vpop.f32.mrf.mxu0
    %v10051 = vadd.f32 %v7517, %v10050
    %v10052 = vpop.f32.mrf.mxu0
    %10053 = vdwg.mxu0
    %10054 = vmatpush.bf16.msra.mxu0 %v9044
    %10055 = vmatpush.bf16.msra.mxu0 %v9037
    %10056 = vmatpush.bf16.msra.mxu0 %v9030
    %10057 = vmatpush.bf16.msra.mxu0 %v9023
    %10058 = vmatpush.bf16.msra.mxu0 %v9016
    %10059 = vmatpush.bf16.msra.mxu0 %v9009
    %10060 = vmatpush.bf16.msra.mxu0 %v9002
    %10061 = vmatpush.bf16.msra.mxu0 %v8995
    %10062 = vmatmul.bf16.gmra.mxu0 %v6994
    %v10063 = vpop.f32.mrf.mxu0
    %v10064 = vadd.f32 %v10051, %v10063
    %v10065 = vpop.f32.mrf.mxu0
    %10066 = vdwg.mxu0
    %10067 = vmatpush.bf16.msra.mxu0 %v9100
    %10068 = vmatpush.bf16.msra.mxu0 %v9093
    %10069 = vmatpush.bf16.msra.mxu0 %v9086
    %10070 = vmatpush.bf16.msra.mxu0 %v9079
    %10071 = vmatpush.bf16.msra.mxu0 %v9072
    %10072 = vmatpush.bf16.msra.mxu0 %v9065
    %10073 = vmatpush.bf16.msra.mxu0 %v9058
    %10074 = vmatpush.bf16.msra.mxu0 %v9051
    %10075 = vmatmul.bf16.gmra.mxu0 %v6995
    %v10076 = vpop.f32.mrf.mxu0
    %v10077 = vadd.f32 %v10064, %v10076
    %v10078 = vpop.f32.mrf.mxu0
    %10079 = vdwg.mxu0
    %10080 = vmatpush.bf16.msra.mxu0 %v9156
    %10081 = vmatpush.bf16.msra.mxu0 %v9149
    %10082 = vmatpush.bf16.msra.mxu0 %v9142
    %10083 = vmatpush.bf16.msra.mxu0 %v9135
    %10084 = vmatpush.bf16.msra.mxu0 %v9128
    %10085 = vmatpush.bf16.msra.mxu0 %v9121
    %10086 = vmatpush.bf16.msra.mxu0 %v9114
    %10087 = vmatpush.bf16.msra.mxu0 %v9107
    %10088 = vmatmul.bf16.gmra.mxu0 %v6996
    %v10089 = vpop.f32.mrf.mxu0
    %v10090 = vadd.f32 %v10077, %v10089
    %v10091 = vpop.f32.mrf.mxu0
    %10092 = vdwg.mxu0
    %10093 = vmatpush.bf16.msra.mxu0 %v9212
    %10094 = vmatpush.bf16.msra.mxu0 %v9205
    %10095 = vmatpush.bf16.msra.mxu0 %v9198
    %10096 = vmatpush.bf16.msra.mxu0 %v9191
    %10097 = vmatpush.bf16.msra.mxu0 %v9184
    %10098 = vmatpush.bf16.msra.mxu0 %v9177
    %10099 = vmatpush.bf16.msra.mxu0 %v9170
    %10100 = vmatpush.bf16.msra.mxu0 %v9163
    %10101 = vmatmul.bf16.gmra.mxu0 %v6997
    %v10102 = vpop.f32.mrf.mxu0
    %v10103 = vadd.f32 %v10090, %v10102
    %v10104 = vpop.f32.mrf.mxu0
    %10105 = vdwg.mxu0
    %10106 = vmatpush.bf16.msra.mxu0 %v9268
    %10107 = vmatpush.bf16.msra.mxu0 %v9261
    %10108 = vmatpush.bf16.msra.mxu0 %v9254
    %10109 = vmatpush.bf16.msra.mxu0 %v9247
    %10110 = vmatpush.bf16.msra.mxu0 %v9240
    %10111 = vmatpush.bf16.msra.mxu0 %v9233
    %10112 = vmatpush.bf16.msra.mxu0 %v9226
    %10113 = vmatpush.bf16.msra.mxu0 %v9219
    %10114 = vmatmul.bf16.gmra.mxu0 %v6998
    %v10115 = vpop.f32.mrf.mxu0
    %v10116 = vadd.f32 %v10103, %v10115
    %v10117 = vpop.f32.mrf.mxu0
    %10118 = vdwg.mxu0
    %10119 = vmatpush.bf16.msra.mxu0 %v9324
    %10120 = vmatpush.bf16.msra.mxu0 %v9317
    %10121 = vmatpush.bf16.msra.mxu0 %v9310
    %10122 = vmatpush.bf16.msra.mxu0 %v9303
    %10123 = vmatpush.bf16.msra.mxu0 %v9296
    %10124 = vmatpush.bf16.msra.mxu0 %v9289
    %10125 = vmatpush.bf16.msra.mxu0 %v9282
    %10126 = vmatpush.bf16.msra.mxu0 %v9275
    %10127 = vmatmul.bf16.gmra.mxu0 %v6999
    %v10128 = vpop.f32.mrf.mxu0
    %v10129 = vadd.f32 %v10116, %v10128
    %v10130 = vpop.f32.mrf.mxu0
    %10131 = vdwg.mxu0
    %10132 = vmatpush.bf16.msra.mxu0 %v9380
    %10133 = vmatpush.bf16.msra.mxu0 %v9373
    %10134 = vmatpush.bf16.msra.mxu0 %v9366
    %10135 = vmatpush.bf16.msra.mxu0 %v9359
    %10136 = vmatpush.bf16.msra.mxu0 %v9352
    %10137 = vmatpush.bf16.msra.mxu0 %v9345
    %10138 = vmatpush.bf16.msra.mxu0 %v9338
    %10139 = vmatpush.bf16.msra.mxu0 %v9331
    %10140 = vmatmul.bf16.gmra.mxu0 %v7000
    %v10141 = vpop.f32.mrf.mxu0
    %v10142 = vadd.f32 %v10129, %v10141
    %v10143 = vpop.f32.mrf.mxu0
    %10144 = vdwg.mxu0
    %10145 = vmatpush.bf16.msra.mxu0 %v8989
    %10146 = vmatpush.bf16.msra.mxu0 %v8982
    %10147 = vmatpush.bf16.msra.mxu0 %v8975
    %10148 = vmatpush.bf16.msra.mxu0 %v8968
    %10149 = vmatpush.bf16.msra.mxu0 %v8961
    %10150 = vmatpush.bf16.msra.mxu0 %v8954
    %10151 = vmatpush.bf16.msra.mxu0 %v8947
    %10152 = vmatpush.bf16.msra.mxu0 %v8940
    %10153 = vmatmul.bf16.gmra.mxu0 %v6993
    %v10154 = vpop.f32.mrf.mxu0
    %v10155 = vadd.f32 %v7518, %v10154
    %v10156 = vpop.f32.mrf.mxu0
    %10157 = vdwg.mxu0
    %10158 = vmatpush.bf16.msra.mxu0 %v9045
    %10159 = vmatpush.bf16.msra.mxu0 %v9038
    %10160 = vmatpush.bf16.msra.mxu0 %v9031
    %10161 = vmatpush.bf16.msra.mxu0 %v9024
    %10162 = vmatpush.bf16.msra.mxu0 %v9017
    %10163 = vmatpush.bf16.msra.mxu0 %v9010
    %10164 = vmatpush.bf16.msra.mxu0 %v9003
    %10165 = vmatpush.bf16.msra.mxu0 %v8996
    %10166 = vmatmul.bf16.gmra.mxu0 %v6994
    %v10167 = vpop.f32.mrf.mxu0
    %v10168 = vadd.f32 %v10155, %v10167
    %v10169 = vpop.f32.mrf.mxu0
    %10170 = vdwg.mxu0
    %10171 = vmatpush.bf16.msra.mxu0 %v9101
    %10172 = vmatpush.bf16.msra.mxu0 %v9094
    %10173 = vmatpush.bf16.msra.mxu0 %v9087
    %10174 = vmatpush.bf16.msra.mxu0 %v9080
    %10175 = vmatpush.bf16.msra.mxu0 %v9073
    %10176 = vmatpush.bf16.msra.mxu0 %v9066
    %10177 = vmatpush.bf16.msra.mxu0 %v9059
    %10178 = vmatpush.bf16.msra.mxu0 %v9052
    %10179 = vmatmul.bf16.gmra.mxu0 %v6995
    %v10180 = vpop.f32.mrf.mxu0
    %v10181 = vadd.f32 %v10168, %v10180
    %v10182 = vpop.f32.mrf.mxu0
    %10183 = vdwg.mxu0
    %10184 = vmatpush.bf16.msra.mxu0 %v9157
    %10185 = vmatpush.bf16.msra.mxu0 %v9150
    %10186 = vmatpush.bf16.msra.mxu0 %v9143
    %10187 = vmatpush.bf16.msra.mxu0 %v9136
    %10188 = vmatpush.bf16.msra.mxu0 %v9129
    %10189 = vmatpush.bf16.msra.mxu0 %v9122
    %10190 = vmatpush.bf16.msra.mxu0 %v9115
    %10191 = vmatpush.bf16.msra.mxu0 %v9108
    %10192 = vmatmul.bf16.gmra.mxu0 %v6996
    %v10193 = vpop.f32.mrf.mxu0
    %v10194 = vadd.f32 %v10181, %v10193
    %v10195 = vpop.f32.mrf.mxu0
    %10196 = vdwg.mxu0
    %10197 = vmatpush.bf16.msra.mxu0 %v9213
    %10198 = vmatpush.bf16.msra.mxu0 %v9206
    %10199 = vmatpush.bf16.msra.mxu0 %v9199
    %10200 = vmatpush.bf16.msra.mxu0 %v9192
    %10201 = vmatpush.bf16.msra.mxu0 %v9185
    %10202 = vmatpush.bf16.msra.mxu0 %v9178
    %10203 = vmatpush.bf16.msra.mxu0 %v9171
    %10204 = vmatpush.bf16.msra.mxu0 %v9164
    %10205 = vmatmul.bf16.gmra.mxu0 %v6997
    %v10206 = vpop.f32.mrf.mxu0
    %v10207 = vadd.f32 %v10194, %v10206
    %v10208 = vpop.f32.mrf.mxu0
    %10209 = vdwg.mxu0
    %10210 = vmatpush.bf16.msra.mxu0 %v9269
    %10211 = vmatpush.bf16.msra.mxu0 %v9262
    %10212 = vmatpush.bf16.msra.mxu0 %v9255
    %10213 = vmatpush.bf16.msra.mxu0 %v9248
    %10214 = vmatpush.bf16.msra.mxu0 %v9241
    %10215 = vmatpush.bf16.msra.mxu0 %v9234
    %10216 = vmatpush.bf16.msra.mxu0 %v9227
    %10217 = vmatpush.bf16.msra.mxu0 %v9220
    %10218 = vmatmul.bf16.gmra.mxu0 %v6998
    %v10219 = vpop.f32.mrf.mxu0
    %v10220 = vadd.f32 %v10207, %v10219
    %v10221 = vpop.f32.mrf.mxu0
    %10222 = vdwg.mxu0
    %10223 = vmatpush.bf16.msra.mxu0 %v9325
    %10224 = vmatpush.bf16.msra.mxu0 %v9318
    %10225 = vmatpush.bf16.msra.mxu0 %v9311
    %10226 = vmatpush.bf16.msra.mxu0 %v9304
    %10227 = vmatpush.bf16.msra.mxu0 %v9297
    %10228 = vmatpush.bf16.msra.mxu0 %v9290
    %10229 = vmatpush.bf16.msra.mxu0 %v9283
    %10230 = vmatpush.bf16.msra.mxu0 %v9276
    %10231 = vmatmul.bf16.gmra.mxu0 %v6999
    %v10232 = vpop.f32.mrf.mxu0
    %v10233 = vadd.f32 %v10220, %v10232
    %v10234 = vpop.f32.mrf.mxu0
    %10235 = vdwg.mxu0
    %10236 = vmatpush.bf16.msra.mxu0 %v9381
    %10237 = vmatpush.bf16.msra.mxu0 %v9374
    %10238 = vmatpush.bf16.msra.mxu0 %v9367
    %10239 = vmatpush.bf16.msra.mxu0 %v9360
    %10240 = vmatpush.bf16.msra.mxu0 %v9353
    %10241 = vmatpush.bf16.msra.mxu0 %v9346
    %10242 = vmatpush.bf16.msra.mxu0 %v9339
    %10243 = vmatpush.bf16.msra.mxu0 %v9332
    %10244 = vmatmul.bf16.gmra.mxu0 %v7000
    %v10245 = vpop.f32.mrf.mxu0
    %v10246 = vadd.f32 %v10233, %v10245
    %v10247 = vpop.f32.mrf.mxu0
    %10248 = vdwg.mxu0
    %10249 = vmatpush.bf16.msra.mxu0 %v8990
    %10250 = vmatpush.bf16.msra.mxu0 %v8983
    %10251 = vmatpush.bf16.msra.mxu0 %v8976
    %10252 = vmatpush.bf16.msra.mxu0 %v8969
    %10253 = vmatpush.bf16.msra.mxu0 %v8962
    %10254 = vmatpush.bf16.msra.mxu0 %v8955
    %10255 = vmatpush.bf16.msra.mxu0 %v8948
    %10256 = vmatpush.bf16.msra.mxu0 %v8941
    %10257 = vmatmul.bf16.gmra.mxu0 %v6993
    %v10258 = vpop.f32.mrf.mxu0
    %v10259 = vadd.f32 %v7519, %v10258
    %v10260 = vpop.f32.mrf.mxu0
    %10261 = vdwg.mxu0
    %10262 = vmatpush.bf16.msra.mxu0 %v9046
    %10263 = vmatpush.bf16.msra.mxu0 %v9039
    %10264 = vmatpush.bf16.msra.mxu0 %v9032
    %10265 = vmatpush.bf16.msra.mxu0 %v9025
    %10266 = vmatpush.bf16.msra.mxu0 %v9018
    %10267 = vmatpush.bf16.msra.mxu0 %v9011
    %10268 = vmatpush.bf16.msra.mxu0 %v9004
    %10269 = vmatpush.bf16.msra.mxu0 %v8997
    %10270 = vmatmul.bf16.gmra.mxu0 %v6994
    %v10271 = vpop.f32.mrf.mxu0
    %v10272 = vadd.f32 %v10259, %v10271
    %v10273 = vpop.f32.mrf.mxu0
    %10274 = vdwg.mxu0
    %10275 = vmatpush.bf16.msra.mxu0 %v9102
    %10276 = vmatpush.bf16.msra.mxu0 %v9095
    %10277 = vmatpush.bf16.msra.mxu0 %v9088
    %10278 = vmatpush.bf16.msra.mxu0 %v9081
    %10279 = vmatpush.bf16.msra.mxu0 %v9074
    %10280 = vmatpush.bf16.msra.mxu0 %v9067
    %10281 = vmatpush.bf16.msra.mxu0 %v9060
    %10282 = vmatpush.bf16.msra.mxu0 %v9053
    %10283 = vmatmul.bf16.gmra.mxu0 %v6995
    %v10284 = vpop.f32.mrf.mxu0
    %v10285 = vadd.f32 %v10272, %v10284
    %v10286 = vpop.f32.mrf.mxu0
    %10287 = vdwg.mxu0
    %10288 = vmatpush.bf16.msra.mxu0 %v9158
    %10289 = vmatpush.bf16.msra.mxu0 %v9151
    %10290 = vmatpush.bf16.msra.mxu0 %v9144
    %10291 = vmatpush.bf16.msra.mxu0 %v9137
    %10292 = vmatpush.bf16.msra.mxu0 %v9130
    %10293 = vmatpush.bf16.msra.mxu0 %v9123
    %10294 = vmatpush.bf16.msra.mxu0 %v9116
    %10295 = vmatpush.bf16.msra.mxu0 %v9109
    %10296 = vmatmul.bf16.gmra.mxu0 %v6996
    %v10297 = vpop.f32.mrf.mxu0
    %v10298 = vadd.f32 %v10285, %v10297
    %v10299 = vpop.f32.mrf.mxu0
    %10300 = vdwg.mxu0
    %10301 = vmatpush.bf16.msra.mxu0 %v9214
    %10302 = vmatpush.bf16.msra.mxu0 %v9207
    %10303 = vmatpush.bf16.msra.mxu0 %v9200
    %10304 = vmatpush.bf16.msra.mxu0 %v9193
    %10305 = vmatpush.bf16.msra.mxu0 %v9186
    %10306 = vmatpush.bf16.msra.mxu0 %v9179
    %10307 = vmatpush.bf16.msra.mxu0 %v9172
    %10308 = vmatpush.bf16.msra.mxu0 %v9165
    %10309 = vmatmul.bf16.gmra.mxu0 %v6997
    %v10310 = vpop.f32.mrf.mxu0
    %v10311 = vadd.f32 %v10298, %v10310
    %v10312 = vpop.f32.mrf.mxu0
    %10313 = vdwg.mxu0
    %10314 = vmatpush.bf16.msra.mxu0 %v9270
    %10315 = vmatpush.bf16.msra.mxu0 %v9263
    %10316 = vmatpush.bf16.msra.mxu0 %v9256
    %10317 = vmatpush.bf16.msra.mxu0 %v9249
    %10318 = vmatpush.bf16.msra.mxu0 %v9242
    %10319 = vmatpush.bf16.msra.mxu0 %v9235
    %10320 = vmatpush.bf16.msra.mxu0 %v9228
    %10321 = vmatpush.bf16.msra.mxu0 %v9221
    %10322 = vmatmul.bf16.gmra.mxu0 %v6998
    %v10323 = vpop.f32.mrf.mxu0
    %v10324 = vadd.f32 %v10311, %v10323
    %v10325 = vpop.f32.mrf.mxu0
    %10326 = vdwg.mxu0
    %10327 = vmatpush.bf16.msra.mxu0 %v9326
    %10328 = vmatpush.bf16.msra.mxu0 %v9319
    %10329 = vmatpush.bf16.msra.mxu0 %v9312
    %10330 = vmatpush.bf16.msra.mxu0 %v9305
    %10331 = vmatpush.bf16.msra.mxu0 %v9298
    %10332 = vmatpush.bf16.msra.mxu0 %v9291
    %10333 = vmatpush.bf16.msra.mxu0 %v9284
    %10334 = vmatpush.bf16.msra.mxu0 %v9277
    %10335 = vmatmul.bf16.gmra.mxu0 %v6999
    %v10336 = vpop.f32.mrf.mxu0
    %v10337 = vadd.f32 %v10324, %v10336
    %v10338 = vpop.f32.mrf.mxu0
    %10339 = vdwg.mxu0
    %10340 = vmatpush.bf16.msra.mxu0 %v9382
    %10341 = vmatpush.bf16.msra.mxu0 %v9375
    %10342 = vmatpush.bf16.msra.mxu0 %v9368
    %10343 = vmatpush.bf16.msra.mxu0 %v9361
    %10344 = vmatpush.bf16.msra.mxu0 %v9354
    %10345 = vmatpush.bf16.msra.mxu0 %v9347
    %10346 = vmatpush.bf16.msra.mxu0 %v9340
    %10347 = vmatpush.bf16.msra.mxu0 %v9333
    %10348 = vmatmul.bf16.gmra.mxu0 %v7000
    %v10349 = vpop.f32.mrf.mxu0
    %v10350 = vadd.f32 %v10337, %v10349
    %v10351 = vpop.f32.mrf.mxu0
    %10352 = vdwg.mxu0
    %10353 = vmatpush.bf16.msra.mxu0 %v8991
    %10354 = vmatpush.bf16.msra.mxu0 %v8984
    %10355 = vmatpush.bf16.msra.mxu0 %v8977
    %10356 = vmatpush.bf16.msra.mxu0 %v8970
    %10357 = vmatpush.bf16.msra.mxu0 %v8963
    %10358 = vmatpush.bf16.msra.mxu0 %v8956
    %10359 = vmatpush.bf16.msra.mxu0 %v8949
    %10360 = vmatpush.bf16.msra.mxu0 %v8942
    %10361 = vmatmul.bf16.gmra.mxu0 %v6993
    %v10362 = vpop.f32.mrf.mxu0
    %v10363 = vadd.f32 %v7520, %v10362
    %v10364 = vpop.f32.mrf.mxu0
    %10365 = vdwg.mxu0
    %10366 = vmatpush.bf16.msra.mxu0 %v9047
    %10367 = vmatpush.bf16.msra.mxu0 %v9040
    %10368 = vmatpush.bf16.msra.mxu0 %v9033
    %10369 = vmatpush.bf16.msra.mxu0 %v9026
    %10370 = vmatpush.bf16.msra.mxu0 %v9019
    %10371 = vmatpush.bf16.msra.mxu0 %v9012
    %10372 = vmatpush.bf16.msra.mxu0 %v9005
    %10373 = vmatpush.bf16.msra.mxu0 %v8998
    %10374 = vmatmul.bf16.gmra.mxu0 %v6994
    %v10375 = vpop.f32.mrf.mxu0
    %v10376 = vadd.f32 %v10363, %v10375
    %v10377 = vpop.f32.mrf.mxu0
    %10378 = vdwg.mxu0
    %10379 = vmatpush.bf16.msra.mxu0 %v9103
    %10380 = vmatpush.bf16.msra.mxu0 %v9096
    %10381 = vmatpush.bf16.msra.mxu0 %v9089
    %10382 = vmatpush.bf16.msra.mxu0 %v9082
    %10383 = vmatpush.bf16.msra.mxu0 %v9075
    %10384 = vmatpush.bf16.msra.mxu0 %v9068
    %10385 = vmatpush.bf16.msra.mxu0 %v9061
    %10386 = vmatpush.bf16.msra.mxu0 %v9054
    %10387 = vmatmul.bf16.gmra.mxu0 %v6995
    %v10388 = vpop.f32.mrf.mxu0
    %v10389 = vadd.f32 %v10376, %v10388
    %v10390 = vpop.f32.mrf.mxu0
    %10391 = vdwg.mxu0
    %10392 = vmatpush.bf16.msra.mxu0 %v9159
    %10393 = vmatpush.bf16.msra.mxu0 %v9152
    %10394 = vmatpush.bf16.msra.mxu0 %v9145
    %10395 = vmatpush.bf16.msra.mxu0 %v9138
    %10396 = vmatpush.bf16.msra.mxu0 %v9131
    %10397 = vmatpush.bf16.msra.mxu0 %v9124
    %10398 = vmatpush.bf16.msra.mxu0 %v9117
    %10399 = vmatpush.bf16.msra.mxu0 %v9110
    %10400 = vmatmul.bf16.gmra.mxu0 %v6996
    %v10401 = vpop.f32.mrf.mxu0
    %v10402 = vadd.f32 %v10389, %v10401
    %v10403 = vpop.f32.mrf.mxu0
    %10404 = vdwg.mxu0
    %10405 = vmatpush.bf16.msra.mxu0 %v9215
    %10406 = vmatpush.bf16.msra.mxu0 %v9208
    %10407 = vmatpush.bf16.msra.mxu0 %v9201
    %10408 = vmatpush.bf16.msra.mxu0 %v9194
    %10409 = vmatpush.bf16.msra.mxu0 %v9187
    %10410 = vmatpush.bf16.msra.mxu0 %v9180
    %10411 = vmatpush.bf16.msra.mxu0 %v9173
    %10412 = vmatpush.bf16.msra.mxu0 %v9166
    %10413 = vmatmul.bf16.gmra.mxu0 %v6997
    %v10414 = vpop.f32.mrf.mxu0
    %v10415 = vadd.f32 %v10402, %v10414
    %v10416 = vpop.f32.mrf.mxu0
    %10417 = vdwg.mxu0
    %10418 = vmatpush.bf16.msra.mxu0 %v9271
    %10419 = vmatpush.bf16.msra.mxu0 %v9264
    %10420 = vmatpush.bf16.msra.mxu0 %v9257
    %10421 = vmatpush.bf16.msra.mxu0 %v9250
    %10422 = vmatpush.bf16.msra.mxu0 %v9243
    %10423 = vmatpush.bf16.msra.mxu0 %v9236
    %10424 = vmatpush.bf16.msra.mxu0 %v9229
    %10425 = vmatpush.bf16.msra.mxu0 %v9222
    %10426 = vmatmul.bf16.gmra.mxu0 %v6998
    %v10427 = vpop.f32.mrf.mxu0
    %v10428 = vadd.f32 %v10415, %v10427
    %v10429 = vpop.f32.mrf.mxu0
    %10430 = vdwg.mxu0
    %10431 = vmatpush.bf16.msra.mxu0 %v9327
    %10432 = vmatpush.bf16.msra.mxu0 %v9320
    %10433 = vmatpush.bf16.msra.mxu0 %v9313
    %10434 = vmatpush.bf16.msra.mxu0 %v9306
    %10435 = vmatpush.bf16.msra.mxu0 %v9299
    %10436 = vmatpush.bf16.msra.mxu0 %v9292
    %10437 = vmatpush.bf16.msra.mxu0 %v9285
    %10438 = vmatpush.bf16.msra.mxu0 %v9278
    %10439 = vmatmul.bf16.gmra.mxu0 %v6999
    %v10440 = vpop.f32.mrf.mxu0
    %v10441 = vadd.f32 %v10428, %v10440
    %v10442 = vpop.f32.mrf.mxu0
    %10443 = vdwg.mxu0
    %10444 = vmatpush.bf16.msra.mxu0 %v9383
    %10445 = vmatpush.bf16.msra.mxu0 %v9376
    %10446 = vmatpush.bf16.msra.mxu0 %v9369
    %10447 = vmatpush.bf16.msra.mxu0 %v9362
    %10448 = vmatpush.bf16.msra.mxu0 %v9355
    %10449 = vmatpush.bf16.msra.mxu0 %v9348
    %10450 = vmatpush.bf16.msra.mxu0 %v9341
    %10451 = vmatpush.bf16.msra.mxu0 %v9334
    %10452 = vmatmul.bf16.gmra.mxu0 %v7000
    %v10453 = vpop.f32.mrf.mxu0
    %v10454 = vadd.f32 %v10441, %v10453
    %v10455 = vpop.f32.mrf.mxu0
    %10456 = vdwg.mxu0
    %10457 = vmatpush.bf16.msra.mxu0 %v8992
    %10458 = vmatpush.bf16.msra.mxu0 %v8985
    %10459 = vmatpush.bf16.msra.mxu0 %v8978
    %10460 = vmatpush.bf16.msra.mxu0 %v8971
    %10461 = vmatpush.bf16.msra.mxu0 %v8964
    %10462 = vmatpush.bf16.msra.mxu0 %v8957
    %10463 = vmatpush.bf16.msra.mxu0 %v8950
    %10464 = vmatpush.bf16.msra.mxu0 %v8943
    %10465 = vmatmul.bf16.gmra.mxu0 %v6993
    %v10466 = vpop.f32.mrf.mxu0
    %v10467 = vadd.f32 %v7521, %v10466
    %v10468 = vpop.f32.mrf.mxu0
    %10469 = vdwg.mxu0
    %10470 = vmatpush.bf16.msra.mxu0 %v9048
    %10471 = vmatpush.bf16.msra.mxu0 %v9041
    %10472 = vmatpush.bf16.msra.mxu0 %v9034
    %10473 = vmatpush.bf16.msra.mxu0 %v9027
    %10474 = vmatpush.bf16.msra.mxu0 %v9020
    %10475 = vmatpush.bf16.msra.mxu0 %v9013
    %10476 = vmatpush.bf16.msra.mxu0 %v9006
    %10477 = vmatpush.bf16.msra.mxu0 %v8999
    %10478 = vmatmul.bf16.gmra.mxu0 %v6994
    %v10479 = vpop.f32.mrf.mxu0
    %v10480 = vadd.f32 %v10467, %v10479
    %v10481 = vpop.f32.mrf.mxu0
    %10482 = vdwg.mxu0
    %10483 = vmatpush.bf16.msra.mxu0 %v9104
    %10484 = vmatpush.bf16.msra.mxu0 %v9097
    %10485 = vmatpush.bf16.msra.mxu0 %v9090
    %10486 = vmatpush.bf16.msra.mxu0 %v9083
    %10487 = vmatpush.bf16.msra.mxu0 %v9076
    %10488 = vmatpush.bf16.msra.mxu0 %v9069
    %10489 = vmatpush.bf16.msra.mxu0 %v9062
    %10490 = vmatpush.bf16.msra.mxu0 %v9055
    %10491 = vmatmul.bf16.gmra.mxu0 %v6995
    %v10492 = vpop.f32.mrf.mxu0
    %v10493 = vadd.f32 %v10480, %v10492
    %v10494 = vpop.f32.mrf.mxu0
    %10495 = vdwg.mxu0
    %10496 = vmatpush.bf16.msra.mxu0 %v9160
    %10497 = vmatpush.bf16.msra.mxu0 %v9153
    %10498 = vmatpush.bf16.msra.mxu0 %v9146
    %10499 = vmatpush.bf16.msra.mxu0 %v9139
    %10500 = vmatpush.bf16.msra.mxu0 %v9132
    %10501 = vmatpush.bf16.msra.mxu0 %v9125
    %10502 = vmatpush.bf16.msra.mxu0 %v9118
    %10503 = vmatpush.bf16.msra.mxu0 %v9111
    %10504 = vmatmul.bf16.gmra.mxu0 %v6996
    %v10505 = vpop.f32.mrf.mxu0
    %v10506 = vadd.f32 %v10493, %v10505
    %v10507 = vpop.f32.mrf.mxu0
    %10508 = vdwg.mxu0
    %10509 = vmatpush.bf16.msra.mxu0 %v9216
    %10510 = vmatpush.bf16.msra.mxu0 %v9209
    %10511 = vmatpush.bf16.msra.mxu0 %v9202
    %10512 = vmatpush.bf16.msra.mxu0 %v9195
    %10513 = vmatpush.bf16.msra.mxu0 %v9188
    %10514 = vmatpush.bf16.msra.mxu0 %v9181
    %10515 = vmatpush.bf16.msra.mxu0 %v9174
    %10516 = vmatpush.bf16.msra.mxu0 %v9167
    %10517 = vmatmul.bf16.gmra.mxu0 %v6997
    %v10518 = vpop.f32.mrf.mxu0
    %v10519 = vadd.f32 %v10506, %v10518
    %v10520 = vpop.f32.mrf.mxu0
    %10521 = vdwg.mxu0
    %10522 = vmatpush.bf16.msra.mxu0 %v9272
    %10523 = vmatpush.bf16.msra.mxu0 %v9265
    %10524 = vmatpush.bf16.msra.mxu0 %v9258
    %10525 = vmatpush.bf16.msra.mxu0 %v9251
    %10526 = vmatpush.bf16.msra.mxu0 %v9244
    %10527 = vmatpush.bf16.msra.mxu0 %v9237
    %10528 = vmatpush.bf16.msra.mxu0 %v9230
    %10529 = vmatpush.bf16.msra.mxu0 %v9223
    %10530 = vmatmul.bf16.gmra.mxu0 %v6998
    %v10531 = vpop.f32.mrf.mxu0
    %v10532 = vadd.f32 %v10519, %v10531
    %v10533 = vpop.f32.mrf.mxu0
    %10534 = vdwg.mxu0
    %10535 = vmatpush.bf16.msra.mxu0 %v9328
    %10536 = vmatpush.bf16.msra.mxu0 %v9321
    %10537 = vmatpush.bf16.msra.mxu0 %v9314
    %10538 = vmatpush.bf16.msra.mxu0 %v9307
    %10539 = vmatpush.bf16.msra.mxu0 %v9300
    %10540 = vmatpush.bf16.msra.mxu0 %v9293
    %10541 = vmatpush.bf16.msra.mxu0 %v9286
    %10542 = vmatpush.bf16.msra.mxu0 %v9279
    %10543 = vmatmul.bf16.gmra.mxu0 %v6999
    %v10544 = vpop.f32.mrf.mxu0
    %v10545 = vadd.f32 %v10532, %v10544
    %v10546 = vpop.f32.mrf.mxu0
    %10547 = vdwg.mxu0
    %10548 = vmatpush.bf16.msra.mxu0 %v9384
    %10549 = vmatpush.bf16.msra.mxu0 %v9377
    %10550 = vmatpush.bf16.msra.mxu0 %v9370
    %10551 = vmatpush.bf16.msra.mxu0 %v9363
    %10552 = vmatpush.bf16.msra.mxu0 %v9356
    %10553 = vmatpush.bf16.msra.mxu0 %v9349
    %10554 = vmatpush.bf16.msra.mxu0 %v9342
    %10555 = vmatpush.bf16.msra.mxu0 %v9335
    %10556 = vmatmul.bf16.gmra.mxu0 %v7000
    %v10557 = vpop.f32.mrf.mxu0
    %v10558 = vadd.f32 %v10545, %v10557
    %v10559 = vpop.f32.mrf.mxu0
    %10560 = vdwg.mxu0
    %v10561 = vmax.f32 %v9934, 0.0
    %v10562 = vmax.f32 %v10038, 0.0
    %v10563 = vmax.f32 %v10142, 0.0
    %v10564 = vmax.f32 %v10246, 0.0
    %v10565 = vmax.f32 %v10350, 0.0
    %v10566 = vmax.f32 %v10454, 0.0
    %v10567 = vmax.f32 %v10558, 0.0
    %10568 = vst [vmem:[%s5] sm:$0xff] %v10561
    %10569 = vst [vmem:[%s5 + $0x8] sm:$0xff] %v10562
    %10570 = vst [vmem:[%s5 + $0x10] sm:$0xff] %v10563
    %10571 = vst [vmem:[%s5 + $0x18] sm:$0xff] %v10564
    %10572 = vst [vmem:[%s5 + $0x20] sm:$0xff] %v10565
    %10573 = vst [vmem:[%s5 + $0x28] sm:$0xff] %v10566
    %10574 = vst [vmem:[%s5 + $0x30] sm:$0xff] %v10567
    // Predicated region
    $region38: #{simple_predict.1} parent=1 // pred_check
      _
    $region39: #{simple_predict.1} parent=1 // pred_check_branch
      %10576 = sbr.rel (0) target = $region41
    $region40: #{simple_predict.1} parent=1 // pred_region
      _
    $region41: #{simple_predict.1} parent=1 // pred_fallthru
      _
    // Predicated region
    $region42: #{simple_predict.1} parent=1 // pred_check
      _
    $region43: #{simple_predict.1} parent=1 // pred_check_branch
      %10578 = sbr.rel (0) target = $region45
    $region44: #{simple_predict.1} parent=1 // pred_region
      _
    $region45: #{simple_predict.1} parent=1 // pred_fallthru
      _
    %10579 = vsyncpa [#allocation3], 1
    %10580 = vsyncpa [#allocation5], 1
    %10581 = vsyncpa [#allocation8], 1

</llo_original>
